<compile_context>
chip_gen: v7x
topology: tpu7x:2x2x1
jax: 0.10.0
libtpu: 0.0.40
codegen_flags: <defaults>
</compile_context>

<pallas_src>
import functools

import jax
import jax.numpy as jnp
from jax.experimental import pallas as pl
from jax.experimental.pallas import tpu as pltpu


# ----------------------------------------------------------------------------
# Config (CONFIG is not given in the reference; use a small synthetic config).
# ----------------------------------------------------------------------------
CONFIG = {
    "fpn": {
        "lateral": {"out_channels": 16},
        "smooth": {"out_channels": 16, "kernel_size": 3, "padding": 1},
    }
}
BACKBONE_OUT_CHANNELS = [8, 16, 32, 64]   # channels of c1, c2, c3, c4

_VMEM_LIMIT = 32 * 1024 * 1024            # explicit scoped-VMEM budget (v7x safe)
_MAX_TILE_ELEMS = 2048                    # flattened lanes per activation block


# ----------------------------------------------------------------------------
# helpers
# ----------------------------------------------------------------------------
def _pick_row_tile(H, W, max_elems, lane_multiple, need_even):
    """Largest row tile th (dividing H) whose flattened width th*W is either the
    full spatial size or a multiple of `lane_multiple` (and even if required)."""
    if H * W <= max_elems:
        return H
    th, best = H, H
    while th % 2 == 0:
        th //= 2
        if (th * W) % lane_multiple != 0 or (need_even and th % 2 != 0):
            break
        best = th
        if th * W <= max_elems:
            break
    return best


def _upsample_matrix(th, W, dtype=jnp.float32):
    """(th//2 * W//2, th*W) 0/1 matrix mapping a flattened coarse row-tile to its
    exact 2x nearest-neighbour upsampled flattened fine row-tile."""
    wc = W // 2
    hc = th // 2
    src = (jnp.arange(th)[:, None] // 2) * wc + (jnp.arange(W)[None, :] // 2)
    src = src.reshape(-1)                                        # (th*W,)
    return (jnp.arange(hc * wc)[:, None] == src[None, :]).astype(dtype)


# ----------------------------------------------------------------------------
# lateral 1x1 conv kernels (channels-first, spatial flattened onto lanes)
# ----------------------------------------------------------------------------
def _lateral_kernel(x_ref, w_ref, b_ref, o_ref):
    # x: (Cin, ts) ; w: (Cout, Cin) bf16 ; b: (Cout, 1) f32 ; o: (Cout, ts) f32
    x = x_ref[...].astype(jnp.bfloat16)
    lat = jax.lax.dot_general(
        w_ref[...], x,
        dimension_numbers=(((1,), (0,)), ((), ())),
        preferred_element_type=jnp.float32)
    o_ref[...] = lat + b_ref[...]


def _lateral_upadd_kernel(x_ref, w_ref, b_ref, c_ref, u_ref, o_ref):
    # as above, plus c: (Cout, ts//4) coarse block and u: (ts//4, ts) 0/1 matrix
    # implementing the fused exact 2x nearest upsample of the coarser level.
    x = x_ref[...].astype(jnp.bfloat16)
    lat = jax.lax.dot_general(
        w_ref[...], x,
        dimension_numbers=(((1,), (0,)), ((), ())),
        preferred_element_type=jnp.float32)
    up = jax.lax.dot_general(
        c_ref[...], u_ref[...],
        dimension_numbers=(((1,), (0,)), ((), ())),
        preferred_element_type=jnp.float32)
    o_ref[...] = lat + b_ref[...] + up


def lateral_conv(x, w, b, up_src=None):
    """1x1 conv of NCHW `x`, optionally fused with `+ upsample2x(up_src)`.

    x:      (N, Cin, H, W) float32 (or bfloat16)
    w:      (Cout, Cin)
    b:      (Cout,)
    up_src: (N, Cout, H//2, W//2) float32 or None
    returns (N, Cout, H, W) float32
    """
    N, Cin, H, W = x.shape
    Cout = w.shape[0]
    S = H * W
    fused = up_src is not None
    if fused:
        assert up_src.shape == (N, Cout, H // 2, W // 2)
        assert H % 2 == 0 and W % 2 == 0

    th = _pick_row_tile(H, W, _MAX_TILE_ELEMS,
                        lane_multiple=512 if fused else 128,
                        need_even=fused)
    ts = th * W
    grid = (N, H // th)

    xf = x.reshape(N, Cin, S)
    wq = w.astype(jnp.bfloat16)
    b2 = b.reshape(Cout, 1).astype(jnp.float32)

    x_spec = pl.BlockSpec((None, Cin, ts), lambda n, r: (n, 0, r))
    w_spec = pl.BlockSpec((Cout, Cin), lambda n, r: (0, 0))
    b_spec = pl.BlockSpec((Cout, 1), lambda n, r: (0, 0))
    o_spec = pl.BlockSpec((None, Cout, ts), lambda n, r: (n, 0, r))

    cparams = pltpu.CompilerParams(
        dimension_semantics=("parallel", "parallel"),
        vmem_limit_bytes=_VMEM_LIMIT)

    flops = 2 * N * S * Cin * Cout
    bytes_accessed = (xf.size * xf.dtype.itemsize + wq.size * 2 + b2.size * 4
                      + N * Cout * S * 4)

    if not fused:
        out = pl.pallas_call(
            _lateral_kernel,
            out_shape=jax.ShapeDtypeStruct((N, Cout, S), jnp.float32),
            grid=grid,
            in_specs=[x_spec, w_spec, b_spec],
            out_specs=o_spec,
            compiler_params=cparams,
            cost_estimate=pl.CostEstimate(flops=int(flops), transcendentals=0,
                                          bytes_accessed=int(bytes_accessed)),
        )(xf, wq, b2)
        return out.reshape(N, Cout, H, W)

    sc = ts // 4
    Sc = S // 4
    cf = up_src.reshape(N, Cout, Sc).astype(jnp.float32)
    U = _upsample_matrix(th, W)                        # (sc, ts) exact 0/1
    c_spec = pl.BlockSpec((None, Cout, sc), lambda n, r: (n, 0, r))
    u_spec = pl.BlockSpec((sc, ts), lambda n, r: (0, 0))

    flops_total = int(flops + 2 * N * S * Cout * sc)
    bytes_total = int(bytes_accessed + cf.size * 4 + U.size * 4)
    out = pl.pallas_call(
        _lateral_upadd_kernel,
        out_shape=jax.ShapeDtypeStruct((N, Cout, S), jnp.float32),
        grid=grid,
        in_specs=[x_spec, w_spec, b_spec, c_spec, u_spec],
        out_specs=o_spec,
        compiler_params=cparams,
        cost_estimate=pl.CostEstimate(flops=flops_total, transcendentals=0,
                                      bytes_accessed=bytes_total),
    )(xf, wq, b2, cf, U)
    return out.reshape(N, Cout, H, W)


# ----------------------------------------------------------------------------
# smooth 3x3 conv kernel (9 taps as 2-D matmuls, roll+mask for the shifts)
# ----------------------------------------------------------------------------
def _smooth_kernel(width, x_ref, w_ref, b_ref, o_ref):
    # x: (Cin, S) f32 for one sample, w: (9, Cout, Cin) f32, b: (Cout, 1) f32,
    # o: (Cout, S) f32.  S = H*W; `width` = W (static).
    _cin, S = x_ref.shape
    Cout = o_ref.shape[0]
    x = x_ref[...]
    col = jax.lax.broadcasted_iota(jnp.int32, (1, S), 1)
    wcol = col % width

    acc = jnp.zeros((Cout, S), jnp.float32)
    t = 0
    for dy in (-1, 0, 1):
        for dx in (-1, 0, 1):
            d = dy * width + dx                      # flattened tap offset
            amt = (-d) % S
            xs = x if amt == 0 else pltpu.roll(x, amt, 1)
            # keep only lanes whose source pixel (h+dy, w+dx) is inside the image
            valid = None
            if dx == 1:
                valid = wcol < (width - 1)
            elif dx == -1:
                valid = wcol >= 1
            if dy == 1:
                v = col < (S - width)
                valid = v if valid is None else jnp.logical_and(valid, v)
            elif dy == -1:
                v = col >= width
                valid = v if valid is None else jnp.logical_and(valid, v)
            if valid is not None:
                xs = jnp.where(valid, xs, 0.0)
            acc = acc + jax.lax.dot_general(
                w_ref[t], xs,
                dimension_numbers=(((1,), (0,)), ((), ())),
                preferred_element_type=jnp.float32)
            t += 1
    o_ref[...] = acc + b_ref[...]


def smooth_conv(p, w, b):
    """3x3 conv, stride 1, padding 1, on NCHW `p` (float32).
    w: (Cout, Cin, 3, 3) PyTorch OIHW, b: (Cout,). Returns NCHW float32."""
    N, Cin, H, W = p.shape
    Cout = w.shape[0]
    S = H * W
    pf = p.reshape(N, Cin, S).astype(jnp.float32)
    w9 = jnp.transpose(w.reshape(Cout, Cin, 9), (2, 0, 1)).astype(jnp.float32)
    b2 = b.reshape(Cout, 1).astype(jnp.float32)

    # TODO(synk): for very large pyramid levels, tile H with halo rows (manual
    # double-buffered DMA) instead of one whole sample per grid step.
    kernel = functools.partial(_smooth_kernel, W)
    flops = 2 * 9 * N * S * Cin * Cout
    bytes_accessed = pf.size * 4 + w9.size * 4 + b2.size * 4 + N * Cout * S * 4
    out = pl.pallas_call(
        kernel,
        out_shape=jax.ShapeDtypeStruct((N, Cout, S), jnp.float32),
        grid=(N,),
        in_specs=[pl.BlockSpec((None, Cin, S), lambda n: (n, 0, 0)),
                  pl.BlockSpec((9, Cout, Cin), lambda n: (0, 0, 0)),
                  pl.BlockSpec((Cout, 1), lambda n: (0, 0))],
        out_specs=pl.BlockSpec((None, Cout, S), lambda n: (n, 0, 0)),
        compiler_params=pltpu.CompilerParams(
            dimension_semantics=("parallel",),
            vmem_limit_bytes=_VMEM_LIMIT),
        cost_estimate=pl.CostEstimate(flops=int(flops), transcendentals=0,
                                      bytes_accessed=int(bytes_accessed)),
    )(pf, w9, b2)
    return out.reshape(N, Cout, H, W)


# ----------------------------------------------------------------------------
# Parameters (deterministic synthetic init, PyTorch-native layouts)
# ----------------------------------------------------------------------------
def init_fpn_params(key, backbone_out_channels, config):
    c_lat = config["fpn"]["lateral"]["out_channels"]
    c_sm = config["fpn"]["smooth"]["out_channels"]
    k = config["fpn"]["smooth"]["kernel_size"]
    params = {}
    keys = jax.random.split(key, 16)
    i = 0
    for lvl, cin in enumerate(backbone_out_channels, start=1):
        params[f"lateral{lvl}_w"] = (
            0.05 * jax.random.normal(keys[i], (c_lat, cin), jnp.float32)); i += 1
        params[f"lateral{lvl}_b"] = (
            0.05 * jax.random.normal(keys[i], (c_lat,), jnp.float32)); i += 1
    for lvl in range(1, 5):
        params[f"smooth{lvl}_w"] = (
            0.05 * jax.random.normal(keys[i], (c_sm, c_lat, k, k), jnp.float32)); i += 1
        params[f"smooth{lvl}_b"] = (
            0.05 * jax.random.normal(keys[i], (c_sm,), jnp.float32)); i += 1
    return params


# ----------------------------------------------------------------------------
# FPN forward (NCHW in, NCHW out, like the PyTorch module)
# ----------------------------------------------------------------------------
@jax.jit
def fpn_forward(params, c1, c2, c3, c4):
    p4 = lateral_conv(c4, params["lateral4_w"], params["lateral4_b"])
    p3 = lateral_conv(c3, params["lateral3_w"], params["lateral3_b"], up_src=p4)
    p2 = lateral_conv(c2, params["lateral2_w"], params["lateral2_b"], up_src=p3)
    p1 = lateral_conv(c1, params["lateral1_w"], params["lateral1_b"], up_src=p2)
    return (smooth_conv(p1, params["smooth1_w"], params["smooth1_b"]),
            smooth_conv(p2, params["smooth2_w"], params["smooth2_b"]),
            smooth_conv(p3, params["smooth3_w"], params["smooth3_b"]),
            smooth_conv(p4, params["smooth4_w"], params["smooth4_b"]))


# ----------------------------------------------------------------------------
# Pure-JAX reference (same bf16 matmul operands / f32 accumulation)
# ----------------------------------------------------------------------------
def fpn_forward_ref(params, c1, c2, c3, c4):
    dn = ("NCHW", "OIHW", "NCHW")

    def conv1x1(x, w, b):
        y = jax.lax.conv_general_dilated(
            x.astype(jnp.bfloat16),
            w.reshape(w.shape[0], w.shape[1], 1, 1).astype(jnp.bfloat16),
            window_strides=(1, 1), padding="VALID", dimension_numbers=dn,
            preferred_element_type=jnp.float32)
        return y + b.reshape(1, -1, 1, 1)

    def conv3x3(x, w, b):
        y = jax.lax.conv_general_dilated(
            x, w, window_strides=(1, 1), padding=[(1, 1), (1, 1)],
            dimension_numbers=dn, preferred_element_type=jnp.float32)
        return y + b.reshape(1, -1, 1, 1)

    def up2(x):
        return jnp.repeat(jnp.repeat(x, 2, axis=2), 2, axis=3)

    p4 = conv1x1(c4, params["lateral4_w"], params["lateral4_b"])
    p3 = conv1x1(c3, params["lateral3_w"], params["lateral3_b"]) + up2(p4)
    p2 = conv1x1(c2, params["lateral2_w"], params["lateral2_b"]) + up2(p3)
    p1 = conv1x1(c1, params["lateral1_w"], params["lateral1_b"]) + up2(p2)
    return (conv3x3(p1, params["smooth1_w"], params["smooth1_b"]),
            conv3x3(p2, params["smooth2_w"], params["smooth2_b"]),
            conv3x3(p3, params["smooth3_w"], params["smooth3_b"]),
            conv3x3(p4, params["smooth4_w"], params["smooth4_b"]))


if __name__ == "__main__":
    key = jax.random.PRNGKey(0)
    kp, k1, k2, k3, k4 = jax.random.split(key, 5)

    params = init_fpn_params(kp, BACKBONE_OUT_CHANNELS, CONFIG)

    # NCHW inputs, spatial sizes halving at each pyramid level.
    N = 2
    c1 = jax.random.normal(k1, (N, BACKBONE_OUT_CHANNELS[0], 16, 16), jnp.float32)
    c2 = jax.random.normal(k2, (N, BACKBONE_OUT_CHANNELS[1], 8, 8), jnp.float32)
    c3 = jax.random.normal(k3, (N, BACKBONE_OUT_CHANNELS[2], 4, 4), jnp.float32)
    c4 = jax.random.normal(k4, (N, BACKBONE_OUT_CHANNELS[3], 2, 2), jnp.float32)

    outs = jax.block_until_ready(fpn_forward(params, c1, c2, c3, c4))
    refs = fpn_forward_ref(params, c1, c2, c3, c4)
    for o, r in zip(outs, refs):
        assert o.shape == r.shape, (o.shape, r.shape)
        err = float(jnp.max(jnp.abs(o - r)))
        assert err < 2e-4, err

    print("KERNEL_OK")
</pallas_src>

<mosaic_0001>
module attributes {stable_mosaic.version = 11 : i64} {
  func.func @_lateral_upadd_kernel(%arg0: i32, %arg1: i32, %arg2: memref<1x16x64xf32, #tpu.memory_space<vmem>>, %arg3: memref<16x16xbf16, #tpu.memory_space<vmem>>, %arg4: memref<16x1xf32, #tpu.memory_space<vmem>>, %arg5: memref<1x16x16xf32, #tpu.memory_space<vmem>>, %arg6: memref<16x64xf32, #tpu.memory_space<vmem>>, %arg7: memref<1x16x64xf32, #tpu.memory_space<vmem>>) attributes {dimension_semantics = [#tpu.dimension_semantics<parallel>, #tpu.dimension_semantics<parallel>], iteration_bounds = array<i64: 2, 1>, scalar_prefetch = 0 : i64, scratch_operands = 0 : i64, tpu.core_type = #tpu.core_type<tc>, window_params = [{transform_indices = @transform_0, window_bounds = array<i64: 1, 16, 64>}, {pipeline_mode = #tpu.pipeline_mode<synchronous>, transform_indices = @transform_1, window_bounds = array<i64: 16, 16>}, {pipeline_mode = #tpu.pipeline_mode<synchronous>, transform_indices = @transform_2, window_bounds = array<i64: 16, 1>}, {transform_indices = @transform_3, window_bounds = array<i64: 1, 16, 16>}, {pipeline_mode = #tpu.pipeline_mode<synchronous>, transform_indices = @transform_4, window_bounds = array<i64: 16, 64>}, {transform_indices = @transform_5, window_bounds = array<i64: 1, 16, 64>}]} {
    %c0 = arith.constant 0 : index
    %c0_0 = arith.constant 0 : index
    %c0_1 = arith.constant 0 : index
    %0 = vector.load %arg2[%c0, %c0_0, %c0_1] : memref<1x16x64xf32, #tpu.memory_space<vmem>>, vector<1x16x64xf32>
    %1 = vector.shape_cast %0 : vector<1x16x64xf32> to vector<16x64xf32>
    %2 = arith.truncf %1 : vector<16x64xf32> to vector<16x64xbf16>
    %c0_2 = arith.constant 0 : index
    %c0_3 = arith.constant 0 : index
    %3 = vector.load %arg3[%c0_2, %c0_3] : memref<16x16xbf16, #tpu.memory_space<vmem>>, vector<16x16xbf16>
    %cst = arith.constant dense<0.000000e+00> : vector<16x64xf32>
    %4 = tpu.matmul %3, %2, %cst {dimension_numbers = #tpu.dot_dimension_numbers<[1], [0], [0], [1], [0, 0, 1, 1], [], []>} : vector<16x16xbf16>, vector<16x64xbf16>, vector<16x64xf32> -> vector<16x64xf32>
    %c0_4 = arith.constant 0 : index
    %c0_5 = arith.constant 0 : index
    %c0_6 = arith.constant 0 : index
    %5 = vector.load %arg5[%c0_4, %c0_5, %c0_6] : memref<1x16x16xf32, #tpu.memory_space<vmem>>, vector<1x16x16xf32>
    %6 = vector.shape_cast %5 : vector<1x16x16xf32> to vector<16x16xf32>
    %c0_7 = arith.constant 0 : index
    %c0_8 = arith.constant 0 : index
    %7 = vector.load %arg6[%c0_7, %c0_8] : memref<16x64xf32, #tpu.memory_space<vmem>>, vector<16x64xf32>
    %cst_9 = arith.constant dense<0.000000e+00> : vector<16x64xf32>
    %8 = tpu.matmul %6, %7, %cst_9 {dimension_numbers = #tpu.dot_dimension_numbers<[1], [0], [0], [1], [0, 0, 1, 1], [], []>} : vector<16x16xf32>, vector<16x64xf32>, vector<16x64xf32> -> vector<16x64xf32>
    %c0_10 = arith.constant 0 : index
    %c0_11 = arith.constant 0 : index
    %9 = vector.load %arg4[%c0_10, %c0_11] : memref<16x1xf32, #tpu.memory_space<vmem>>, vector<16x1xf32>
    %10 = vector.broadcast %9 : vector<16x1xf32> to vector<16x64xf32>
    %11 = arith.addf %4, %10 : vector<16x64xf32>
    %12 = arith.addf %11, %8 : vector<16x64xf32>
    %c0_12 = arith.constant 0 : index
    %c0_13 = arith.constant 0 : index
    %c0_14 = arith.constant 0 : index
    %13 = vector.load %arg7[%c0_12, %c0_13, %c0_14] : memref<1x16x64xf32, #tpu.memory_space<vmem>>, vector<1x16x64xf32>
    %14 = vector.shape_cast %13 : vector<1x16x64xf32> to vector<16x64xf32>
    %15 = vector.shape_cast %12 : vector<16x64xf32> to vector<1x16x64xf32>
    tpu.vector_store %arg7[%c0_12, %c0_13, %c0_14], %15 {strides = array<i32>} : memref<1x16x64xf32, #tpu.memory_space<vmem>>, vector<1x16x64xf32>,
    return
  }
  func.func @transform_0(%arg0: i32, %arg1: i32) -> (i32, i32, i32) {
    %c0_i32 = arith.constant 0 : i32
    %c0_i32_0 = arith.constant 0 : i32
    return %arg0, %c0_i32, %arg1 : i32, i32, i32
  }
  func.func @transform_1(%arg0: i32, %arg1: i32) -> (i32, i32) {
    %c0_i32 = arith.constant 0 : i32
    %c0_i32_0 = arith.constant 0 : i32
    %c0_i32_1 = arith.constant 0 : i32
    return %c0_i32, %c0_i32_0 : i32, i32
  }
  func.func @transform_2(%arg0: i32, %arg1: i32) -> (i32, i32) {
    %c0_i32 = arith.constant 0 : i32
    %c0_i32_0 = arith.constant 0 : i32
    %c0_i32_1 = arith.constant 0 : i32
    return %c0_i32, %c0_i32_0 : i32, i32
  }
  func.func @transform_3(%arg0: i32, %arg1: i32) -> (i32, i32, i32) {
    %c0_i32 = arith.constant 0 : i32
    %c0_i32_0 = arith.constant 0 : i32
    return %arg0, %c0_i32, %arg1 : i32, i32, i32
  }
  func.func @transform_4(%arg0: i32, %arg1: i32) -> (i32, i32) {
    %c0_i32 = arith.constant 0 : i32
    %c0_i32_0 = arith.constant 0 : i32
    %c0_i32_1 = arith.constant 0 : i32
    return %c0_i32, %c0_i32_0 : i32, i32
  }
  func.func @transform_5(%arg0: i32, %arg1: i32) -> (i32, i32, i32) {
    %c0_i32 = arith.constant 0 : i32
    %c0_i32_0 = arith.constant 0 : i32
    return %arg0, %c0_i32, %arg1 : i32, i32, i32
  }
}

module attributes {stable_mosaic.version = 11 : i64} {
  func.func @_lateral_kernel(%arg0: i32, %arg1: i32, %arg2: memref<1x64x4xf32, #tpu.memory_space<vmem>>, %arg3: memref<16x64xbf16, #tpu.memory_space<vmem>>, %arg4: memref<16x1xf32, #tpu.memory_space<vmem>>, %arg5: memref<1x16x4xf32, #tpu.memory_space<vmem>>) attributes {dimension_semantics = [#tpu.dimension_semantics<parallel>, #tpu.dimension_semantics<parallel>], iteration_bounds = array<i64: 2, 1>, scalar_prefetch = 0 : i64, scratch_operands = 0 : i64, tpu.core_type = #tpu.core_type<tc>, window_params = [{transform_indices = @transform_0, window_bounds = array<i64: 1, 64, 4>}, {pipeline_mode = #tpu.pipeline_mode<synchronous>, transform_indices = @transform_1, window_bounds = array<i64: 16, 64>}, {pipeline_mode = #tpu.pipeline_mode<synchronous>, transform_indices = @transform_2, window_bounds = array<i64: 16, 1>}, {transform_indices = @transform_3, window_bounds = array<i64: 1, 16, 4>}]} {
    %c0 = arith.constant 0 : index
    %c0_0 = arith.constant 0 : index
    %c0_1 = arith.constant 0 : index
    %0 = vector.load %arg2[%c0, %c0_0, %c0_1] : memref<1x64x4xf32, #tpu.memory_space<vmem>>, vector<1x64x4xf32>
    %1 = vector.shape_cast %0 : vector<1x64x4xf32> to vector<64x4xf32>
    %2 = arith.truncf %1 : vector<64x4xf32> to vector<64x4xbf16>
    %c0_2 = arith.constant 0 : index
    %c0_3 = arith.constant 0 : index
    %3 = vector.load %arg3[%c0_2, %c0_3] : memref<16x64xbf16, #tpu.memory_space<vmem>>, vector<16x64xbf16>
    %cst = arith.constant dense<0.000000e+00> : vector<16x4xf32>
    %4 = tpu.matmul %3, %2, %cst {dimension_numbers = #tpu.dot_dimension_numbers<[1], [0], [0], [1], [0, 0, 1, 1], [], []>} : vector<16x64xbf16>, vector<64x4xbf16>, vector<16x4xf32> -> vector<16x4xf32>
    %c0_4 = arith.constant 0 : index
    %c0_5 = arith.constant 0 : index
    %5 = vector.load %arg4[%c0_4, %c0_5] : memref<16x1xf32, #tpu.memory_space<vmem>>, vector<16x1xf32>
    %6 = vector.broadcast %5 : vector<16x1xf32> to vector<16x4xf32>
    %7 = arith.addf %4, %6 : vector<16x4xf32>
    %c0_6 = arith.constant 0 : index
    %c0_7 = arith.constant 0 : index
    %c0_8 = arith.constant 0 : index
    %8 = vector.load %arg5[%c0_6, %c0_7, %c0_8] : memref<1x16x4xf32, #tpu.memory_space<vmem>>, vector<1x16x4xf32>
    %9 = vector.shape_cast %8 : vector<1x16x4xf32> to vector<16x4xf32>
    %10 = vector.shape_cast %7 : vector<16x4xf32> to vector<1x16x4xf32>
    tpu.vector_store %arg5[%c0_6, %c0_7, %c0_8], %10 {strides = array<i32>} : memref<1x16x4xf32, #tpu.memory_space<vmem>>, vector<1x16x4xf32>,
    return
  }
  func.func @transform_0(%arg0: i32, %arg1: i32) -> (i32, i32, i32) {
    %c0_i32 = arith.constant 0 : i32
    %c0_i32_0 = arith.constant 0 : i32
    return %arg0, %c0_i32, %arg1 : i32, i32, i32
  }
  func.func @transform_1(%arg0: i32, %arg1: i32) -> (i32, i32) {
    %c0_i32 = arith.constant 0 : i32
    %c0_i32_0 = arith.constant 0 : i32
    %c0_i32_1 = arith.constant 0 : i32
    return %c0_i32, %c0_i32_0 : i32, i32
  }
  func.func @transform_2(%arg0: i32, %arg1: i32) -> (i32, i32) {
    %c0_i32 = arith.constant 0 : i32
    %c0_i32_0 = arith.constant 0 : i32
    %c0_i32_1 = arith.constant 0 : i32
    return %c0_i32, %c0_i32_0 : i32, i32
  }
  func.func @transform_3(%arg0: i32, %arg1: i32) -> (i32, i32, i32) {
    %c0_i32 = arith.constant 0 : i32
    %c0_i32_0 = arith.constant 0 : i32
    return %arg0, %c0_i32, %arg1 : i32, i32, i32
  }
}

module attributes {stable_mosaic.version = 11 : i64} {
  func.func @_lateral_upadd_kernel(%arg0: i32, %arg1: i32, %arg2: memref<1x32x16xf32, #tpu.memory_space<vmem>>, %arg3: memref<16x32xbf16, #tpu.memory_space<vmem>>, %arg4: memref<16x1xf32, #tpu.memory_space<vmem>>, %arg5: memref<1x16x4xf32, #tpu.memory_space<vmem>>, %arg6: memref<4x16xf32, #tpu.memory_space<vmem>>, %arg7: memref<1x16x16xf32, #tpu.memory_space<vmem>>) attributes {dimension_semantics = [#tpu.dimension_semantics<parallel>, #tpu.dimension_semantics<parallel>], iteration_bounds = array<i64: 2, 1>, scalar_prefetch = 0 : i64, scratch_operands = 0 : i64, tpu.core_type = #tpu.core_type<tc>, window_params = [{transform_indices = @transform_0, window_bounds = array<i64: 1, 32, 16>}, {pipeline_mode = #tpu.pipeline_mode<synchronous>, transform_indices = @transform_1, window_bounds = array<i64: 16, 32>}, {pipeline_mode = #tpu.pipeline_mode<synchronous>, transform_indices = @transform_2, window_bounds = array<i64: 16, 1>}, {transform_indices = @transform_3, window_bounds = array<i64: 1, 16, 4>}, {pipeline_mode = #tpu.pipeline_mode<synchronous>, transform_indices = @transform_4, window_bounds = array<i64: 4, 16>}, {transform_indices = @transform_5, window_bounds = array<i64: 1, 16, 16>}]} {
    %c0 = arith.constant 0 : index
    %c0_0 = arith.constant 0 : index
    %c0_1 = arith.constant 0 : index
    %0 = vector.load %arg2[%c0, %c0_0, %c0_1] : memref<1x32x16xf32, #tpu.memory_space<vmem>>, vector<1x32x16xf32>
    %1 = vector.shape_cast %0 : vector<1x32x16xf32> to vector<32x16xf32>
    %2 = arith.truncf %1 : vector<32x16xf32> to vector<32x16xbf16>
    %c0_2 = arith.constant 0 : index
    %c0_3 = arith.constant 0 : index
    %3 = vector.load %arg3[%c0_2, %c0_3] : memref<16x32xbf16, #tpu.memory_space<vmem>>, vector<16x32xbf16>
    %cst = arith.constant dense<0.000000e+00> : vector<16x16xf32>
    %4 = tpu.matmul %3, %2, %cst {dimension_numbers = #tpu.dot_dimension_numbers<[1], [0], [0], [1], [0, 0, 1, 1], [], []>} : vector<16x32xbf16>, vector<32x16xbf16>, vector<16x16xf32> -> vector<16x16xf32>
    %c0_4 = arith.constant 0 : index
    %c0_5 = arith.constant 0 : index
    %c0_6 = arith.constant 0 : index
    %5 = vector.load %arg5[%c0_4, %c0_5, %c0_6] : memref<1x16x4xf32, #tpu.memory_space<vmem>>, vector<1x16x4xf32>
    %6 = vector.shape_cast %5 : vector<1x16x4xf32> to vector<16x4xf32>
    %c0_7 = arith.constant 0 : index
    %c0_8 = arith.constant 0 : index
    %7 = vector.load %arg6[%c0_7, %c0_8] : memref<4x16xf32, #tpu.memory_space<vmem>>, vector<4x16xf32>
    %cst_9 = arith.constant dense<0.000000e+00> : vector<16x16xf32>
    %8 = tpu.matmul %6, %7, %cst_9 {dimension_numbers = #tpu.dot_dimension_numbers<[1], [0], [0], [1], [0, 0, 1, 1], [], []>} : vector<16x4xf32>, vector<4x16xf32>, vector<16x16xf32> -> vector<16x16xf32>
    %c0_10 = arith.constant 0 : index
    %c0_11 = arith.constant 0 : index
    %9 = vector.load %arg4[%c0_10, %c0_11] : memref<16x1xf32, #tpu.memory_space<vmem>>, vector<16x1xf32>
    %10 = vector.broadcast %9 : vector<16x1xf32> to vector<16x16xf32>
    %11 = arith.addf %4, %10 : vector<16x16xf32>
    %12 = arith.addf %11, %8 : vector<16x16xf32>
    %c0_12 = arith.constant 0 : index
    %c0_13 = arith.constant 0 : index
    %c0_14 = arith.constant 0 : index
    %13 = vector.load %arg7[%c0_12, %c0_13, %c0_14] : memref<1x16x16xf32, #tpu.memory_space<vmem>>, vector<1x16x16xf32>
    %14 = vector.shape_cast %13 : vector<1x16x16xf32> to vector<16x16xf32>
    %15 = vector.shape_cast %12 : vector<16x16xf32> to vector<1x16x16xf32>
    tpu.vector_store %arg7[%c0_12, %c0_13, %c0_14], %15 {strides = array<i32>} : memref<1x16x16xf32, #tpu.memory_space<vmem>>, vector<1x16x16xf32>,
    return
  }
  func.func @transform_0(%arg0: i32, %arg1: i32) -> (i32, i32, i32) {
    %c0_i32 = arith.constant 0 : i32
    %c0_i32_0 = arith.constant 0 : i32
    return %arg0, %c0_i32, %arg1 : i32, i32, i32
  }
  func.func @transform_1(%arg0: i32, %arg1: i32) -> (i32, i32) {
    %c0_i32 = arith.constant 0 : i32
    %c0_i32_0 = arith.constant 0 : i32
    %c0_i32_1 = arith.constant 0 : i32
    return %c0_i32, %c0_i32_0 : i32, i32
  }
  func.func @transform_2(%arg0: i32, %arg1: i32) -> (i32, i32) {
    %c0_i32 = arith.constant 0 : i32
    %c0_i32_0 = arith.constant 0 : i32
    %c0_i32_1 = arith.constant 0 : i32
    return %c0_i32, %c0_i32_0 : i32, i32
  }
  func.func @transform_3(%arg0: i32, %arg1: i32) -> (i32, i32, i32) {
    %c0_i32 = arith.constant 0 : i32
    %c0_i32_0 = arith.constant 0 : i32
    return %arg0, %c0_i32, %arg1 : i32, i32, i32
  }
  func.func @transform_4(%arg0: i32, %arg1: i32) -> (i32, i32) {
    %c0_i32 = arith.constant 0 : i32
    %c0_i32_0 = arith.constant 0 : i32
    %c0_i32_1 = arith.constant 0 : i32
    return %c0_i32, %c0_i32_0 : i32, i32
  }
  func.func @transform_5(%arg0: i32, %arg1: i32) -> (i32, i32, i32) {
    %c0_i32 = arith.constant 0 : i32
    %c0_i32_0 = arith.constant 0 : i32
    return %arg0, %c0_i32, %arg1 : i32, i32, i32
  }
}

module attributes {stable_mosaic.version = 11 : i64} {
  func.func @_lateral_upadd_kernel(%arg0: i32, %arg1: i32, %arg2: memref<1x8x256xf32, #tpu.memory_space<vmem>>, %arg3: memref<16x8xbf16, #tpu.memory_space<vmem>>, %arg4: memref<16x1xf32, #tpu.memory_space<vmem>>, %arg5: memref<1x16x64xf32, #tpu.memory_space<vmem>>, %arg6: memref<64x256xf32, #tpu.memory_space<vmem>>, %arg7: memref<1x16x256xf32, #tpu.memory_space<vmem>>) attributes {dimension_semantics = [#tpu.dimension_semantics<parallel>, #tpu.dimension_semantics<parallel>], iteration_bounds = array<i64: 2, 1>, scalar_prefetch = 0 : i64, scratch_operands = 0 : i64, tpu.core_type = #tpu.core_type<tc>, window_params = [{transform_indices = @transform_0, window_bounds = array<i64: 1, 8, 256>}, {pipeline_mode = #tpu.pipeline_mode<synchronous>, transform_indices = @transform_1, window_bounds = array<i64: 16, 8>}, {pipeline_mode = #tpu.pipeline_mode<synchronous>, transform_indices = @transform_2, window_bounds = array<i64: 16, 1>}, {transform_indices = @transform_3, window_bounds = array<i64: 1, 16, 64>}, {pipeline_mode = #tpu.pipeline_mode<synchronous>, transform_indices = @transform_4, window_bounds = array<i64: 64, 256>}, {transform_indices = @transform_5, window_bounds = array<i64: 1, 16, 256>}]} {
    %c0 = arith.constant 0 : index
    %c0_0 = arith.constant 0 : index
    %c0_1 = arith.constant 0 : index
    %0 = vector.load %arg2[%c0, %c0_0, %c0_1] : memref<1x8x256xf32, #tpu.memory_space<vmem>>, vector<1x8x256xf32>
    %1 = vector.shape_cast %0 : vector<1x8x256xf32> to vector<8x256xf32>
    %2 = arith.truncf %1 : vector<8x256xf32> to vector<8x256xbf16>
    %c0_2 = arith.constant 0 : index
    %c0_3 = arith.constant 0 : index
    %3 = vector.load %arg3[%c0_2, %c0_3] : memref<16x8xbf16, #tpu.memory_space<vmem>>, vector<16x8xbf16>
    %cst = arith.constant dense<0.000000e+00> : vector<16x256xf32>
    %4 = tpu.matmul %3, %2, %cst {dimension_numbers = #tpu.dot_dimension_numbers<[1], [0], [0], [1], [0, 0, 1, 1], [], []>} : vector<16x8xbf16>, vector<8x256xbf16>, vector<16x256xf32> -> vector<16x256xf32>
    %c0_4 = arith.constant 0 : index
    %c0_5 = arith.constant 0 : index
    %c0_6 = arith.constant 0 : index
    %5 = vector.load %arg5[%c0_4, %c0_5, %c0_6] : memref<1x16x64xf32, #tpu.memory_space<vmem>>, vector<1x16x64xf32>
    %6 = vector.shape_cast %5 : vector<1x16x64xf32> to vector<16x64xf32>
    %c0_7 = arith.constant 0 : index
    %c0_8 = arith.constant 0 : index
    %7 = vector.load %arg6[%c0_7, %c0_8] : memref<64x256xf32, #tpu.memory_space<vmem>>, vector<64x256xf32>
    %cst_9 = arith.constant dense<0.000000e+00> : vector<16x256xf32>
    %8 = tpu.matmul %6, %7, %cst_9 {dimension_numbers = #tpu.dot_dimension_numbers<[1], [0], [0], [1], [0, 0, 1, 1], [], []>} : vector<16x64xf32>, vector<64x256xf32>, vector<16x256xf32> -> vector<16x256xf32>
    %c0_10 = arith.constant 0 : index
    %c0_11 = arith.constant 0 : index
    %9 = vector.load %arg4[%c0_10, %c0_11] : memref<16x1xf32, #tpu.memory_space<vmem>>, vector<16x1xf32>
    %10 = vector.broadcast %9 : vector<16x1xf32> to vector<16x256xf32>
    %11 = arith.addf %4, %10 : vector<16x256xf32>
    %12 = arith.addf %11, %8 : vector<16x256xf32>
    %c0_12 = arith.constant 0 : index
    %c0_13 = arith.constant 0 : index
    %c0_14 = arith.constant 0 : index
    %13 = vector.load %arg7[%c0_12, %c0_13, %c0_14] : memref<1x16x256xf32, #tpu.memory_space<vmem>>, vector<1x16x256xf32>
    %14 = vector.shape_cast %13 : vector<1x16x256xf32> to vector<16x256xf32>
    %15 = vector.shape_cast %12 : vector<16x256xf32> to vector<1x16x256xf32>
    tpu.vector_store %arg7[%c0_12, %c0_13, %c0_14], %15 {strides = array<i32>} : memref<1x16x256xf32, #tpu.memory_space<vmem>>, vector<1x16x256xf32>,
    return
  }
  func.func @transform_0(%arg0: i32, %arg1: i32) -> (i32, i32, i32) {
    %c0_i32 = arith.constant 0 : i32
    %c0_i32_0 = arith.constant 0 : i32
    return %arg0, %c0_i32, %arg1 : i32, i32, i32
  }
  func.func @transform_1(%arg0: i32, %arg1: i32) -> (i32, i32) {
    %c0_i32 = arith.constant 0 : i32
    %c0_i32_0 = arith.constant 0 : i32
    %c0_i32_1 = arith.constant 0 : i32
    return %c0_i32, %c0_i32_0 : i32, i32
  }
  func.func @transform_2(%arg0: i32, %arg1: i32) -> (i32, i32) {
    %c0_i32 = arith.constant 0 : i32
    %c0_i32_0 = arith.constant 0 : i32
    %c0_i32_1 = arith.constant 0 : i32
    return %c0_i32, %c0_i32_0 : i32, i32
  }
  func.func @transform_3(%arg0: i32, %arg1: i32) -> (i32, i32, i32) {
    %c0_i32 = arith.constant 0 : i32
    %c0_i32_0 = arith.constant 0 : i32
    return %arg0, %c0_i32, %arg1 : i32, i32, i32
  }
  func.func @transform_4(%arg0: i32, %arg1: i32) -> (i32, i32) {
    %c0_i32 = arith.constant 0 : i32
    %c0_i32_0 = arith.constant 0 : i32
    %c0_i32_1 = arith.constant 0 : i32
    return %c0_i32, %c0_i32_0 : i32, i32
  }
  func.func @transform_5(%arg0: i32, %arg1: i32) -> (i32, i32, i32) {
    %c0_i32 = arith.constant 0 : i32
    %c0_i32_0 = arith.constant 0 : i32
    return %arg0, %c0_i32, %arg1 : i32, i32, i32
  }
}

module attributes {stable_mosaic.version = 11 : i64} {
  func.func @_smooth_kernel(%arg0: i32, %arg1: memref<1x16x64xf32, #tpu.memory_space<vmem>>, %arg2: memref<9x16x16xf32, #tpu.memory_space<vmem>>, %arg3: memref<16x1xf32, #tpu.memory_space<vmem>>, %arg4: memref<1x16x64xf32, #tpu.memory_space<vmem>>) attributes {dimension_semantics = [#tpu.dimension_semantics<parallel>], iteration_bounds = array<i64: 2>, scalar_prefetch = 0 : i64, scratch_operands = 0 : i64, tpu.core_type = #tpu.core_type<tc>, window_params = [{transform_indices = @transform_0, window_bounds = array<i64: 1, 16, 64>}, {pipeline_mode = #tpu.pipeline_mode<synchronous>, transform_indices = @transform_1, window_bounds = array<i64: 9, 16, 16>}, {pipeline_mode = #tpu.pipeline_mode<synchronous>, transform_indices = @transform_2, window_bounds = array<i64: 16, 1>}, {transform_indices = @transform_3, window_bounds = array<i64: 1, 16, 64>}]} {
    %c0 = arith.constant 0 : index
    %c0_0 = arith.constant 0 : index
    %c0_1 = arith.constant 0 : index
    %0 = vector.load %arg1[%c0, %c0_0, %c0_1] : memref<1x16x64xf32, #tpu.memory_space<vmem>>, vector<1x16x64xf32>
    %1 = vector.shape_cast %0 : vector<1x16x64xf32> to vector<16x64xf32>
    %2 = tpu.iota {dimensions = array<i32: 1>} : vector<1x64xi32>
    %c8_i32 = arith.constant 8 : i32
    %c0_i32 = arith.constant 0 : i32
    %3 = arith.cmpi eq, %c8_i32, %c0_i32 : i32
    %c1_i32 = arith.constant 1 : i32
    %4 = arith.select %3, %c1_i32, %c8_i32 : i32
    %5 = vector.broadcast %4 : i32 to vector<1x64xi32>
    %6 = arith.remsi %2, %5 : vector<1x64xi32>
    %c0_i32_2 = arith.constant 0 : i32
    %7 = vector.broadcast %c0_i32_2 : i32 to vector<1x64xi32>
    %8 = arith.cmpi ne, %6, %7 : vector<1x64xi32>
    %c0_i32_3 = arith.constant 0 : i32
    %9 = vector.broadcast %c0_i32_3 : i32 to vector<1x64xi32>
    %10 = arith.cmpi slt, %6, %9 : vector<1x64xi32>
    %c0_i32_4 = arith.constant 0 : i32
    %11 = arith.cmpi slt, %4, %c0_i32_4 : i32
    %12 = vector.broadcast %11 : i1 to vector<1x64xi1>
    %13 = vector.broadcast %12 : vector<1x64xi1> to vector<1x64xi1>
    %14 = arith.xori %10, %13 : vector<1x64xi1>
    %15 = arith.andi %14, %8 : vector<1x64xi1>
    %16 = vector.broadcast %4 : i32 to vector<1x64xi32>
    %17 = arith.addi %6, %16 : vector<1x64xi32>
    %18 = arith.select %15, %17, %6 : vector<1x64xi1>, vector<1x64xi32>
    %cst = arith.constant 0.000000e+00 : f32
    %19 = vector.broadcast %cst : f32 to vector<16x64xf32>
    %c9_i32 = arith.constant 9 : i32
    %20 = tpu.dynamic_rotate %1 by %c9_i32 dim 1 : vector<16x64xf32>, i32 -> vector<16x64xf32>
    %c1_i32_5 = arith.constant 1 : i32
    %21 = vector.broadcast %c1_i32_5 : i32 to vector<1x64xi32>
    %22 = arith.cmpi sge, %18, %21 : vector<1x64xi32>
    %c8_i32_6 = arith.constant 8 : i32
    %23 = vector.broadcast %c8_i32_6 : i32 to vector<1x64xi32>
    %24 = arith.cmpi sge, %2, %23 : vector<1x64xi32>
    %25 = arith.andi %22, %24 : vector<1x64xi1>
    %cst_7 = arith.constant 0.000000e+00 : f32
    %26 = vector.shape_cast %25 : vector<1x64xi1> to vector<1x64xi1>
    %27 = vector.broadcast %26 : vector<1x64xi1> to vector<16x64xi1>
    %28 = vector.broadcast %cst_7 : f32 to vector<16x64xf32>
    %29 = arith.select %27, %20, %28 : vector<16x64xi1>, vector<16x64xf32>
    %c0_8 = arith.constant 0 : index
    %c0_9 = arith.constant 0 : index
    %c0_10 = arith.constant 0 : index
    %30 = vector.load %arg2[%c0_8, %c0_9, %c0_10] : memref<9x16x16xf32, #tpu.memory_space<vmem>>, vector<1x16x16xf32>
    %31 = vector.shape_cast %30 : vector<1x16x16xf32> to vector<16x16xf32>
    %cst_11 = arith.constant dense<0.000000e+00> : vector<16x64xf32>
    %32 = tpu.matmul %31, %29, %cst_11 {dimension_numbers = #tpu.dot_dimension_numbers<[1], [0], [0], [1], [0, 0, 1, 1], [], []>} : vector<16x16xf32>, vector<16x64xf32>, vector<16x64xf32> -> vector<16x64xf32>
    %33 = arith.addf %19, %32 : vector<16x64xf32>
    %c8_i32_12 = arith.constant 8 : i32
    %34 = tpu.dynamic_rotate %1 by %c8_i32_12 dim 1 : vector<16x64xf32>, i32 -> vector<16x64xf32>
    %c8_i32_13 = arith.constant 8 : i32
    %35 = vector.broadcast %c8_i32_13 : i32 to vector<1x64xi32>
    %36 = arith.cmpi sge, %2, %35 : vector<1x64xi32>
    %cst_14 = arith.constant 0.000000e+00 : f32
    %37 = vector.shape_cast %36 : vector<1x64xi1> to vector<1x64xi1>
    %38 = vector.broadcast %37 : vector<1x64xi1> to vector<16x64xi1>
    %39 = vector.broadcast %cst_14 : f32 to vector<16x64xf32>
    %40 = arith.select %38, %34, %39 : vector<16x64xi1>, vector<16x64xf32>
    %c1 = arith.constant 1 : index
    %c0_15 = arith.constant 0 : index
    %c0_16 = arith.constant 0 : index
    %41 = vector.load %arg2[%c1, %c0_15, %c0_16] : memref<9x16x16xf32, #tpu.memory_space<vmem>>, vector<1x16x16xf32>
    %42 = vector.shape_cast %41 : vector<1x16x16xf32> to vector<16x16xf32>
    %cst_17 = arith.constant dense<0.000000e+00> : vector<16x64xf32>
    %43 = tpu.matmul %42, %40, %cst_17 {dimension_numbers = #tpu.dot_dimension_numbers<[1], [0], [0], [1], [0, 0, 1, 1], [], []>} : vector<16x16xf32>, vector<16x64xf32>, vector<16x64xf32> -> vector<16x64xf32>
    %44 = arith.addf %33, %43 : vector<16x64xf32>
    %c7_i32 = arith.constant 7 : i32
    %45 = tpu.dynamic_rotate %1 by %c7_i32 dim 1 : vector<16x64xf32>, i32 -> vector<16x64xf32>
    %c7_i32_18 = arith.constant 7 : i32
    %46 = vector.broadcast %c7_i32_18 : i32 to vector<1x64xi32>
    %47 = arith.cmpi slt, %18, %46 : vector<1x64xi32>
    %c8_i32_19 = arith.constant 8 : i32
    %48 = vector.broadcast %c8_i32_19 : i32 to vector<1x64xi32>
    %49 = arith.cmpi sge, %2, %48 : vector<1x64xi32>
    %50 = arith.andi %47, %49 : vector<1x64xi1>
    %cst_20 = arith.constant 0.000000e+00 : f32
    %51 = vector.shape_cast %50 : vector<1x64xi1> to vector<1x64xi1>
    %52 = vector.broadcast %51 : vector<1x64xi1> to vector<16x64xi1>
    %53 = vector.broadcast %cst_20 : f32 to vector<16x64xf32>
    %54 = arith.select %52, %45, %53 : vector<16x64xi1>, vector<16x64xf32>
    %c2 = arith.constant 2 : index
    %c0_21 = arith.constant 0 : index
    %c0_22 = arith.constant 0 : index
    %55 = vector.load %arg2[%c2, %c0_21, %c0_22] : memref<9x16x16xf32, #tpu.memory_space<vmem>>, vector<1x16x16xf32>
    %56 = vector.shape_cast %55 : vector<1x16x16xf32> to vector<16x16xf32>
    %cst_23 = arith.constant dense<0.000000e+00> : vector<16x64xf32>
    %57 = tpu.matmul %56, %54, %cst_23 {dimension_numbers = #tpu.dot_dimension_numbers<[1], [0], [0], [1], [0, 0, 1, 1], [], []>} : vector<16x16xf32>, vector<16x64xf32>, vector<16x64xf32> -> vector<16x64xf32>
    %58 = arith.addf %44, %57 : vector<16x64xf32>
    %c1_i32_24 = arith.constant 1 : i32
    %59 = tpu.dynamic_rotate %1 by %c1_i32_24 dim 1 : vector<16x64xf32>, i32 -> vector<16x64xf32>
    %c1_i32_25 = arith.constant 1 : i32
    %60 = vector.broadcast %c1_i32_25 : i32 to vector<1x64xi32>
    %61 = arith.cmpi sge, %18, %60 : vector<1x64xi32>
    %cst_26 = arith.constant 0.000000e+00 : f32
    %62 = vector.shape_cast %61 : vector<1x64xi1> to vector<1x64xi1>
    %63 = vector.broadcast %62 : vector<1x64xi1> to vector<16x64xi1>
    %64 = vector.broadcast %cst_26 : f32 to vector<16x64xf32>
    %65 = arith.select %63, %59, %64 : vector<16x64xi1>, vector<16x64xf32>
    %c3 = arith.constant 3 : index
    %c0_27 = arith.constant 0 : index
    %c0_28 = arith.constant 0 : index
    %66 = vector.load %arg2[%c3, %c0_27, %c0_28] : memref<9x16x16xf32, #tpu.memory_space<vmem>>, vector<1x16x16xf32>
    %67 = vector.shape_cast %66 : vector<1x16x16xf32> to vector<16x16xf32>
    %cst_29 = arith.constant dense<0.000000e+00> : vector<16x64xf32>
    %68 = tpu.matmul %67, %65, %cst_29 {dimension_numbers = #tpu.dot_dimension_numbers<[1], [0], [0], [1], [0, 0, 1, 1], [], []>} : vector<16x16xf32>, vector<16x64xf32>, vector<16x64xf32> -> vector<16x64xf32>
    %69 = arith.addf %58, %68 : vector<16x64xf32>
    %c4 = arith.constant 4 : index
    %c0_30 = arith.constant 0 : index
    %c0_31 = arith.constant 0 : index
    %70 = vector.load %arg2[%c4, %c0_30, %c0_31] : memref<9x16x16xf32, #tpu.memory_space<vmem>>, vector<1x16x16xf32>
    %71 = vector.shape_cast %70 : vector<1x16x16xf32> to vector<16x16xf32>
    %cst_32 = arith.constant dense<0.000000e+00> : vector<16x64xf32>
    %72 = tpu.matmul %71, %1, %cst_32 {dimension_numbers = #tpu.dot_dimension_numbers<[1], [0], [0], [1], [0, 0, 1, 1], [], []>} : vector<16x16xf32>, vector<16x64xf32>, vector<16x64xf32> -> vector<16x64xf32>
    %73 = arith.addf %69, %72 : vector<16x64xf32>
    %c63_i32 = arith.constant 63 : i32
    %74 = tpu.dynamic_rotate %1 by %c63_i32 dim 1 : vector<16x64xf32>, i32 -> vector<16x64xf32>
    %c7_i32_33 = arith.constant 7 : i32
    %75 = vector.broadcast %c7_i32_33 : i32 to vector<1x64xi32>
    %76 = arith.cmpi slt, %18, %75 : vector<1x64xi32>
    %cst_34 = arith.constant 0.000000e+00 : f32
    %77 = vector.shape_cast %76 : vector<1x64xi1> to vector<1x64xi1>
    %78 = vector.broadcast %77 : vector<1x64xi1> to vector<16x64xi1>
    %79 = vector.broadcast %cst_34 : f32 to vector<16x64xf32>
    %80 = arith.select %78, %74, %79 : vector<16x64xi1>, vector<16x64xf32>
    %c5 = arith.constant 5 : index
    %c0_35 = arith.constant 0 : index
    %c0_36 = arith.constant 0 : index
    %81 = vector.load %arg2[%c5, %c0_35, %c0_36] : memref<9x16x16xf32, #tpu.memory_space<vmem>>, vector<1x16x16xf32>
    %82 = vector.shape_cast %81 : vector<1x16x16xf32> to vector<16x16xf32>
    %cst_37 = arith.constant dense<0.000000e+00> : vector<16x64xf32>
    %83 = tpu.matmul %82, %80, %cst_37 {dimension_numbers = #tpu.dot_dimension_numbers<[1], [0], [0], [1], [0, 0, 1, 1], [], []>} : vector<16x16xf32>, vector<16x64xf32>, vector<16x64xf32> -> vector<16x64xf32>
    %84 = arith.addf %73, %83 : vector<16x64xf32>
    %c57_i32 = arith.constant 57 : i32
    %85 = tpu.dynamic_rotate %1 by %c57_i32 dim 1 : vector<16x64xf32>, i32 -> vector<16x64xf32>
    %c1_i32_38 = arith.constant 1 : i32
    %86 = vector.broadcast %c1_i32_38 : i32 to vector<1x64xi32>
    %87 = arith.cmpi sge, %18, %86 : vector<1x64xi32>
    %c56_i32 = arith.constant 56 : i32
    %88 = vector.broadcast %c56_i32 : i32 to vector<1x64xi32>
    %89 = arith.cmpi slt, %2, %88 : vector<1x64xi32>
    %90 = arith.andi %87, %89 : vector<1x64xi1>
    %cst_39 = arith.constant 0.000000e+00 : f32
    %91 = vector.shape_cast %90 : vector<1x64xi1> to vector<1x64xi1>
    %92 = vector.broadcast %91 : vector<1x64xi1> to vector<16x64xi1>
    %93 = vector.broadcast %cst_39 : f32 to vector<16x64xf32>
    %94 = arith.select %92, %85, %93 : vector<16x64xi1>, vector<16x64xf32>
    %c6 = arith.constant 6 : index
    %c0_40 = arith.constant 0 : index
    %c0_41 = arith.constant 0 : index
    %95 = vector.load %arg2[%c6, %c0_40, %c0_41] : memref<9x16x16xf32, #tpu.memory_space<vmem>>, vector<1x16x16xf32>
    %96 = vector.shape_cast %95 : vector<1x16x16xf32> to vector<16x16xf32>
    %cst_42 = arith.constant dense<0.000000e+00> : vector<16x64xf32>
    %97 = tpu.matmul %96, %94, %cst_42 {dimension_numbers = #tpu.dot_dimension_numbers<[1], [0], [0], [1], [0, 0, 1, 1], [], []>} : vector<16x16xf32>, vector<16x64xf32>, vector<16x64xf32> -> vector<16x64xf32>
    %98 = arith.addf %84, %97 : vector<16x64xf32>
    %c56_i32_43 = arith.constant 56 : i32
    %99 = tpu.dynamic_rotate %1 by %c56_i32_43 dim 1 : vector<16x64xf32>, i32 -> vector<16x64xf32>
    %c56_i32_44 = arith.constant 56 : i32
    %100 = vector.broadcast %c56_i32_44 : i32 to vector<1x64xi32>
    %101 = arith.cmpi slt, %2, %100 : vector<1x64xi32>
    %cst_45 = arith.constant 0.000000e+00 : f32
    %102 = vector.shape_cast %101 : vector<1x64xi1> to vector<1x64xi1>
    %103 = vector.broadcast %102 : vector<1x64xi1> to vector<16x64xi1>
    %104 = vector.broadcast %cst_45 : f32 to vector<16x64xf32>
    %105 = arith.select %103, %99, %104 : vector<16x64xi1>, vector<16x64xf32>
    %c7 = arith.constant 7 : index
    %c0_46 = arith.constant 0 : index
    %c0_47 = arith.constant 0 : index
    %106 = vector.load %arg2[%c7, %c0_46, %c0_47] : memref<9x16x16xf32, #tpu.memory_space<vmem>>, vector<1x16x16xf32>
    %107 = vector.shape_cast %106 : vector<1x16x16xf32> to vector<16x16xf32>
    %cst_48 = arith.constant dense<0.000000e+00> : vector<16x64xf32>
    %108 = tpu.matmul %107, %105, %cst_48 {dimension_numbers = #tpu.dot_dimension_numbers<[1], [0], [0], [1], [0, 0, 1, 1], [], []>} : vector<16x16xf32>, vector<16x64xf32>, vector<16x64xf32> -> vector<16x64xf32>
    %109 = arith.addf %98, %108 : vector<16x64xf32>
    %c55_i32 = arith.constant 55 : i32
    %110 = tpu.dynamic_rotate %1 by %c55_i32 dim 1 : vector<16x64xf32>, i32 -> vector<16x64xf32>
    %c7_i32_49 = arith.constant 7 : i32
    %111 = vector.broadcast %c7_i32_49 : i32 to vector<1x64xi32>
    %112 = arith.cmpi slt, %18, %111 : vector<1x64xi32>
    %c56_i32_50 = arith.constant 56 : i32
    %113 = vector.broadcast %c56_i32_50 : i32 to vector<1x64xi32>
    %114 = arith.cmpi slt, %2, %113 : vector<1x64xi32>
    %115 = arith.andi %112, %114 : vector<1x64xi1>
    %cst_51 = arith.constant 0.000000e+00 : f32
    %116 = vector.shape_cast %115 : vector<1x64xi1> to vector<1x64xi1>
    %117 = vector.broadcast %116 : vector<1x64xi1> to vector<16x64xi1>
    %118 = vector.broadcast %cst_51 : f32 to vector<16x64xf32>
    %119 = arith.select %117, %110, %118 : vector<16x64xi1>, vector<16x64xf32>
    %c8 = arith.constant 8 : index
    %c0_52 = arith.constant 0 : index
    %c0_53 = arith.constant 0 : index
    %120 = vector.load %arg2[%c8, %c0_52, %c0_53] : memref<9x16x16xf32, #tpu.memory_space<vmem>>, vector<1x16x16xf32>
    %121 = vector.shape_cast %120 : vector<1x16x16xf32> to vector<16x16xf32>
    %cst_54 = arith.constant dense<0.000000e+00> : vector<16x64xf32>
    %122 = tpu.matmul %121, %119, %cst_54 {dimension_numbers = #tpu.dot_dimension_numbers<[1], [0], [0], [1], [0, 0, 1, 1], [], []>} : vector<16x16xf32>, vector<16x64xf32>, vector<16x64xf32> -> vector<16x64xf32>
    %123 = arith.addf %109, %122 : vector<16x64xf32>
    %c0_55 = arith.constant 0 : index
    %c0_56 = arith.constant 0 : index
    %124 = vector.load %arg3[%c0_55, %c0_56] : memref<16x1xf32, #tpu.memory_space<vmem>>, vector<16x1xf32>
    %125 = vector.broadcast %124 : vector<16x1xf32> to vector<16x64xf32>
    %126 = arith.addf %123, %125 : vector<16x64xf32>
    %c0_57 = arith.constant 0 : index
    %c0_58 = arith.constant 0 : index
    %c0_59 = arith.constant 0 : index
    %127 = vector.load %arg4[%c0_57, %c0_58, %c0_59] : memref<1x16x64xf32, #tpu.memory_space<vmem>>, vector<1x16x64xf32>
    %128 = vector.shape_cast %127 : vector<1x16x64xf32> to vector<16x64xf32>
    %129 = vector.shape_cast %126 : vector<16x64xf32> to vector<1x16x64xf32>
    tpu.vector_store %arg4[%c0_57, %c0_58, %c0_59], %129 {strides = array<i32>} : memref<1x16x64xf32, #tpu.memory_space<vmem>>, vector<1x16x64xf32>,
    return
  }
  func.func @transform_0(%arg0: i32) -> (i32, i32, i32) {
    %c0_i32 = arith.constant 0 : i32
    %c0_i32_0 = arith.constant 0 : i32
    %c0_i32_1 = arith.constant 0 : i32
    return %arg0, %c0_i32, %c0_i32_0 : i32, i32, i32
  }
  func.func @transform_1(%arg0: i32) -> (i32, i32, i32) {
    %c0_i32 = arith.constant 0 : i32
    %c0_i32_0 = arith.constant 0 : i32
    %c0_i32_1 = arith.constant 0 : i32
    %c0_i32_2 = arith.constant 0 : i32
    return %c0_i32, %c0_i32_0, %c0_i32_1 : i32, i32, i32
  }
  func.func @transform_2(%arg0: i32) -> (i32, i32) {
    %c0_i32 = arith.constant 0 : i32
    %c0_i32_0 = arith.constant 0 : i32
    %c0_i32_1 = arith.constant 0 : i32
    return %c0_i32, %c0_i32_0 : i32, i32
  }
  func.func @transform_3(%arg0: i32) -> (i32, i32, i32) {
    %c0_i32 = arith.constant 0 : i32
    %c0_i32_0 = arith.constant 0 : i32
    %c0_i32_1 = arith.constant 0 : i32
    return %arg0, %c0_i32, %c0_i32_0 : i32, i32, i32
  }
}

module attributes {stable_mosaic.version = 11 : i64} {
  func.func @_smooth_kernel(%arg0: i32, %arg1: memref<1x16x256xf32, #tpu.memory_space<vmem>>, %arg2: memref<9x16x16xf32, #tpu.memory_space<vmem>>, %arg3: memref<16x1xf32, #tpu.memory_space<vmem>>, %arg4: memref<1x16x256xf32, #tpu.memory_space<vmem>>) attributes {dimension_semantics = [#tpu.dimension_semantics<parallel>], iteration_bounds = array<i64: 2>, scalar_prefetch = 0 : i64, scratch_operands = 0 : i64, tpu.core_type = #tpu.core_type<tc>, window_params = [{transform_indices = @transform_0, window_bounds = array<i64: 1, 16, 256>}, {pipeline_mode = #tpu.pipeline_mode<synchronous>, transform_indices = @transform_1, window_bounds = array<i64: 9, 16, 16>}, {pipeline_mode = #tpu.pipeline_mode<synchronous>, transform_indices = @transform_2, window_bounds = array<i64: 16, 1>}, {transform_indices = @transform_3, window_bounds = array<i64: 1, 16, 256>}]} {
    %c0 = arith.constant 0 : index
    %c0_0 = arith.constant 0 : index
    %c0_1 = arith.constant 0 : index
    %0 = vector.load %arg1[%c0, %c0_0, %c0_1] : memref<1x16x256xf32, #tpu.memory_space<vmem>>, vector<1x16x256xf32>
    %1 = vector.shape_cast %0 : vector<1x16x256xf32> to vector<16x256xf32>
    %2 = tpu.iota {dimensions = array<i32: 1>} : vector<1x256xi32>
    %c16_i32 = arith.constant 16 : i32
    %c0_i32 = arith.constant 0 : i32
    %3 = arith.cmpi eq, %c16_i32, %c0_i32 : i32
    %c1_i32 = arith.constant 1 : i32
    %4 = arith.select %3, %c1_i32, %c16_i32 : i32
    %5 = vector.broadcast %4 : i32 to vector<1x256xi32>
    %6 = arith.remsi %2, %5 : vector<1x256xi32>
    %c0_i32_2 = arith.constant 0 : i32
    %7 = vector.broadcast %c0_i32_2 : i32 to vector<1x256xi32>
    %8 = arith.cmpi ne, %6, %7 : vector<1x256xi32>
    %c0_i32_3 = arith.constant 0 : i32
    %9 = vector.broadcast %c0_i32_3 : i32 to vector<1x256xi32>
    %10 = arith.cmpi slt, %6, %9 : vector<1x256xi32>
    %c0_i32_4 = arith.constant 0 : i32
    %11 = arith.cmpi slt, %4, %c0_i32_4 : i32
    %12 = vector.broadcast %11 : i1 to vector<1x256xi1>
    %13 = vector.broadcast %12 : vector<1x256xi1> to vector<1x256xi1>
    %14 = arith.xori %10, %13 : vector<1x256xi1>
    %15 = arith.andi %14, %8 : vector<1x256xi1>
    %16 = vector.broadcast %4 : i32 to vector<1x256xi32>
    %17 = arith.addi %6, %16 : vector<1x256xi32>
    %18 = arith.select %15, %17, %6 : vector<1x256xi1>, vector<1x256xi32>
    %cst = arith.constant 0.000000e+00 : f32
    %19 = vector.broadcast %cst : f32 to vector<16x256xf32>
    %c17_i32 = arith.constant 17 : i32
    %20 = tpu.dynamic_rotate %1 by %c17_i32 dim 1 : vector<16x256xf32>, i32 -> vector<16x256xf32>
    %c1_i32_5 = arith.constant 1 : i32
    %21 = vector.broadcast %c1_i32_5 : i32 to vector<1x256xi32>
    %22 = arith.cmpi sge, %18, %21 : vector<1x256xi32>
    %c16_i32_6 = arith.constant 16 : i32
    %23 = vector.broadcast %c16_i32_6 : i32 to vector<1x256xi32>
    %24 = arith.cmpi sge, %2, %23 : vector<1x256xi32>
    %25 = arith.andi %22, %24 : vector<1x256xi1>
    %cst_7 = arith.constant 0.000000e+00 : f32
    %26 = vector.shape_cast %25 : vector<1x256xi1> to vector<1x256xi1>
    %27 = vector.broadcast %26 : vector<1x256xi1> to vector<16x256xi1>
    %28 = vector.broadcast %cst_7 : f32 to vector<16x256xf32>
    %29 = arith.select %27, %20, %28 : vector<16x256xi1>, vector<16x256xf32>
    %c0_8 = arith.constant 0 : index
    %c0_9 = arith.constant 0 : index
    %c0_10 = arith.constant 0 : index
    %30 = vector.load %arg2[%c0_8, %c0_9, %c0_10] : memref<9x16x16xf32, #tpu.memory_space<vmem>>, vector<1x16x16xf32>
    %31 = vector.shape_cast %30 : vector<1x16x16xf32> to vector<16x16xf32>
    %cst_11 = arith.constant dense<0.000000e+00> : vector<16x256xf32>
    %32 = tpu.matmul %31, %29, %cst_11 {dimension_numbers = #tpu.dot_dimension_numbers<[1], [0], [0], [1], [0, 0, 1, 1], [], []>} : vector<16x16xf32>, vector<16x256xf32>, vector<16x256xf32> -> vector<16x256xf32>
    %33 = arith.addf %19, %32 : vector<16x256xf32>
    %c16_i32_12 = arith.constant 16 : i32
    %34 = tpu.dynamic_rotate %1 by %c16_i32_12 dim 1 : vector<16x256xf32>, i32 -> vector<16x256xf32>
    %c16_i32_13 = arith.constant 16 : i32
    %35 = vector.broadcast %c16_i32_13 : i32 to vector<1x256xi32>
    %36 = arith.cmpi sge, %2, %35 : vector<1x256xi32>
    %cst_14 = arith.constant 0.000000e+00 : f32
    %37 = vector.shape_cast %36 : vector<1x256xi1> to vector<1x256xi1>
    %38 = vector.broadcast %37 : vector<1x256xi1> to vector<16x256xi1>
    %39 = vector.broadcast %cst_14 : f32 to vector<16x256xf32>
    %40 = arith.select %38, %34, %39 : vector<16x256xi1>, vector<16x256xf32>
    %c1 = arith.constant 1 : index
    %c0_15 = arith.constant 0 : index
    %c0_16 = arith.constant 0 : index
    %41 = vector.load %arg2[%c1, %c0_15, %c0_16] : memref<9x16x16xf32, #tpu.memory_space<vmem>>, vector<1x16x16xf32>
    %42 = vector.shape_cast %41 : vector<1x16x16xf32> to vector<16x16xf32>
    %cst_17 = arith.constant dense<0.000000e+00> : vector<16x256xf32>
    %43 = tpu.matmul %42, %40, %cst_17 {dimension_numbers = #tpu.dot_dimension_numbers<[1], [0], [0], [1], [0, 0, 1, 1], [], []>} : vector<16x16xf32>, vector<16x256xf32>, vector<16x256xf32> -> vector<16x256xf32>
    %44 = arith.addf %33, %43 : vector<16x256xf32>
    %c15_i32 = arith.constant 15 : i32
    %45 = tpu.dynamic_rotate %1 by %c15_i32 dim 1 : vector<16x256xf32>, i32 -> vector<16x256xf32>
    %c15_i32_18 = arith.constant 15 : i32
    %46 = vector.broadcast %c15_i32_18 : i32 to vector<1x256xi32>
    %47 = arith.cmpi slt, %18, %46 : vector<1x256xi32>
    %c16_i32_19 = arith.constant 16 : i32
    %48 = vector.broadcast %c16_i32_19 : i32 to vector<1x256xi32>
    %49 = arith.cmpi sge, %2, %48 : vector<1x256xi32>
    %50 = arith.andi %47, %49 : vector<1x256xi1>
    %cst_20 = arith.constant 0.000000e+00 : f32
    %51 = vector.shape_cast %50 : vector<1x256xi1> to vector<1x256xi1>
    %52 = vector.broadcast %51 : vector<1x256xi1> to vector<16x256xi1>
    %53 = vector.broadcast %cst_20 : f32 to vector<16x256xf32>
    %54 = arith.select %52, %45, %53 : vector<16x256xi1>, vector<16x256xf32>
    %c2 = arith.constant 2 : index
    %c0_21 = arith.constant 0 : index
    %c0_22 = arith.constant 0 : index
    %55 = vector.load %arg2[%c2, %c0_21, %c0_22] : memref<9x16x16xf32, #tpu.memory_space<vmem>>, vector<1x16x16xf32>
    %56 = vector.shape_cast %55 : vector<1x16x16xf32> to vector<16x16xf32>
    %cst_23 = arith.constant dense<0.000000e+00> : vector<16x256xf32>
    %57 = tpu.matmul %56, %54, %cst_23 {dimension_numbers = #tpu.dot_dimension_numbers<[1], [0], [0], [1], [0, 0, 1, 1], [], []>} : vector<16x16xf32>, vector<16x256xf32>, vector<16x256xf32> -> vector<16x256xf32>
    %58 = arith.addf %44, %57 : vector<16x256xf32>
    %c1_i32_24 = arith.constant 1 : i32
    %59 = tpu.dynamic_rotate %1 by %c1_i32_24 dim 1 : vector<16x256xf32>, i32 -> vector<16x256xf32>
    %c1_i32_25 = arith.constant 1 : i32
    %60 = vector.broadcast %c1_i32_25 : i32 to vector<1x256xi32>
    %61 = arith.cmpi sge, %18, %60 : vector<1x256xi32>
    %cst_26 = arith.constant 0.000000e+00 : f32
    %62 = vector.shape_cast %61 : vector<1x256xi1> to vector<1x256xi1>
    %63 = vector.broadcast %62 : vector<1x256xi1> to vector<16x256xi1>
    %64 = vector.broadcast %cst_26 : f32 to vector<16x256xf32>
    %65 = arith.select %63, %59, %64 : vector<16x256xi1>, vector<16x256xf32>
    %c3 = arith.constant 3 : index
    %c0_27 = arith.constant 0 : index
    %c0_28 = arith.constant 0 : index
    %66 = vector.load %arg2[%c3, %c0_27, %c0_28] : memref<9x16x16xf32, #tpu.memory_space<vmem>>, vector<1x16x16xf32>
    %67 = vector.shape_cast %66 : vector<1x16x16xf32> to vector<16x16xf32>
    %cst_29 = arith.constant dense<0.000000e+00> : vector<16x256xf32>
    %68 = tpu.matmul %67, %65, %cst_29 {dimension_numbers = #tpu.dot_dimension_numbers<[1], [0], [0], [1], [0, 0, 1, 1], [], []>} : vector<16x16xf32>, vector<16x256xf32>, vector<16x256xf32> -> vector<16x256xf32>
    %69 = arith.addf %58, %68 : vector<16x256xf32>
    %c4 = arith.constant 4 : index
    %c0_30 = arith.constant 0 : index
    %c0_31 = arith.constant 0 : index
    %70 = vector.load %arg2[%c4, %c0_30, %c0_31] : memref<9x16x16xf32, #tpu.memory_space<vmem>>, vector<1x16x16xf32>
    %71 = vector.shape_cast %70 : vector<1x16x16xf32> to vector<16x16xf32>
    %cst_32 = arith.constant dense<0.000000e+00> : vector<16x256xf32>
    %72 = tpu.matmul %71, %1, %cst_32 {dimension_numbers = #tpu.dot_dimension_numbers<[1], [0], [0], [1], [0, 0, 1, 1], [], []>} : vector<16x16xf32>, vector<16x256xf32>, vector<16x256xf32> -> vector<16x256xf32>
    %73 = arith.addf %69, %72 : vector<16x256xf32>
    %c255_i32 = arith.constant 255 : i32
    %74 = tpu.dynamic_rotate %1 by %c255_i32 dim 1 : vector<16x256xf32>, i32 -> vector<16x256xf32>
    %c15_i32_33 = arith.constant 15 : i32
    %75 = vector.broadcast %c15_i32_33 : i32 to vector<1x256xi32>
    %76 = arith.cmpi slt, %18, %75 : vector<1x256xi32>
    %cst_34 = arith.constant 0.000000e+00 : f32
    %77 = vector.shape_cast %76 : vector<1x256xi1> to vector<1x256xi1>
    %78 = vector.broadcast %77 : vector<1x256xi1> to vector<16x256xi1>
    %79 = vector.broadcast %cst_34 : f32 to vector<16x256xf32>
    %80 = arith.select %78, %74, %79 : vector<16x256xi1>, vector<16x256xf32>
    %c5 = arith.constant 5 : index
    %c0_35 = arith.constant 0 : index
    %c0_36 = arith.constant 0 : index
    %81 = vector.load %arg2[%c5, %c0_35, %c0_36] : memref<9x16x16xf32, #tpu.memory_space<vmem>>, vector<1x16x16xf32>
    %82 = vector.shape_cast %81 : vector<1x16x16xf32> to vector<16x16xf32>
    %cst_37 = arith.constant dense<0.000000e+00> : vector<16x256xf32>
    %83 = tpu.matmul %82, %80, %cst_37 {dimension_numbers = #tpu.dot_dimension_numbers<[1], [0], [0], [1], [0, 0, 1, 1], [], []>} : vector<16x16xf32>, vector<16x256xf32>, vector<16x256xf32> -> vector<16x256xf32>
    %84 = arith.addf %73, %83 : vector<16x256xf32>
    %c241_i32 = arith.constant 241 : i32
    %85 = tpu.dynamic_rotate %1 by %c241_i32 dim 1 : vector<16x256xf32>, i32 -> vector<16x256xf32>
    %c1_i32_38 = arith.constant 1 : i32
    %86 = vector.broadcast %c1_i32_38 : i32 to vector<1x256xi32>
    %87 = arith.cmpi sge, %18, %86 : vector<1x256xi32>
    %c240_i32 = arith.constant 240 : i32
    %88 = vector.broadcast %c240_i32 : i32 to vector<1x256xi32>
    %89 = arith.cmpi slt, %2, %88 : vector<1x256xi32>
    %90 = arith.andi %87, %89 : vector<1x256xi1>
    %cst_39 = arith.constant 0.000000e+00 : f32
    %91 = vector.shape_cast %90 : vector<1x256xi1> to vector<1x256xi1>
    %92 = vector.broadcast %91 : vector<1x256xi1> to vector<16x256xi1>
    %93 = vector.broadcast %cst_39 : f32 to vector<16x256xf32>
    %94 = arith.select %92, %85, %93 : vector<16x256xi1>, vector<16x256xf32>
    %c6 = arith.constant 6 : index
    %c0_40 = arith.constant 0 : index
    %c0_41 = arith.constant 0 : index
    %95 = vector.load %arg2[%c6, %c0_40, %c0_41] : memref<9x16x16xf32, #tpu.memory_space<vmem>>, vector<1x16x16xf32>
    %96 = vector.shape_cast %95 : vector<1x16x16xf32> to vector<16x16xf32>
    %cst_42 = arith.constant dense<0.000000e+00> : vector<16x256xf32>
    %97 = tpu.matmul %96, %94, %cst_42 {dimension_numbers = #tpu.dot_dimension_numbers<[1], [0], [0], [1], [0, 0, 1, 1], [], []>} : vector<16x16xf32>, vector<16x256xf32>, vector<16x256xf32> -> vector<16x256xf32>
    %98 = arith.addf %84, %97 : vector<16x256xf32>
    %c240_i32_43 = arith.constant 240 : i32
    %99 = tpu.dynamic_rotate %1 by %c240_i32_43 dim 1 : vector<16x256xf32>, i32 -> vector<16x256xf32>
    %c240_i32_44 = arith.constant 240 : i32
    %100 = vector.broadcast %c240_i32_44 : i32 to vector<1x256xi32>
    %101 = arith.cmpi slt, %2, %100 : vector<1x256xi32>
    %cst_45 = arith.constant 0.000000e+00 : f32
    %102 = vector.shape_cast %101 : vector<1x256xi1> to vector<1x256xi1>
    %103 = vector.broadcast %102 : vector<1x256xi1> to vector<16x256xi1>
    %104 = vector.broadcast %cst_45 : f32 to vector<16x256xf32>
    %105 = arith.select %103, %99, %104 : vector<16x256xi1>, vector<16x256xf32>
    %c7 = arith.constant 7 : index
    %c0_46 = arith.constant 0 : index
    %c0_47 = arith.constant 0 : index
    %106 = vector.load %arg2[%c7, %c0_46, %c0_47] : memref<9x16x16xf32, #tpu.memory_space<vmem>>, vector<1x16x16xf32>
    %107 = vector.shape_cast %106 : vector<1x16x16xf32> to vector<16x16xf32>
    %cst_48 = arith.constant dense<0.000000e+00> : vector<16x256xf32>
    %108 = tpu.matmul %107, %105, %cst_48 {dimension_numbers = #tpu.dot_dimension_numbers<[1], [0], [0], [1], [0, 0, 1, 1], [], []>} : vector<16x16xf32>, vector<16x256xf32>, vector<16x256xf32> -> vector<16x256xf32>
    %109 = arith.addf %98, %108 : vector<16x256xf32>
    %c239_i32 = arith.constant 239 : i32
    %110 = tpu.dynamic_rotate %1 by %c239_i32 dim 1 : vector<16x256xf32>, i32 -> vector<16x256xf32>
    %c15_i32_49 = arith.constant 15 : i32
    %111 = vector.broadcast %c15_i32_49 : i32 to vector<1x256xi32>
    %112 = arith.cmpi slt, %18, %111 : vector<1x256xi32>
    %c240_i32_50 = arith.constant 240 : i32
    %113 = vector.broadcast %c240_i32_50 : i32 to vector<1x256xi32>
    %114 = arith.cmpi slt, %2, %113 : vector<1x256xi32>
    %115 = arith.andi %112, %114 : vector<1x256xi1>
    %cst_51 = arith.constant 0.000000e+00 : f32
    %116 = vector.shape_cast %115 : vector<1x256xi1> to vector<1x256xi1>
    %117 = vector.broadcast %116 : vector<1x256xi1> to vector<16x256xi1>
    %118 = vector.broadcast %cst_51 : f32 to vector<16x256xf32>
    %119 = arith.select %117, %110, %118 : vector<16x256xi1>, vector<16x256xf32>
    %c8 = arith.constant 8 : index
    %c0_52 = arith.constant 0 : index
    %c0_53 = arith.constant 0 : index
    %120 = vector.load %arg2[%c8, %c0_52, %c0_53] : memref<9x16x16xf32, #tpu.memory_space<vmem>>, vector<1x16x16xf32>
    %121 = vector.shape_cast %120 : vector<1x16x16xf32> to vector<16x16xf32>
    %cst_54 = arith.constant dense<0.000000e+00> : vector<16x256xf32>
    %122 = tpu.matmul %121, %119, %cst_54 {dimension_numbers = #tpu.dot_dimension_numbers<[1], [0], [0], [1], [0, 0, 1, 1], [], []>} : vector<16x16xf32>, vector<16x256xf32>, vector<16x256xf32> -> vector<16x256xf32>
    %123 = arith.addf %109, %122 : vector<16x256xf32>
    %c0_55 = arith.constant 0 : index
    %c0_56 = arith.constant 0 : index
    %124 = vector.load %arg3[%c0_55, %c0_56] : memref<16x1xf32, #tpu.memory_space<vmem>>, vector<16x1xf32>
    %125 = vector.broadcast %124 : vector<16x1xf32> to vector<16x256xf32>
    %126 = arith.addf %123, %125 : vector<16x256xf32>
    %c0_57 = arith.constant 0 : index
    %c0_58 = arith.constant 0 : index
    %c0_59 = arith.constant 0 : index
    %127 = vector.load %arg4[%c0_57, %c0_58, %c0_59] : memref<1x16x256xf32, #tpu.memory_space<vmem>>, vector<1x16x256xf32>
    %128 = vector.shape_cast %127 : vector<1x16x256xf32> to vector<16x256xf32>
    %129 = vector.shape_cast %126 : vector<16x256xf32> to vector<1x16x256xf32>
    tpu.vector_store %arg4[%c0_57, %c0_58, %c0_59], %129 {strides = array<i32>} : memref<1x16x256xf32, #tpu.memory_space<vmem>>, vector<1x16x256xf32>,
    return
  }
  func.func @transform_0(%arg0: i32) -> (i32, i32, i32) {
    %c0_i32 = arith.constant 0 : i32
    %c0_i32_0 = arith.constant 0 : i32
    %c0_i32_1 = arith.constant 0 : i32
    return %arg0, %c0_i32, %c0_i32_0 : i32, i32, i32
  }
  func.func @transform_1(%arg0: i32) -> (i32, i32, i32) {
    %c0_i32 = arith.constant 0 : i32
    %c0_i32_0 = arith.constant 0 : i32
    %c0_i32_1 = arith.constant 0 : i32
    %c0_i32_2 = arith.constant 0 : i32
    return %c0_i32, %c0_i32_0, %c0_i32_1 : i32, i32, i32
  }
  func.func @transform_2(%arg0: i32) -> (i32, i32) {
    %c0_i32 = arith.constant 0 : i32
    %c0_i32_0 = arith.constant 0 : i32
    %c0_i32_1 = arith.constant 0 : i32
    return %c0_i32, %c0_i32_0 : i32, i32
  }
  func.func @transform_3(%arg0: i32) -> (i32, i32, i32) {
    %c0_i32 = arith.constant 0 : i32
    %c0_i32_0 = arith.constant 0 : i32
    %c0_i32_1 = arith.constant 0 : i32
    return %arg0, %c0_i32, %c0_i32_0 : i32, i32, i32
  }
}

module attributes {stable_mosaic.version = 11 : i64} {
  func.func @_smooth_kernel(%arg0: i32, %arg1: memref<1x16x16xf32, #tpu.memory_space<vmem>>, %arg2: memref<9x16x16xf32, #tpu.memory_space<vmem>>, %arg3: memref<16x1xf32, #tpu.memory_space<vmem>>, %arg4: memref<1x16x16xf32, #tpu.memory_space<vmem>>) attributes {dimension_semantics = [#tpu.dimension_semantics<parallel>], iteration_bounds = array<i64: 2>, scalar_prefetch = 0 : i64, scratch_operands = 0 : i64, tpu.core_type = #tpu.core_type<tc>, window_params = [{transform_indices = @transform_0, window_bounds = array<i64: 1, 16, 16>}, {pipeline_mode = #tpu.pipeline_mode<synchronous>, transform_indices = @transform_1, window_bounds = array<i64: 9, 16, 16>}, {pipeline_mode = #tpu.pipeline_mode<synchronous>, transform_indices = @transform_2, window_bounds = array<i64: 16, 1>}, {transform_indices = @transform_3, window_bounds = array<i64: 1, 16, 16>}]} {
    %c0 = arith.constant 0 : index
    %c0_0 = arith.constant 0 : index
    %c0_1 = arith.constant 0 : index
    %0 = vector.load %arg1[%c0, %c0_0, %c0_1] : memref<1x16x16xf32, #tpu.memory_space<vmem>>, vector<1x16x16xf32>
    %1 = vector.shape_cast %0 : vector<1x16x16xf32> to vector<16x16xf32>
    %2 = tpu.iota {dimensions = array<i32: 1>} : vector<1x16xi32>
    %c4_i32 = arith.constant 4 : i32
    %c0_i32 = arith.constant 0 : i32
    %3 = arith.cmpi eq, %c4_i32, %c0_i32 : i32
    %c1_i32 = arith.constant 1 : i32
    %4 = arith.select %3, %c1_i32, %c4_i32 : i32
    %5 = vector.broadcast %4 : i32 to vector<1x16xi32>
    %6 = arith.remsi %2, %5 : vector<1x16xi32>
    %c0_i32_2 = arith.constant 0 : i32
    %7 = vector.broadcast %c0_i32_2 : i32 to vector<1x16xi32>
    %8 = arith.cmpi ne, %6, %7 : vector<1x16xi32>
    %c0_i32_3 = arith.constant 0 : i32
    %9 = vector.broadcast %c0_i32_3 : i32 to vector<1x16xi32>
    %10 = arith.cmpi slt, %6, %9 : vector<1x16xi32>
    %c0_i32_4 = arith.constant 0 : i32
    %11 = arith.cmpi slt, %4, %c0_i32_4 : i32
    %12 = vector.broadcast %11 : i1 to vector<1x16xi1>
    %13 = vector.broadcast %12 : vector<1x16xi1> to vector<1x16xi1>
    %14 = arith.xori %10, %13 : vector<1x16xi1>
    %15 = arith.andi %14, %8 : vector<1x16xi1>
    %16 = vector.broadcast %4 : i32 to vector<1x16xi32>
    %17 = arith.addi %6, %16 : vector<1x16xi32>
    %18 = arith.select %15, %17, %6 : vector<1x16xi1>, vector<1x16xi32>
    %cst = arith.constant 0.000000e+00 : f32
    %19 = vector.broadcast %cst : f32 to vector<16x16xf32>
    %c5_i32 = arith.constant 5 : i32
    %20 = tpu.dynamic_rotate %1 by %c5_i32 dim 1 : vector<16x16xf32>, i32 -> vector<16x16xf32>
    %c1_i32_5 = arith.constant 1 : i32
    %21 = vector.broadcast %c1_i32_5 : i32 to vector<1x16xi32>
    %22 = arith.cmpi sge, %18, %21 : vector<1x16xi32>
    %c4_i32_6 = arith.constant 4 : i32
    %23 = vector.broadcast %c4_i32_6 : i32 to vector<1x16xi32>
    %24 = arith.cmpi sge, %2, %23 : vector<1x16xi32>
    %25 = arith.andi %22, %24 : vector<1x16xi1>
    %cst_7 = arith.constant 0.000000e+00 : f32
    %26 = vector.shape_cast %25 : vector<1x16xi1> to vector<1x16xi1>
    %27 = vector.broadcast %26 : vector<1x16xi1> to vector<16x16xi1>
    %28 = vector.broadcast %cst_7 : f32 to vector<16x16xf32>
    %29 = arith.select %27, %20, %28 : vector<16x16xi1>, vector<16x16xf32>
    %c0_8 = arith.constant 0 : index
    %c0_9 = arith.constant 0 : index
    %c0_10 = arith.constant 0 : index
    %30 = vector.load %arg2[%c0_8, %c0_9, %c0_10] : memref<9x16x16xf32, #tpu.memory_space<vmem>>, vector<1x16x16xf32>
    %31 = vector.shape_cast %30 : vector<1x16x16xf32> to vector<16x16xf32>
    %cst_11 = arith.constant dense<0.000000e+00> : vector<16x16xf32>
    %32 = tpu.matmul %31, %29, %cst_11 {dimension_numbers = #tpu.dot_dimension_numbers<[1], [0], [0], [1], [0, 0, 1, 1], [], []>} : vector<16x16xf32>, vector<16x16xf32>, vector<16x16xf32> -> vector<16x16xf32>
    %33 = arith.addf %19, %32 : vector<16x16xf32>
    %c4_i32_12 = arith.constant 4 : i32
    %34 = tpu.dynamic_rotate %1 by %c4_i32_12 dim 1 : vector<16x16xf32>, i32 -> vector<16x16xf32>
    %c4_i32_13 = arith.constant 4 : i32
    %35 = vector.broadcast %c4_i32_13 : i32 to vector<1x16xi32>
    %36 = arith.cmpi sge, %2, %35 : vector<1x16xi32>
    %cst_14 = arith.constant 0.000000e+00 : f32
    %37 = vector.shape_cast %36 : vector<1x16xi1> to vector<1x16xi1>
    %38 = vector.broadcast %37 : vector<1x16xi1> to vector<16x16xi1>
    %39 = vector.broadcast %cst_14 : f32 to vector<16x16xf32>
    %40 = arith.select %38, %34, %39 : vector<16x16xi1>, vector<16x16xf32>
    %c1 = arith.constant 1 : index
    %c0_15 = arith.constant 0 : index
    %c0_16 = arith.constant 0 : index
    %41 = vector.load %arg2[%c1, %c0_15, %c0_16] : memref<9x16x16xf32, #tpu.memory_space<vmem>>, vector<1x16x16xf32>
    %42 = vector.shape_cast %41 : vector<1x16x16xf32> to vector<16x16xf32>
    %cst_17 = arith.constant dense<0.000000e+00> : vector<16x16xf32>
    %43 = tpu.matmul %42, %40, %cst_17 {dimension_numbers = #tpu.dot_dimension_numbers<[1], [0], [0], [1], [0, 0, 1, 1], [], []>} : vector<16x16xf32>, vector<16x16xf32>, vector<16x16xf32> -> vector<16x16xf32>
    %44 = arith.addf %33, %43 : vector<16x16xf32>
    %c3_i32 = arith.constant 3 : i32
    %45 = tpu.dynamic_rotate %1 by %c3_i32 dim 1 : vector<16x16xf32>, i32 -> vector<16x16xf32>
    %c3_i32_18 = arith.constant 3 : i32
    %46 = vector.broadcast %c3_i32_18 : i32 to vector<1x16xi32>
    %47 = arith.cmpi slt, %18, %46 : vector<1x16xi32>
    %c4_i32_19 = arith.constant 4 : i32
    %48 = vector.broadcast %c4_i32_19 : i32 to vector<1x16xi32>
    %49 = arith.cmpi sge, %2, %48 : vector<1x16xi32>
    %50 = arith.andi %47, %49 : vector<1x16xi1>
    %cst_20 = arith.constant 0.000000e+00 : f32
    %51 = vector.shape_cast %50 : vector<1x16xi1> to vector<1x16xi1>
    %52 = vector.broadcast %51 : vector<1x16xi1> to vector<16x16xi1>
    %53 = vector.broadcast %cst_20 : f32 to vector<16x16xf32>
    %54 = arith.select %52, %45, %53 : vector<16x16xi1>, vector<16x16xf32>
    %c2 = arith.constant 2 : index
    %c0_21 = arith.constant 0 : index
    %c0_22 = arith.constant 0 : index
    %55 = vector.load %arg2[%c2, %c0_21, %c0_22] : memref<9x16x16xf32, #tpu.memory_space<vmem>>, vector<1x16x16xf32>
    %56 = vector.shape_cast %55 : vector<1x16x16xf32> to vector<16x16xf32>
    %cst_23 = arith.constant dense<0.000000e+00> : vector<16x16xf32>
    %57 = tpu.matmul %56, %54, %cst_23 {dimension_numbers = #tpu.dot_dimension_numbers<[1], [0], [0], [1], [0, 0, 1, 1], [], []>} : vector<16x16xf32>, vector<16x16xf32>, vector<16x16xf32> -> vector<16x16xf32>
    %58 = arith.addf %44, %57 : vector<16x16xf32>
    %c1_i32_24 = arith.constant 1 : i32
    %59 = tpu.dynamic_rotate %1 by %c1_i32_24 dim 1 : vector<16x16xf32>, i32 -> vector<16x16xf32>
    %c1_i32_25 = arith.constant 1 : i32
    %60 = vector.broadcast %c1_i32_25 : i32 to vector<1x16xi32>
    %61 = arith.cmpi sge, %18, %60 : vector<1x16xi32>
    %cst_26 = arith.constant 0.000000e+00 : f32
    %62 = vector.shape_cast %61 : vector<1x16xi1> to vector<1x16xi1>
    %63 = vector.broadcast %62 : vector<1x16xi1> to vector<16x16xi1>
    %64 = vector.broadcast %cst_26 : f32 to vector<16x16xf32>
    %65 = arith.select %63, %59, %64 : vector<16x16xi1>, vector<16x16xf32>
    %c3 = arith.constant 3 : index
    %c0_27 = arith.constant 0 : index
    %c0_28 = arith.constant 0 : index
    %66 = vector.load %arg2[%c3, %c0_27, %c0_28] : memref<9x16x16xf32, #tpu.memory_space<vmem>>, vector<1x16x16xf32>
    %67 = vector.shape_cast %66 : vector<1x16x16xf32> to vector<16x16xf32>
    %cst_29 = arith.constant dense<0.000000e+00> : vector<16x16xf32>
    %68 = tpu.matmul %67, %65, %cst_29 {dimension_numbers = #tpu.dot_dimension_numbers<[1], [0], [0], [1], [0, 0, 1, 1], [], []>} : vector<16x16xf32>, vector<16x16xf32>, vector<16x16xf32> -> vector<16x16xf32>
    %69 = arith.addf %58, %68 : vector<16x16xf32>
    %c4 = arith.constant 4 : index
    %c0_30 = arith.constant 0 : index
    %c0_31 = arith.constant 0 : index
    %70 = vector.load %arg2[%c4, %c0_30, %c0_31] : memref<9x16x16xf32, #tpu.memory_space<vmem>>, vector<1x16x16xf32>
    %71 = vector.shape_cast %70 : vector<1x16x16xf32> to vector<16x16xf32>
    %cst_32 = arith.constant dense<0.000000e+00> : vector<16x16xf32>
    %72 = tpu.matmul %71, %1, %cst_32 {dimension_numbers = #tpu.dot_dimension_numbers<[1], [0], [0], [1], [0, 0, 1, 1], [], []>} : vector<16x16xf32>, vector<16x16xf32>, vector<16x16xf32> -> vector<16x16xf32>
    %73 = arith.addf %69, %72 : vector<16x16xf32>
    %c15_i32 = arith.constant 15 : i32
    %74 = tpu.dynamic_rotate %1 by %c15_i32 dim 1 : vector<16x16xf32>, i32 -> vector<16x16xf32>
    %c3_i32_33 = arith.constant 3 : i32
    %75 = vector.broadcast %c3_i32_33 : i32 to vector<1x16xi32>
    %76 = arith.cmpi slt, %18, %75 : vector<1x16xi32>
    %cst_34 = arith.constant 0.000000e+00 : f32
    %77 = vector.shape_cast %76 : vector<1x16xi1> to vector<1x16xi1>
    %78 = vector.broadcast %77 : vector<1x16xi1> to vector<16x16xi1>
    %79 = vector.broadcast %cst_34 : f32 to vector<16x16xf32>
    %80 = arith.select %78, %74, %79 : vector<16x16xi1>, vector<16x16xf32>
    %c5 = arith.constant 5 : index
    %c0_35 = arith.constant 0 : index
    %c0_36 = arith.constant 0 : index
    %81 = vector.load %arg2[%c5, %c0_35, %c0_36] : memref<9x16x16xf32, #tpu.memory_space<vmem>>, vector<1x16x16xf32>
    %82 = vector.shape_cast %81 : vector<1x16x16xf32> to vector<16x16xf32>
    %cst_37 = arith.constant dense<0.000000e+00> : vector<16x16xf32>
    %83 = tpu.matmul %82, %80, %cst_37 {dimension_numbers = #tpu.dot_dimension_numbers<[1], [0], [0], [1], [0, 0, 1, 1], [], []>} : vector<16x16xf32>, vector<16x16xf32>, vector<16x16xf32> -> vector<16x16xf32>
    %84 = arith.addf %73, %83 : vector<16x16xf32>
    %c13_i32 = arith.constant 13 : i32
    %85 = tpu.dynamic_rotate %1 by %c13_i32 dim 1 : vector<16x16xf32>, i32 -> vector<16x16xf32>
    %c1_i32_38 = arith.constant 1 : i32
    %86 = vector.broadcast %c1_i32_38 : i32 to vector<1x16xi32>
    %87 = arith.cmpi sge, %18, %86 : vector<1x16xi32>
    %c12_i32 = arith.constant 12 : i32
    %88 = vector.broadcast %c12_i32 : i32 to vector<1x16xi32>
    %89 = arith.cmpi slt, %2, %88 : vector<1x16xi32>
    %90 = arith.andi %87, %89 : vector<1x16xi1>
    %cst_39 = arith.constant 0.000000e+00 : f32
    %91 = vector.shape_cast %90 : vector<1x16xi1> to vector<1x16xi1>
    %92 = vector.broadcast %91 : vector<1x16xi1> to vector<16x16xi1>
    %93 = vector.broadcast %cst_39 : f32 to vector<16x16xf32>
    %94 = arith.select %92, %85, %93 : vector<16x16xi1>, vector<16x16xf32>
    %c6 = arith.constant 6 : index
    %c0_40 = arith.constant 0 : index
    %c0_41 = arith.constant 0 : index
    %95 = vector.load %arg2[%c6, %c0_40, %c0_41] : memref<9x16x16xf32, #tpu.memory_space<vmem>>, vector<1x16x16xf32>
    %96 = vector.shape_cast %95 : vector<1x16x16xf32> to vector<16x16xf32>
    %cst_42 = arith.constant dense<0.000000e+00> : vector<16x16xf32>
    %97 = tpu.matmul %96, %94, %cst_42 {dimension_numbers = #tpu.dot_dimension_numbers<[1], [0], [0], [1], [0, 0, 1, 1], [], []>} : vector<16x16xf32>, vector<16x16xf32>, vector<16x16xf32> -> vector<16x16xf32>
    %98 = arith.addf %84, %97 : vector<16x16xf32>
    %c12_i32_43 = arith.constant 12 : i32
    %99 = tpu.dynamic_rotate %1 by %c12_i32_43 dim 1 : vector<16x16xf32>, i32 -> vector<16x16xf32>
    %c12_i32_44 = arith.constant 12 : i32
    %100 = vector.broadcast %c12_i32_44 : i32 to vector<1x16xi32>
    %101 = arith.cmpi slt, %2, %100 : vector<1x16xi32>
    %cst_45 = arith.constant 0.000000e+00 : f32
    %102 = vector.shape_cast %101 : vector<1x16xi1> to vector<1x16xi1>
    %103 = vector.broadcast %102 : vector<1x16xi1> to vector<16x16xi1>
    %104 = vector.broadcast %cst_45 : f32 to vector<16x16xf32>
    %105 = arith.select %103, %99, %104 : vector<16x16xi1>, vector<16x16xf32>
    %c7 = arith.constant 7 : index
    %c0_46 = arith.constant 0 : index
    %c0_47 = arith.constant 0 : index
    %106 = vector.load %arg2[%c7, %c0_46, %c0_47] : memref<9x16x16xf32, #tpu.memory_space<vmem>>, vector<1x16x16xf32>
    %107 = vector.shape_cast %106 : vector<1x16x16xf32> to vector<16x16xf32>
    %cst_48 = arith.constant dense<0.000000e+00> : vector<16x16xf32>
    %108 = tpu.matmul %107, %105, %cst_48 {dimension_numbers = #tpu.dot_dimension_numbers<[1], [0], [0], [1], [0, 0, 1, 1], [], []>} : vector<16x16xf32>, vector<16x16xf32>, vector<16x16xf32> -> vector<16x16xf32>
    %109 = arith.addf %98, %108 : vector<16x16xf32>
    %c11_i32 = arith.constant 11 : i32
    %110 = tpu.dynamic_rotate %1 by %c11_i32 dim 1 : vector<16x16xf32>, i32 -> vector<16x16xf32>
    %c3_i32_49 = arith.constant 3 : i32
    %111 = vector.broadcast %c3_i32_49 : i32 to vector<1x16xi32>
    %112 = arith.cmpi slt, %18, %111 : vector<1x16xi32>
    %c12_i32_50 = arith.constant 12 : i32
    %113 = vector.broadcast %c12_i32_50 : i32 to vector<1x16xi32>
    %114 = arith.cmpi slt, %2, %113 : vector<1x16xi32>
    %115 = arith.andi %112, %114 : vector<1x16xi1>
    %cst_51 = arith.constant 0.000000e+00 : f32
    %116 = vector.shape_cast %115 : vector<1x16xi1> to vector<1x16xi1>
    %117 = vector.broadcast %116 : vector<1x16xi1> to vector<16x16xi1>
    %118 = vector.broadcast %cst_51 : f32 to vector<16x16xf32>
    %119 = arith.select %117, %110, %118 : vector<16x16xi1>, vector<16x16xf32>
    %c8 = arith.constant 8 : index
    %c0_52 = arith.constant 0 : index
    %c0_53 = arith.constant 0 : index
    %120 = vector.load %arg2[%c8, %c0_52, %c0_53] : memref<9x16x16xf32, #tpu.memory_space<vmem>>, vector<1x16x16xf32>
    %121 = vector.shape_cast %120 : vector<1x16x16xf32> to vector<16x16xf32>
    %cst_54 = arith.constant dense<0.000000e+00> : vector<16x16xf32>
    %122 = tpu.matmul %121, %119, %cst_54 {dimension_numbers = #tpu.dot_dimension_numbers<[1], [0], [0], [1], [0, 0, 1, 1], [], []>} : vector<16x16xf32>, vector<16x16xf32>, vector<16x16xf32> -> vector<16x16xf32>
    %123 = arith.addf %109, %122 : vector<16x16xf32>
    %c0_55 = arith.constant 0 : index
    %c0_56 = arith.constant 0 : index
    %124 = vector.load %arg3[%c0_55, %c0_56] : memref<16x1xf32, #tpu.memory_space<vmem>>, vector<16x1xf32>
    %125 = vector.broadcast %124 : vector<16x1xf32> to vector<16x16xf32>
    %126 = arith.addf %123, %125 : vector<16x16xf32>
    %c0_57 = arith.constant 0 : index
    %c0_58 = arith.constant 0 : index
    %c0_59 = arith.constant 0 : index
    %127 = vector.load %arg4[%c0_57, %c0_58, %c0_59] : memref<1x16x16xf32, #tpu.memory_space<vmem>>, vector<1x16x16xf32>
    %128 = vector.shape_cast %127 : vector<1x16x16xf32> to vector<16x16xf32>
    %129 = vector.shape_cast %126 : vector<16x16xf32> to vector<1x16x16xf32>
    tpu.vector_store %arg4[%c0_57, %c0_58, %c0_59], %129 {strides = array<i32>} : memref<1x16x16xf32, #tpu.memory_space<vmem>>, vector<1x16x16xf32>,
    return
  }
  func.func @transform_0(%arg0: i32) -> (i32, i32, i32) {
    %c0_i32 = arith.constant 0 : i32
    %c0_i32_0 = arith.constant 0 : i32
    %c0_i32_1 = arith.constant 0 : i32
    return %arg0, %c0_i32, %c0_i32_0 : i32, i32, i32
  }
  func.func @transform_1(%arg0: i32) -> (i32, i32, i32) {
    %c0_i32 = arith.constant 0 : i32
    %c0_i32_0 = arith.constant 0 : i32
    %c0_i32_1 = arith.constant 0 : i32
    %c0_i32_2 = arith.constant 0 : i32
    return %c0_i32, %c0_i32_0, %c0_i32_1 : i32, i32, i32
  }
  func.func @transform_2(%arg0: i32) -> (i32, i32) {
    %c0_i32 = arith.constant 0 : i32
    %c0_i32_0 = arith.constant 0 : i32
    %c0_i32_1 = arith.constant 0 : i32
    return %c0_i32, %c0_i32_0 : i32, i32
  }
  func.func @transform_3(%arg0: i32) -> (i32, i32, i32) {
    %c0_i32 = arith.constant 0 : i32
    %c0_i32_0 = arith.constant 0 : i32
    %c0_i32_1 = arith.constant 0 : i32
    return %arg0, %c0_i32, %c0_i32_0 : i32, i32, i32
  }
}

module attributes {stable_mosaic.version = 11 : i64} {
  func.func @_smooth_kernel(%arg0: i32, %arg1: memref<1x16x4xf32, #tpu.memory_space<vmem>>, %arg2: memref<9x16x16xf32, #tpu.memory_space<vmem>>, %arg3: memref<16x1xf32, #tpu.memory_space<vmem>>, %arg4: memref<1x16x4xf32, #tpu.memory_space<vmem>>) attributes {dimension_semantics = [#tpu.dimension_semantics<parallel>], iteration_bounds = array<i64: 2>, scalar_prefetch = 0 : i64, scratch_operands = 0 : i64, tpu.core_type = #tpu.core_type<tc>, window_params = [{transform_indices = @transform_0, window_bounds = array<i64: 1, 16, 4>}, {pipeline_mode = #tpu.pipeline_mode<synchronous>, transform_indices = @transform_1, window_bounds = array<i64: 9, 16, 16>}, {pipeline_mode = #tpu.pipeline_mode<synchronous>, transform_indices = @transform_2, window_bounds = array<i64: 16, 1>}, {transform_indices = @transform_3, window_bounds = array<i64: 1, 16, 4>}]} {
    %c0 = arith.constant 0 : index
    %c0_0 = arith.constant 0 : index
    %c0_1 = arith.constant 0 : index
    %0 = vector.load %arg1[%c0, %c0_0, %c0_1] : memref<1x16x4xf32, #tpu.memory_space<vmem>>, vector<1x16x4xf32>
    %1 = vector.shape_cast %0 : vector<1x16x4xf32> to vector<16x4xf32>
    %2 = tpu.iota {dimensions = array<i32: 1>} : vector<1x4xi32>
    %c2_i32 = arith.constant 2 : i32
    %c0_i32 = arith.constant 0 : i32
    %3 = arith.cmpi eq, %c2_i32, %c0_i32 : i32
    %c1_i32 = arith.constant 1 : i32
    %4 = arith.select %3, %c1_i32, %c2_i32 : i32
    %5 = vector.broadcast %4 : i32 to vector<1x4xi32>
    %6 = arith.remsi %2, %5 : vector<1x4xi32>
    %c0_i32_2 = arith.constant 0 : i32
    %7 = vector.broadcast %c0_i32_2 : i32 to vector<1x4xi32>
    %8 = arith.cmpi ne, %6, %7 : vector<1x4xi32>
    %c0_i32_3 = arith.constant 0 : i32
    %9 = vector.broadcast %c0_i32_3 : i32 to vector<1x4xi32>
    %10 = arith.cmpi slt, %6, %9 : vector<1x4xi32>
    %c0_i32_4 = arith.constant 0 : i32
    %11 = arith.cmpi slt, %4, %c0_i32_4 : i32
    %12 = vector.broadcast %11 : i1 to vector<1x4xi1>
    %13 = vector.broadcast %12 : vector<1x4xi1> to vector<1x4xi1>
    %14 = arith.xori %10, %13 : vector<1x4xi1>
    %15 = arith.andi %14, %8 : vector<1x4xi1>
    %16 = vector.broadcast %4 : i32 to vector<1x4xi32>
    %17 = arith.addi %6, %16 : vector<1x4xi32>
    %18 = arith.select %15, %17, %6 : vector<1x4xi1>, vector<1x4xi32>
    %cst = arith.constant 0.000000e+00 : f32
    %19 = vector.broadcast %cst : f32 to vector<16x4xf32>
    %c3_i32 = arith.constant 3 : i32
    %20 = tpu.dynamic_rotate %1 by %c3_i32 dim 1 : vector<16x4xf32>, i32 -> vector<16x4xf32>
    %c1_i32_5 = arith.constant 1 : i32
    %21 = vector.broadcast %c1_i32_5 : i32 to vector<1x4xi32>
    %22 = arith.cmpi sge, %18, %21 : vector<1x4xi32>
    %c2_i32_6 = arith.constant 2 : i32
    %23 = vector.broadcast %c2_i32_6 : i32 to vector<1x4xi32>
    %24 = arith.cmpi sge, %2, %23 : vector<1x4xi32>
    %25 = arith.andi %22, %24 : vector<1x4xi1>
    %cst_7 = arith.constant 0.000000e+00 : f32
    %26 = vector.shape_cast %25 : vector<1x4xi1> to vector<1x4xi1>
    %27 = vector.broadcast %26 : vector<1x4xi1> to vector<16x4xi1>
    %28 = vector.broadcast %cst_7 : f32 to vector<16x4xf32>
    %29 = arith.select %27, %20, %28 : vector<16x4xi1>, vector<16x4xf32>
    %c0_8 = arith.constant 0 : index
    %c0_9 = arith.constant 0 : index
    %c0_10 = arith.constant 0 : index
    %30 = vector.load %arg2[%c0_8, %c0_9, %c0_10] : memref<9x16x16xf32, #tpu.memory_space<vmem>>, vector<1x16x16xf32>
    %31 = vector.shape_cast %30 : vector<1x16x16xf32> to vector<16x16xf32>
    %cst_11 = arith.constant dense<0.000000e+00> : vector<16x4xf32>
    %32 = tpu.matmul %31, %29, %cst_11 {dimension_numbers = #tpu.dot_dimension_numbers<[1], [0], [0], [1], [0, 0, 1, 1], [], []>} : vector<16x16xf32>, vector<16x4xf32>, vector<16x4xf32> -> vector<16x4xf32>
    %33 = arith.addf %19, %32 : vector<16x4xf32>
    %c2_i32_12 = arith.constant 2 : i32
    %34 = tpu.dynamic_rotate %1 by %c2_i32_12 dim 1 : vector<16x4xf32>, i32 -> vector<16x4xf32>
    %c2_i32_13 = arith.constant 2 : i32
    %35 = vector.broadcast %c2_i32_13 : i32 to vector<1x4xi32>
    %36 = arith.cmpi sge, %2, %35 : vector<1x4xi32>
    %cst_14 = arith.constant 0.000000e+00 : f32
    %37 = vector.shape_cast %36 : vector<1x4xi1> to vector<1x4xi1>
    %38 = vector.broadcast %37 : vector<1x4xi1> to vector<16x4xi1>
    %39 = vector.broadcast %cst_14 : f32 to vector<16x4xf32>
    %40 = arith.select %38, %34, %39 : vector<16x4xi1>, vector<16x4xf32>
    %c1 = arith.constant 1 : index
    %c0_15 = arith.constant 0 : index
    %c0_16 = arith.constant 0 : index
    %41 = vector.load %arg2[%c1, %c0_15, %c0_16] : memref<9x16x16xf32, #tpu.memory_space<vmem>>, vector<1x16x16xf32>
    %42 = vector.shape_cast %41 : vector<1x16x16xf32> to vector<16x16xf32>
    %cst_17 = arith.constant dense<0.000000e+00> : vector<16x4xf32>
    %43 = tpu.matmul %42, %40, %cst_17 {dimension_numbers = #tpu.dot_dimension_numbers<[1], [0], [0], [1], [0, 0, 1, 1], [], []>} : vector<16x16xf32>, vector<16x4xf32>, vector<16x4xf32> -> vector<16x4xf32>
    %44 = arith.addf %33, %43 : vector<16x4xf32>
    %c1_i32_18 = arith.constant 1 : i32
    %45 = tpu.dynamic_rotate %1 by %c1_i32_18 dim 1 : vector<16x4xf32>, i32 -> vector<16x4xf32>
    %c1_i32_19 = arith.constant 1 : i32
    %46 = vector.broadcast %c1_i32_19 : i32 to vector<1x4xi32>
    %47 = arith.cmpi slt, %18, %46 : vector<1x4xi32>
    %c2_i32_20 = arith.constant 2 : i32
    %48 = vector.broadcast %c2_i32_20 : i32 to vector<1x4xi32>
    %49 = arith.cmpi sge, %2, %48 : vector<1x4xi32>
    %50 = arith.andi %47, %49 : vector<1x4xi1>
    %cst_21 = arith.constant 0.000000e+00 : f32
    %51 = vector.shape_cast %50 : vector<1x4xi1> to vector<1x4xi1>
    %52 = vector.broadcast %51 : vector<1x4xi1> to vector<16x4xi1>
    %53 = vector.broadcast %cst_21 : f32 to vector<16x4xf32>
    %54 = arith.select %52, %45, %53 : vector<16x4xi1>, vector<16x4xf32>
    %c2 = arith.constant 2 : index
    %c0_22 = arith.constant 0 : index
    %c0_23 = arith.constant 0 : index
    %55 = vector.load %arg2[%c2, %c0_22, %c0_23] : memref<9x16x16xf32, #tpu.memory_space<vmem>>, vector<1x16x16xf32>
    %56 = vector.shape_cast %55 : vector<1x16x16xf32> to vector<16x16xf32>
    %cst_24 = arith.constant dense<0.000000e+00> : vector<16x4xf32>
    %57 = tpu.matmul %56, %54, %cst_24 {dimension_numbers = #tpu.dot_dimension_numbers<[1], [0], [0], [1], [0, 0, 1, 1], [], []>} : vector<16x16xf32>, vector<16x4xf32>, vector<16x4xf32> -> vector<16x4xf32>
    %58 = arith.addf %44, %57 : vector<16x4xf32>
    %c1_i32_25 = arith.constant 1 : i32
    %59 = tpu.dynamic_rotate %1 by %c1_i32_25 dim 1 : vector<16x4xf32>, i32 -> vector<16x4xf32>
    %c1_i32_26 = arith.constant 1 : i32
    %60 = vector.broadcast %c1_i32_26 : i32 to vector<1x4xi32>
    %61 = arith.cmpi sge, %18, %60 : vector<1x4xi32>
    %cst_27 = arith.constant 0.000000e+00 : f32
    %62 = vector.shape_cast %61 : vector<1x4xi1> to vector<1x4xi1>
    %63 = vector.broadcast %62 : vector<1x4xi1> to vector<16x4xi1>
    %64 = vector.broadcast %cst_27 : f32 to vector<16x4xf32>
    %65 = arith.select %63, %59, %64 : vector<16x4xi1>, vector<16x4xf32>
    %c3 = arith.constant 3 : index
    %c0_28 = arith.constant 0 : index
    %c0_29 = arith.constant 0 : index
    %66 = vector.load %arg2[%c3, %c0_28, %c0_29] : memref<9x16x16xf32, #tpu.memory_space<vmem>>, vector<1x16x16xf32>
    %67 = vector.shape_cast %66 : vector<1x16x16xf32> to vector<16x16xf32>
    %cst_30 = arith.constant dense<0.000000e+00> : vector<16x4xf32>
    %68 = tpu.matmul %67, %65, %cst_30 {dimension_numbers = #tpu.dot_dimension_numbers<[1], [0], [0], [1], [0, 0, 1, 1], [], []>} : vector<16x16xf32>, vector<16x4xf32>, vector<16x4xf32> -> vector<16x4xf32>
    %69 = arith.addf %58, %68 : vector<16x4xf32>
    %c4 = arith.constant 4 : index
    %c0_31 = arith.constant 0 : index
    %c0_32 = arith.constant 0 : index
    %70 = vector.load %arg2[%c4, %c0_31, %c0_32] : memref<9x16x16xf32, #tpu.memory_space<vmem>>, vector<1x16x16xf32>
    %71 = vector.shape_cast %70 : vector<1x16x16xf32> to vector<16x16xf32>
    %cst_33 = arith.constant dense<0.000000e+00> : vector<16x4xf32>
    %72 = tpu.matmul %71, %1, %cst_33 {dimension_numbers = #tpu.dot_dimension_numbers<[1], [0], [0], [1], [0, 0, 1, 1], [], []>} : vector<16x16xf32>, vector<16x4xf32>, vector<16x4xf32> -> vector<16x4xf32>
    %73 = arith.addf %69, %72 : vector<16x4xf32>
    %c3_i32_34 = arith.constant 3 : i32
    %74 = tpu.dynamic_rotate %1 by %c3_i32_34 dim 1 : vector<16x4xf32>, i32 -> vector<16x4xf32>
    %c1_i32_35 = arith.constant 1 : i32
    %75 = vector.broadcast %c1_i32_35 : i32 to vector<1x4xi32>
    %76 = arith.cmpi slt, %18, %75 : vector<1x4xi32>
    %cst_36 = arith.constant 0.000000e+00 : f32
    %77 = vector.shape_cast %76 : vector<1x4xi1> to vector<1x4xi1>
    %78 = vector.broadcast %77 : vector<1x4xi1> to vector<16x4xi1>
    %79 = vector.broadcast %cst_36 : f32 to vector<16x4xf32>
    %80 = arith.select %78, %74, %79 : vector<16x4xi1>, vector<16x4xf32>
    %c5 = arith.constant 5 : index
    %c0_37 = arith.constant 0 : index
    %c0_38 = arith.constant 0 : index
    %81 = vector.load %arg2[%c5, %c0_37, %c0_38] : memref<9x16x16xf32, #tpu.memory_space<vmem>>, vector<1x16x16xf32>
    %82 = vector.shape_cast %81 : vector<1x16x16xf32> to vector<16x16xf32>
    %cst_39 = arith.constant dense<0.000000e+00> : vector<16x4xf32>
    %83 = tpu.matmul %82, %80, %cst_39 {dimension_numbers = #tpu.dot_dimension_numbers<[1], [0], [0], [1], [0, 0, 1, 1], [], []>} : vector<16x16xf32>, vector<16x4xf32>, vector<16x4xf32> -> vector<16x4xf32>
    %84 = arith.addf %73, %83 : vector<16x4xf32>
    %c3_i32_40 = arith.constant 3 : i32
    %85 = tpu.dynamic_rotate %1 by %c3_i32_40 dim 1 : vector<16x4xf32>, i32 -> vector<16x4xf32>
    %c1_i32_41 = arith.constant 1 : i32
    %86 = vector.broadcast %c1_i32_41 : i32 to vector<1x4xi32>
    %87 = arith.cmpi sge, %18, %86 : vector<1x4xi32>
    %c2_i32_42 = arith.constant 2 : i32
    %88 = vector.broadcast %c2_i32_42 : i32 to vector<1x4xi32>
    %89 = arith.cmpi slt, %2, %88 : vector<1x4xi32>
    %90 = arith.andi %87, %89 : vector<1x4xi1>
    %cst_43 = arith.constant 0.000000e+00 : f32
    %91 = vector.shape_cast %90 : vector<1x4xi1> to vector<1x4xi1>
    %92 = vector.broadcast %91 : vector<1x4xi1> to vector<16x4xi1>
    %93 = vector.broadcast %cst_43 : f32 to vector<16x4xf32>
    %94 = arith.select %92, %85, %93 : vector<16x4xi1>, vector<16x4xf32>
    %c6 = arith.constant 6 : index
    %c0_44 = arith.constant 0 : index
    %c0_45 = arith.constant 0 : index
    %95 = vector.load %arg2[%c6, %c0_44, %c0_45] : memref<9x16x16xf32, #tpu.memory_space<vmem>>, vector<1x16x16xf32>
    %96 = vector.shape_cast %95 : vector<1x16x16xf32> to vector<16x16xf32>
    %cst_46 = arith.constant dense<0.000000e+00> : vector<16x4xf32>
    %97 = tpu.matmul %96, %94, %cst_46 {dimension_numbers = #tpu.dot_dimension_numbers<[1], [0], [0], [1], [0, 0, 1, 1], [], []>} : vector<16x16xf32>, vector<16x4xf32>, vector<16x4xf32> -> vector<16x4xf32>
    %98 = arith.addf %84, %97 : vector<16x4xf32>
    %c2_i32_47 = arith.constant 2 : i32
    %99 = tpu.dynamic_rotate %1 by %c2_i32_47 dim 1 : vector<16x4xf32>, i32 -> vector<16x4xf32>
    %c2_i32_48 = arith.constant 2 : i32
    %100 = vector.broadcast %c2_i32_48 : i32 to vector<1x4xi32>
    %101 = arith.cmpi slt, %2, %100 : vector<1x4xi32>
    %cst_49 = arith.constant 0.000000e+00 : f32
    %102 = vector.shape_cast %101 : vector<1x4xi1> to vector<1x4xi1>
    %103 = vector.broadcast %102 : vector<1x4xi1> to vector<16x4xi1>
    %104 = vector.broadcast %cst_49 : f32 to vector<16x4xf32>
    %105 = arith.select %103, %99, %104 : vector<16x4xi1>, vector<16x4xf32>
    %c7 = arith.constant 7 : index
    %c0_50 = arith.constant 0 : index
    %c0_51 = arith.constant 0 : index
    %106 = vector.load %arg2[%c7, %c0_50, %c0_51] : memref<9x16x16xf32, #tpu.memory_space<vmem>>, vector<1x16x16xf32>
    %107 = vector.shape_cast %106 : vector<1x16x16xf32> to vector<16x16xf32>
    %cst_52 = arith.constant dense<0.000000e+00> : vector<16x4xf32>
    %108 = tpu.matmul %107, %105, %cst_52 {dimension_numbers = #tpu.dot_dimension_numbers<[1], [0], [0], [1], [0, 0, 1, 1], [], []>} : vector<16x16xf32>, vector<16x4xf32>, vector<16x4xf32> -> vector<16x4xf32>
    %109 = arith.addf %98, %108 : vector<16x4xf32>
    %c1_i32_53 = arith.constant 1 : i32
    %110 = tpu.dynamic_rotate %1 by %c1_i32_53 dim 1 : vector<16x4xf32>, i32 -> vector<16x4xf32>
    %c1_i32_54 = arith.constant 1 : i32
    %111 = vector.broadcast %c1_i32_54 : i32 to vector<1x4xi32>
    %112 = arith.cmpi slt, %18, %111 : vector<1x4xi32>
    %c2_i32_55 = arith.constant 2 : i32
    %113 = vector.broadcast %c2_i32_55 : i32 to vector<1x4xi32>
    %114 = arith.cmpi slt, %2, %113 : vector<1x4xi32>
    %115 = arith.andi %112, %114 : vector<1x4xi1>
    %cst_56 = arith.constant 0.000000e+00 : f32
    %116 = vector.shape_cast %115 : vector<1x4xi1> to vector<1x4xi1>
    %117 = vector.broadcast %116 : vector<1x4xi1> to vector<16x4xi1>
    %118 = vector.broadcast %cst_56 : f32 to vector<16x4xf32>
    %119 = arith.select %117, %110, %118 : vector<16x4xi1>, vector<16x4xf32>
    %c8 = arith.constant 8 : index
    %c0_57 = arith.constant 0 : index
    %c0_58 = arith.constant 0 : index
    %120 = vector.load %arg2[%c8, %c0_57, %c0_58] : memref<9x16x16xf32, #tpu.memory_space<vmem>>, vector<1x16x16xf32>
    %121 = vector.shape_cast %120 : vector<1x16x16xf32> to vector<16x16xf32>
    %cst_59 = arith.constant dense<0.000000e+00> : vector<16x4xf32>
    %122 = tpu.matmul %121, %119, %cst_59 {dimension_numbers = #tpu.dot_dimension_numbers<[1], [0], [0], [1], [0, 0, 1, 1], [], []>} : vector<16x16xf32>, vector<16x4xf32>, vector<16x4xf32> -> vector<16x4xf32>
    %123 = arith.addf %109, %122 : vector<16x4xf32>
    %c0_60 = arith.constant 0 : index
    %c0_61 = arith.constant 0 : index
    %124 = vector.load %arg3[%c0_60, %c0_61] : memref<16x1xf32, #tpu.memory_space<vmem>>, vector<16x1xf32>
    %125 = vector.broadcast %124 : vector<16x1xf32> to vector<16x4xf32>
    %126 = arith.addf %123, %125 : vector<16x4xf32>
    %c0_62 = arith.constant 0 : index
    %c0_63 = arith.constant 0 : index
    %c0_64 = arith.constant 0 : index
    %127 = vector.load %arg4[%c0_62, %c0_63, %c0_64] : memref<1x16x4xf32, #tpu.memory_space<vmem>>, vector<1x16x4xf32>
    %128 = vector.shape_cast %127 : vector<1x16x4xf32> to vector<16x4xf32>
    %129 = vector.shape_cast %126 : vector<16x4xf32> to vector<1x16x4xf32>
    tpu.vector_store %arg4[%c0_62, %c0_63, %c0_64], %129 {strides = array<i32>} : memref<1x16x4xf32, #tpu.memory_space<vmem>>, vector<1x16x4xf32>,
    return
  }
  func.func @transform_0(%arg0: i32) -> (i32, i32, i32) {
    %c0_i32 = arith.constant 0 : i32
    %c0_i32_0 = arith.constant 0 : i32
    %c0_i32_1 = arith.constant 0 : i32
    return %arg0, %c0_i32, %c0_i32_0 : i32, i32, i32
  }
  func.func @transform_1(%arg0: i32) -> (i32, i32, i32) {
    %c0_i32 = arith.constant 0 : i32
    %c0_i32_0 = arith.constant 0 : i32
    %c0_i32_1 = arith.constant 0 : i32
    %c0_i32_2 = arith.constant 0 : i32
    return %c0_i32, %c0_i32_0, %c0_i32_1 : i32, i32, i32
  }
  func.func @transform_2(%arg0: i32) -> (i32, i32) {
    %c0_i32 = arith.constant 0 : i32
    %c0_i32_0 = arith.constant 0 : i32
    %c0_i32_1 = arith.constant 0 : i32
    return %c0_i32, %c0_i32_0 : i32, i32
  }
  func.func @transform_3(%arg0: i32) -> (i32, i32, i32) {
    %c0_i32 = arith.constant 0 : i32
    %c0_i32_0 = arith.constant 0 : i32
    %c0_i32_1 = arith.constant 0 : i32
    return %arg0, %c0_i32, %c0_i32_0 : i32, i32, i32
  }
}

</mosaic_0001>

<llo_original>
// kernel: fpn_forward.8
$region0: #{fpn_forward.8}
  #allocation0 [shape = 'u32[]', space=smem, size = 0x4, offset = 0x4, fixed_abs, tag = 'smem constant byte address 0x4 - core index']
  #allocation1 [shape = 'u32[144,128]{1,0:T(1,128)}', space=vmem, size = 0x12000, scoped, tag = 'internal scratch']
  %s0 = inlined_call_operand.vmem [shape: f32[2,64,4], index: 0, kind: input, shape index: {}]
  %s1 = inlined_call_operand.vmem [shape: bf16[16,64], index: 1, kind: input, shape index: {}]
  %s2 = inlined_call_operand.vmem [shape: f32[16,1], index: 2, kind: input, shape index: {}]
  %s3 = inlined_call_operand.vmem [shape: f32[2,16,4], index: 3, kind: output, shape index: {}]
  %s4 = sld [smem:[#allocation0]]
  $region45: #{fpn_forward.8} parent=0
    _
  %s6 = ssub.s32 1, %s4
  %s7 = scalar_select 0, %s6, %s4
  loop: start=0, step=1, limit=4
  $region2: #{fpn_forward.8} parent=0 // loop_pre_header
    _
  $region3: #{fpn_forward.8} parent=0 // loop_header
    %s9 = sphi 0, %s13
    %p10 = scmp.ge.s32.totalorder %s9, 4
    %s16 = sphi 0, %s28
    %s17 = sphi 0, %s24
    %s18 = sphi 0, %s16
    %s19 = sphi 0, %s17
    %s20 = sphi 0, %s18
    %s21 = sphi 0, %s19
    %s33 = sphi 0, %s35
    %s36 = sphi 0, %s33
    %s37 = sphi 0, %s36
    %s53 = sphi 0, %s37
    %s57 = sphi 0, %s57
    %s59 = sphi 0, %s57
    %s60 = sphi 0, %s59
    %s74 = sphi 0, %s60
    %s78 = sphi 0, %s78
    %s80 = sphi 0, %s78
    %s81 = sphi 0, %s80
    %s95 = sphi 0, %s81
    %s103 = sphi 0, %s105
    %s106 = sphi 0, %s103
    %s107 = sphi 0, %s106
    %s123 = sphi 0, %s107
  $region4: #{fpn_forward.8} parent=0 // loop_header_branch
    %12 = sbr.rel (%p10) target = $region8
  $region5: #{fpn_forward.8} parent=0 // loop_body
    %s14 = ssub.s32 %s9, 1
    %s15 = ssub.s32 %s9, 2
    %s22 = sadd.s32 1, %s17
    %p23 = scmp.ge.s32.totalorder %s22, 1
    %s24 = scalar_select %p23, 0, %s22
    %s25 = sadd.s32 1, %s16
    %s26 = scalar_select %p23, %s25, %s16
    %p27 = scmp.ge.s32.totalorder %s26, 2
    %s28 = scalar_select %p27, 0, %s26
    %s29 = ssub.s32 %s16, %s28
    %s30 = ssub.s32 %s17, %s24
    %s31 = sor.u32 %s29, %s30
    %p32 = scmp.eq.s32.totalorder %s31, 0
    %s34 = sadd.s32 %s33, 1
    %s35 = scalar_select %p32, %s33, %s34
    %p38 = pneg %p32
    %p39 = scmp.eq.s32.totalorder %s9, 1
    %p40 = por %p38, %p39
    %p41 = scmp.ne.s32.totalorder %s33, %s36
    %p42 = scmp.eq.s32.totalorder %s9, 0
    %p43 = por %p41, %p42
    %p44 = scmp.ne.s32.totalorder %s33, %s36
    %p45 = scmp.eq.s32.totalorder %s14, 1
    %p46 = por %p44, %p45
    %p47 = scmp.ne.s32.totalorder %s36, %s37
    %p48 = scmp.eq.s32.totalorder %s14, 0
    %p49 = por %p47, %p48
    %p50 = scmp.ne.s32.totalorder %s36, %s37
    %p51 = scmp.eq.s32.totalorder %s15, 1
    %p52 = por %p50, %p51
    %p54 = scmp.ne.s32.totalorder %s37, %s53
    %p55 = scmp.eq.s32.totalorder %s15, 0
    %p56 = por %p54, %p55
    %s58 = sadd.s32 %s57, 1
    %p61 = scmp.eq.s32.totalorder %s9, 1
    %p62 = scmp.ne.s32.totalorder %s57, %s59
    %p63 = scmp.eq.s32.totalorder %s9, 0
    %p64 = por %p62, %p63
    %p65 = scmp.ne.s32.totalorder %s57, %s59
    %p66 = scmp.eq.s32.totalorder %s14, 1
    %p67 = por %p65, %p66
    %p68 = scmp.ne.s32.totalorder %s59, %s60
    %p69 = scmp.eq.s32.totalorder %s14, 0
    %p70 = por %p68, %p69
    %p71 = scmp.ne.s32.totalorder %s59, %s60
    %p72 = scmp.eq.s32.totalorder %s15, 1
    %p73 = por %p71, %p72
    %p75 = scmp.ne.s32.totalorder %s60, %s74
    %p76 = scmp.eq.s32.totalorder %s15, 0
    %p77 = por %p75, %p76
    %s79 = sadd.s32 %s78, 1
    %p82 = scmp.eq.s32.totalorder %s9, 1
    %p83 = scmp.ne.s32.totalorder %s78, %s80
    %p84 = scmp.eq.s32.totalorder %s9, 0
    %p85 = por %p83, %p84
    %p86 = scmp.ne.s32.totalorder %s78, %s80
    %p87 = scmp.eq.s32.totalorder %s14, 1
    %p88 = por %p86, %p87
    %p89 = scmp.ne.s32.totalorder %s80, %s81
    %p90 = scmp.eq.s32.totalorder %s14, 0
    %p91 = por %p89, %p90
    %p92 = scmp.ne.s32.totalorder %s80, %s81
    %p93 = scmp.eq.s32.totalorder %s15, 1
    %p94 = por %p92, %p93
    %p96 = scmp.ne.s32.totalorder %s81, %s95
    %p97 = scmp.eq.s32.totalorder %s15, 0
    %p98 = por %p96, %p97
    %s99 = ssub.s32 %s16, %s28
    %s100 = ssub.s32 %s17, %s24
    %s101 = sor.u32 %s99, %s100
    %p102 = scmp.eq.s32.totalorder %s101, 0
    %s104 = sadd.s32 %s103, 1
    %s105 = scalar_select %p102, %s103, %s104
    %p108 = pneg %p102
    %p109 = scmp.eq.s32.totalorder %s9, 1
    %p110 = por %p108, %p109
    %p111 = scmp.ne.s32.totalorder %s103, %s106
    %p112 = scmp.eq.s32.totalorder %s9, 0
    %p113 = por %p111, %p112
    %p114 = scmp.ne.s32.totalorder %s103, %s106
    %p115 = scmp.eq.s32.totalorder %s14, 1
    %p116 = por %p114, %p115
    %p117 = scmp.ne.s32.totalorder %s106, %s107
    %p118 = scmp.eq.s32.totalorder %s14, 0
    %p119 = por %p117, %p118
    %p120 = scmp.ne.s32.totalorder %s106, %s107
    %p121 = scmp.eq.s32.totalorder %s15, 1
    %p122 = por %p120, %p121
    %p124 = scmp.ne.s32.totalorder %s107, %s123
    %p125 = scmp.eq.s32.totalorder %s15, 0
    %p126 = por %p124, %p125
    %p127 = scmp.le.s32.totalorder 1, %s9
    %p128 = scmp.lt.s32.totalorder %s9, 3
    %p129 = pnand %p127, %p128
    %p130 = pneg %p129
    // Predicated region
    $region9: #{fpn_forward.8} parent=5 // pred_check
      _
    $region10: #{fpn_forward.8} parent=5 // pred_check_branch
      %132 = sbr.rel (%p129) target = $region12
    $region11: #{fpn_forward.8} parent=5 // pred_region
      %s133 = ssub.s32 %s9, 1
      // Predicated region
      $region13: #{fpn_forward.8} parent=11 // pred_check
        %p134 = pneg %p70
      $region14: #{fpn_forward.8} parent=11 // pred_check_branch
        %136 = sbr.rel (%p134) target = $region16
      $region15: #{fpn_forward.8} parent=11 // pred_region
        _
      $region16: #{fpn_forward.8} parent=11 // pred_fallthru
        _
      // Predicated region
      $region17: #{fpn_forward.8} parent=11 // pred_check
        %p137 = pneg %p91
      $region18: #{fpn_forward.8} parent=11 // pred_check_branch
        %139 = sbr.rel (%p137) target = $region20
      $region19: #{fpn_forward.8} parent=11 // pred_region
        _
      $region20: #{fpn_forward.8} parent=11 // pred_fallthru
        _
    $region12: #{fpn_forward.8} parent=5 // pred_fallthru
      _
    %p140 = scmp.lt.s32.totalorder %s9, 2
    // Predicated region
    $region21: #{fpn_forward.8} parent=5 // pred_check
      %p141 = pneg %p140
    $region22: #{fpn_forward.8} parent=5 // pred_check_branch
      %143 = sbr.rel (%p141) target = $region24
    $region23: #{fpn_forward.8} parent=5 // pred_region
      // Predicated region
      $region25: #{fpn_forward.8} parent=23 // pred_check
        %p144 = pneg %p43
      $region26: #{fpn_forward.8} parent=23 // pred_check_branch
        %146 = sbr.rel (%p144) target = $region28
      $region27: #{fpn_forward.8} parent=23 // pred_region
        %p147 = scmp.lt.s32.totalorder %s16, 1
        %s148 = scalar_select %p147, %s16, 1
        %p149 = scmp.lt.s32.totalorder %s17, 0
        %s150 = scalar_select %p149, %s17, 0
        %s151 = smul.addr %s148, 8
        %s152 = sadd.s32 %s150, %s151
        %s153 = smul.addr %s152, 8
        %s154 = scalar_lea.vmem %s0, %s153
      $region28: #{fpn_forward.8} parent=23 // pred_fallthru
        _
    $region24: #{fpn_forward.8} parent=5 // pred_fallthru
      _
    %p155 = scmp.le.s32.totalorder 1, %s9
    %p156 = scmp.lt.s32.totalorder %s9, 3
    %p157 = pnand %p155, %p156
    %p158 = pneg %p157
    // Predicated region
    $region29: #{fpn_forward.8} parent=5 // pred_check
      _
    $region30: #{fpn_forward.8} parent=5 // pred_check_branch
      %160 = sbr.rel (%p157) target = $region32
    $region31: #{fpn_forward.8} parent=5 // pred_region
      %s161 = ssub.s32 %s9, 1
      %p162 = scmp.lt.s32.totalorder %s18, 1
      %s163 = scalar_select %p162, %s18, 1
      %p164 = scmp.lt.s32.totalorder %s19, 0
      %s165 = scalar_select %p164, %s19, 0
      %s166 = smul.addr %s163, 8
      %s167 = sadd.s32 %s165, %s166
      %s168 = smul.addr %s167, 8
      %s169 = scalar_lea.vmem %s0, %s168
      %p170 = pneg %p49
      %p171 = pneg %p46
      %p172 = pneg %p70
      %p173 = pneg %p67
      %p174 = pneg %p91
      %p175 = pneg %p88
      %p176 = pneg %p119
      %p177 = pneg %p116
      %p178 = scmp.lt.s32.totalorder %s18, 1
      %s179 = scalar_select %p178, %s18, 1
      %p180 = scmp.lt.s32.totalorder %s19, 0
      %s181 = scalar_select %p180, %s19, 0
      %s182 = smul.addr %s179, 2
      %s183 = sadd.s32 %s181, %s182
      %s184 = smul.addr %s183, 8
      %s185 = scalar_lea.vmem %s3, %s184
      %p186 = scmp.lt.s32.totalorder %s18, 1
      %s187 = scalar_select %p186, %s18, 1
      %p188 = scmp.lt.s32.totalorder %s19, 0
      %s189 = scalar_select %p188, %s19, 0
      %s190 = smul.addr %s187, 8
      %s191 = sadd.s32 %s189, %s190
      %s192 = smul.addr %s191, 8
      %s193 = scalar_lea.vmem %s0, %s192
      %p194 = scmp.lt.s32.totalorder %s18, 1
      %s195 = scalar_select %p194, %s18, 1
      %p196 = scmp.lt.s32.totalorder %s19, 0
      %s197 = scalar_select %p196, %s19, 0
      %s198 = smul.addr %s195, 2
      %s199 = sadd.s32 %s197, %s198
      %s200 = smul.addr %s199, 8
      %s201 = scalar_lea.vmem %s3, %s200
      %v203 = vld [vmem:[%s193] sm:$0xff]
      %v204 = vld [vmem:[%s193 + $0x8] sm:$0xff]
      %v205 = vld [vmem:[%s193 + $0x10] sm:$0xff]
      %v206 = vld [vmem:[%s193 + $0x18] sm:$0xff]
      %v207 = vld [vmem:[%s193 + $0x20] sm:$0xff]
      %v208 = vld [vmem:[%s193 + $0x28] sm:$0xff]
      %v209 = vld [vmem:[%s193 + $0x30] sm:$0xff]
      %v210 = vld [vmem:[%s193 + $0x38] sm:$0xff]
      %v211 = vpack.c.bf16 %v204, %v203
      %v212 = vpack.c.bf16 %v206, %v205
      %v213 = vpack.c.bf16 %v208, %v207
      %v214 = vpack.c.bf16 %v210, %v209
      %v215 = vld [vmem:[%s1] sm:$0xf]
      %v216 = vld [vmem:[%s1 + $0x4] sm:$0xf]
      %v217 = vld [vmem:[%s2] sm:$0xff]
      %v218 = vld [vmem:[%s2 + $0x8] sm:$0xff]
      %220 = vset.pattern.permute.xlu0 0
      %221 = vperm.xlu0 %220, %v217
      %v222 = vpop.permute.xlu0 %221
      %225 = vset.pattern.permute.xlu0 0
      %226 = vperm.xlu0 %225, %v218
      %v227 = vpop.permute.xlu0 %226
      %v231 = vunpack.c.l.b16 %v215
      %v232 = vunpack.c.l.b16 %v216
      %v233 = vpack.c.b16 %v232, %v231
      %vm234 = vcmask 523264
      %v236 = vsel %vm234, %v233, 0
      %238 = vmatprep.subr.bf16.mxu0 0
      %239 = vmatpush1.bf16.msra.mxu0 %v211
      %240 = vmatprep.subr.bf16.mxu0 0
      %241 = vmatpush1.bf16.msra.mxu0 %v212
      %242 = vmatprep.subr.bf16.mxu0 0
      %243 = vmatpush1.bf16.msra.mxu0 %v213
      %244 = vmatprep.subr.bf16.mxu0 0
      %245 = vmatpush1.bf16.msra.mxu0 %v214
      %246 = vmatprep.subr.bf16.mxu0 0
      %247 = vmatpush1.bf16.msra.mxu0 0
      %248 = vmatprep.subr.bf16.mxu0 0
      %249 = vmatpush1.bf16.msra.mxu0 0
      %250 = vmatprep.subr.bf16.mxu0 0
      %251 = vmatpush1.bf16.msra.mxu0 0
      %252 = vmatprep.subr.bf16.mxu0 0
      %253 = vmatpush1.bf16.msra.mxu0 0
      %254 = vmatprep.subr.bf16.mxu0 0
      %255 = vmatpush1.bf16.msra.mxu0 0
      %256 = vmatprep.subr.bf16.mxu0 0
      %257 = vmatpush1.bf16.msra.mxu0 0
      %258 = vmatprep.subr.bf16.mxu0 0
      %259 = vmatpush1.bf16.msra.mxu0 0
      %260 = vmatprep.subr.bf16.mxu0 0
      %261 = vmatpush1.bf16.msra.mxu0 0
      %262 = vmatprep.subr.bf16.mxu0 0
      %263 = vmatpush1.bf16.msra.mxu0 0
      %264 = vmatprep.subr.bf16.mxu0 0
      %265 = vmatpush1.bf16.msra.mxu0 0
      %266 = vmatprep.subr.bf16.mxu0 0
      %267 = vmatpush1.bf16.msra.mxu0 0
      %268 = vmatprep.subr.bf16.mxu0 0
      %269 = vmatpush1.bf16.msra.mxu0 0
      %270 = vmatprep.mubr.bf16.mxu0 0
      %271 = vmatmul.mubr.bf16.gmra.mrb[0].mxu0 %v236
      %v272 = vpop.f32.mrb[0].mxu0
      %v273 = vadd.f32 %v222, %v272
      %v274 = vpop.f32.mrb[0].mxu0
      %v275 = vpop.f32.mrb[0].mxu0
      %v276 = vadd.f32 %v227, %v275
      %v277 = vpop.f32.mrb[0].mxu0
      %278 = vdwg.mxu0
      %vm279 = vcmask 31744
      %280 = vst.msk [vmem:[%s201] sm:$0xff] %vm279, %v273
      %281 = vst.msk [vmem:[%s201 + $0x8] sm:$0xff] %vm279, %v276
      %p282 = scmp.lt.s32.totalorder %s18, 1
      %s283 = scalar_select %p282, %s18, 1
      %p284 = scmp.lt.s32.totalorder %s19, 0
      %s285 = scalar_select %p284, %s19, 0
      %s286 = smul.addr %s283, 2
      %s287 = sadd.s32 %s285, %s286
      %s288 = smul.addr %s287, 8
      %s289 = scalar_lea.vmem %s3, %s288
      // Predicated region
      $region33: #{fpn_forward.8} parent=31 // pred_check
        %p290 = pneg %p116
      $region34: #{fpn_forward.8} parent=31 // pred_check_branch
        %292 = sbr.rel (%p290) target = $region36
      $region35: #{fpn_forward.8} parent=31 // pred_region
        _
      $region36: #{fpn_forward.8} parent=31 // pred_fallthru
        _
    $region32: #{fpn_forward.8} parent=5 // pred_fallthru
      _
    %p293 = scmp.le.s32.totalorder 2, %s9
    // Predicated region
    $region37: #{fpn_forward.8} parent=5 // pred_check
      %p294 = pneg %p293
    $region38: #{fpn_forward.8} parent=5 // pred_check_branch
      %296 = sbr.rel (%p294) target = $region40
    $region39: #{fpn_forward.8} parent=5 // pred_region
      %s297 = ssub.s32 %s9, 2
      // Predicated region
      $region41: #{fpn_forward.8} parent=39 // pred_check
        %p298 = pneg %p122
      $region42: #{fpn_forward.8} parent=39 // pred_check_branch
        %300 = sbr.rel (%p298) target = $region44
      $region43: #{fpn_forward.8} parent=39 // pred_region
        %p301 = scmp.lt.s32.totalorder %s20, 1
        %s302 = scalar_select %p301, %s20, 1
        %p303 = scmp.lt.s32.totalorder %s21, 0
        %s304 = scalar_select %p303, %s21, 0
        %s305 = smul.addr %s302, 2
        %s306 = sadd.s32 %s304, %s305
        %s307 = smul.addr %s306, 8
        %s308 = scalar_lea.vmem %s3, %s307
      $region44: #{fpn_forward.8} parent=39 // pred_fallthru
        _
    $region40: #{fpn_forward.8} parent=5 // pred_fallthru
      _
  $region6: #{fpn_forward.8} parent=0 // loop_footer
    %s13 = sadd.s32 1, %s9
  $region7: #{fpn_forward.8} parent=0 // loop_footer_branch
    %8 = sbr.rel target = $region3
  $region8: #{fpn_forward.8} parent=0 // loop_exit
    _

// kernel: fpn_forward.10
$region0: #{fpn_forward.10}
  #allocation0 [shape = 'u32[]', space=smem, size = 0x4, offset = 0x4, fixed_abs, tag = 'smem constant byte address 0x4 - core index']
  #allocation1 [shape = 'u32[144,128]{1,0:T(1,128)}', space=vmem, size = 0x12000, scoped, tag = 'internal scratch']
  %s0 = inlined_call_operand.vmem [shape: f32[2,16,64], index: 0, kind: input, shape index: {}]
  %s1 = inlined_call_operand.vmem [shape: bf16[16,16], index: 1, kind: input, shape index: {}]
  %s2 = inlined_call_operand.vmem [shape: f32[16,1], index: 2, kind: input, shape index: {}]
  %s3 = inlined_call_operand.vmem [shape: f32[2,16,16], index: 3, kind: input, shape index: {}]
  %s4 = inlined_call_operand.vmem [shape: f32[16,64], index: 4, kind: input, shape index: {}]
  %s5 = inlined_call_operand.vmem [shape: f32[2,16,64], index: 5, kind: output, shape index: {}]
  %s6 = sld [smem:[#allocation0]]
  $region53: #{fpn_forward.10} parent=0
    _
  %s8 = ssub.s32 1, %s6
  %s9 = scalar_select 0, %s8, %s6
  loop: start=0, step=1, limit=4
  $region2: #{fpn_forward.10} parent=0 // loop_pre_header
    _
  $region3: #{fpn_forward.10} parent=0 // loop_header
    %s11 = sphi 0, %s15
    %p12 = scmp.ge.s32.totalorder %s11, 4
    %s18 = sphi 0, %s30
    %s19 = sphi 0, %s26
    %s20 = sphi 0, %s18
    %s21 = sphi 0, %s19
    %s22 = sphi 0, %s20
    %s23 = sphi 0, %s21
    %s35 = sphi 0, %s37
    %s38 = sphi 0, %s35
    %s39 = sphi 0, %s38
    %s55 = sphi 0, %s39
    %s59 = sphi 0, %s59
    %s61 = sphi 0, %s59
    %s62 = sphi 0, %s61
    %s76 = sphi 0, %s62
    %s80 = sphi 0, %s80
    %s82 = sphi 0, %s80
    %s83 = sphi 0, %s82
    %s97 = sphi 0, %s83
    %s105 = sphi 0, %s107
    %s108 = sphi 0, %s105
    %s109 = sphi 0, %s108
    %s125 = sphi 0, %s109
    %s129 = sphi 0, %s129
    %s131 = sphi 0, %s129
    %s132 = sphi 0, %s131
    %s146 = sphi 0, %s132
    %s154 = sphi 0, %s156
    %s157 = sphi 0, %s154
    %s158 = sphi 0, %s157
    %s174 = sphi 0, %s158
  $region4: #{fpn_forward.10} parent=0 // loop_header_branch
    %14 = sbr.rel (%p12) target = $region8
  $region5: #{fpn_forward.10} parent=0 // loop_body
    %s16 = ssub.s32 %s11, 1
    %s17 = ssub.s32 %s11, 2
    %s24 = sadd.s32 1, %s19
    %p25 = scmp.ge.s32.totalorder %s24, 1
    %s26 = scalar_select %p25, 0, %s24
    %s27 = sadd.s32 1, %s18
    %s28 = scalar_select %p25, %s27, %s18
    %p29 = scmp.ge.s32.totalorder %s28, 2
    %s30 = scalar_select %p29, 0, %s28
    %s31 = ssub.s32 %s18, %s30
    %s32 = ssub.s32 %s19, %s26
    %s33 = sor.u32 %s31, %s32
    %p34 = scmp.eq.s32.totalorder %s33, 0
    %s36 = sadd.s32 %s35, 1
    %s37 = scalar_select %p34, %s35, %s36
    %p40 = pneg %p34
    %p41 = scmp.eq.s32.totalorder %s11, 1
    %p42 = por %p40, %p41
    %p43 = scmp.ne.s32.totalorder %s35, %s38
    %p44 = scmp.eq.s32.totalorder %s11, 0
    %p45 = por %p43, %p44
    %p46 = scmp.ne.s32.totalorder %s35, %s38
    %p47 = scmp.eq.s32.totalorder %s16, 1
    %p48 = por %p46, %p47
    %p49 = scmp.ne.s32.totalorder %s38, %s39
    %p50 = scmp.eq.s32.totalorder %s16, 0
    %p51 = por %p49, %p50
    %p52 = scmp.ne.s32.totalorder %s38, %s39
    %p53 = scmp.eq.s32.totalorder %s17, 1
    %p54 = por %p52, %p53
    %p56 = scmp.ne.s32.totalorder %s39, %s55
    %p57 = scmp.eq.s32.totalorder %s17, 0
    %p58 = por %p56, %p57
    %s60 = sadd.s32 %s59, 1
    %p63 = scmp.eq.s32.totalorder %s11, 1
    %p64 = scmp.ne.s32.totalorder %s59, %s61
    %p65 = scmp.eq.s32.totalorder %s11, 0
    %p66 = por %p64, %p65
    %p67 = scmp.ne.s32.totalorder %s59, %s61
    %p68 = scmp.eq.s32.totalorder %s16, 1
    %p69 = por %p67, %p68
    %p70 = scmp.ne.s32.totalorder %s61, %s62
    %p71 = scmp.eq.s32.totalorder %s16, 0
    %p72 = por %p70, %p71
    %p73 = scmp.ne.s32.totalorder %s61, %s62
    %p74 = scmp.eq.s32.totalorder %s17, 1
    %p75 = por %p73, %p74
    %p77 = scmp.ne.s32.totalorder %s62, %s76
    %p78 = scmp.eq.s32.totalorder %s17, 0
    %p79 = por %p77, %p78
    %s81 = sadd.s32 %s80, 1
    %p84 = scmp.eq.s32.totalorder %s11, 1
    %p85 = scmp.ne.s32.totalorder %s80, %s82
    %p86 = scmp.eq.s32.totalorder %s11, 0
    %p87 = por %p85, %p86
    %p88 = scmp.ne.s32.totalorder %s80, %s82
    %p89 = scmp.eq.s32.totalorder %s16, 1
    %p90 = por %p88, %p89
    %p91 = scmp.ne.s32.totalorder %s82, %s83
    %p92 = scmp.eq.s32.totalorder %s16, 0
    %p93 = por %p91, %p92
    %p94 = scmp.ne.s32.totalorder %s82, %s83
    %p95 = scmp.eq.s32.totalorder %s17, 1
    %p96 = por %p94, %p95
    %p98 = scmp.ne.s32.totalorder %s83, %s97
    %p99 = scmp.eq.s32.totalorder %s17, 0
    %p100 = por %p98, %p99
    %s101 = ssub.s32 %s18, %s30
    %s102 = ssub.s32 %s19, %s26
    %s103 = sor.u32 %s101, %s102
    %p104 = scmp.eq.s32.totalorder %s103, 0
    %s106 = sadd.s32 %s105, 1
    %s107 = scalar_select %p104, %s105, %s106
    %p110 = pneg %p104
    %p111 = scmp.eq.s32.totalorder %s11, 1
    %p112 = por %p110, %p111
    %p113 = scmp.ne.s32.totalorder %s105, %s108
    %p114 = scmp.eq.s32.totalorder %s11, 0
    %p115 = por %p113, %p114
    %p116 = scmp.ne.s32.totalorder %s105, %s108
    %p117 = scmp.eq.s32.totalorder %s16, 1
    %p118 = por %p116, %p117
    %p119 = scmp.ne.s32.totalorder %s108, %s109
    %p120 = scmp.eq.s32.totalorder %s16, 0
    %p121 = por %p119, %p120
    %p122 = scmp.ne.s32.totalorder %s108, %s109
    %p123 = scmp.eq.s32.totalorder %s17, 1
    %p124 = por %p122, %p123
    %p126 = scmp.ne.s32.totalorder %s109, %s125
    %p127 = scmp.eq.s32.totalorder %s17, 0
    %p128 = por %p126, %p127
    %s130 = sadd.s32 %s129, 1
    %p133 = scmp.eq.s32.totalorder %s11, 1
    %p134 = scmp.ne.s32.totalorder %s129, %s131
    %p135 = scmp.eq.s32.totalorder %s11, 0
    %p136 = por %p134, %p135
    %p137 = scmp.ne.s32.totalorder %s129, %s131
    %p138 = scmp.eq.s32.totalorder %s16, 1
    %p139 = por %p137, %p138
    %p140 = scmp.ne.s32.totalorder %s131, %s132
    %p141 = scmp.eq.s32.totalorder %s16, 0
    %p142 = por %p140, %p141
    %p143 = scmp.ne.s32.totalorder %s131, %s132
    %p144 = scmp.eq.s32.totalorder %s17, 1
    %p145 = por %p143, %p144
    %p147 = scmp.ne.s32.totalorder %s132, %s146
    %p148 = scmp.eq.s32.totalorder %s17, 0
    %p149 = por %p147, %p148
    %s150 = ssub.s32 %s18, %s30
    %s151 = ssub.s32 %s19, %s26
    %s152 = sor.u32 %s150, %s151
    %p153 = scmp.eq.s32.totalorder %s152, 0
    %s155 = sadd.s32 %s154, 1
    %s156 = scalar_select %p153, %s154, %s155
    %p159 = pneg %p153
    %p160 = scmp.eq.s32.totalorder %s11, 1
    %p161 = por %p159, %p160
    %p162 = scmp.ne.s32.totalorder %s154, %s157
    %p163 = scmp.eq.s32.totalorder %s11, 0
    %p164 = por %p162, %p163
    %p165 = scmp.ne.s32.totalorder %s154, %s157
    %p166 = scmp.eq.s32.totalorder %s16, 1
    %p167 = por %p165, %p166
    %p168 = scmp.ne.s32.totalorder %s157, %s158
    %p169 = scmp.eq.s32.totalorder %s16, 0
    %p170 = por %p168, %p169
    %p171 = scmp.ne.s32.totalorder %s157, %s158
    %p172 = scmp.eq.s32.totalorder %s17, 1
    %p173 = por %p171, %p172
    %p175 = scmp.ne.s32.totalorder %s158, %s174
    %p176 = scmp.eq.s32.totalorder %s17, 0
    %p177 = por %p175, %p176
    %p178 = scmp.le.s32.totalorder 1, %s11
    %p179 = scmp.lt.s32.totalorder %s11, 3
    %p180 = pnand %p178, %p179
    %p181 = pneg %p180
    // Predicated region
    $region9: #{fpn_forward.10} parent=5 // pred_check
      _
    $region10: #{fpn_forward.10} parent=5 // pred_check_branch
      %183 = sbr.rel (%p180) target = $region12
    $region11: #{fpn_forward.10} parent=5 // pred_region
      %s184 = ssub.s32 %s11, 1
      // Predicated region
      $region13: #{fpn_forward.10} parent=11 // pred_check
        %p185 = pneg %p72
      $region14: #{fpn_forward.10} parent=11 // pred_check_branch
        %187 = sbr.rel (%p185) target = $region16
      $region15: #{fpn_forward.10} parent=11 // pred_region
        _
      $region16: #{fpn_forward.10} parent=11 // pred_fallthru
        _
      // Predicated region
      $region17: #{fpn_forward.10} parent=11 // pred_check
        %p188 = pneg %p93
      $region18: #{fpn_forward.10} parent=11 // pred_check_branch
        %190 = sbr.rel (%p188) target = $region20
      $region19: #{fpn_forward.10} parent=11 // pred_region
        _
      $region20: #{fpn_forward.10} parent=11 // pred_fallthru
        _
      // Predicated region
      $region21: #{fpn_forward.10} parent=11 // pred_check
        %p191 = pneg %p142
      $region22: #{fpn_forward.10} parent=11 // pred_check_branch
        %193 = sbr.rel (%p191) target = $region24
      $region23: #{fpn_forward.10} parent=11 // pred_region
        _
      $region24: #{fpn_forward.10} parent=11 // pred_fallthru
        _
    $region12: #{fpn_forward.10} parent=5 // pred_fallthru
      _
    %p194 = scmp.lt.s32.totalorder %s11, 2
    // Predicated region
    $region25: #{fpn_forward.10} parent=5 // pred_check
      %p195 = pneg %p194
    $region26: #{fpn_forward.10} parent=5 // pred_check_branch
      %197 = sbr.rel (%p195) target = $region28
    $region27: #{fpn_forward.10} parent=5 // pred_region
      // Predicated region
      $region29: #{fpn_forward.10} parent=27 // pred_check
        %p198 = pneg %p45
      $region30: #{fpn_forward.10} parent=27 // pred_check_branch
        %200 = sbr.rel (%p198) target = $region32
      $region31: #{fpn_forward.10} parent=27 // pred_region
        %p201 = scmp.lt.s32.totalorder %s18, 1
        %s202 = scalar_select %p201, %s18, 1
        %p203 = scmp.lt.s32.totalorder %s19, 0
        %s204 = scalar_select %p203, %s19, 0
        %s205 = smul.addr %s202, 2
        %s206 = sadd.s32 %s204, %s205
        %s207 = smul.addr %s206, 8
        %s208 = scalar_lea.vmem %s0, %s207
      $region32: #{fpn_forward.10} parent=27 // pred_fallthru
        _
      // Predicated region
      $region33: #{fpn_forward.10} parent=27 // pred_check
        %p209 = pneg %p115
      $region34: #{fpn_forward.10} parent=27 // pred_check_branch
        %211 = sbr.rel (%p209) target = $region36
      $region35: #{fpn_forward.10} parent=27 // pred_region
        %p212 = scmp.lt.s32.totalorder %s18, 1
        %s213 = scalar_select %p212, %s18, 1
        %p214 = scmp.lt.s32.totalorder %s19, 0
        %s215 = scalar_select %p214, %s19, 0
        %s216 = smul.addr %s213, 2
        %s217 = sadd.s32 %s215, %s216
        %s218 = smul.addr %s217, 8
        %s219 = scalar_lea.vmem %s3, %s218
      $region36: #{fpn_forward.10} parent=27 // pred_fallthru
        _
    $region28: #{fpn_forward.10} parent=5 // pred_fallthru
      _
    %p220 = scmp.le.s32.totalorder 1, %s11
    %p221 = scmp.lt.s32.totalorder %s11, 3
    %p222 = pnand %p220, %p221
    %p223 = pneg %p222
    // Predicated region
    $region37: #{fpn_forward.10} parent=5 // pred_check
      _
    $region38: #{fpn_forward.10} parent=5 // pred_check_branch
      %225 = sbr.rel (%p222) target = $region40
    $region39: #{fpn_forward.10} parent=5 // pred_region
      %s226 = ssub.s32 %s11, 1
      %p227 = scmp.lt.s32.totalorder %s20, 1
      %s228 = scalar_select %p227, %s20, 1
      %p229 = scmp.lt.s32.totalorder %s21, 0
      %s230 = scalar_select %p229, %s21, 0
      %s231 = smul.addr %s228, 2
      %s232 = sadd.s32 %s230, %s231
      %s233 = smul.addr %s232, 8
      %s234 = scalar_lea.vmem %s0, %s233
      %p235 = pneg %p51
      %p236 = pneg %p48
      %p237 = pneg %p72
      %p238 = pneg %p69
      %p239 = pneg %p93
      %p240 = pneg %p90
      %p241 = scmp.lt.s32.totalorder %s20, 1
      %s242 = scalar_select %p241, %s20, 1
      %p243 = scmp.lt.s32.totalorder %s21, 0
      %s244 = scalar_select %p243, %s21, 0
      %s245 = smul.addr %s242, 2
      %s246 = sadd.s32 %s244, %s245
      %s247 = smul.addr %s246, 8
      %s248 = scalar_lea.vmem %s3, %s247
      %p249 = pneg %p121
      %p250 = pneg %p118
      %p251 = pneg %p142
      %p252 = pneg %p139
      %p253 = pneg %p170
      %p254 = pneg %p167
      %p255 = scmp.lt.s32.totalorder %s20, 1
      %s256 = scalar_select %p255, %s20, 1
      %p257 = scmp.lt.s32.totalorder %s21, 0
      %s258 = scalar_select %p257, %s21, 0
      %s259 = smul.addr %s256, 2
      %s260 = sadd.s32 %s258, %s259
      %s261 = smul.addr %s260, 8
      %s262 = scalar_lea.vmem %s5, %s261
      %p263 = scmp.lt.s32.totalorder %s20, 1
      %s264 = scalar_select %p263, %s20, 1
      %p265 = scmp.lt.s32.totalorder %s21, 0
      %s266 = scalar_select %p265, %s21, 0
      %s267 = smul.addr %s264, 2
      %s268 = sadd.s32 %s266, %s267
      %s269 = smul.addr %s268, 8
      %s270 = scalar_lea.vmem %s0, %s269
      %p271 = scmp.lt.s32.totalorder %s20, 1
      %s272 = scalar_select %p271, %s20, 1
      %p273 = scmp.lt.s32.totalorder %s21, 0
      %s274 = scalar_select %p273, %s21, 0
      %s275 = smul.addr %s272, 2
      %s276 = sadd.s32 %s274, %s275
      %s277 = smul.addr %s276, 8
      %s278 = scalar_lea.vmem %s3, %s277
      %p279 = scmp.lt.s32.totalorder %s20, 1
      %s280 = scalar_select %p279, %s20, 1
      %p281 = scmp.lt.s32.totalorder %s21, 0
      %s282 = scalar_select %p281, %s21, 0
      %s283 = smul.addr %s280, 2
      %s284 = sadd.s32 %s282, %s283
      %s285 = smul.addr %s284, 8
      %s286 = scalar_lea.vmem %s5, %s285
      %v288 = vld [vmem:[%s270] sm:$0xff]
      %v289 = vld [vmem:[%s270 + $0x8] sm:$0xff]
      %v290 = vpack.c.bf16 %v289, %v288
      %v291 = vld [vmem:[%s1] sm:$0xf]
      %v292 = vld [vmem:[%s1 + $0x4] sm:$0xf]
      %v293 = vld [vmem:[%s278] sm:$0xff]
      %v294 = vld [vmem:[%s278 + $0x8] sm:$0xff]
      %v295 = vld [vmem:[%s4] sm:$0xff]
      %v296 = vld [vmem:[%s4 + $0x8] sm:$0xff]
      %vm297 = vcmask 130048
      %v299 = vsel %vm297, %v293, 0
      %v302 = vsel %vm297, %v294, 0
      %304 = vmatprep.subr.mxu0 0.0
      %305 = vmatpush1.msra.mxu0 %v295
      %306 = vmatprep.subr.mxu0 0.0
      %307 = vmatpush1.msra.mxu0 %v296
      %308 = vmatprep.subr.mxu0 0.0
      %309 = vmatpush1.msra.mxu0 0.0
      %310 = vmatprep.subr.mxu0 0.0
      %311 = vmatpush1.msra.mxu0 0.0
      %312 = vmatprep.subr.mxu0 0.0
      %313 = vmatpush1.msra.mxu0 0.0
      %314 = vmatprep.subr.mxu0 0.0
      %315 = vmatpush1.msra.mxu0 0.0
      %316 = vmatprep.subr.mxu0 0.0
      %317 = vmatpush1.msra.mxu0 0.0
      %318 = vmatprep.subr.mxu0 0.0
      %319 = vmatpush1.msra.mxu0 0.0
      %320 = vmatprep.subr.mxu0 0.0
      %321 = vmatpush1.msra.mxu0 0.0
      %322 = vmatprep.subr.mxu0 0.0
      %323 = vmatpush1.msra.mxu0 0.0
      %324 = vmatprep.subr.mxu0 0.0
      %325 = vmatpush1.msra.mxu0 0.0
      %326 = vmatprep.subr.mxu0 0.0
      %327 = vmatpush1.msra.mxu0 0.0
      %328 = vmatprep.subr.mxu0 0.0
      %329 = vmatpush1.msra.mxu0 0.0
      %330 = vmatprep.subr.mxu0 0.0
      %331 = vmatpush1.msra.mxu0 0.0
      %332 = vmatprep.subr.mxu0 0.0
      %333 = vmatpush1.msra.mxu0 0.0
      %334 = vmatprep.subr.mxu0 0.0
      %335 = vmatpush1.msra.mxu0 0.0
      %336 = vmatprep.subr.mxu0 0.0
      %337 = vmatpush1.msra.mxu0 0.0
      %338 = vmatprep.subr.mxu0 0.0
      %339 = vmatpush1.msra.mxu0 0.0
      %340 = vmatprep.subr.mxu0 0.0
      %341 = vmatpush1.msra.mxu0 0.0
      %342 = vmatprep.subr.mxu0 0.0
      %343 = vmatpush1.msra.mxu0 0.0
      %344 = vmatprep.subr.mxu0 0.0
      %345 = vmatpush1.msra.mxu0 0.0
      %346 = vmatprep.subr.mxu0 0.0
      %347 = vmatpush1.msra.mxu0 0.0
      %348 = vmatprep.subr.mxu0 0.0
      %349 = vmatpush1.msra.mxu0 0.0
      %350 = vmatprep.subr.mxu0 0.0
      %351 = vmatpush1.msra.mxu0 0.0
      %352 = vmatprep.subr.mxu0 0.0
      %353 = vmatpush1.msra.mxu0 0.0
      %354 = vmatprep.subr.mxu0 0.0
      %355 = vmatpush1.msra.mxu0 0.0
      %356 = vmatprep.subr.mxu0 0.0
      %357 = vmatpush1.msra.mxu0 0.0
      %358 = vmatprep.subr.mxu0 0.0
      %359 = vmatpush1.msra.mxu0 0.0
      %360 = vmatprep.subr.mxu0 0.0
      %361 = vmatpush1.msra.mxu0 0.0
      %362 = vmatprep.subr.mxu0 0.0
      %363 = vmatpush1.msra.mxu0 0.0
      %364 = vmatprep.subr.mxu0 0.0
      %365 = vmatpush1.msra.mxu0 0.0
      %366 = vmatprep.subr.mxu0 0.0
      %367 = vmatpush1.msra.mxu0 0.0
      %368 = vmatprep.mubr.f32.mxu0 0.0
      %369 = vmatmul.mubr.f32.gmra.mrb[0].mxu0 %v299
      %v370 = vpop.f32.mrb[0].mxu0
      %v371 = vadd.f32 0.0, %v370
      %v372 = vpop.f32.mrb[0].mxu0
      %373 = vmatprep.mubr.f32.mxu0 0.0
      %374 = vmatmul.mubr.f32.gmra.mrb[0].mxu0 %v302
      %v375 = vpop.f32.mrb[0].mxu0
      %v376 = vadd.f32 0.0, %v375
      %v377 = vpop.f32.mrb[0].mxu0
      %378 = vdwg.mxu0
      %v379 = vld [vmem:[%s2] sm:$0xff]
      %v380 = vld [vmem:[%s2 + $0x8] sm:$0xff]
      %382 = vset.pattern.permute.xlu0 0
      %383 = vperm.xlu0 %382, %v379
      %v384 = vpop.permute.xlu0 %383
      %387 = vset.pattern.permute.xlu0 0
      %388 = vperm.xlu0 %387, %v380
      %v389 = vpop.permute.xlu0 %388
      %v393 = vunpack.c.l.b16 %v291
      %v394 = vunpack.c.l.b16 %v292
      %v395 = vpack.c.b16 %v394, %v393
      %v397 = vsel %vm297, %v395, 0
      %399 = vmatprep.subr.bf16.mxu0 0
      %400 = vmatpush1.bf16.msra.mxu0 %v290
      %401 = vmatprep.subr.bf16.mxu0 0
      %402 = vmatpush1.bf16.msra.mxu0 0
      %403 = vmatprep.subr.bf16.mxu0 0
      %404 = vmatpush1.bf16.msra.mxu0 0
      %405 = vmatprep.subr.bf16.mxu0 0
      %406 = vmatpush1.bf16.msra.mxu0 0
      %407 = vmatprep.subr.bf16.mxu0 0
      %408 = vmatpush1.bf16.msra.mxu0 0
      %409 = vmatprep.subr.bf16.mxu0 0
      %410 = vmatpush1.bf16.msra.mxu0 0
      %411 = vmatprep.subr.bf16.mxu0 0
      %412 = vmatpush1.bf16.msra.mxu0 0
      %413 = vmatprep.subr.bf16.mxu0 0
      %414 = vmatpush1.bf16.msra.mxu0 0
      %415 = vmatprep.subr.bf16.mxu0 0
      %416 = vmatpush1.bf16.msra.mxu0 0
      %417 = vmatprep.subr.bf16.mxu0 0
      %418 = vmatpush1.bf16.msra.mxu0 0
      %419 = vmatprep.subr.bf16.mxu0 0
      %420 = vmatpush1.bf16.msra.mxu0 0
      %421 = vmatprep.subr.bf16.mxu0 0
      %422 = vmatpush1.bf16.msra.mxu0 0
      %423 = vmatprep.subr.bf16.mxu0 0
      %424 = vmatpush1.bf16.msra.mxu0 0
      %425 = vmatprep.subr.bf16.mxu0 0
      %426 = vmatpush1.bf16.msra.mxu0 0
      %427 = vmatprep.subr.bf16.mxu0 0
      %428 = vmatpush1.bf16.msra.mxu0 0
      %429 = vmatprep.subr.bf16.mxu0 0
      %430 = vmatpush1.bf16.msra.mxu0 0
      %431 = vmatprep.mubr.bf16.mxu0 0
      %432 = vmatmul.mubr.bf16.gmra.mrb[0].mxu0 %v397
      %v433 = vpop.f32.mrb[0].mxu0
      %v434 = vadd.f32 %v384, %v433
      %v435 = vpop.f32.mrb[0].mxu0
      %v436 = vpop.f32.mrb[0].mxu0
      %v437 = vadd.f32 %v389, %v436
      %v438 = vpop.f32.mrb[0].mxu0
      %439 = vdwg.mxu0
      %v440 = vadd.f32 %v434, %v371
      %v441 = vadd.f32 %v437, %v376
      %vm442 = vcmask 523264
      %443 = vst.msk [vmem:[%s286] sm:$0xff] %vm442, %v440
      %444 = vst.msk [vmem:[%s286 + $0x8] sm:$0xff] %vm442, %v441
      %p445 = scmp.lt.s32.totalorder %s20, 1
      %s446 = scalar_select %p445, %s20, 1
      %p447 = scmp.lt.s32.totalorder %s21, 0
      %s448 = scalar_select %p447, %s21, 0
      %s449 = smul.addr %s446, 2
      %s450 = sadd.s32 %s448, %s449
      %s451 = smul.addr %s450, 8
      %s452 = scalar_lea.vmem %s5, %s451
      // Predicated region
      $region41: #{fpn_forward.10} parent=39 // pred_check
        %p453 = pneg %p167
      $region42: #{fpn_forward.10} parent=39 // pred_check_branch
        %455 = sbr.rel (%p453) target = $region44
      $region43: #{fpn_forward.10} parent=39 // pred_region
        _
      $region44: #{fpn_forward.10} parent=39 // pred_fallthru
        _
    $region40: #{fpn_forward.10} parent=5 // pred_fallthru
      _
    %p456 = scmp.le.s32.totalorder 2, %s11
    // Predicated region
    $region45: #{fpn_forward.10} parent=5 // pred_check
      %p457 = pneg %p456
    $region46: #{fpn_forward.10} parent=5 // pred_check_branch
      %459 = sbr.rel (%p457) target = $region48
    $region47: #{fpn_forward.10} parent=5 // pred_region
      %s460 = ssub.s32 %s11, 2
      // Predicated region
      $region49: #{fpn_forward.10} parent=47 // pred_check
        %p461 = pneg %p173
      $region50: #{fpn_forward.10} parent=47 // pred_check_branch
        %463 = sbr.rel (%p461) target = $region52
      $region51: #{fpn_forward.10} parent=47 // pred_region
        %p464 = scmp.lt.s32.totalorder %s22, 1
        %s465 = scalar_select %p464, %s22, 1
        %p466 = scmp.lt.s32.totalorder %s23, 0
        %s467 = scalar_select %p466, %s23, 0
        %s468 = smul.addr %s465, 2
        %s469 = sadd.s32 %s467, %s468
        %s470 = smul.addr %s469, 8
        %s471 = scalar_lea.vmem %s5, %s470
      $region52: #{fpn_forward.10} parent=47 // pred_fallthru
        _
    $region48: #{fpn_forward.10} parent=5 // pred_fallthru
      _
  $region6: #{fpn_forward.10} parent=0 // loop_footer
    %s15 = sadd.s32 1, %s11
  $region7: #{fpn_forward.10} parent=0 // loop_footer_branch
    %10 = sbr.rel target = $region3
  $region8: #{fpn_forward.10} parent=0 // loop_exit
    _

// kernel: fpn_forward.9
$region0: #{fpn_forward.9}
  #allocation0 [shape = 'u32[]', space=smem, size = 0x4, offset = 0x4, fixed_abs, tag = 'smem constant byte address 0x4 - core index']
  #allocation1 [shape = 'u32[144,128]{1,0:T(1,128)}', space=vmem, size = 0x12000, scoped, tag = 'internal scratch']
  %s0 = inlined_call_operand.vmem [shape: f32[2,32,16], index: 0, kind: input, shape index: {}]
  %s1 = inlined_call_operand.vmem [shape: bf16[16,32], index: 1, kind: input, shape index: {}]
  %s2 = inlined_call_operand.vmem [shape: f32[16,1], index: 2, kind: input, shape index: {}]
  %s3 = inlined_call_operand.vmem [shape: f32[2,16,4], index: 3, kind: input, shape index: {}]
  %s4 = inlined_call_operand.vmem [shape: f32[4,16], index: 4, kind: input, shape index: {}]
  %s5 = inlined_call_operand.vmem [shape: f32[2,16,16], index: 5, kind: output, shape index: {}]
  %s6 = sld [smem:[#allocation0]]
  $region53: #{fpn_forward.9} parent=0
    _
  %s8 = ssub.s32 1, %s6
  %s9 = scalar_select 0, %s8, %s6
  loop: start=0, step=1, limit=4
  $region2: #{fpn_forward.9} parent=0 // loop_pre_header
    _
  $region3: #{fpn_forward.9} parent=0 // loop_header
    %s11 = sphi 0, %s15
    %p12 = scmp.ge.s32.totalorder %s11, 4
    %s18 = sphi 0, %s30
    %s19 = sphi 0, %s26
    %s20 = sphi 0, %s18
    %s21 = sphi 0, %s19
    %s22 = sphi 0, %s20
    %s23 = sphi 0, %s21
    %s35 = sphi 0, %s37
    %s38 = sphi 0, %s35
    %s39 = sphi 0, %s38
    %s55 = sphi 0, %s39
    %s59 = sphi 0, %s59
    %s61 = sphi 0, %s59
    %s62 = sphi 0, %s61
    %s76 = sphi 0, %s62
    %s80 = sphi 0, %s80
    %s82 = sphi 0, %s80
    %s83 = sphi 0, %s82
    %s97 = sphi 0, %s83
    %s105 = sphi 0, %s107
    %s108 = sphi 0, %s105
    %s109 = sphi 0, %s108
    %s125 = sphi 0, %s109
    %s129 = sphi 0, %s129
    %s131 = sphi 0, %s129
    %s132 = sphi 0, %s131
    %s146 = sphi 0, %s132
    %s154 = sphi 0, %s156
    %s157 = sphi 0, %s154
    %s158 = sphi 0, %s157
    %s174 = sphi 0, %s158
  $region4: #{fpn_forward.9} parent=0 // loop_header_branch
    %14 = sbr.rel (%p12) target = $region8
  $region5: #{fpn_forward.9} parent=0 // loop_body
    %s16 = ssub.s32 %s11, 1
    %s17 = ssub.s32 %s11, 2
    %s24 = sadd.s32 1, %s19
    %p25 = scmp.ge.s32.totalorder %s24, 1
    %s26 = scalar_select %p25, 0, %s24
    %s27 = sadd.s32 1, %s18
    %s28 = scalar_select %p25, %s27, %s18
    %p29 = scmp.ge.s32.totalorder %s28, 2
    %s30 = scalar_select %p29, 0, %s28
    %s31 = ssub.s32 %s18, %s30
    %s32 = ssub.s32 %s19, %s26
    %s33 = sor.u32 %s31, %s32
    %p34 = scmp.eq.s32.totalorder %s33, 0
    %s36 = sadd.s32 %s35, 1
    %s37 = scalar_select %p34, %s35, %s36
    %p40 = pneg %p34
    %p41 = scmp.eq.s32.totalorder %s11, 1
    %p42 = por %p40, %p41
    %p43 = scmp.ne.s32.totalorder %s35, %s38
    %p44 = scmp.eq.s32.totalorder %s11, 0
    %p45 = por %p43, %p44
    %p46 = scmp.ne.s32.totalorder %s35, %s38
    %p47 = scmp.eq.s32.totalorder %s16, 1
    %p48 = por %p46, %p47
    %p49 = scmp.ne.s32.totalorder %s38, %s39
    %p50 = scmp.eq.s32.totalorder %s16, 0
    %p51 = por %p49, %p50
    %p52 = scmp.ne.s32.totalorder %s38, %s39
    %p53 = scmp.eq.s32.totalorder %s17, 1
    %p54 = por %p52, %p53
    %p56 = scmp.ne.s32.totalorder %s39, %s55
    %p57 = scmp.eq.s32.totalorder %s17, 0
    %p58 = por %p56, %p57
    %s60 = sadd.s32 %s59, 1
    %p63 = scmp.eq.s32.totalorder %s11, 1
    %p64 = scmp.ne.s32.totalorder %s59, %s61
    %p65 = scmp.eq.s32.totalorder %s11, 0
    %p66 = por %p64, %p65
    %p67 = scmp.ne.s32.totalorder %s59, %s61
    %p68 = scmp.eq.s32.totalorder %s16, 1
    %p69 = por %p67, %p68
    %p70 = scmp.ne.s32.totalorder %s61, %s62
    %p71 = scmp.eq.s32.totalorder %s16, 0
    %p72 = por %p70, %p71
    %p73 = scmp.ne.s32.totalorder %s61, %s62
    %p74 = scmp.eq.s32.totalorder %s17, 1
    %p75 = por %p73, %p74
    %p77 = scmp.ne.s32.totalorder %s62, %s76
    %p78 = scmp.eq.s32.totalorder %s17, 0
    %p79 = por %p77, %p78
    %s81 = sadd.s32 %s80, 1
    %p84 = scmp.eq.s32.totalorder %s11, 1
    %p85 = scmp.ne.s32.totalorder %s80, %s82
    %p86 = scmp.eq.s32.totalorder %s11, 0
    %p87 = por %p85, %p86
    %p88 = scmp.ne.s32.totalorder %s80, %s82
    %p89 = scmp.eq.s32.totalorder %s16, 1
    %p90 = por %p88, %p89
    %p91 = scmp.ne.s32.totalorder %s82, %s83
    %p92 = scmp.eq.s32.totalorder %s16, 0
    %p93 = por %p91, %p92
    %p94 = scmp.ne.s32.totalorder %s82, %s83
    %p95 = scmp.eq.s32.totalorder %s17, 1
    %p96 = por %p94, %p95
    %p98 = scmp.ne.s32.totalorder %s83, %s97
    %p99 = scmp.eq.s32.totalorder %s17, 0
    %p100 = por %p98, %p99
    %s101 = ssub.s32 %s18, %s30
    %s102 = ssub.s32 %s19, %s26
    %s103 = sor.u32 %s101, %s102
    %p104 = scmp.eq.s32.totalorder %s103, 0
    %s106 = sadd.s32 %s105, 1
    %s107 = scalar_select %p104, %s105, %s106
    %p110 = pneg %p104
    %p111 = scmp.eq.s32.totalorder %s11, 1
    %p112 = por %p110, %p111
    %p113 = scmp.ne.s32.totalorder %s105, %s108
    %p114 = scmp.eq.s32.totalorder %s11, 0
    %p115 = por %p113, %p114
    %p116 = scmp.ne.s32.totalorder %s105, %s108
    %p117 = scmp.eq.s32.totalorder %s16, 1
    %p118 = por %p116, %p117
    %p119 = scmp.ne.s32.totalorder %s108, %s109
    %p120 = scmp.eq.s32.totalorder %s16, 0
    %p121 = por %p119, %p120
    %p122 = scmp.ne.s32.totalorder %s108, %s109
    %p123 = scmp.eq.s32.totalorder %s17, 1
    %p124 = por %p122, %p123
    %p126 = scmp.ne.s32.totalorder %s109, %s125
    %p127 = scmp.eq.s32.totalorder %s17, 0
    %p128 = por %p126, %p127
    %s130 = sadd.s32 %s129, 1
    %p133 = scmp.eq.s32.totalorder %s11, 1
    %p134 = scmp.ne.s32.totalorder %s129, %s131
    %p135 = scmp.eq.s32.totalorder %s11, 0
    %p136 = por %p134, %p135
    %p137 = scmp.ne.s32.totalorder %s129, %s131
    %p138 = scmp.eq.s32.totalorder %s16, 1
    %p139 = por %p137, %p138
    %p140 = scmp.ne.s32.totalorder %s131, %s132
    %p141 = scmp.eq.s32.totalorder %s16, 0
    %p142 = por %p140, %p141
    %p143 = scmp.ne.s32.totalorder %s131, %s132
    %p144 = scmp.eq.s32.totalorder %s17, 1
    %p145 = por %p143, %p144
    %p147 = scmp.ne.s32.totalorder %s132, %s146
    %p148 = scmp.eq.s32.totalorder %s17, 0
    %p149 = por %p147, %p148
    %s150 = ssub.s32 %s18, %s30
    %s151 = ssub.s32 %s19, %s26
    %s152 = sor.u32 %s150, %s151
    %p153 = scmp.eq.s32.totalorder %s152, 0
    %s155 = sadd.s32 %s154, 1
    %s156 = scalar_select %p153, %s154, %s155
    %p159 = pneg %p153
    %p160 = scmp.eq.s32.totalorder %s11, 1
    %p161 = por %p159, %p160
    %p162 = scmp.ne.s32.totalorder %s154, %s157
    %p163 = scmp.eq.s32.totalorder %s11, 0
    %p164 = por %p162, %p163
    %p165 = scmp.ne.s32.totalorder %s154, %s157
    %p166 = scmp.eq.s32.totalorder %s16, 1
    %p167 = por %p165, %p166
    %p168 = scmp.ne.s32.totalorder %s157, %s158
    %p169 = scmp.eq.s32.totalorder %s16, 0
    %p170 = por %p168, %p169
    %p171 = scmp.ne.s32.totalorder %s157, %s158
    %p172 = scmp.eq.s32.totalorder %s17, 1
    %p173 = por %p171, %p172
    %p175 = scmp.ne.s32.totalorder %s158, %s174
    %p176 = scmp.eq.s32.totalorder %s17, 0
    %p177 = por %p175, %p176
    %p178 = scmp.le.s32.totalorder 1, %s11
    %p179 = scmp.lt.s32.totalorder %s11, 3
    %p180 = pnand %p178, %p179
    %p181 = pneg %p180
    // Predicated region
    $region9: #{fpn_forward.9} parent=5 // pred_check
      _
    $region10: #{fpn_forward.9} parent=5 // pred_check_branch
      %183 = sbr.rel (%p180) target = $region12
    $region11: #{fpn_forward.9} parent=5 // pred_region
      %s184 = ssub.s32 %s11, 1
      // Predicated region
      $region13: #{fpn_forward.9} parent=11 // pred_check
        %p185 = pneg %p72
      $region14: #{fpn_forward.9} parent=11 // pred_check_branch
        %187 = sbr.rel (%p185) target = $region16
      $region15: #{fpn_forward.9} parent=11 // pred_region
        _
      $region16: #{fpn_forward.9} parent=11 // pred_fallthru
        _
      // Predicated region
      $region17: #{fpn_forward.9} parent=11 // pred_check
        %p188 = pneg %p93
      $region18: #{fpn_forward.9} parent=11 // pred_check_branch
        %190 = sbr.rel (%p188) target = $region20
      $region19: #{fpn_forward.9} parent=11 // pred_region
        _
      $region20: #{fpn_forward.9} parent=11 // pred_fallthru
        _
      // Predicated region
      $region21: #{fpn_forward.9} parent=11 // pred_check
        %p191 = pneg %p142
      $region22: #{fpn_forward.9} parent=11 // pred_check_branch
        %193 = sbr.rel (%p191) target = $region24
      $region23: #{fpn_forward.9} parent=11 // pred_region
        _
      $region24: #{fpn_forward.9} parent=11 // pred_fallthru
        _
    $region12: #{fpn_forward.9} parent=5 // pred_fallthru
      _
    %p194 = scmp.lt.s32.totalorder %s11, 2
    // Predicated region
    $region25: #{fpn_forward.9} parent=5 // pred_check
      %p195 = pneg %p194
    $region26: #{fpn_forward.9} parent=5 // pred_check_branch
      %197 = sbr.rel (%p195) target = $region28
    $region27: #{fpn_forward.9} parent=5 // pred_region
      // Predicated region
      $region29: #{fpn_forward.9} parent=27 // pred_check
        %p198 = pneg %p45
      $region30: #{fpn_forward.9} parent=27 // pred_check_branch
        %200 = sbr.rel (%p198) target = $region32
      $region31: #{fpn_forward.9} parent=27 // pred_region
        %p201 = scmp.lt.s32.totalorder %s18, 1
        %s202 = scalar_select %p201, %s18, 1
        %p203 = scmp.lt.s32.totalorder %s19, 0
        %s204 = scalar_select %p203, %s19, 0
        %s205 = smul.addr %s202, 4
        %s206 = sadd.s32 %s204, %s205
        %s207 = smul.addr %s206, 8
        %s208 = scalar_lea.vmem %s0, %s207
      $region32: #{fpn_forward.9} parent=27 // pred_fallthru
        _
      // Predicated region
      $region33: #{fpn_forward.9} parent=27 // pred_check
        %p209 = pneg %p115
      $region34: #{fpn_forward.9} parent=27 // pred_check_branch
        %211 = sbr.rel (%p209) target = $region36
      $region35: #{fpn_forward.9} parent=27 // pred_region
        %p212 = scmp.lt.s32.totalorder %s18, 1
        %s213 = scalar_select %p212, %s18, 1
        %p214 = scmp.lt.s32.totalorder %s19, 0
        %s215 = scalar_select %p214, %s19, 0
        %s216 = smul.addr %s213, 2
        %s217 = sadd.s32 %s215, %s216
        %s218 = smul.addr %s217, 8
        %s219 = scalar_lea.vmem %s3, %s218
      $region36: #{fpn_forward.9} parent=27 // pred_fallthru
        _
    $region28: #{fpn_forward.9} parent=5 // pred_fallthru
      _
    %p220 = scmp.le.s32.totalorder 1, %s11
    %p221 = scmp.lt.s32.totalorder %s11, 3
    %p222 = pnand %p220, %p221
    %p223 = pneg %p222
    // Predicated region
    $region37: #{fpn_forward.9} parent=5 // pred_check
      _
    $region38: #{fpn_forward.9} parent=5 // pred_check_branch
      %225 = sbr.rel (%p222) target = $region40
    $region39: #{fpn_forward.9} parent=5 // pred_region
      %s226 = ssub.s32 %s11, 1
      %p227 = scmp.lt.s32.totalorder %s20, 1
      %s228 = scalar_select %p227, %s20, 1
      %p229 = scmp.lt.s32.totalorder %s21, 0
      %s230 = scalar_select %p229, %s21, 0
      %s231 = smul.addr %s228, 4
      %s232 = sadd.s32 %s230, %s231
      %s233 = smul.addr %s232, 8
      %s234 = scalar_lea.vmem %s0, %s233
      %p235 = pneg %p51
      %p236 = pneg %p48
      %p237 = pneg %p72
      %p238 = pneg %p69
      %p239 = pneg %p93
      %p240 = pneg %p90
      %p241 = scmp.lt.s32.totalorder %s20, 1
      %s242 = scalar_select %p241, %s20, 1
      %p243 = scmp.lt.s32.totalorder %s21, 0
      %s244 = scalar_select %p243, %s21, 0
      %s245 = smul.addr %s242, 2
      %s246 = sadd.s32 %s244, %s245
      %s247 = smul.addr %s246, 8
      %s248 = scalar_lea.vmem %s3, %s247
      %p249 = pneg %p121
      %p250 = pneg %p118
      %p251 = pneg %p142
      %p252 = pneg %p139
      %p253 = pneg %p170
      %p254 = pneg %p167
      %p255 = scmp.lt.s32.totalorder %s20, 1
      %s256 = scalar_select %p255, %s20, 1
      %p257 = scmp.lt.s32.totalorder %s21, 0
      %s258 = scalar_select %p257, %s21, 0
      %s259 = smul.addr %s256, 2
      %s260 = sadd.s32 %s258, %s259
      %s261 = smul.addr %s260, 8
      %s262 = scalar_lea.vmem %s5, %s261
      %p263 = scmp.lt.s32.totalorder %s20, 1
      %s264 = scalar_select %p263, %s20, 1
      %p265 = scmp.lt.s32.totalorder %s21, 0
      %s266 = scalar_select %p265, %s21, 0
      %s267 = smul.addr %s264, 4
      %s268 = sadd.s32 %s266, %s267
      %s269 = smul.addr %s268, 8
      %s270 = scalar_lea.vmem %s0, %s269
      %p271 = scmp.lt.s32.totalorder %s20, 1
      %s272 = scalar_select %p271, %s20, 1
      %p273 = scmp.lt.s32.totalorder %s21, 0
      %s274 = scalar_select %p273, %s21, 0
      %s275 = smul.addr %s272, 2
      %s276 = sadd.s32 %s274, %s275
      %s277 = smul.addr %s276, 8
      %s278 = scalar_lea.vmem %s3, %s277
      %p279 = scmp.lt.s32.totalorder %s20, 1
      %s280 = scalar_select %p279, %s20, 1
      %p281 = scmp.lt.s32.totalorder %s21, 0
      %s282 = scalar_select %p281, %s21, 0
      %s283 = smul.addr %s280, 2
      %s284 = sadd.s32 %s282, %s283
      %s285 = smul.addr %s284, 8
      %s286 = scalar_lea.vmem %s5, %s285
      %v288 = vld [vmem:[%s270] sm:$0xff]
      %v289 = vld [vmem:[%s270 + $0x8] sm:$0xff]
      %v290 = vld [vmem:[%s270 + $0x10] sm:$0xff]
      %v291 = vld [vmem:[%s270 + $0x18] sm:$0xff]
      %v292 = vpack.c.bf16 %v289, %v288
      %v293 = vpack.c.bf16 %v291, %v290
      %v294 = vld [vmem:[%s1] sm:$0xf]
      %v295 = vld [vmem:[%s1 + $0x4] sm:$0xf]
      %v296 = vld [vmem:[%s278] sm:$0xff]
      %v297 = vld [vmem:[%s278 + $0x8] sm:$0xff]
      %v298 = vld [vmem:[%s4] sm:$0xf]
      %vm299 = vcmask 31744
      %v301 = vsel %vm299, %v296, 0
      %v304 = vsel %vm299, %v297, 0
      %vm306 = vcmask 1043456
      %v308 = vsel %vm306, %v298, 0
      %310 = vmatprep.subr.mxu0 0.0
      %311 = vmatpush1.msra.mxu0 %v308
      %312 = vmatprep.subr.mxu0 0.0
      %313 = vmatpush1.msra.mxu0 0.0
      %314 = vmatprep.subr.mxu0 0.0
      %315 = vmatpush1.msra.mxu0 0.0
      %316 = vmatprep.subr.mxu0 0.0
      %317 = vmatpush1.msra.mxu0 0.0
      %318 = vmatprep.subr.mxu0 0.0
      %319 = vmatpush1.msra.mxu0 0.0
      %320 = vmatprep.subr.mxu0 0.0
      %321 = vmatpush1.msra.mxu0 0.0
      %322 = vmatprep.subr.mxu0 0.0
      %323 = vmatpush1.msra.mxu0 0.0
      %324 = vmatprep.subr.mxu0 0.0
      %325 = vmatpush1.msra.mxu0 0.0
      %326 = vmatprep.subr.mxu0 0.0
      %327 = vmatpush1.msra.mxu0 0.0
      %328 = vmatprep.subr.mxu0 0.0
      %329 = vmatpush1.msra.mxu0 0.0
      %330 = vmatprep.subr.mxu0 0.0
      %331 = vmatpush1.msra.mxu0 0.0
      %332 = vmatprep.subr.mxu0 0.0
      %333 = vmatpush1.msra.mxu0 0.0
      %334 = vmatprep.subr.mxu0 0.0
      %335 = vmatpush1.msra.mxu0 0.0
      %336 = vmatprep.subr.mxu0 0.0
      %337 = vmatpush1.msra.mxu0 0.0
      %338 = vmatprep.subr.mxu0 0.0
      %339 = vmatpush1.msra.mxu0 0.0
      %340 = vmatprep.subr.mxu0 0.0
      %341 = vmatpush1.msra.mxu0 0.0
      %342 = vmatprep.subr.mxu0 0.0
      %343 = vmatpush1.msra.mxu0 0.0
      %344 = vmatprep.subr.mxu0 0.0
      %345 = vmatpush1.msra.mxu0 0.0
      %346 = vmatprep.subr.mxu0 0.0
      %347 = vmatpush1.msra.mxu0 0.0
      %348 = vmatprep.subr.mxu0 0.0
      %349 = vmatpush1.msra.mxu0 0.0
      %350 = vmatprep.subr.mxu0 0.0
      %351 = vmatpush1.msra.mxu0 0.0
      %352 = vmatprep.subr.mxu0 0.0
      %353 = vmatpush1.msra.mxu0 0.0
      %354 = vmatprep.subr.mxu0 0.0
      %355 = vmatpush1.msra.mxu0 0.0
      %356 = vmatprep.subr.mxu0 0.0
      %357 = vmatpush1.msra.mxu0 0.0
      %358 = vmatprep.subr.mxu0 0.0
      %359 = vmatpush1.msra.mxu0 0.0
      %360 = vmatprep.subr.mxu0 0.0
      %361 = vmatpush1.msra.mxu0 0.0
      %362 = vmatprep.subr.mxu0 0.0
      %363 = vmatpush1.msra.mxu0 0.0
      %364 = vmatprep.subr.mxu0 0.0
      %365 = vmatpush1.msra.mxu0 0.0
      %366 = vmatprep.subr.mxu0 0.0
      %367 = vmatpush1.msra.mxu0 0.0
      %368 = vmatprep.subr.mxu0 0.0
      %369 = vmatpush1.msra.mxu0 0.0
      %370 = vmatprep.subr.mxu0 0.0
      %371 = vmatpush1.msra.mxu0 0.0
      %372 = vmatprep.subr.mxu0 0.0
      %373 = vmatpush1.msra.mxu0 0.0
      %374 = vmatprep.mubr.f32.mxu0 0.0
      %375 = vmatmul.mubr.f32.gmra.mrb[0].mxu0 %v301
      %v376 = vpop.f32.mrb[0].mxu0
      %v377 = vadd.f32 0.0, %v376
      %v378 = vpop.f32.mrb[0].mxu0
      %379 = vmatprep.mubr.f32.mxu0 0.0
      %380 = vmatmul.mubr.f32.gmra.mrb[0].mxu0 %v304
      %v381 = vpop.f32.mrb[0].mxu0
      %v382 = vadd.f32 0.0, %v381
      %v383 = vpop.f32.mrb[0].mxu0
      %384 = vdwg.mxu0
      %v385 = vld [vmem:[%s2] sm:$0xff]
      %v386 = vld [vmem:[%s2 + $0x8] sm:$0xff]
      %388 = vset.pattern.permute.xlu0 0
      %389 = vperm.xlu0 %388, %v385
      %v390 = vpop.permute.xlu0 %389
      %393 = vset.pattern.permute.xlu0 0
      %394 = vperm.xlu0 %393, %v386
      %v395 = vpop.permute.xlu0 %394
      %v399 = vunpack.c.l.b16 %v294
      %v400 = vunpack.c.l.b16 %v295
      %v401 = vpack.c.b16 %v400, %v399
      %vm402 = vcmask 261120
      %v404 = vsel %vm402, %v401, 0
      %406 = vmatprep.subr.bf16.mxu0 0
      %407 = vmatpush1.bf16.msra.mxu0 %v292
      %408 = vmatprep.subr.bf16.mxu0 0
      %409 = vmatpush1.bf16.msra.mxu0 %v293
      %410 = vmatprep.subr.bf16.mxu0 0
      %411 = vmatpush1.bf16.msra.mxu0 0
      %412 = vmatprep.subr.bf16.mxu0 0
      %413 = vmatpush1.bf16.msra.mxu0 0
      %414 = vmatprep.subr.bf16.mxu0 0
      %415 = vmatpush1.bf16.msra.mxu0 0
      %416 = vmatprep.subr.bf16.mxu0 0
      %417 = vmatpush1.bf16.msra.mxu0 0
      %418 = vmatprep.subr.bf16.mxu0 0
      %419 = vmatpush1.bf16.msra.mxu0 0
      %420 = vmatprep.subr.bf16.mxu0 0
      %421 = vmatpush1.bf16.msra.mxu0 0
      %422 = vmatprep.subr.bf16.mxu0 0
      %423 = vmatpush1.bf16.msra.mxu0 0
      %424 = vmatprep.subr.bf16.mxu0 0
      %425 = vmatpush1.bf16.msra.mxu0 0
      %426 = vmatprep.subr.bf16.mxu0 0
      %427 = vmatpush1.bf16.msra.mxu0 0
      %428 = vmatprep.subr.bf16.mxu0 0
      %429 = vmatpush1.bf16.msra.mxu0 0
      %430 = vmatprep.subr.bf16.mxu0 0
      %431 = vmatpush1.bf16.msra.mxu0 0
      %432 = vmatprep.subr.bf16.mxu0 0
      %433 = vmatpush1.bf16.msra.mxu0 0
      %434 = vmatprep.subr.bf16.mxu0 0
      %435 = vmatpush1.bf16.msra.mxu0 0
      %436 = vmatprep.subr.bf16.mxu0 0
      %437 = vmatpush1.bf16.msra.mxu0 0
      %438 = vmatprep.mubr.bf16.mxu0 0
      %439 = vmatmul.mubr.bf16.gmra.mrb[0].mxu0 %v404
      %v440 = vpop.f32.mrb[0].mxu0
      %v441 = vadd.f32 %v390, %v440
      %v442 = vpop.f32.mrb[0].mxu0
      %v443 = vpop.f32.mrb[0].mxu0
      %v444 = vadd.f32 %v395, %v443
      %v445 = vpop.f32.mrb[0].mxu0
      %446 = vdwg.mxu0
      %v447 = vadd.f32 %v441, %v377
      %v448 = vadd.f32 %v444, %v382
      %vm449 = vcmask 130048
      %450 = vst.msk [vmem:[%s286] sm:$0xff] %vm449, %v447
      %451 = vst.msk [vmem:[%s286 + $0x8] sm:$0xff] %vm449, %v448
      %p452 = scmp.lt.s32.totalorder %s20, 1
      %s453 = scalar_select %p452, %s20, 1
      %p454 = scmp.lt.s32.totalorder %s21, 0
      %s455 = scalar_select %p454, %s21, 0
      %s456 = smul.addr %s453, 2
      %s457 = sadd.s32 %s455, %s456
      %s458 = smul.addr %s457, 8
      %s459 = scalar_lea.vmem %s5, %s458
      // Predicated region
      $region41: #{fpn_forward.9} parent=39 // pred_check
        %p460 = pneg %p167
      $region42: #{fpn_forward.9} parent=39 // pred_check_branch
        %462 = sbr.rel (%p460) target = $region44
      $region43: #{fpn_forward.9} parent=39 // pred_region
        _
      $region44: #{fpn_forward.9} parent=39 // pred_fallthru
        _
    $region40: #{fpn_forward.9} parent=5 // pred_fallthru
      _
    %p463 = scmp.le.s32.totalorder 2, %s11
    // Predicated region
    $region45: #{fpn_forward.9} parent=5 // pred_check
      %p464 = pneg %p463
    $region46: #{fpn_forward.9} parent=5 // pred_check_branch
      %466 = sbr.rel (%p464) target = $region48
    $region47: #{fpn_forward.9} parent=5 // pred_region
      %s467 = ssub.s32 %s11, 2
      // Predicated region
      $region49: #{fpn_forward.9} parent=47 // pred_check
        %p468 = pneg %p173
      $region50: #{fpn_forward.9} parent=47 // pred_check_branch
        %470 = sbr.rel (%p468) target = $region52
      $region51: #{fpn_forward.9} parent=47 // pred_region
        %p471 = scmp.lt.s32.totalorder %s22, 1
        %s472 = scalar_select %p471, %s22, 1
        %p473 = scmp.lt.s32.totalorder %s23, 0
        %s474 = scalar_select %p473, %s23, 0
        %s475 = smul.addr %s472, 2
        %s476 = sadd.s32 %s474, %s475
        %s477 = smul.addr %s476, 8
        %s478 = scalar_lea.vmem %s5, %s477
      $region52: #{fpn_forward.9} parent=47 // pred_fallthru
        _
    $region48: #{fpn_forward.9} parent=5 // pred_fallthru
      _
  $region6: #{fpn_forward.9} parent=0 // loop_footer
    %s15 = sadd.s32 1, %s11
  $region7: #{fpn_forward.9} parent=0 // loop_footer_branch
    %10 = sbr.rel target = $region3
  $region8: #{fpn_forward.9} parent=0 // loop_exit
    _

// kernel: fpn_forward.11
$region0: #{fpn_forward.11}
  #allocation0 [shape = 'u32[]', space=smem, size = 0x4, offset = 0x4, fixed_abs, tag = 'smem constant byte address 0x4 - core index']
  #allocation1 [shape = 'u32[144,128]{1,0:T(1,128)}', space=vmem, size = 0x12000, scoped, tag = 'internal scratch']
  %s0 = inlined_call_operand.vmem [shape: f32[2,8,256], index: 0, kind: input, shape index: {}]
  %s1 = inlined_call_operand.vmem [shape: bf16[16,8], index: 1, kind: input, shape index: {}]
  %s2 = inlined_call_operand.vmem [shape: f32[16,1], index: 2, kind: input, shape index: {}]
  %s3 = inlined_call_operand.vmem [shape: f32[2,16,64], index: 3, kind: input, shape index: {}]
  %s4 = inlined_call_operand.vmem [shape: f32[64,256], index: 4, kind: input, shape index: {}]
  %s5 = inlined_call_operand.vmem [shape: f32[2,16,256], index: 5, kind: output, shape index: {}]
  %s6 = sld [smem:[#allocation0]]
  $region53: #{fpn_forward.11} parent=0
    _
  %s8 = ssub.s32 1, %s6
  %s9 = scalar_select 0, %s8, %s6
  loop: start=0, step=1, limit=4
  $region2: #{fpn_forward.11} parent=0 // loop_pre_header
    _
  $region3: #{fpn_forward.11} parent=0 // loop_header
    %s11 = sphi 0, %s15
    %p12 = scmp.ge.s32.totalorder %s11, 4
    %s18 = sphi 0, %s30
    %s19 = sphi 0, %s26
    %s20 = sphi 0, %s18
    %s21 = sphi 0, %s19
    %s22 = sphi 0, %s20
    %s23 = sphi 0, %s21
    %s35 = sphi 0, %s37
    %s38 = sphi 0, %s35
    %s39 = sphi 0, %s38
    %s55 = sphi 0, %s39
    %s59 = sphi 0, %s59
    %s61 = sphi 0, %s59
    %s62 = sphi 0, %s61
    %s76 = sphi 0, %s62
    %s80 = sphi 0, %s80
    %s82 = sphi 0, %s80
    %s83 = sphi 0, %s82
    %s97 = sphi 0, %s83
    %s105 = sphi 0, %s107
    %s108 = sphi 0, %s105
    %s109 = sphi 0, %s108
    %s125 = sphi 0, %s109
    %s129 = sphi 0, %s129
    %s131 = sphi 0, %s129
    %s132 = sphi 0, %s131
    %s146 = sphi 0, %s132
    %s154 = sphi 0, %s156
    %s157 = sphi 0, %s154
    %s158 = sphi 0, %s157
    %s174 = sphi 0, %s158
  $region4: #{fpn_forward.11} parent=0 // loop_header_branch
    %14 = sbr.rel (%p12) target = $region8
  $region5: #{fpn_forward.11} parent=0 // loop_body
    %s16 = ssub.s32 %s11, 1
    %s17 = ssub.s32 %s11, 2
    %s24 = sadd.s32 1, %s19
    %p25 = scmp.ge.s32.totalorder %s24, 1
    %s26 = scalar_select %p25, 0, %s24
    %s27 = sadd.s32 1, %s18
    %s28 = scalar_select %p25, %s27, %s18
    %p29 = scmp.ge.s32.totalorder %s28, 2
    %s30 = scalar_select %p29, 0, %s28
    %s31 = ssub.s32 %s18, %s30
    %s32 = ssub.s32 %s19, %s26
    %s33 = sor.u32 %s31, %s32
    %p34 = scmp.eq.s32.totalorder %s33, 0
    %s36 = sadd.s32 %s35, 1
    %s37 = scalar_select %p34, %s35, %s36
    %p40 = pneg %p34
    %p41 = scmp.eq.s32.totalorder %s11, 1
    %p42 = por %p40, %p41
    %p43 = scmp.ne.s32.totalorder %s35, %s38
    %p44 = scmp.eq.s32.totalorder %s11, 0
    %p45 = por %p43, %p44
    %p46 = scmp.ne.s32.totalorder %s35, %s38
    %p47 = scmp.eq.s32.totalorder %s16, 1
    %p48 = por %p46, %p47
    %p49 = scmp.ne.s32.totalorder %s38, %s39
    %p50 = scmp.eq.s32.totalorder %s16, 0
    %p51 = por %p49, %p50
    %p52 = scmp.ne.s32.totalorder %s38, %s39
    %p53 = scmp.eq.s32.totalorder %s17, 1
    %p54 = por %p52, %p53
    %p56 = scmp.ne.s32.totalorder %s39, %s55
    %p57 = scmp.eq.s32.totalorder %s17, 0
    %p58 = por %p56, %p57
    %s60 = sadd.s32 %s59, 1
    %p63 = scmp.eq.s32.totalorder %s11, 1
    %p64 = scmp.ne.s32.totalorder %s59, %s61
    %p65 = scmp.eq.s32.totalorder %s11, 0
    %p66 = por %p64, %p65
    %p67 = scmp.ne.s32.totalorder %s59, %s61
    %p68 = scmp.eq.s32.totalorder %s16, 1
    %p69 = por %p67, %p68
    %p70 = scmp.ne.s32.totalorder %s61, %s62
    %p71 = scmp.eq.s32.totalorder %s16, 0
    %p72 = por %p70, %p71
    %p73 = scmp.ne.s32.totalorder %s61, %s62
    %p74 = scmp.eq.s32.totalorder %s17, 1
    %p75 = por %p73, %p74
    %p77 = scmp.ne.s32.totalorder %s62, %s76
    %p78 = scmp.eq.s32.totalorder %s17, 0
    %p79 = por %p77, %p78
    %s81 = sadd.s32 %s80, 1
    %p84 = scmp.eq.s32.totalorder %s11, 1
    %p85 = scmp.ne.s32.totalorder %s80, %s82
    %p86 = scmp.eq.s32.totalorder %s11, 0
    %p87 = por %p85, %p86
    %p88 = scmp.ne.s32.totalorder %s80, %s82
    %p89 = scmp.eq.s32.totalorder %s16, 1
    %p90 = por %p88, %p89
    %p91 = scmp.ne.s32.totalorder %s82, %s83
    %p92 = scmp.eq.s32.totalorder %s16, 0
    %p93 = por %p91, %p92
    %p94 = scmp.ne.s32.totalorder %s82, %s83
    %p95 = scmp.eq.s32.totalorder %s17, 1
    %p96 = por %p94, %p95
    %p98 = scmp.ne.s32.totalorder %s83, %s97
    %p99 = scmp.eq.s32.totalorder %s17, 0
    %p100 = por %p98, %p99
    %s101 = ssub.s32 %s18, %s30
    %s102 = ssub.s32 %s19, %s26
    %s103 = sor.u32 %s101, %s102
    %p104 = scmp.eq.s32.totalorder %s103, 0
    %s106 = sadd.s32 %s105, 1
    %s107 = scalar_select %p104, %s105, %s106
    %p110 = pneg %p104
    %p111 = scmp.eq.s32.totalorder %s11, 1
    %p112 = por %p110, %p111
    %p113 = scmp.ne.s32.totalorder %s105, %s108
    %p114 = scmp.eq.s32.totalorder %s11, 0
    %p115 = por %p113, %p114
    %p116 = scmp.ne.s32.totalorder %s105, %s108
    %p117 = scmp.eq.s32.totalorder %s16, 1
    %p118 = por %p116, %p117
    %p119 = scmp.ne.s32.totalorder %s108, %s109
    %p120 = scmp.eq.s32.totalorder %s16, 0
    %p121 = por %p119, %p120
    %p122 = scmp.ne.s32.totalorder %s108, %s109
    %p123 = scmp.eq.s32.totalorder %s17, 1
    %p124 = por %p122, %p123
    %p126 = scmp.ne.s32.totalorder %s109, %s125
    %p127 = scmp.eq.s32.totalorder %s17, 0
    %p128 = por %p126, %p127
    %s130 = sadd.s32 %s129, 1
    %p133 = scmp.eq.s32.totalorder %s11, 1
    %p134 = scmp.ne.s32.totalorder %s129, %s131
    %p135 = scmp.eq.s32.totalorder %s11, 0
    %p136 = por %p134, %p135
    %p137 = scmp.ne.s32.totalorder %s129, %s131
    %p138 = scmp.eq.s32.totalorder %s16, 1
    %p139 = por %p137, %p138
    %p140 = scmp.ne.s32.totalorder %s131, %s132
    %p141 = scmp.eq.s32.totalorder %s16, 0
    %p142 = por %p140, %p141
    %p143 = scmp.ne.s32.totalorder %s131, %s132
    %p144 = scmp.eq.s32.totalorder %s17, 1
    %p145 = por %p143, %p144
    %p147 = scmp.ne.s32.totalorder %s132, %s146
    %p148 = scmp.eq.s32.totalorder %s17, 0
    %p149 = por %p147, %p148
    %s150 = ssub.s32 %s18, %s30
    %s151 = ssub.s32 %s19, %s26
    %s152 = sor.u32 %s150, %s151
    %p153 = scmp.eq.s32.totalorder %s152, 0
    %s155 = sadd.s32 %s154, 1
    %s156 = scalar_select %p153, %s154, %s155
    %p159 = pneg %p153
    %p160 = scmp.eq.s32.totalorder %s11, 1
    %p161 = por %p159, %p160
    %p162 = scmp.ne.s32.totalorder %s154, %s157
    %p163 = scmp.eq.s32.totalorder %s11, 0
    %p164 = por %p162, %p163
    %p165 = scmp.ne.s32.totalorder %s154, %s157
    %p166 = scmp.eq.s32.totalorder %s16, 1
    %p167 = por %p165, %p166
    %p168 = scmp.ne.s32.totalorder %s157, %s158
    %p169 = scmp.eq.s32.totalorder %s16, 0
    %p170 = por %p168, %p169
    %p171 = scmp.ne.s32.totalorder %s157, %s158
    %p172 = scmp.eq.s32.totalorder %s17, 1
    %p173 = por %p171, %p172
    %p175 = scmp.ne.s32.totalorder %s158, %s174
    %p176 = scmp.eq.s32.totalorder %s17, 0
    %p177 = por %p175, %p176
    %p178 = scmp.le.s32.totalorder 1, %s11
    %p179 = scmp.lt.s32.totalorder %s11, 3
    %p180 = pnand %p178, %p179
    %p181 = pneg %p180
    // Predicated region
    $region9: #{fpn_forward.11} parent=5 // pred_check
      _
    $region10: #{fpn_forward.11} parent=5 // pred_check_branch
      %183 = sbr.rel (%p180) target = $region12
    $region11: #{fpn_forward.11} parent=5 // pred_region
      %s184 = ssub.s32 %s11, 1
      // Predicated region
      $region13: #{fpn_forward.11} parent=11 // pred_check
        %p185 = pneg %p72
      $region14: #{fpn_forward.11} parent=11 // pred_check_branch
        %187 = sbr.rel (%p185) target = $region16
      $region15: #{fpn_forward.11} parent=11 // pred_region
        _
      $region16: #{fpn_forward.11} parent=11 // pred_fallthru
        _
      // Predicated region
      $region17: #{fpn_forward.11} parent=11 // pred_check
        %p188 = pneg %p93
      $region18: #{fpn_forward.11} parent=11 // pred_check_branch
        %190 = sbr.rel (%p188) target = $region20
      $region19: #{fpn_forward.11} parent=11 // pred_region
        _
      $region20: #{fpn_forward.11} parent=11 // pred_fallthru
        _
      // Predicated region
      $region21: #{fpn_forward.11} parent=11 // pred_check
        %p191 = pneg %p142
      $region22: #{fpn_forward.11} parent=11 // pred_check_branch
        %193 = sbr.rel (%p191) target = $region24
      $region23: #{fpn_forward.11} parent=11 // pred_region
        _
      $region24: #{fpn_forward.11} parent=11 // pred_fallthru
        _
    $region12: #{fpn_forward.11} parent=5 // pred_fallthru
      _
    %p194 = scmp.lt.s32.totalorder %s11, 2
    // Predicated region
    $region25: #{fpn_forward.11} parent=5 // pred_check
      %p195 = pneg %p194
    $region26: #{fpn_forward.11} parent=5 // pred_check_branch
      %197 = sbr.rel (%p195) target = $region28
    $region27: #{fpn_forward.11} parent=5 // pred_region
      // Predicated region
      $region29: #{fpn_forward.11} parent=27 // pred_check
        %p198 = pneg %p45
      $region30: #{fpn_forward.11} parent=27 // pred_check_branch
        %200 = sbr.rel (%p198) target = $region32
      $region31: #{fpn_forward.11} parent=27 // pred_region
        %s201 = smul.u32 2, %s19
        %p202 = scmp.lt.s32.totalorder %s18, 1
        %s203 = scalar_select %p202, %s18, 1
        %p204 = scmp.lt.s32.totalorder %s201, 1
        %s205 = scalar_select %p204, %s201, 1
        %s206 = smul.addr %s203, 2
        %s207 = sadd.s32 %s205, %s206
        %s208 = smul.addr %s207, 8
        %s209 = scalar_lea.vmem %s0, %s208
        %s210 = smul.u32 2, %s19
      $region32: #{fpn_forward.11} parent=27 // pred_fallthru
        _
      // Predicated region
      $region33: #{fpn_forward.11} parent=27 // pred_check
        %p211 = pneg %p115
      $region34: #{fpn_forward.11} parent=27 // pred_check_branch
        %213 = sbr.rel (%p211) target = $region36
      $region35: #{fpn_forward.11} parent=27 // pred_region
        %p214 = scmp.lt.s32.totalorder %s18, 1
        %s215 = scalar_select %p214, %s18, 1
        %p216 = scmp.lt.s32.totalorder %s19, 0
        %s217 = scalar_select %p216, %s19, 0
        %s218 = smul.addr %s215, 2
        %s219 = sadd.s32 %s217, %s218
        %s220 = smul.addr %s219, 8
        %s221 = scalar_lea.vmem %s3, %s220
      $region36: #{fpn_forward.11} parent=27 // pred_fallthru
        _
    $region28: #{fpn_forward.11} parent=5 // pred_fallthru
      _
    %p222 = scmp.le.s32.totalorder 1, %s11
    %p223 = scmp.lt.s32.totalorder %s11, 3
    %p224 = pnand %p222, %p223
    %p225 = pneg %p224
    // Predicated region
    $region37: #{fpn_forward.11} parent=5 // pred_check
      _
    $region38: #{fpn_forward.11} parent=5 // pred_check_branch
      %227 = sbr.rel (%p224) target = $region40
    $region39: #{fpn_forward.11} parent=5 // pred_region
      %s228 = ssub.s32 %s11, 1
      %s229 = smul.u32 2, %s21
      %p230 = scmp.lt.s32.totalorder %s20, 1
      %s231 = scalar_select %p230, %s20, 1
      %p232 = scmp.lt.s32.totalorder %s229, 1
      %s233 = scalar_select %p232, %s229, 1
      %s234 = smul.addr %s231, 2
      %s235 = sadd.s32 %s233, %s234
      %s236 = smul.addr %s235, 8
      %s237 = scalar_lea.vmem %s0, %s236
      %p238 = pneg %p51
      %p239 = pneg %p48
      %p240 = pneg %p72
      %p241 = pneg %p69
      %p242 = pneg %p93
      %p243 = pneg %p90
      %p244 = scmp.lt.s32.totalorder %s20, 1
      %s245 = scalar_select %p244, %s20, 1
      %p246 = scmp.lt.s32.totalorder %s21, 0
      %s247 = scalar_select %p246, %s21, 0
      %s248 = smul.addr %s245, 2
      %s249 = sadd.s32 %s247, %s248
      %s250 = smul.addr %s249, 8
      %s251 = scalar_lea.vmem %s3, %s250
      %p252 = pneg %p121
      %p253 = pneg %p118
      %p254 = pneg %p142
      %p255 = pneg %p139
      %p256 = pneg %p170
      %p257 = pneg %p167
      %s258 = smul.u32 2, %s21
      %p259 = scmp.lt.s32.totalorder %s20, 1
      %s260 = scalar_select %p259, %s20, 1
      %p261 = scmp.lt.s32.totalorder %s258, 1
      %s262 = scalar_select %p261, %s258, 1
      %s263 = smul.addr %s260, 4
      %s264 = sadd.s32 %s262, %s263
      %s265 = smul.addr %s264, 8
      %s266 = scalar_lea.vmem %s5, %s265
      %s267 = smul.u32 2, %s21
      %p268 = scmp.lt.s32.totalorder %s20, 1
      %s269 = scalar_select %p268, %s20, 1
      %p270 = scmp.lt.s32.totalorder %s267, 1
      %s271 = scalar_select %p270, %s267, 1
      %s272 = smul.addr %s269, 2
      %s273 = sadd.s32 %s271, %s272
      %s274 = smul.addr %s273, 8
      %s275 = scalar_lea.vmem %s0, %s274
      %s276 = smul.u32 2, %s21
      %p277 = scmp.lt.s32.totalorder %s20, 1
      %s278 = scalar_select %p277, %s20, 1
      %p279 = scmp.lt.s32.totalorder %s21, 0
      %s280 = scalar_select %p279, %s21, 0
      %s281 = smul.addr %s278, 2
      %s282 = sadd.s32 %s280, %s281
      %s283 = smul.addr %s282, 8
      %s284 = scalar_lea.vmem %s3, %s283
      %s285 = smul.u32 2, %s21
      %p286 = scmp.lt.s32.totalorder %s20, 1
      %s287 = scalar_select %p286, %s20, 1
      %p288 = scmp.lt.s32.totalorder %s285, 1
      %s289 = scalar_select %p288, %s285, 1
      %s290 = smul.addr %s287, 4
      %s291 = sadd.s32 %s289, %s290
      %s292 = smul.addr %s291, 8
      %s293 = scalar_lea.vmem %s5, %s292
      %s294 = smul.u32 2, %s21
      %v296 = vld [vmem:[%s275] sm:$0xff]
      %v297 = vld [vmem:[%s275 + $0x8] sm:$0xff]
      %v298 = vpack.c.bf16 %v296, %v296
      %v299 = vpack.c.bf16 %v297, %v297
      %v300 = vld [vmem:[%s1] sm:$0xf]
      %v301 = vld [vmem:[%s1 + $0x4] sm:$0xf]
      %v302 = vld [vmem:[%s284] sm:$0xff]
      %v303 = vld [vmem:[%s284 + $0x8] sm:$0xff]
      %v304 = vld [vmem:[%s4] sm:$0xff]
      %v305 = vld [vmem:[%s4 + $0x8] sm:$0xff]
      %v306 = vld [vmem:[%s4 + $0x10] sm:$0xff]
      %v307 = vld [vmem:[%s4 + $0x18] sm:$0xff]
      %v308 = vld [vmem:[%s4 + $0x20] sm:$0xff]
      %v309 = vld [vmem:[%s4 + $0x28] sm:$0xff]
      %v310 = vld [vmem:[%s4 + $0x30] sm:$0xff]
      %v311 = vld [vmem:[%s4 + $0x38] sm:$0xff]
      %v312 = vld [vmem:[%s4 + $0x40] sm:$0xff]
      %v313 = vld [vmem:[%s4 + $0x48] sm:$0xff]
      %v314 = vld [vmem:[%s4 + $0x50] sm:$0xff]
      %v315 = vld [vmem:[%s4 + $0x58] sm:$0xff]
      %v316 = vld [vmem:[%s4 + $0x60] sm:$0xff]
      %v317 = vld [vmem:[%s4 + $0x68] sm:$0xff]
      %v318 = vld [vmem:[%s4 + $0x70] sm:$0xff]
      %v319 = vld [vmem:[%s4 + $0x78] sm:$0xff]
      %vm320 = vcmask 523264
      %v322 = vsel %vm320, %v302, 0
      %v325 = vsel %vm320, %v303, 0
      %327 = vmatprep.subr.mxu0 %v305
      %328 = vmatpush1.msra.mxu0 %v304
      %329 = vmatprep.subr.mxu0 %v307
      %330 = vmatpush1.msra.mxu0 %v306
      %331 = vmatprep.subr.mxu0 %v309
      %332 = vmatpush1.msra.mxu0 %v308
      %333 = vmatprep.subr.mxu0 %v311
      %334 = vmatpush1.msra.mxu0 %v310
      %335 = vmatprep.subr.mxu0 %v313
      %336 = vmatpush1.msra.mxu0 %v312
      %337 = vmatprep.subr.mxu0 %v315
      %338 = vmatpush1.msra.mxu0 %v314
      %339 = vmatprep.subr.mxu0 %v317
      %340 = vmatpush1.msra.mxu0 %v316
      %341 = vmatprep.subr.mxu0 %v319
      %342 = vmatpush1.msra.mxu0 %v318
      %343 = vmatprep.subr.mxu0 0.0
      %344 = vmatpush1.msra.mxu0 0.0
      %345 = vmatprep.subr.mxu0 0.0
      %346 = vmatpush1.msra.mxu0 0.0
      %347 = vmatprep.subr.mxu0 0.0
      %348 = vmatpush1.msra.mxu0 0.0
      %349 = vmatprep.subr.mxu0 0.0
      %350 = vmatpush1.msra.mxu0 0.0
      %351 = vmatprep.subr.mxu0 0.0
      %352 = vmatpush1.msra.mxu0 0.0
      %353 = vmatprep.subr.mxu0 0.0
      %354 = vmatpush1.msra.mxu0 0.0
      %355 = vmatprep.subr.mxu0 0.0
      %356 = vmatpush1.msra.mxu0 0.0
      %357 = vmatprep.subr.mxu0 0.0
      %358 = vmatpush1.msra.mxu0 0.0
      %359 = vmatprep.subr.mxu0 0.0
      %360 = vmatpush1.msra.mxu0 0.0
      %361 = vmatprep.subr.mxu0 0.0
      %362 = vmatpush1.msra.mxu0 0.0
      %363 = vmatprep.subr.mxu0 0.0
      %364 = vmatpush1.msra.mxu0 0.0
      %365 = vmatprep.subr.mxu0 0.0
      %366 = vmatpush1.msra.mxu0 0.0
      %367 = vmatprep.subr.mxu0 0.0
      %368 = vmatpush1.msra.mxu0 0.0
      %369 = vmatprep.subr.mxu0 0.0
      %370 = vmatpush1.msra.mxu0 0.0
      %371 = vmatprep.subr.mxu0 0.0
      %372 = vmatpush1.msra.mxu0 0.0
      %373 = vmatprep.subr.mxu0 0.0
      %374 = vmatpush1.msra.mxu0 0.0
      %375 = vmatprep.subr.mxu0 0.0
      %376 = vmatpush1.msra.mxu0 0.0
      %377 = vmatprep.subr.mxu0 0.0
      %378 = vmatpush1.msra.mxu0 0.0
      %379 = vmatprep.subr.mxu0 0.0
      %380 = vmatpush1.msra.mxu0 0.0
      %381 = vmatprep.subr.mxu0 0.0
      %382 = vmatpush1.msra.mxu0 0.0
      %383 = vmatprep.subr.mxu0 0.0
      %384 = vmatpush1.msra.mxu0 0.0
      %385 = vmatprep.subr.mxu0 0.0
      %386 = vmatpush1.msra.mxu0 0.0
      %387 = vmatprep.subr.mxu0 0.0
      %388 = vmatpush1.msra.mxu0 0.0
      %389 = vmatprep.subr.mxu0 0.0
      %390 = vmatpush1.msra.mxu0 0.0
      %391 = vmatprep.mubr.f32.mxu0 0.0
      %392 = vmatmul.mubr.f32.gmra.mrb[0].mxu0 %v322
      %v393 = vpop.f32.mrb[0].mxu0
      %v394 = vadd.f32 0.0, %v393
      %v395 = vpop.f32.mrb[0].mxu0
      %v396 = vadd.f32 0.0, %v395
      %397 = vmatprep.mubr.f32.mxu0 0.0
      %398 = vmatmul.mubr.f32.gmra.mrb[0].mxu0 %v325
      %v399 = vpop.f32.mrb[0].mxu0
      %v400 = vadd.f32 0.0, %v399
      %v401 = vpop.f32.mrb[0].mxu0
      %v402 = vadd.f32 0.0, %v401
      %403 = vdwg.mxu0
      %v404 = vld [vmem:[%s2] sm:$0xff]
      %v405 = vld [vmem:[%s2 + $0x8] sm:$0xff]
      %407 = vset.pattern.permute.xlu0 0
      %408 = vperm.xlu0 %407, %v404
      %v409 = vpop.permute.xlu0 %408
      %412 = vset.pattern.permute.xlu0 0
      %413 = vperm.xlu0 %412, %v405
      %v414 = vpop.permute.xlu0 %413
      %v418 = vunpack.c.l.b16 %v300
      %v419 = vunpack.c.l.b16 %v301
      %v420 = vpack.c.b16 %v419, %v418
      %vm421 = vcmask 64512
      %v423 = vsel %vm421, %v420, 0
      %vm425 = vcmask 1043456
      %v427 = vsel %vm425, %v298, 0
      %v430 = vsel %vm425, %v299, 0
      %432 = vmatprep.subr.bf16.mxu0 %v430
      %433 = vmatpush1.bf16.msra.mxu0 %v427
      %434 = vmatprep.subr.bf16.mxu0 0
      %435 = vmatpush1.bf16.msra.mxu0 0
      %436 = vmatprep.subr.bf16.mxu0 0
      %437 = vmatpush1.bf16.msra.mxu0 0
      %438 = vmatprep.subr.bf16.mxu0 0
      %439 = vmatpush1.bf16.msra.mxu0 0
      %440 = vmatprep.subr.bf16.mxu0 0
      %441 = vmatpush1.bf16.msra.mxu0 0
      %442 = vmatprep.subr.bf16.mxu0 0
      %443 = vmatpush1.bf16.msra.mxu0 0
      %444 = vmatprep.subr.bf16.mxu0 0
      %445 = vmatpush1.bf16.msra.mxu0 0
      %446 = vmatprep.subr.bf16.mxu0 0
      %447 = vmatpush1.bf16.msra.mxu0 0
      %448 = vmatprep.subr.bf16.mxu0 0
      %449 = vmatpush1.bf16.msra.mxu0 0
      %450 = vmatprep.subr.bf16.mxu0 0
      %451 = vmatpush1.bf16.msra.mxu0 0
      %452 = vmatprep.subr.bf16.mxu0 0
      %453 = vmatpush1.bf16.msra.mxu0 0
      %454 = vmatprep.subr.bf16.mxu0 0
      %455 = vmatpush1.bf16.msra.mxu0 0
      %456 = vmatprep.subr.bf16.mxu0 0
      %457 = vmatpush1.bf16.msra.mxu0 0
      %458 = vmatprep.subr.bf16.mxu0 0
      %459 = vmatpush1.bf16.msra.mxu0 0
      %460 = vmatprep.subr.bf16.mxu0 0
      %461 = vmatpush1.bf16.msra.mxu0 0
      %462 = vmatprep.subr.bf16.mxu0 0
      %463 = vmatpush1.bf16.msra.mxu0 0
      %464 = vmatprep.mubr.bf16.mxu0 0
      %465 = vmatmul.mubr.bf16.gmra.mrb[0].mxu0 %v423
      %v466 = vpop.f32.mrb[0].mxu0
      %v467 = vadd.f32 %v409, %v466
      %v468 = vpop.f32.mrb[0].mxu0
      %v469 = vadd.f32 %v409, %v468
      %v470 = vpop.f32.mrb[0].mxu0
      %v471 = vadd.f32 %v414, %v470
      %v472 = vpop.f32.mrb[0].mxu0
      %v473 = vadd.f32 %v414, %v472
      %474 = vdwg.mxu0
      %v475 = vadd.f32 %v467, %v394
      %v476 = vadd.f32 %v469, %v396
      %v477 = vadd.f32 %v471, %v400
      %v478 = vadd.f32 %v473, %v402
      %479 = vst [vmem:[%s293] sm:$0xff] %v475
      %480 = vst [vmem:[%s293 + $0x8] sm:$0xff] %v476
      %481 = vst [vmem:[%s293 + $0x10] sm:$0xff] %v477
      %482 = vst [vmem:[%s293 + $0x18] sm:$0xff] %v478
      %s483 = smul.u32 2, %s21
      %p484 = scmp.lt.s32.totalorder %s20, 1
      %s485 = scalar_select %p484, %s20, 1
      %p486 = scmp.lt.s32.totalorder %s483, 1
      %s487 = scalar_select %p486, %s483, 1
      %s488 = smul.addr %s485, 4
      %s489 = sadd.s32 %s487, %s488
      %s490 = smul.addr %s489, 8
      %s491 = scalar_lea.vmem %s5, %s490
      // Predicated region
      $region41: #{fpn_forward.11} parent=39 // pred_check
        %p492 = pneg %p167
      $region42: #{fpn_forward.11} parent=39 // pred_check_branch
        %494 = sbr.rel (%p492) target = $region44
      $region43: #{fpn_forward.11} parent=39 // pred_region
        %s495 = smul.u32 2, %s21
      $region44: #{fpn_forward.11} parent=39 // pred_fallthru
        _
    $region40: #{fpn_forward.11} parent=5 // pred_fallthru
      _
    %p496 = scmp.le.s32.totalorder 2, %s11
    // Predicated region
    $region45: #{fpn_forward.11} parent=5 // pred_check
      %p497 = pneg %p496
    $region46: #{fpn_forward.11} parent=5 // pred_check_branch
      %499 = sbr.rel (%p497) target = $region48
    $region47: #{fpn_forward.11} parent=5 // pred_region
      %s500 = ssub.s32 %s11, 2
      // Predicated region
      $region49: #{fpn_forward.11} parent=47 // pred_check
        %p501 = pneg %p173
      $region50: #{fpn_forward.11} parent=47 // pred_check_branch
        %503 = sbr.rel (%p501) target = $region52
      $region51: #{fpn_forward.11} parent=47 // pred_region
        %s504 = smul.u32 2, %s23
        %p505 = scmp.lt.s32.totalorder %s22, 1
        %s506 = scalar_select %p505, %s22, 1
        %p507 = scmp.lt.s32.totalorder %s504, 1
        %s508 = scalar_select %p507, %s504, 1
        %s509 = smul.addr %s506, 4
        %s510 = sadd.s32 %s508, %s509
        %s511 = smul.addr %s510, 8
        %s512 = scalar_lea.vmem %s5, %s511
      $region52: #{fpn_forward.11} parent=47 // pred_fallthru
        _
    $region48: #{fpn_forward.11} parent=5 // pred_fallthru
      _
  $region6: #{fpn_forward.11} parent=0 // loop_footer
    %s15 = sadd.s32 1, %s11
  $region7: #{fpn_forward.11} parent=0 // loop_footer_branch
    %10 = sbr.rel target = $region3
  $region8: #{fpn_forward.11} parent=0 // loop_exit
    _

// kernel: fpn_forward.13
$region0: #{fpn_forward.13}
  #allocation0 [shape = 'u32[]', space=smem, size = 0x4, offset = 0x4, fixed_abs, tag = 'smem constant byte address 0x4 - core index']
  #allocation1 [shape = 'u32[144,128]{1,0:T(1,128)}', space=vmem, size = 0x12000, scoped, tag = 'internal scratch']
  %s0 = inlined_call_operand.vmem [shape: f32[2,16,64], index: 0, kind: input, shape index: {}]
  %s1 = inlined_call_operand.vmem [shape: f32[9,16,16], index: 1, kind: input, shape index: {}]
  %s2 = inlined_call_operand.vmem [shape: f32[16,1], index: 2, kind: input, shape index: {}]
  %s3 = inlined_call_operand.vmem [shape: f32[2,16,64], index: 3, kind: output, shape index: {}]
  %s4 = sld [smem:[#allocation0]]
  $region45: #{fpn_forward.13} parent=0
    _
  %s6 = ssub.s32 1, %s4
  %s7 = scalar_select 0, %s6, %s4
  loop: start=0, step=1, limit=4
  $region2: #{fpn_forward.13} parent=0 // loop_pre_header
    _
  $region3: #{fpn_forward.13} parent=0 // loop_header
    %s9 = sphi 0, %s13
    %p10 = scmp.ge.s32.totalorder %s9, 4
    %s19 = sphi 0, %s21
    %s22 = sphi 0, %s19
    %s23 = sphi 0, %s22
    %s39 = sphi 0, %s23
    %s43 = sphi 0, %s43
    %s45 = sphi 0, %s43
    %s46 = sphi 0, %s45
    %s60 = sphi 0, %s46
    %s64 = sphi 0, %s64
    %s66 = sphi 0, %s64
    %s67 = sphi 0, %s66
    %s81 = sphi 0, %s67
    %s87 = sphi 0, %s89
    %s90 = sphi 0, %s87
    %s91 = sphi 0, %s90
    %s107 = sphi 0, %s91
  $region4: #{fpn_forward.13} parent=0 // loop_header_branch
    %12 = sbr.rel (%p10) target = $region8
  $region5: #{fpn_forward.13} parent=0 // loop_body
    %s14 = ssub.s32 %s9, 1
    %s15 = ssub.s32 %s9, 2
    %s16 = sadd.s32 %s9, 1
    %s17 = ssub.s32 %s9, %s16
    %p18 = scmp.eq.s32.totalorder %s17, 0
    %s20 = sadd.s32 %s19, 1
    %s21 = scalar_select %p18, %s19, %s20
    %p24 = pneg %p18
    %p25 = scmp.eq.s32.totalorder %s9, 1
    %p26 = por %p24, %p25
    %p27 = scmp.ne.s32.totalorder %s19, %s22
    %p28 = scmp.eq.s32.totalorder %s9, 0
    %p29 = por %p27, %p28
    %p30 = scmp.ne.s32.totalorder %s19, %s22
    %p31 = scmp.eq.s32.totalorder %s14, 1
    %p32 = por %p30, %p31
    %p33 = scmp.ne.s32.totalorder %s22, %s23
    %p34 = scmp.eq.s32.totalorder %s14, 0
    %p35 = por %p33, %p34
    %p36 = scmp.ne.s32.totalorder %s22, %s23
    %p37 = scmp.eq.s32.totalorder %s15, 1
    %p38 = por %p36, %p37
    %p40 = scmp.ne.s32.totalorder %s23, %s39
    %p41 = scmp.eq.s32.totalorder %s15, 0
    %p42 = por %p40, %p41
    %s44 = sadd.s32 %s43, 1
    %p47 = scmp.eq.s32.totalorder %s9, 1
    %p48 = scmp.ne.s32.totalorder %s43, %s45
    %p49 = scmp.eq.s32.totalorder %s9, 0
    %p50 = por %p48, %p49
    %p51 = scmp.ne.s32.totalorder %s43, %s45
    %p52 = scmp.eq.s32.totalorder %s14, 1
    %p53 = por %p51, %p52
    %p54 = scmp.ne.s32.totalorder %s45, %s46
    %p55 = scmp.eq.s32.totalorder %s14, 0
    %p56 = por %p54, %p55
    %p57 = scmp.ne.s32.totalorder %s45, %s46
    %p58 = scmp.eq.s32.totalorder %s15, 1
    %p59 = por %p57, %p58
    %p61 = scmp.ne.s32.totalorder %s46, %s60
    %p62 = scmp.eq.s32.totalorder %s15, 0
    %p63 = por %p61, %p62
    %s65 = sadd.s32 %s64, 1
    %p68 = scmp.eq.s32.totalorder %s9, 1
    %p69 = scmp.ne.s32.totalorder %s64, %s66
    %p70 = scmp.eq.s32.totalorder %s9, 0
    %p71 = por %p69, %p70
    %p72 = scmp.ne.s32.totalorder %s64, %s66
    %p73 = scmp.eq.s32.totalorder %s14, 1
    %p74 = por %p72, %p73
    %p75 = scmp.ne.s32.totalorder %s66, %s67
    %p76 = scmp.eq.s32.totalorder %s14, 0
    %p77 = por %p75, %p76
    %p78 = scmp.ne.s32.totalorder %s66, %s67
    %p79 = scmp.eq.s32.totalorder %s15, 1
    %p80 = por %p78, %p79
    %p82 = scmp.ne.s32.totalorder %s67, %s81
    %p83 = scmp.eq.s32.totalorder %s15, 0
    %p84 = por %p82, %p83
    %s85 = ssub.s32 %s9, %s16
    %p86 = scmp.eq.s32.totalorder %s85, 0
    %s88 = sadd.s32 %s87, 1
    %s89 = scalar_select %p86, %s87, %s88
    %p92 = pneg %p86
    %p93 = scmp.eq.s32.totalorder %s9, 1
    %p94 = por %p92, %p93
    %p95 = scmp.ne.s32.totalorder %s87, %s90
    %p96 = scmp.eq.s32.totalorder %s9, 0
    %p97 = por %p95, %p96
    %p98 = scmp.ne.s32.totalorder %s87, %s90
    %p99 = scmp.eq.s32.totalorder %s14, 1
    %p100 = por %p98, %p99
    %p101 = scmp.ne.s32.totalorder %s90, %s91
    %p102 = scmp.eq.s32.totalorder %s14, 0
    %p103 = por %p101, %p102
    %p104 = scmp.ne.s32.totalorder %s90, %s91
    %p105 = scmp.eq.s32.totalorder %s15, 1
    %p106 = por %p104, %p105
    %p108 = scmp.ne.s32.totalorder %s91, %s107
    %p109 = scmp.eq.s32.totalorder %s15, 0
    %p110 = por %p108, %p109
    %p111 = scmp.le.s32.totalorder 1, %s9
    %p112 = scmp.lt.s32.totalorder %s9, 3
    %p113 = pnand %p111, %p112
    %p114 = pneg %p113
    // Predicated region
    $region9: #{fpn_forward.13} parent=5 // pred_check
      _
    $region10: #{fpn_forward.13} parent=5 // pred_check_branch
      %116 = sbr.rel (%p113) target = $region12
    $region11: #{fpn_forward.13} parent=5 // pred_region
      %s117 = ssub.s32 %s9, 1
      // Predicated region
      $region13: #{fpn_forward.13} parent=11 // pred_check
        %p118 = pneg %p56
      $region14: #{fpn_forward.13} parent=11 // pred_check_branch
        %120 = sbr.rel (%p118) target = $region16
      $region15: #{fpn_forward.13} parent=11 // pred_region
        _
      $region16: #{fpn_forward.13} parent=11 // pred_fallthru
        _
      // Predicated region
      $region17: #{fpn_forward.13} parent=11 // pred_check
        %p121 = pneg %p77
      $region18: #{fpn_forward.13} parent=11 // pred_check_branch
        %123 = sbr.rel (%p121) target = $region20
      $region19: #{fpn_forward.13} parent=11 // pred_region
        _
      $region20: #{fpn_forward.13} parent=11 // pred_fallthru
        _
    $region12: #{fpn_forward.13} parent=5 // pred_fallthru
      _
    %p124 = scmp.lt.s32.totalorder %s9, 2
    // Predicated region
    $region21: #{fpn_forward.13} parent=5 // pred_check
      %p125 = pneg %p124
    $region22: #{fpn_forward.13} parent=5 // pred_check_branch
      %127 = sbr.rel (%p125) target = $region24
    $region23: #{fpn_forward.13} parent=5 // pred_region
      // Predicated region
      $region25: #{fpn_forward.13} parent=23 // pred_check
        %p128 = pneg %p29
      $region26: #{fpn_forward.13} parent=23 // pred_check_branch
        %130 = sbr.rel (%p128) target = $region28
      $region27: #{fpn_forward.13} parent=23 // pred_region
        %p131 = scmp.lt.s32.totalorder %s9, 1
        %s132 = scalar_select %p131, %s9, 1
        %s133 = smul.addr %s132, 2
        %s134 = smul.addr %s133, 8
        %s135 = scalar_lea.vmem %s0, %s134
      $region28: #{fpn_forward.13} parent=23 // pred_fallthru
        _
    $region24: #{fpn_forward.13} parent=5 // pred_fallthru
      _
    %p136 = scmp.le.s32.totalorder 1, %s9
    %p137 = scmp.lt.s32.totalorder %s9, 3
    %p138 = pnand %p136, %p137
    %p139 = pneg %p138
    // Predicated region
    $region29: #{fpn_forward.13} parent=5 // pred_check
      _
    $region30: #{fpn_forward.13} parent=5 // pred_check_branch
      %141 = sbr.rel (%p138) target = $region32
    $region31: #{fpn_forward.13} parent=5 // pred_region
      %s142 = ssub.s32 %s9, 1
      %p143 = scmp.lt.s32.totalorder %s14, 1
      %s144 = scalar_select %p143, %s14, 1
      %s145 = smul.addr %s144, 2
      %s146 = smul.addr %s145, 8
      %s147 = scalar_lea.vmem %s0, %s146
      %p148 = pneg %p35
      %p149 = pneg %p32
      %p150 = pneg %p56
      %p151 = pneg %p53
      %p152 = pneg %p77
      %p153 = pneg %p74
      %p154 = pneg %p103
      %p155 = pneg %p100
      %p156 = scmp.lt.s32.totalorder %s14, 1
      %s157 = scalar_select %p156, %s14, 1
      %s158 = smul.addr %s157, 2
      %s159 = smul.addr %s158, 8
      %s160 = scalar_lea.vmem %s3, %s159
      %p161 = scmp.lt.s32.totalorder %s14, 1
      %s162 = scalar_select %p161, %s14, 1
      %s163 = smul.addr %s162, 2
      %s164 = smul.addr %s163, 8
      %s165 = scalar_lea.vmem %s0, %s164
      %p166 = scmp.lt.s32.totalorder %s14, 1
      %s167 = scalar_select %p166, %s14, 1
      %s168 = smul.addr %s167, 2
      %s169 = smul.addr %s168, 8
      %s170 = scalar_lea.vmem %s3, %s169
      %v171 = vld [vmem:[%s165] sm:$0xff]
      %v172 = vld [vmem:[%s165 + $0x8] sm:$0xff]
      %v173 = vlaneseq
      %v174 = vand.u32 %v173, 127
      %vm175 = vcmp.lt.s32.totalorder %v174, 0
      %v176 = vsub.s32 0, %v174
      %v177 = vsel %vm175, %v176, %v174
      %v178 = vshrl.u32 %v177, 3
      %v179 = vand.u32 %v177, 7
      %v180 = vsub.s32 0, %v179
      %v181 = vsel %vm175, %v180, %v179
      %vm182 = vcmp.ne.s32.totalorder %v181, 0
      %vm183 = vcmp.lt.s32.totalorder %v181, 0
      %vm184 = vmand %vm183, %vm182
      %v185 = vadd.s32 %v181, 8
      %v186 = vsel %vm184, %v185, %v181
      %vm187 = vcmask 1048064
      %188 = vrot.lane.b32.xlu0 %v171, 64
      %v189 = vpop.permute.xlu0 %188
      %v190 = vsel %vm187, %v189, %v171
      %191 = vrot.lane.b32.xlu0 %v172, 64
      %v192 = vpop.permute.xlu0 %191
      %v193 = vsel %vm187, %v192, %v172
      %194 = vrot.lane.b32.xlu0 %v190, 64
      %v195 = vpop.permute.xlu0 %194
      %196 = vrot.lane.b32.xlu0 %v193, 64
      %v197 = vpop.permute.xlu0 %196
      %v198 = vsel %vm187, %v195, %v171
      %v199 = vsel %vm187, %v197, %v172
      %vm200 = vcmp.ge.s32.totalorder %v186, 1
      %vm201 = vcmp.ge.s32.totalorder %v174, 8
      %vm202 = vmand %vm200, %vm201
      %v203 = vsel %vm202, 1, 0
      %vm204 = vcmp.eq.s32.totalorder %v203, 1
      %207 = vrot.lane.b32.xlu0 %v198, 73
      %v208 = vpop.permute.xlu0 %207
      %209 = vrot.lane.b32.xlu0 %v199, 73
      %v210 = vpop.permute.xlu0 %209
      %v213 = vsel %vm204, %v208, 0.0
      %v214 = vsel %vm204, %v210, 0.0
      %v215 = vld [vmem:[%s1] sm:$0xff]
      %v216 = vld [vmem:[%s1 + $0x8] sm:$0xff]
      %v217 = vsel %vm201, 1, 0
      %vm218 = vcmp.eq.s32.totalorder %v217, 1
      %219 = vrot.lane.b32.xlu0 %v198, 72
      %v220 = vpop.permute.xlu0 %219
      %221 = vrot.lane.b32.xlu0 %v199, 72
      %v222 = vpop.permute.xlu0 %221
      %v225 = vsel %vm218, %v220, 0.0
      %v226 = vsel %vm218, %v222, 0.0
      %s227 = scalar_lea.vmem %s1, 16
      %v228 = vld [vmem:[%s227] sm:$0xff]
      %v229 = vld [vmem:[%s227 + $0x8] sm:$0xff]
      %vm230 = vcmask 130048
      %v232 = vsel %vm230, %v228, 0
      %v235 = vsel %vm230, %v229, 0
      %237 = vmatprep.subr.mxu0 0.0
      %238 = vmatpush1.msra.mxu0 %v225
      %239 = vmatprep.subr.mxu0 0.0
      %240 = vmatpush1.msra.mxu0 %v226
      %241 = vmatprep.subr.mxu0 0.0
      %242 = vmatpush1.msra.mxu0 0.0
      %243 = vmatprep.subr.mxu0 0.0
      %244 = vmatpush1.msra.mxu0 0.0
      %245 = vmatprep.subr.mxu0 0.0
      %246 = vmatpush1.msra.mxu0 0.0
      %247 = vmatprep.subr.mxu0 0.0
      %248 = vmatpush1.msra.mxu0 0.0
      %249 = vmatprep.subr.mxu0 0.0
      %250 = vmatpush1.msra.mxu0 0.0
      %251 = vmatprep.subr.mxu0 0.0
      %252 = vmatpush1.msra.mxu0 0.0
      %253 = vmatprep.subr.mxu0 0.0
      %254 = vmatpush1.msra.mxu0 0.0
      %255 = vmatprep.subr.mxu0 0.0
      %256 = vmatpush1.msra.mxu0 0.0
      %257 = vmatprep.subr.mxu0 0.0
      %258 = vmatpush1.msra.mxu0 0.0
      %259 = vmatprep.subr.mxu0 0.0
      %260 = vmatpush1.msra.mxu0 0.0
      %261 = vmatprep.subr.mxu0 0.0
      %262 = vmatpush1.msra.mxu0 0.0
      %263 = vmatprep.subr.mxu0 0.0
      %264 = vmatpush1.msra.mxu0 0.0
      %265 = vmatprep.subr.mxu0 0.0
      %266 = vmatpush1.msra.mxu0 0.0
      %267 = vmatprep.subr.mxu0 0.0
      %268 = vmatpush1.msra.mxu0 0.0
      %269 = vmatprep.subr.mxu0 0.0
      %270 = vmatpush1.msra.mxu0 0.0
      %271 = vmatprep.subr.mxu0 0.0
      %272 = vmatpush1.msra.mxu0 0.0
      %273 = vmatprep.subr.mxu0 0.0
      %274 = vmatpush1.msra.mxu0 0.0
      %275 = vmatprep.subr.mxu0 0.0
      %276 = vmatpush1.msra.mxu0 0.0
      %277 = vmatprep.subr.mxu0 0.0
      %278 = vmatpush1.msra.mxu0 0.0
      %279 = vmatprep.subr.mxu0 0.0
      %280 = vmatpush1.msra.mxu0 0.0
      %281 = vmatprep.subr.mxu0 0.0
      %282 = vmatpush1.msra.mxu0 0.0
      %283 = vmatprep.subr.mxu0 0.0
      %284 = vmatpush1.msra.mxu0 0.0
      %285 = vmatprep.subr.mxu0 0.0
      %286 = vmatpush1.msra.mxu0 0.0
      %287 = vmatprep.subr.mxu0 0.0
      %288 = vmatpush1.msra.mxu0 0.0
      %289 = vmatprep.subr.mxu0 0.0
      %290 = vmatpush1.msra.mxu0 0.0
      %291 = vmatprep.subr.mxu0 0.0
      %292 = vmatpush1.msra.mxu0 0.0
      %293 = vmatprep.subr.mxu0 0.0
      %294 = vmatpush1.msra.mxu0 0.0
      %295 = vmatprep.subr.mxu0 0.0
      %296 = vmatpush1.msra.mxu0 0.0
      %297 = vmatprep.subr.mxu0 0.0
      %298 = vmatpush1.msra.mxu0 0.0
      %299 = vmatprep.subr.mxu0 0.0
      %300 = vmatpush1.msra.mxu0 0.0
      %301 = vmatprep.mubr.f32.mxu0 0.0
      %302 = vmatmul.mubr.f32.gmra.mrb[0].mxu0 %v232
      %v303 = vpop.f32.mrb[0].mxu0
      %v304 = vadd.f32 0.0, %v303
      %v305 = vpop.f32.mrb[0].mxu0
      %306 = vmatprep.mubr.f32.mxu0 0.0
      %307 = vmatmul.mubr.f32.gmra.mrb[0].mxu0 %v235
      %v308 = vpop.f32.mrb[0].mxu0
      %v309 = vadd.f32 0.0, %v308
      %v310 = vpop.f32.mrb[0].mxu0
      %311 = vdwg.mxu0
      %v313 = vsel %vm230, %v215, 0
      %v316 = vsel %vm230, %v216, 0
      %318 = vmatprep.subr.mxu0 0.0
      %319 = vmatpush1.msra.mxu0 %v213
      %320 = vmatprep.subr.mxu0 0.0
      %321 = vmatpush1.msra.mxu0 %v214
      %322 = vmatprep.subr.mxu0 0.0
      %323 = vmatpush1.msra.mxu0 0.0
      %324 = vmatprep.subr.mxu0 0.0
      %325 = vmatpush1.msra.mxu0 0.0
      %326 = vmatprep.subr.mxu0 0.0
      %327 = vmatpush1.msra.mxu0 0.0
      %328 = vmatprep.subr.mxu0 0.0
      %329 = vmatpush1.msra.mxu0 0.0
      %330 = vmatprep.subr.mxu0 0.0
      %331 = vmatpush1.msra.mxu0 0.0
      %332 = vmatprep.subr.mxu0 0.0
      %333 = vmatpush1.msra.mxu0 0.0
      %334 = vmatprep.subr.mxu0 0.0
      %335 = vmatpush1.msra.mxu0 0.0
      %336 = vmatprep.subr.mxu0 0.0
      %337 = vmatpush1.msra.mxu0 0.0
      %338 = vmatprep.subr.mxu0 0.0
      %339 = vmatpush1.msra.mxu0 0.0
      %340 = vmatprep.subr.mxu0 0.0
      %341 = vmatpush1.msra.mxu0 0.0
      %342 = vmatprep.subr.mxu0 0.0
      %343 = vmatpush1.msra.mxu0 0.0
      %344 = vmatprep.subr.mxu0 0.0
      %345 = vmatpush1.msra.mxu0 0.0
      %346 = vmatprep.subr.mxu0 0.0
      %347 = vmatpush1.msra.mxu0 0.0
      %348 = vmatprep.subr.mxu0 0.0
      %349 = vmatpush1.msra.mxu0 0.0
      %350 = vmatprep.subr.mxu0 0.0
      %351 = vmatpush1.msra.mxu0 0.0
      %352 = vmatprep.subr.mxu0 0.0
      %353 = vmatpush1.msra.mxu0 0.0
      %354 = vmatprep.subr.mxu0 0.0
      %355 = vmatpush1.msra.mxu0 0.0
      %356 = vmatprep.subr.mxu0 0.0
      %357 = vmatpush1.msra.mxu0 0.0
      %358 = vmatprep.subr.mxu0 0.0
      %359 = vmatpush1.msra.mxu0 0.0
      %360 = vmatprep.subr.mxu0 0.0
      %361 = vmatpush1.msra.mxu0 0.0
      %362 = vmatprep.subr.mxu0 0.0
      %363 = vmatpush1.msra.mxu0 0.0
      %364 = vmatprep.subr.mxu0 0.0
      %365 = vmatpush1.msra.mxu0 0.0
      %366 = vmatprep.subr.mxu0 0.0
      %367 = vmatpush1.msra.mxu0 0.0
      %368 = vmatprep.subr.mxu0 0.0
      %369 = vmatpush1.msra.mxu0 0.0
      %370 = vmatprep.subr.mxu0 0.0
      %371 = vmatpush1.msra.mxu0 0.0
      %372 = vmatprep.subr.mxu0 0.0
      %373 = vmatpush1.msra.mxu0 0.0
      %374 = vmatprep.subr.mxu0 0.0
      %375 = vmatpush1.msra.mxu0 0.0
      %376 = vmatprep.subr.mxu0 0.0
      %377 = vmatpush1.msra.mxu0 0.0
      %378 = vmatprep.subr.mxu0 0.0
      %379 = vmatpush1.msra.mxu0 0.0
      %380 = vmatprep.subr.mxu0 0.0
      %381 = vmatpush1.msra.mxu0 0.0
      %382 = vmatprep.mubr.f32.mxu0 0.0
      %383 = vmatmul.mubr.f32.gmra.mrb[0].mxu0 %v313
      %v384 = vpop.f32.mrb[0].mxu0
      %v385 = vadd.f32 %v304, %v384
      %v386 = vpop.f32.mrb[0].mxu0
      %387 = vmatprep.mubr.f32.mxu0 0.0
      %388 = vmatmul.mubr.f32.gmra.mrb[0].mxu0 %v316
      %v389 = vpop.f32.mrb[0].mxu0
      %v390 = vadd.f32 %v309, %v389
      %v391 = vpop.f32.mrb[0].mxu0
      %392 = vdwg.mxu0
      %vm393 = vcmp.lt.s32.totalorder %v186, 7
      %vm394 = vmand %vm393, %vm201
      %v395 = vsel %vm394, 1, 0
      %vm396 = vcmp.eq.s32.totalorder %v395, 1
      %397 = vrot.lane.b32.xlu0 %v198, 71
      %v398 = vpop.permute.xlu0 %397
      %399 = vrot.lane.b32.xlu0 %v199, 71
      %v400 = vpop.permute.xlu0 %399
      %v403 = vsel %vm396, %v398, 0.0
      %v404 = vsel %vm396, %v400, 0.0
      %s405 = scalar_lea.vmem %s1, 32
      %v406 = vld [vmem:[%s405] sm:$0xff]
      %v407 = vld [vmem:[%s405 + $0x8] sm:$0xff]
      %v409 = vsel %vm230, %v406, 0
      %v412 = vsel %vm230, %v407, 0
      %414 = vmatprep.subr.mxu0 0.0
      %415 = vmatpush1.msra.mxu0 %v403
      %416 = vmatprep.subr.mxu0 0.0
      %417 = vmatpush1.msra.mxu0 %v404
      %418 = vmatprep.subr.mxu0 0.0
      %419 = vmatpush1.msra.mxu0 0.0
      %420 = vmatprep.subr.mxu0 0.0
      %421 = vmatpush1.msra.mxu0 0.0
      %422 = vmatprep.subr.mxu0 0.0
      %423 = vmatpush1.msra.mxu0 0.0
      %424 = vmatprep.subr.mxu0 0.0
      %425 = vmatpush1.msra.mxu0 0.0
      %426 = vmatprep.subr.mxu0 0.0
      %427 = vmatpush1.msra.mxu0 0.0
      %428 = vmatprep.subr.mxu0 0.0
      %429 = vmatpush1.msra.mxu0 0.0
      %430 = vmatprep.subr.mxu0 0.0
      %431 = vmatpush1.msra.mxu0 0.0
      %432 = vmatprep.subr.mxu0 0.0
      %433 = vmatpush1.msra.mxu0 0.0
      %434 = vmatprep.subr.mxu0 0.0
      %435 = vmatpush1.msra.mxu0 0.0
      %436 = vmatprep.subr.mxu0 0.0
      %437 = vmatpush1.msra.mxu0 0.0
      %438 = vmatprep.subr.mxu0 0.0
      %439 = vmatpush1.msra.mxu0 0.0
      %440 = vmatprep.subr.mxu0 0.0
      %441 = vmatpush1.msra.mxu0 0.0
      %442 = vmatprep.subr.mxu0 0.0
      %443 = vmatpush1.msra.mxu0 0.0
      %444 = vmatprep.subr.mxu0 0.0
      %445 = vmatpush1.msra.mxu0 0.0
      %446 = vmatprep.subr.mxu0 0.0
      %447 = vmatpush1.msra.mxu0 0.0
      %448 = vmatprep.subr.mxu0 0.0
      %449 = vmatpush1.msra.mxu0 0.0
      %450 = vmatprep.subr.mxu0 0.0
      %451 = vmatpush1.msra.mxu0 0.0
      %452 = vmatprep.subr.mxu0 0.0
      %453 = vmatpush1.msra.mxu0 0.0
      %454 = vmatprep.subr.mxu0 0.0
      %455 = vmatpush1.msra.mxu0 0.0
      %456 = vmatprep.subr.mxu0 0.0
      %457 = vmatpush1.msra.mxu0 0.0
      %458 = vmatprep.subr.mxu0 0.0
      %459 = vmatpush1.msra.mxu0 0.0
      %460 = vmatprep.subr.mxu0 0.0
      %461 = vmatpush1.msra.mxu0 0.0
      %462 = vmatprep.subr.mxu0 0.0
      %463 = vmatpush1.msra.mxu0 0.0
      %464 = vmatprep.subr.mxu0 0.0
      %465 = vmatpush1.msra.mxu0 0.0
      %466 = vmatprep.subr.mxu0 0.0
      %467 = vmatpush1.msra.mxu0 0.0
      %468 = vmatprep.subr.mxu0 0.0
      %469 = vmatpush1.msra.mxu0 0.0
      %470 = vmatprep.subr.mxu0 0.0
      %471 = vmatpush1.msra.mxu0 0.0
      %472 = vmatprep.subr.mxu0 0.0
      %473 = vmatpush1.msra.mxu0 0.0
      %474 = vmatprep.subr.mxu0 0.0
      %475 = vmatpush1.msra.mxu0 0.0
      %476 = vmatprep.subr.mxu0 0.0
      %477 = vmatpush1.msra.mxu0 0.0
      %478 = vmatprep.mubr.f32.mxu0 0.0
      %479 = vmatmul.mubr.f32.gmra.mrb[0].mxu0 %v409
      %v480 = vpop.f32.mrb[0].mxu0
      %v481 = vadd.f32 0.0, %v480
      %v482 = vpop.f32.mrb[0].mxu0
      %483 = vmatprep.mubr.f32.mxu0 0.0
      %484 = vmatmul.mubr.f32.gmra.mrb[0].mxu0 %v412
      %v485 = vpop.f32.mrb[0].mxu0
      %v486 = vadd.f32 0.0, %v485
      %v487 = vpop.f32.mrb[0].mxu0
      %488 = vdwg.mxu0
      %v489 = vadd.f32 %v385, %v481
      %v490 = vadd.f32 %v390, %v486
      %v491 = vsel %vm200, 1, 0
      %vm492 = vcmp.eq.s32.totalorder %v491, 1
      %493 = vrot.lane.b32.xlu0 %v198, 65
      %v494 = vpop.permute.xlu0 %493
      %495 = vrot.lane.b32.xlu0 %v199, 65
      %v496 = vpop.permute.xlu0 %495
      %v499 = vsel %vm492, %v494, 0.0
      %v500 = vsel %vm492, %v496, 0.0
      %s501 = scalar_lea.vmem %s1, 48
      %v502 = vld [vmem:[%s501] sm:$0xff]
      %v503 = vld [vmem:[%s501 + $0x8] sm:$0xff]
      %v505 = vsel %vm230, %v502, 0
      %v508 = vsel %vm230, %v503, 0
      %510 = vmatprep.subr.mxu0 0.0
      %511 = vmatpush1.msra.mxu0 %v499
      %512 = vmatprep.subr.mxu0 0.0
      %513 = vmatpush1.msra.mxu0 %v500
      %514 = vmatprep.subr.mxu0 0.0
      %515 = vmatpush1.msra.mxu0 0.0
      %516 = vmatprep.subr.mxu0 0.0
      %517 = vmatpush1.msra.mxu0 0.0
      %518 = vmatprep.subr.mxu0 0.0
      %519 = vmatpush1.msra.mxu0 0.0
      %520 = vmatprep.subr.mxu0 0.0
      %521 = vmatpush1.msra.mxu0 0.0
      %522 = vmatprep.subr.mxu0 0.0
      %523 = vmatpush1.msra.mxu0 0.0
      %524 = vmatprep.subr.mxu0 0.0
      %525 = vmatpush1.msra.mxu0 0.0
      %526 = vmatprep.subr.mxu0 0.0
      %527 = vmatpush1.msra.mxu0 0.0
      %528 = vmatprep.subr.mxu0 0.0
      %529 = vmatpush1.msra.mxu0 0.0
      %530 = vmatprep.subr.mxu0 0.0
      %531 = vmatpush1.msra.mxu0 0.0
      %532 = vmatprep.subr.mxu0 0.0
      %533 = vmatpush1.msra.mxu0 0.0
      %534 = vmatprep.subr.mxu0 0.0
      %535 = vmatpush1.msra.mxu0 0.0
      %536 = vmatprep.subr.mxu0 0.0
      %537 = vmatpush1.msra.mxu0 0.0
      %538 = vmatprep.subr.mxu0 0.0
      %539 = vmatpush1.msra.mxu0 0.0
      %540 = vmatprep.subr.mxu0 0.0
      %541 = vmatpush1.msra.mxu0 0.0
      %542 = vmatprep.subr.mxu0 0.0
      %543 = vmatpush1.msra.mxu0 0.0
      %544 = vmatprep.subr.mxu0 0.0
      %545 = vmatpush1.msra.mxu0 0.0
      %546 = vmatprep.subr.mxu0 0.0
      %547 = vmatpush1.msra.mxu0 0.0
      %548 = vmatprep.subr.mxu0 0.0
      %549 = vmatpush1.msra.mxu0 0.0
      %550 = vmatprep.subr.mxu0 0.0
      %551 = vmatpush1.msra.mxu0 0.0
      %552 = vmatprep.subr.mxu0 0.0
      %553 = vmatpush1.msra.mxu0 0.0
      %554 = vmatprep.subr.mxu0 0.0
      %555 = vmatpush1.msra.mxu0 0.0
      %556 = vmatprep.subr.mxu0 0.0
      %557 = vmatpush1.msra.mxu0 0.0
      %558 = vmatprep.subr.mxu0 0.0
      %559 = vmatpush1.msra.mxu0 0.0
      %560 = vmatprep.subr.mxu0 0.0
      %561 = vmatpush1.msra.mxu0 0.0
      %562 = vmatprep.subr.mxu0 0.0
      %563 = vmatpush1.msra.mxu0 0.0
      %564 = vmatprep.subr.mxu0 0.0
      %565 = vmatpush1.msra.mxu0 0.0
      %566 = vmatprep.subr.mxu0 0.0
      %567 = vmatpush1.msra.mxu0 0.0
      %568 = vmatprep.subr.mxu0 0.0
      %569 = vmatpush1.msra.mxu0 0.0
      %570 = vmatprep.subr.mxu0 0.0
      %571 = vmatpush1.msra.mxu0 0.0
      %572 = vmatprep.subr.mxu0 0.0
      %573 = vmatpush1.msra.mxu0 0.0
      %574 = vmatprep.mubr.f32.mxu0 0.0
      %575 = vmatmul.mubr.f32.gmra.mrb[0].mxu0 %v505
      %v576 = vpop.f32.mrb[0].mxu0
      %v577 = vadd.f32 0.0, %v576
      %v578 = vpop.f32.mrb[0].mxu0
      %579 = vmatprep.mubr.f32.mxu0 0.0
      %580 = vmatmul.mubr.f32.gmra.mrb[0].mxu0 %v508
      %v581 = vpop.f32.mrb[0].mxu0
      %v582 = vadd.f32 0.0, %v581
      %v583 = vpop.f32.mrb[0].mxu0
      %584 = vdwg.mxu0
      %v585 = vadd.f32 %v489, %v577
      %v586 = vadd.f32 %v490, %v582
      %s587 = scalar_lea.vmem %s1, 64
      %v588 = vld [vmem:[%s587] sm:$0xff]
      %v589 = vld [vmem:[%s587 + $0x8] sm:$0xff]
      %v591 = vsel %vm230, %v588, 0
      %v594 = vsel %vm230, %v589, 0
      %596 = vmatprep.subr.mxu0 0.0
      %597 = vmatpush1.msra.mxu0 %v171
      %598 = vmatprep.subr.mxu0 0.0
      %599 = vmatpush1.msra.mxu0 %v172
      %600 = vmatprep.subr.mxu0 0.0
      %601 = vmatpush1.msra.mxu0 0.0
      %602 = vmatprep.subr.mxu0 0.0
      %603 = vmatpush1.msra.mxu0 0.0
      %604 = vmatprep.subr.mxu0 0.0
      %605 = vmatpush1.msra.mxu0 0.0
      %606 = vmatprep.subr.mxu0 0.0
      %607 = vmatpush1.msra.mxu0 0.0
      %608 = vmatprep.subr.mxu0 0.0
      %609 = vmatpush1.msra.mxu0 0.0
      %610 = vmatprep.subr.mxu0 0.0
      %611 = vmatpush1.msra.mxu0 0.0
      %612 = vmatprep.subr.mxu0 0.0
      %613 = vmatpush1.msra.mxu0 0.0
      %614 = vmatprep.subr.mxu0 0.0
      %615 = vmatpush1.msra.mxu0 0.0
      %616 = vmatprep.subr.mxu0 0.0
      %617 = vmatpush1.msra.mxu0 0.0
      %618 = vmatprep.subr.mxu0 0.0
      %619 = vmatpush1.msra.mxu0 0.0
      %620 = vmatprep.subr.mxu0 0.0
      %621 = vmatpush1.msra.mxu0 0.0
      %622 = vmatprep.subr.mxu0 0.0
      %623 = vmatpush1.msra.mxu0 0.0
      %624 = vmatprep.subr.mxu0 0.0
      %625 = vmatpush1.msra.mxu0 0.0
      %626 = vmatprep.subr.mxu0 0.0
      %627 = vmatpush1.msra.mxu0 0.0
      %628 = vmatprep.subr.mxu0 0.0
      %629 = vmatpush1.msra.mxu0 0.0
      %630 = vmatprep.subr.mxu0 0.0
      %631 = vmatpush1.msra.mxu0 0.0
      %632 = vmatprep.subr.mxu0 0.0
      %633 = vmatpush1.msra.mxu0 0.0
      %634 = vmatprep.subr.mxu0 0.0
      %635 = vmatpush1.msra.mxu0 0.0
      %636 = vmatprep.subr.mxu0 0.0
      %637 = vmatpush1.msra.mxu0 0.0
      %638 = vmatprep.subr.mxu0 0.0
      %639 = vmatpush1.msra.mxu0 0.0
      %640 = vmatprep.subr.mxu0 0.0
      %641 = vmatpush1.msra.mxu0 0.0
      %642 = vmatprep.subr.mxu0 0.0
      %643 = vmatpush1.msra.mxu0 0.0
      %644 = vmatprep.subr.mxu0 0.0
      %645 = vmatpush1.msra.mxu0 0.0
      %646 = vmatprep.subr.mxu0 0.0
      %647 = vmatpush1.msra.mxu0 0.0
      %648 = vmatprep.subr.mxu0 0.0
      %649 = vmatpush1.msra.mxu0 0.0
      %650 = vmatprep.subr.mxu0 0.0
      %651 = vmatpush1.msra.mxu0 0.0
      %652 = vmatprep.subr.mxu0 0.0
      %653 = vmatpush1.msra.mxu0 0.0
      %654 = vmatprep.subr.mxu0 0.0
      %655 = vmatpush1.msra.mxu0 0.0
      %656 = vmatprep.subr.mxu0 0.0
      %657 = vmatpush1.msra.mxu0 0.0
      %658 = vmatprep.subr.mxu0 0.0
      %659 = vmatpush1.msra.mxu0 0.0
      %660 = vmatprep.mubr.f32.mxu0 0.0
      %661 = vmatmul.mubr.f32.gmra.mrb[0].mxu0 %v591
      %v662 = vpop.f32.mrb[0].mxu0
      %v663 = vadd.f32 0.0, %v662
      %v664 = vpop.f32.mrb[0].mxu0
      %665 = vmatprep.mubr.f32.mxu0 0.0
      %666 = vmatmul.mubr.f32.gmra.mrb[0].mxu0 %v594
      %v667 = vpop.f32.mrb[0].mxu0
      %v668 = vadd.f32 0.0, %v667
      %v669 = vpop.f32.mrb[0].mxu0
      %670 = vdwg.mxu0
      %v671 = vadd.f32 %v585, %v663
      %v672 = vadd.f32 %v586, %v668
      %v673 = vsel %vm393, 1, 0
      %vm674 = vcmp.eq.s32.totalorder %v673, 1
      %675 = vrot.lane.b32.xlu0 %v198, 127
      %v676 = vpop.permute.xlu0 %675
      %677 = vrot.lane.b32.xlu0 %v199, 127
      %v678 = vpop.permute.xlu0 %677
      %v681 = vsel %vm674, %v676, 0.0
      %v682 = vsel %vm674, %v678, 0.0
      %s683 = scalar_lea.vmem %s1, 80
      %v684 = vld [vmem:[%s683] sm:$0xff]
      %v685 = vld [vmem:[%s683 + $0x8] sm:$0xff]
      %v687 = vsel %vm230, %v684, 0
      %v690 = vsel %vm230, %v685, 0
      %692 = vmatprep.subr.mxu0 0.0
      %693 = vmatpush1.msra.mxu0 %v681
      %694 = vmatprep.subr.mxu0 0.0
      %695 = vmatpush1.msra.mxu0 %v682
      %696 = vmatprep.subr.mxu0 0.0
      %697 = vmatpush1.msra.mxu0 0.0
      %698 = vmatprep.subr.mxu0 0.0
      %699 = vmatpush1.msra.mxu0 0.0
      %700 = vmatprep.subr.mxu0 0.0
      %701 = vmatpush1.msra.mxu0 0.0
      %702 = vmatprep.subr.mxu0 0.0
      %703 = vmatpush1.msra.mxu0 0.0
      %704 = vmatprep.subr.mxu0 0.0
      %705 = vmatpush1.msra.mxu0 0.0
      %706 = vmatprep.subr.mxu0 0.0
      %707 = vmatpush1.msra.mxu0 0.0
      %708 = vmatprep.subr.mxu0 0.0
      %709 = vmatpush1.msra.mxu0 0.0
      %710 = vmatprep.subr.mxu0 0.0
      %711 = vmatpush1.msra.mxu0 0.0
      %712 = vmatprep.subr.mxu0 0.0
      %713 = vmatpush1.msra.mxu0 0.0
      %714 = vmatprep.subr.mxu0 0.0
      %715 = vmatpush1.msra.mxu0 0.0
      %716 = vmatprep.subr.mxu0 0.0
      %717 = vmatpush1.msra.mxu0 0.0
      %718 = vmatprep.subr.mxu0 0.0
      %719 = vmatpush1.msra.mxu0 0.0
      %720 = vmatprep.subr.mxu0 0.0
      %721 = vmatpush1.msra.mxu0 0.0
      %722 = vmatprep.subr.mxu0 0.0
      %723 = vmatpush1.msra.mxu0 0.0
      %724 = vmatprep.subr.mxu0 0.0
      %725 = vmatpush1.msra.mxu0 0.0
      %726 = vmatprep.subr.mxu0 0.0
      %727 = vmatpush1.msra.mxu0 0.0
      %728 = vmatprep.subr.mxu0 0.0
      %729 = vmatpush1.msra.mxu0 0.0
      %730 = vmatprep.subr.mxu0 0.0
      %731 = vmatpush1.msra.mxu0 0.0
      %732 = vmatprep.subr.mxu0 0.0
      %733 = vmatpush1.msra.mxu0 0.0
      %734 = vmatprep.subr.mxu0 0.0
      %735 = vmatpush1.msra.mxu0 0.0
      %736 = vmatprep.subr.mxu0 0.0
      %737 = vmatpush1.msra.mxu0 0.0
      %738 = vmatprep.subr.mxu0 0.0
      %739 = vmatpush1.msra.mxu0 0.0
      %740 = vmatprep.subr.mxu0 0.0
      %741 = vmatpush1.msra.mxu0 0.0
      %742 = vmatprep.subr.mxu0 0.0
      %743 = vmatpush1.msra.mxu0 0.0
      %744 = vmatprep.subr.mxu0 0.0
      %745 = vmatpush1.msra.mxu0 0.0
      %746 = vmatprep.subr.mxu0 0.0
      %747 = vmatpush1.msra.mxu0 0.0
      %748 = vmatprep.subr.mxu0 0.0
      %749 = vmatpush1.msra.mxu0 0.0
      %750 = vmatprep.subr.mxu0 0.0
      %751 = vmatpush1.msra.mxu0 0.0
      %752 = vmatprep.subr.mxu0 0.0
      %753 = vmatpush1.msra.mxu0 0.0
      %754 = vmatprep.subr.mxu0 0.0
      %755 = vmatpush1.msra.mxu0 0.0
      %756 = vmatprep.mubr.f32.mxu0 0.0
      %757 = vmatmul.mubr.f32.gmra.mrb[0].mxu0 %v687
      %v758 = vpop.f32.mrb[0].mxu0
      %v759 = vadd.f32 0.0, %v758
      %v760 = vpop.f32.mrb[0].mxu0
      %761 = vmatprep.mubr.f32.mxu0 0.0
      %762 = vmatmul.mubr.f32.gmra.mrb[0].mxu0 %v690
      %v763 = vpop.f32.mrb[0].mxu0
      %v764 = vadd.f32 0.0, %v763
      %v765 = vpop.f32.mrb[0].mxu0
      %766 = vdwg.mxu0
      %v767 = vadd.f32 %v671, %v759
      %v768 = vadd.f32 %v672, %v764
      %vm769 = vcmp.lt.s32.totalorder %v174, 56
      %vm770 = vmand %vm200, %vm769
      %v771 = vsel %vm770, 1, 0
      %vm772 = vcmp.eq.s32.totalorder %v771, 1
      %773 = vrot.lane.b32.xlu0 %v198, 121
      %v774 = vpop.permute.xlu0 %773
      %775 = vrot.lane.b32.xlu0 %v199, 121
      %v776 = vpop.permute.xlu0 %775
      %v779 = vsel %vm772, %v774, 0.0
      %v780 = vsel %vm772, %v776, 0.0
      %s781 = scalar_lea.vmem %s1, 96
      %v782 = vld [vmem:[%s781] sm:$0xff]
      %v783 = vld [vmem:[%s781 + $0x8] sm:$0xff]
      %v785 = vsel %vm230, %v782, 0
      %v788 = vsel %vm230, %v783, 0
      %790 = vmatprep.subr.mxu0 0.0
      %791 = vmatpush1.msra.mxu0 %v779
      %792 = vmatprep.subr.mxu0 0.0
      %793 = vmatpush1.msra.mxu0 %v780
      %794 = vmatprep.subr.mxu0 0.0
      %795 = vmatpush1.msra.mxu0 0.0
      %796 = vmatprep.subr.mxu0 0.0
      %797 = vmatpush1.msra.mxu0 0.0
      %798 = vmatprep.subr.mxu0 0.0
      %799 = vmatpush1.msra.mxu0 0.0
      %800 = vmatprep.subr.mxu0 0.0
      %801 = vmatpush1.msra.mxu0 0.0
      %802 = vmatprep.subr.mxu0 0.0
      %803 = vmatpush1.msra.mxu0 0.0
      %804 = vmatprep.subr.mxu0 0.0
      %805 = vmatpush1.msra.mxu0 0.0
      %806 = vmatprep.subr.mxu0 0.0
      %807 = vmatpush1.msra.mxu0 0.0
      %808 = vmatprep.subr.mxu0 0.0
      %809 = vmatpush1.msra.mxu0 0.0
      %810 = vmatprep.subr.mxu0 0.0
      %811 = vmatpush1.msra.mxu0 0.0
      %812 = vmatprep.subr.mxu0 0.0
      %813 = vmatpush1.msra.mxu0 0.0
      %814 = vmatprep.subr.mxu0 0.0
      %815 = vmatpush1.msra.mxu0 0.0
      %816 = vmatprep.subr.mxu0 0.0
      %817 = vmatpush1.msra.mxu0 0.0
      %818 = vmatprep.subr.mxu0 0.0
      %819 = vmatpush1.msra.mxu0 0.0
      %820 = vmatprep.subr.mxu0 0.0
      %821 = vmatpush1.msra.mxu0 0.0
      %822 = vmatprep.subr.mxu0 0.0
      %823 = vmatpush1.msra.mxu0 0.0
      %824 = vmatprep.subr.mxu0 0.0
      %825 = vmatpush1.msra.mxu0 0.0
      %826 = vmatprep.subr.mxu0 0.0
      %827 = vmatpush1.msra.mxu0 0.0
      %828 = vmatprep.subr.mxu0 0.0
      %829 = vmatpush1.msra.mxu0 0.0
      %830 = vmatprep.subr.mxu0 0.0
      %831 = vmatpush1.msra.mxu0 0.0
      %832 = vmatprep.subr.mxu0 0.0
      %833 = vmatpush1.msra.mxu0 0.0
      %834 = vmatprep.subr.mxu0 0.0
      %835 = vmatpush1.msra.mxu0 0.0
      %836 = vmatprep.subr.mxu0 0.0
      %837 = vmatpush1.msra.mxu0 0.0
      %838 = vmatprep.subr.mxu0 0.0
      %839 = vmatpush1.msra.mxu0 0.0
      %840 = vmatprep.subr.mxu0 0.0
      %841 = vmatpush1.msra.mxu0 0.0
      %842 = vmatprep.subr.mxu0 0.0
      %843 = vmatpush1.msra.mxu0 0.0
      %844 = vmatprep.subr.mxu0 0.0
      %845 = vmatpush1.msra.mxu0 0.0
      %846 = vmatprep.subr.mxu0 0.0
      %847 = vmatpush1.msra.mxu0 0.0
      %848 = vmatprep.subr.mxu0 0.0
      %849 = vmatpush1.msra.mxu0 0.0
      %850 = vmatprep.subr.mxu0 0.0
      %851 = vmatpush1.msra.mxu0 0.0
      %852 = vmatprep.subr.mxu0 0.0
      %853 = vmatpush1.msra.mxu0 0.0
      %854 = vmatprep.mubr.f32.mxu0 0.0
      %855 = vmatmul.mubr.f32.gmra.mrb[0].mxu0 %v785
      %v856 = vpop.f32.mrb[0].mxu0
      %v857 = vadd.f32 0.0, %v856
      %v858 = vpop.f32.mrb[0].mxu0
      %859 = vmatprep.mubr.f32.mxu0 0.0
      %860 = vmatmul.mubr.f32.gmra.mrb[0].mxu0 %v788
      %v861 = vpop.f32.mrb[0].mxu0
      %v862 = vadd.f32 0.0, %v861
      %v863 = vpop.f32.mrb[0].mxu0
      %864 = vdwg.mxu0
      %v865 = vadd.f32 %v767, %v857
      %v866 = vadd.f32 %v768, %v862
      %v867 = vsel %vm769, 1, 0
      %vm868 = vcmp.eq.s32.totalorder %v867, 1
      %869 = vrot.lane.b32.xlu0 %v198, 120
      %v870 = vpop.permute.xlu0 %869
      %871 = vrot.lane.b32.xlu0 %v199, 120
      %v872 = vpop.permute.xlu0 %871
      %v875 = vsel %vm868, %v870, 0.0
      %v876 = vsel %vm868, %v872, 0.0
      %s877 = scalar_lea.vmem %s1, 112
      %v878 = vld [vmem:[%s877] sm:$0xff]
      %v879 = vld [vmem:[%s877 + $0x8] sm:$0xff]
      %v881 = vsel %vm230, %v878, 0
      %v884 = vsel %vm230, %v879, 0
      %886 = vmatprep.subr.mxu0 0.0
      %887 = vmatpush1.msra.mxu0 %v875
      %888 = vmatprep.subr.mxu0 0.0
      %889 = vmatpush1.msra.mxu0 %v876
      %890 = vmatprep.subr.mxu0 0.0
      %891 = vmatpush1.msra.mxu0 0.0
      %892 = vmatprep.subr.mxu0 0.0
      %893 = vmatpush1.msra.mxu0 0.0
      %894 = vmatprep.subr.mxu0 0.0
      %895 = vmatpush1.msra.mxu0 0.0
      %896 = vmatprep.subr.mxu0 0.0
      %897 = vmatpush1.msra.mxu0 0.0
      %898 = vmatprep.subr.mxu0 0.0
      %899 = vmatpush1.msra.mxu0 0.0
      %900 = vmatprep.subr.mxu0 0.0
      %901 = vmatpush1.msra.mxu0 0.0
      %902 = vmatprep.subr.mxu0 0.0
      %903 = vmatpush1.msra.mxu0 0.0
      %904 = vmatprep.subr.mxu0 0.0
      %905 = vmatpush1.msra.mxu0 0.0
      %906 = vmatprep.subr.mxu0 0.0
      %907 = vmatpush1.msra.mxu0 0.0
      %908 = vmatprep.subr.mxu0 0.0
      %909 = vmatpush1.msra.mxu0 0.0
      %910 = vmatprep.subr.mxu0 0.0
      %911 = vmatpush1.msra.mxu0 0.0
      %912 = vmatprep.subr.mxu0 0.0
      %913 = vmatpush1.msra.mxu0 0.0
      %914 = vmatprep.subr.mxu0 0.0
      %915 = vmatpush1.msra.mxu0 0.0
      %916 = vmatprep.subr.mxu0 0.0
      %917 = vmatpush1.msra.mxu0 0.0
      %918 = vmatprep.subr.mxu0 0.0
      %919 = vmatpush1.msra.mxu0 0.0
      %920 = vmatprep.subr.mxu0 0.0
      %921 = vmatpush1.msra.mxu0 0.0
      %922 = vmatprep.subr.mxu0 0.0
      %923 = vmatpush1.msra.mxu0 0.0
      %924 = vmatprep.subr.mxu0 0.0
      %925 = vmatpush1.msra.mxu0 0.0
      %926 = vmatprep.subr.mxu0 0.0
      %927 = vmatpush1.msra.mxu0 0.0
      %928 = vmatprep.subr.mxu0 0.0
      %929 = vmatpush1.msra.mxu0 0.0
      %930 = vmatprep.subr.mxu0 0.0
      %931 = vmatpush1.msra.mxu0 0.0
      %932 = vmatprep.subr.mxu0 0.0
      %933 = vmatpush1.msra.mxu0 0.0
      %934 = vmatprep.subr.mxu0 0.0
      %935 = vmatpush1.msra.mxu0 0.0
      %936 = vmatprep.subr.mxu0 0.0
      %937 = vmatpush1.msra.mxu0 0.0
      %938 = vmatprep.subr.mxu0 0.0
      %939 = vmatpush1.msra.mxu0 0.0
      %940 = vmatprep.subr.mxu0 0.0
      %941 = vmatpush1.msra.mxu0 0.0
      %942 = vmatprep.subr.mxu0 0.0
      %943 = vmatpush1.msra.mxu0 0.0
      %944 = vmatprep.subr.mxu0 0.0
      %945 = vmatpush1.msra.mxu0 0.0
      %946 = vmatprep.subr.mxu0 0.0
      %947 = vmatpush1.msra.mxu0 0.0
      %948 = vmatprep.subr.mxu0 0.0
      %949 = vmatpush1.msra.mxu0 0.0
      %950 = vmatprep.mubr.f32.mxu0 0.0
      %951 = vmatmul.mubr.f32.gmra.mrb[0].mxu0 %v881
      %v952 = vpop.f32.mrb[0].mxu0
      %v953 = vadd.f32 0.0, %v952
      %v954 = vpop.f32.mrb[0].mxu0
      %955 = vmatprep.mubr.f32.mxu0 0.0
      %956 = vmatmul.mubr.f32.gmra.mrb[0].mxu0 %v884
      %v957 = vpop.f32.mrb[0].mxu0
      %v958 = vadd.f32 0.0, %v957
      %v959 = vpop.f32.mrb[0].mxu0
      %960 = vdwg.mxu0
      %v961 = vadd.f32 %v865, %v953
      %v962 = vadd.f32 %v866, %v958
      %vm963 = vmand %vm393, %vm769
      %v964 = vsel %vm963, 1, 0
      %vm965 = vcmp.eq.s32.totalorder %v964, 1
      %966 = vrot.lane.b32.xlu0 %v198, 119
      %v967 = vpop.permute.xlu0 %966
      %968 = vrot.lane.b32.xlu0 %v199, 119
      %v969 = vpop.permute.xlu0 %968
      %v972 = vsel %vm965, %v967, 0.0
      %v973 = vsel %vm965, %v969, 0.0
      %s974 = scalar_lea.vmem %s1, 128
      %v975 = vld [vmem:[%s974] sm:$0xff]
      %v976 = vld [vmem:[%s974 + $0x8] sm:$0xff]
      %v978 = vsel %vm230, %v975, 0
      %v981 = vsel %vm230, %v976, 0
      %983 = vmatprep.subr.mxu0 0.0
      %984 = vmatpush1.msra.mxu0 %v972
      %985 = vmatprep.subr.mxu0 0.0
      %986 = vmatpush1.msra.mxu0 %v973
      %987 = vmatprep.subr.mxu0 0.0
      %988 = vmatpush1.msra.mxu0 0.0
      %989 = vmatprep.subr.mxu0 0.0
      %990 = vmatpush1.msra.mxu0 0.0
      %991 = vmatprep.subr.mxu0 0.0
      %992 = vmatpush1.msra.mxu0 0.0
      %993 = vmatprep.subr.mxu0 0.0
      %994 = vmatpush1.msra.mxu0 0.0
      %995 = vmatprep.subr.mxu0 0.0
      %996 = vmatpush1.msra.mxu0 0.0
      %997 = vmatprep.subr.mxu0 0.0
      %998 = vmatpush1.msra.mxu0 0.0
      %999 = vmatprep.subr.mxu0 0.0
      %1000 = vmatpush1.msra.mxu0 0.0
      %1001 = vmatprep.subr.mxu0 0.0
      %1002 = vmatpush1.msra.mxu0 0.0
      %1003 = vmatprep.subr.mxu0 0.0
      %1004 = vmatpush1.msra.mxu0 0.0
      %1005 = vmatprep.subr.mxu0 0.0
      %1006 = vmatpush1.msra.mxu0 0.0
      %1007 = vmatprep.subr.mxu0 0.0
      %1008 = vmatpush1.msra.mxu0 0.0
      %1009 = vmatprep.subr.mxu0 0.0
      %1010 = vmatpush1.msra.mxu0 0.0
      %1011 = vmatprep.subr.mxu0 0.0
      %1012 = vmatpush1.msra.mxu0 0.0
      %1013 = vmatprep.subr.mxu0 0.0
      %1014 = vmatpush1.msra.mxu0 0.0
      %1015 = vmatprep.subr.mxu0 0.0
      %1016 = vmatpush1.msra.mxu0 0.0
      %1017 = vmatprep.subr.mxu0 0.0
      %1018 = vmatpush1.msra.mxu0 0.0
      %1019 = vmatprep.subr.mxu0 0.0
      %1020 = vmatpush1.msra.mxu0 0.0
      %1021 = vmatprep.subr.mxu0 0.0
      %1022 = vmatpush1.msra.mxu0 0.0
      %1023 = vmatprep.subr.mxu0 0.0
      %1024 = vmatpush1.msra.mxu0 0.0
      %1025 = vmatprep.subr.mxu0 0.0
      %1026 = vmatpush1.msra.mxu0 0.0
      %1027 = vmatprep.subr.mxu0 0.0
      %1028 = vmatpush1.msra.mxu0 0.0
      %1029 = vmatprep.subr.mxu0 0.0
      %1030 = vmatpush1.msra.mxu0 0.0
      %1031 = vmatprep.subr.mxu0 0.0
      %1032 = vmatpush1.msra.mxu0 0.0
      %1033 = vmatprep.subr.mxu0 0.0
      %1034 = vmatpush1.msra.mxu0 0.0
      %1035 = vmatprep.subr.mxu0 0.0
      %1036 = vmatpush1.msra.mxu0 0.0
      %1037 = vmatprep.subr.mxu0 0.0
      %1038 = vmatpush1.msra.mxu0 0.0
      %1039 = vmatprep.subr.mxu0 0.0
      %1040 = vmatpush1.msra.mxu0 0.0
      %1041 = vmatprep.subr.mxu0 0.0
      %1042 = vmatpush1.msra.mxu0 0.0
      %1043 = vmatprep.subr.mxu0 0.0
      %1044 = vmatpush1.msra.mxu0 0.0
      %1045 = vmatprep.subr.mxu0 0.0
      %1046 = vmatpush1.msra.mxu0 0.0
      %1047 = vmatprep.mubr.f32.mxu0 0.0
      %1048 = vmatmul.mubr.f32.gmra.mrb[0].mxu0 %v978
      %v1049 = vpop.f32.mrb[0].mxu0
      %v1050 = vadd.f32 0.0, %v1049
      %v1051 = vpop.f32.mrb[0].mxu0
      %1052 = vmatprep.mubr.f32.mxu0 0.0
      %1053 = vmatmul.mubr.f32.gmra.mrb[0].mxu0 %v981
      %v1054 = vpop.f32.mrb[0].mxu0
      %v1055 = vadd.f32 0.0, %v1054
      %v1056 = vpop.f32.mrb[0].mxu0
      %1057 = vdwg.mxu0
      %v1058 = vadd.f32 %v961, %v1050
      %v1059 = vadd.f32 %v962, %v1055
      %v1060 = vld [vmem:[%s2] sm:$0xff]
      %v1061 = vld [vmem:[%s2 + $0x8] sm:$0xff]
      %1063 = vset.pattern.permute.xlu0 0
      %1064 = vperm.xlu0 %1063, %v1060
      %v1065 = vpop.permute.xlu0 %1064
      %1068 = vset.pattern.permute.xlu0 0
      %1069 = vperm.xlu0 %1068, %v1061
      %v1070 = vpop.permute.xlu0 %1069
      %v1072 = vadd.f32 %v1058, %v1065
      %v1073 = vadd.f32 %v1059, %v1070
      %vm1074 = vcmask 523264
      %1075 = vst.msk [vmem:[%s170] sm:$0xff] %vm1074, %v1072
      %1076 = vst.msk [vmem:[%s170 + $0x8] sm:$0xff] %vm1074, %v1073
      %p1077 = scmp.lt.s32.totalorder %s14, 1
      %s1078 = scalar_select %p1077, %s14, 1
      %s1079 = smul.addr %s1078, 2
      %s1080 = smul.addr %s1079, 8
      %s1081 = scalar_lea.vmem %s3, %s1080
      // Predicated region
      $region33: #{fpn_forward.13} parent=31 // pred_check
        %p1082 = pneg %p100
      $region34: #{fpn_forward.13} parent=31 // pred_check_branch
        %1084 = sbr.rel (%p1082) target = $region36
      $region35: #{fpn_forward.13} parent=31 // pred_region
        _
      $region36: #{fpn_forward.13} parent=31 // pred_fallthru
        _
    $region32: #{fpn_forward.13} parent=5 // pred_fallthru
      _
    %p1085 = scmp.le.s32.totalorder 2, %s9
    // Predicated region
    $region37: #{fpn_forward.13} parent=5 // pred_check
      %p1086 = pneg %p1085
    $region38: #{fpn_forward.13} parent=5 // pred_check_branch
      %1088 = sbr.rel (%p1086) target = $region40
    $region39: #{fpn_forward.13} parent=5 // pred_region
      %s1089 = ssub.s32 %s9, 2
      // Predicated region
      $region41: #{fpn_forward.13} parent=39 // pred_check
        %p1090 = pneg %p106
      $region42: #{fpn_forward.13} parent=39 // pred_check_branch
        %1092 = sbr.rel (%p1090) target = $region44
      $region43: #{fpn_forward.13} parent=39 // pred_region
        %p1093 = scmp.lt.s32.totalorder %s15, 1
        %s1094 = scalar_select %p1093, %s15, 1
        %s1095 = smul.addr %s1094, 2
        %s1096 = smul.addr %s1095, 8
        %s1097 = scalar_lea.vmem %s3, %s1096
      $region44: #{fpn_forward.13} parent=39 // pred_fallthru
        _
    $region40: #{fpn_forward.13} parent=5 // pred_fallthru
      _
  $region6: #{fpn_forward.13} parent=0 // loop_footer
    %s13 = sadd.s32 1, %s9
  $region7: #{fpn_forward.13} parent=0 // loop_footer_branch
    %8 = sbr.rel target = $region3
  $region8: #{fpn_forward.13} parent=0 // loop_exit
    _

// kernel: fpn_forward.12
$region0: #{fpn_forward.12}
  #allocation0 [shape = 'u32[]', space=smem, size = 0x4, offset = 0x4, fixed_abs, tag = 'smem constant byte address 0x4 - core index']
  #allocation1 [shape = 'u32[144,128]{1,0:T(1,128)}', space=vmem, size = 0x12000, scoped, tag = 'internal scratch']
  %s0 = inlined_call_operand.vmem [shape: f32[2,16,256], index: 0, kind: input, shape index: {}]
  %s1 = inlined_call_operand.vmem [shape: f32[9,16,16], index: 1, kind: input, shape index: {}]
  %s2 = inlined_call_operand.vmem [shape: f32[16,1], index: 2, kind: input, shape index: {}]
  %s3 = inlined_call_operand.vmem [shape: f32[2,16,256], index: 3, kind: output, shape index: {}]
  %s4 = sld [smem:[#allocation0]]
  $region45: #{fpn_forward.12} parent=0
    _
  %s6 = ssub.s32 1, %s4
  %s7 = scalar_select 0, %s6, %s4
  loop: start=0, step=1, limit=4
  $region2: #{fpn_forward.12} parent=0 // loop_pre_header
    _
  $region3: #{fpn_forward.12} parent=0 // loop_header
    %s9 = sphi 0, %s13
    %p10 = scmp.ge.s32.totalorder %s9, 4
    %s19 = sphi 0, %s21
    %s22 = sphi 0, %s19
    %s23 = sphi 0, %s22
    %s39 = sphi 0, %s23
    %s43 = sphi 0, %s43
    %s45 = sphi 0, %s43
    %s46 = sphi 0, %s45
    %s60 = sphi 0, %s46
    %s64 = sphi 0, %s64
    %s66 = sphi 0, %s64
    %s67 = sphi 0, %s66
    %s81 = sphi 0, %s67
    %s87 = sphi 0, %s89
    %s90 = sphi 0, %s87
    %s91 = sphi 0, %s90
    %s107 = sphi 0, %s91
  $region4: #{fpn_forward.12} parent=0 // loop_header_branch
    %12 = sbr.rel (%p10) target = $region8
  $region5: #{fpn_forward.12} parent=0 // loop_body
    %s14 = ssub.s32 %s9, 1
    %s15 = ssub.s32 %s9, 2
    %s16 = sadd.s32 %s9, 1
    %s17 = ssub.s32 %s9, %s16
    %p18 = scmp.eq.s32.totalorder %s17, 0
    %s20 = sadd.s32 %s19, 1
    %s21 = scalar_select %p18, %s19, %s20
    %p24 = pneg %p18
    %p25 = scmp.eq.s32.totalorder %s9, 1
    %p26 = por %p24, %p25
    %p27 = scmp.ne.s32.totalorder %s19, %s22
    %p28 = scmp.eq.s32.totalorder %s9, 0
    %p29 = por %p27, %p28
    %p30 = scmp.ne.s32.totalorder %s19, %s22
    %p31 = scmp.eq.s32.totalorder %s14, 1
    %p32 = por %p30, %p31
    %p33 = scmp.ne.s32.totalorder %s22, %s23
    %p34 = scmp.eq.s32.totalorder %s14, 0
    %p35 = por %p33, %p34
    %p36 = scmp.ne.s32.totalorder %s22, %s23
    %p37 = scmp.eq.s32.totalorder %s15, 1
    %p38 = por %p36, %p37
    %p40 = scmp.ne.s32.totalorder %s23, %s39
    %p41 = scmp.eq.s32.totalorder %s15, 0
    %p42 = por %p40, %p41
    %s44 = sadd.s32 %s43, 1
    %p47 = scmp.eq.s32.totalorder %s9, 1
    %p48 = scmp.ne.s32.totalorder %s43, %s45
    %p49 = scmp.eq.s32.totalorder %s9, 0
    %p50 = por %p48, %p49
    %p51 = scmp.ne.s32.totalorder %s43, %s45
    %p52 = scmp.eq.s32.totalorder %s14, 1
    %p53 = por %p51, %p52
    %p54 = scmp.ne.s32.totalorder %s45, %s46
    %p55 = scmp.eq.s32.totalorder %s14, 0
    %p56 = por %p54, %p55
    %p57 = scmp.ne.s32.totalorder %s45, %s46
    %p58 = scmp.eq.s32.totalorder %s15, 1
    %p59 = por %p57, %p58
    %p61 = scmp.ne.s32.totalorder %s46, %s60
    %p62 = scmp.eq.s32.totalorder %s15, 0
    %p63 = por %p61, %p62
    %s65 = sadd.s32 %s64, 1
    %p68 = scmp.eq.s32.totalorder %s9, 1
    %p69 = scmp.ne.s32.totalorder %s64, %s66
    %p70 = scmp.eq.s32.totalorder %s9, 0
    %p71 = por %p69, %p70
    %p72 = scmp.ne.s32.totalorder %s64, %s66
    %p73 = scmp.eq.s32.totalorder %s14, 1
    %p74 = por %p72, %p73
    %p75 = scmp.ne.s32.totalorder %s66, %s67
    %p76 = scmp.eq.s32.totalorder %s14, 0
    %p77 = por %p75, %p76
    %p78 = scmp.ne.s32.totalorder %s66, %s67
    %p79 = scmp.eq.s32.totalorder %s15, 1
    %p80 = por %p78, %p79
    %p82 = scmp.ne.s32.totalorder %s67, %s81
    %p83 = scmp.eq.s32.totalorder %s15, 0
    %p84 = por %p82, %p83
    %s85 = ssub.s32 %s9, %s16
    %p86 = scmp.eq.s32.totalorder %s85, 0
    %s88 = sadd.s32 %s87, 1
    %s89 = scalar_select %p86, %s87, %s88
    %p92 = pneg %p86
    %p93 = scmp.eq.s32.totalorder %s9, 1
    %p94 = por %p92, %p93
    %p95 = scmp.ne.s32.totalorder %s87, %s90
    %p96 = scmp.eq.s32.totalorder %s9, 0
    %p97 = por %p95, %p96
    %p98 = scmp.ne.s32.totalorder %s87, %s90
    %p99 = scmp.eq.s32.totalorder %s14, 1
    %p100 = por %p98, %p99
    %p101 = scmp.ne.s32.totalorder %s90, %s91
    %p102 = scmp.eq.s32.totalorder %s14, 0
    %p103 = por %p101, %p102
    %p104 = scmp.ne.s32.totalorder %s90, %s91
    %p105 = scmp.eq.s32.totalorder %s15, 1
    %p106 = por %p104, %p105
    %p108 = scmp.ne.s32.totalorder %s91, %s107
    %p109 = scmp.eq.s32.totalorder %s15, 0
    %p110 = por %p108, %p109
    %p111 = scmp.le.s32.totalorder 1, %s9
    %p112 = scmp.lt.s32.totalorder %s9, 3
    %p113 = pnand %p111, %p112
    %p114 = pneg %p113
    // Predicated region
    $region9: #{fpn_forward.12} parent=5 // pred_check
      _
    $region10: #{fpn_forward.12} parent=5 // pred_check_branch
      %116 = sbr.rel (%p113) target = $region12
    $region11: #{fpn_forward.12} parent=5 // pred_region
      %s117 = ssub.s32 %s9, 1
      // Predicated region
      $region13: #{fpn_forward.12} parent=11 // pred_check
        %p118 = pneg %p56
      $region14: #{fpn_forward.12} parent=11 // pred_check_branch
        %120 = sbr.rel (%p118) target = $region16
      $region15: #{fpn_forward.12} parent=11 // pred_region
        _
      $region16: #{fpn_forward.12} parent=11 // pred_fallthru
        _
      // Predicated region
      $region17: #{fpn_forward.12} parent=11 // pred_check
        %p121 = pneg %p77
      $region18: #{fpn_forward.12} parent=11 // pred_check_branch
        %123 = sbr.rel (%p121) target = $region20
      $region19: #{fpn_forward.12} parent=11 // pred_region
        _
      $region20: #{fpn_forward.12} parent=11 // pred_fallthru
        _
    $region12: #{fpn_forward.12} parent=5 // pred_fallthru
      _
    %p124 = scmp.lt.s32.totalorder %s9, 2
    // Predicated region
    $region21: #{fpn_forward.12} parent=5 // pred_check
      %p125 = pneg %p124
    $region22: #{fpn_forward.12} parent=5 // pred_check_branch
      %127 = sbr.rel (%p125) target = $region24
    $region23: #{fpn_forward.12} parent=5 // pred_region
      // Predicated region
      $region25: #{fpn_forward.12} parent=23 // pred_check
        %p128 = pneg %p29
      $region26: #{fpn_forward.12} parent=23 // pred_check_branch
        %130 = sbr.rel (%p128) target = $region28
      $region27: #{fpn_forward.12} parent=23 // pred_region
        %p131 = scmp.lt.s32.totalorder %s9, 1
        %s132 = scalar_select %p131, %s9, 1
        %s133 = smul.addr %s132, 4
        %s134 = smul.addr %s133, 8
        %s135 = scalar_lea.vmem %s0, %s134
      $region28: #{fpn_forward.12} parent=23 // pred_fallthru
        _
    $region24: #{fpn_forward.12} parent=5 // pred_fallthru
      _
    %p136 = scmp.le.s32.totalorder 1, %s9
    %p137 = scmp.lt.s32.totalorder %s9, 3
    %p138 = pnand %p136, %p137
    %p139 = pneg %p138
    // Predicated region
    $region29: #{fpn_forward.12} parent=5 // pred_check
      _
    $region30: #{fpn_forward.12} parent=5 // pred_check_branch
      %141 = sbr.rel (%p138) target = $region32
    $region31: #{fpn_forward.12} parent=5 // pred_region
      %s142 = ssub.s32 %s9, 1
      %p143 = scmp.lt.s32.totalorder %s14, 1
      %s144 = scalar_select %p143, %s14, 1
      %s145 = smul.addr %s144, 4
      %s146 = smul.addr %s145, 8
      %s147 = scalar_lea.vmem %s0, %s146
      %p148 = pneg %p35
      %p149 = pneg %p32
      %p150 = pneg %p56
      %p151 = pneg %p53
      %p152 = pneg %p77
      %p153 = pneg %p74
      %p154 = pneg %p103
      %p155 = pneg %p100
      %p156 = scmp.lt.s32.totalorder %s14, 1
      %s157 = scalar_select %p156, %s14, 1
      %s158 = smul.addr %s157, 4
      %s159 = smul.addr %s158, 8
      %s160 = scalar_lea.vmem %s3, %s159
      %p161 = scmp.lt.s32.totalorder %s14, 1
      %s162 = scalar_select %p161, %s14, 1
      %s163 = smul.addr %s162, 4
      %s164 = smul.addr %s163, 8
      %s165 = scalar_lea.vmem %s0, %s164
      %p166 = scmp.lt.s32.totalorder %s14, 1
      %s167 = scalar_select %p166, %s14, 1
      %s168 = smul.addr %s167, 4
      %s169 = smul.addr %s168, 8
      %s170 = scalar_lea.vmem %s3, %s169
      %v171 = vld [vmem:[%s165] sm:$0xff]
      %v172 = vld [vmem:[%s165 + $0x8] sm:$0xff]
      %v173 = vld [vmem:[%s165 + $0x10] sm:$0xff]
      %v174 = vld [vmem:[%s165 + $0x18] sm:$0xff]
      %v175 = vlaneseq
      %v176 = vand.u32 %v175, 127
      %v177 = vadd.s32 %v176, 128
      %vm178 = vcmp.lt.s32.totalorder %v176, 0
      %v179 = vsub.s32 0, %v176
      %v180 = vsel %vm178, %v179, %v176
      %v181 = vshrl.u32 %v180, 4
      %v182 = vand.u32 %v180, 15
      %v183 = vsub.s32 0, %v182
      %v184 = vsel %vm178, %v183, %v182
      %vm185 = vcmp.lt.s32.totalorder %v177, 0
      %v186 = vsub.s32 0, %v177
      %v187 = vsel %vm185, %v186, %v177
      %v188 = vshrl.u32 %v187, 4
      %v189 = vand.u32 %v187, 15
      %v190 = vsub.s32 0, %v189
      %v191 = vsel %vm185, %v190, %v189
      %vm192 = vcmp.ne.s32.totalorder %v184, 0
      %vm193 = vcmp.ne.s32.totalorder %v191, 0
      %vm194 = vcmp.lt.s32.totalorder %v184, 0
      %vm195 = vcmp.lt.s32.totalorder %v191, 0
      %vm196 = vmand %vm194, %vm192
      %vm197 = vmand %vm195, %vm193
      %v198 = vadd.s32 %v184, 16
      %v199 = vadd.s32 %v191, 16
      %v200 = vsel %vm196, %v198, %v184
      %v201 = vsel %vm197, %v199, %v191
      %202 = vrot.lane.b32.xlu0 %v171, 17
      %v203 = vpop.permute.xlu0 %202
      %204 = vrot.lane.b32.xlu0 %v173, 17
      %v205 = vpop.permute.xlu0 %204
      %206 = vrot.lane.b32.xlu0 %v172, 17
      %v207 = vpop.permute.xlu0 %206
      %208 = vrot.lane.b32.xlu0 %v174, 17
      %v209 = vpop.permute.xlu0 %208
      %vm210 = vcmp.lt.s32.totalorder %v176, 17
      %v211 = vsel %vm210, %v203, %v207
      %v212 = vsel %vm210, %v205, %v209
      %v213 = vsel %vm210, %v207, %v203
      %v214 = vsel %vm210, %v209, %v205
      %vm215 = vcmp.ge.s32.totalorder %v200, 1
      %vm216 = vcmp.ge.s32.totalorder %v201, 1
      %vm217 = vcmp.ge.s32.totalorder %v176, 16
      %vm218 = vcmp.ge.s32.totalorder %v177, 16
      %vm219 = vmand %vm215, %vm217
      %vm220 = vmand %vm216, %vm218
      %v221 = vsel %vm219, 1, 0
      %v222 = vsel %vm220, 1, 0
      %vm223 = vcmp.eq.s32.totalorder %v221, 1
      %vm224 = vcmp.eq.s32.totalorder %v222, 1
      %v225 = vsel %vm223, %v213, 0.0
      %v226 = vsel %vm224, %v211, 0.0
      %v227 = vsel %vm223, %v214, 0.0
      %v228 = vsel %vm224, %v212, 0.0
      %v229 = vld [vmem:[%s1] sm:$0xff]
      %v230 = vld [vmem:[%s1 + $0x8] sm:$0xff]
      %231 = vrot.lane.b32.xlu0 %v171, 16
      %v232 = vpop.permute.xlu0 %231
      %233 = vrot.lane.b32.xlu0 %v173, 16
      %v234 = vpop.permute.xlu0 %233
      %235 = vrot.lane.b32.xlu0 %v172, 16
      %v236 = vpop.permute.xlu0 %235
      %237 = vrot.lane.b32.xlu0 %v174, 16
      %v238 = vpop.permute.xlu0 %237
      %vm239 = vcmp.lt.s32.totalorder %v176, 16
      %v240 = vsel %vm239, %v232, %v236
      %v241 = vsel %vm239, %v234, %v238
      %v242 = vsel %vm239, %v236, %v232
      %v243 = vsel %vm239, %v238, %v234
      %v244 = vsel %vm217, 1, 0
      %v245 = vsel %vm218, 1, 0
      %vm246 = vcmp.eq.s32.totalorder %v244, 1
      %vm247 = vcmp.eq.s32.totalorder %v245, 1
      %v248 = vsel %vm246, %v242, 0.0
      %v249 = vsel %vm247, %v240, 0.0
      %v250 = vsel %vm246, %v243, 0.0
      %v251 = vsel %vm247, %v241, 0.0
      %s252 = scalar_lea.vmem %s1, 16
      %v253 = vld [vmem:[%s252] sm:$0xff]
      %v254 = vld [vmem:[%s252 + $0x8] sm:$0xff]
      %vm255 = vcmask 130048
      %v257 = vsel %vm255, %v253, 0
      %v260 = vsel %vm255, %v254, 0
      %262 = vmatprep.subr.mxu0 %v249
      %263 = vmatpush1.msra.mxu0 %v248
      %264 = vmatprep.subr.mxu0 %v251
      %265 = vmatpush1.msra.mxu0 %v250
      %266 = vmatprep.subr.mxu0 0.0
      %267 = vmatpush1.msra.mxu0 0.0
      %268 = vmatprep.subr.mxu0 0.0
      %269 = vmatpush1.msra.mxu0 0.0
      %270 = vmatprep.subr.mxu0 0.0
      %271 = vmatpush1.msra.mxu0 0.0
      %272 = vmatprep.subr.mxu0 0.0
      %273 = vmatpush1.msra.mxu0 0.0
      %274 = vmatprep.subr.mxu0 0.0
      %275 = vmatpush1.msra.mxu0 0.0
      %276 = vmatprep.subr.mxu0 0.0
      %277 = vmatpush1.msra.mxu0 0.0
      %278 = vmatprep.subr.mxu0 0.0
      %279 = vmatpush1.msra.mxu0 0.0
      %280 = vmatprep.subr.mxu0 0.0
      %281 = vmatpush1.msra.mxu0 0.0
      %282 = vmatprep.subr.mxu0 0.0
      %283 = vmatpush1.msra.mxu0 0.0
      %284 = vmatprep.subr.mxu0 0.0
      %285 = vmatpush1.msra.mxu0 0.0
      %286 = vmatprep.subr.mxu0 0.0
      %287 = vmatpush1.msra.mxu0 0.0
      %288 = vmatprep.subr.mxu0 0.0
      %289 = vmatpush1.msra.mxu0 0.0
      %290 = vmatprep.subr.mxu0 0.0
      %291 = vmatpush1.msra.mxu0 0.0
      %292 = vmatprep.subr.mxu0 0.0
      %293 = vmatpush1.msra.mxu0 0.0
      %294 = vmatprep.subr.mxu0 0.0
      %295 = vmatpush1.msra.mxu0 0.0
      %296 = vmatprep.subr.mxu0 0.0
      %297 = vmatpush1.msra.mxu0 0.0
      %298 = vmatprep.subr.mxu0 0.0
      %299 = vmatpush1.msra.mxu0 0.0
      %300 = vmatprep.subr.mxu0 0.0
      %301 = vmatpush1.msra.mxu0 0.0
      %302 = vmatprep.subr.mxu0 0.0
      %303 = vmatpush1.msra.mxu0 0.0
      %304 = vmatprep.subr.mxu0 0.0
      %305 = vmatpush1.msra.mxu0 0.0
      %306 = vmatprep.subr.mxu0 0.0
      %307 = vmatpush1.msra.mxu0 0.0
      %308 = vmatprep.subr.mxu0 0.0
      %309 = vmatpush1.msra.mxu0 0.0
      %310 = vmatprep.subr.mxu0 0.0
      %311 = vmatpush1.msra.mxu0 0.0
      %312 = vmatprep.subr.mxu0 0.0
      %313 = vmatpush1.msra.mxu0 0.0
      %314 = vmatprep.subr.mxu0 0.0
      %315 = vmatpush1.msra.mxu0 0.0
      %316 = vmatprep.subr.mxu0 0.0
      %317 = vmatpush1.msra.mxu0 0.0
      %318 = vmatprep.subr.mxu0 0.0
      %319 = vmatpush1.msra.mxu0 0.0
      %320 = vmatprep.subr.mxu0 0.0
      %321 = vmatpush1.msra.mxu0 0.0
      %322 = vmatprep.subr.mxu0 0.0
      %323 = vmatpush1.msra.mxu0 0.0
      %324 = vmatprep.subr.mxu0 0.0
      %325 = vmatpush1.msra.mxu0 0.0
      %326 = vmatprep.mubr.f32.mxu0 0.0
      %327 = vmatmul.mubr.f32.gmra.mrb[0].mxu0 %v257
      %v328 = vpop.f32.mrb[0].mxu0
      %v329 = vadd.f32 0.0, %v328
      %v330 = vpop.f32.mrb[0].mxu0
      %v331 = vadd.f32 0.0, %v330
      %332 = vmatprep.mubr.f32.mxu0 0.0
      %333 = vmatmul.mubr.f32.gmra.mrb[0].mxu0 %v260
      %v334 = vpop.f32.mrb[0].mxu0
      %v335 = vadd.f32 0.0, %v334
      %v336 = vpop.f32.mrb[0].mxu0
      %v337 = vadd.f32 0.0, %v336
      %338 = vdwg.mxu0
      %v340 = vsel %vm255, %v229, 0
      %v343 = vsel %vm255, %v230, 0
      %345 = vmatprep.subr.mxu0 %v226
      %346 = vmatpush1.msra.mxu0 %v225
      %347 = vmatprep.subr.mxu0 %v228
      %348 = vmatpush1.msra.mxu0 %v227
      %349 = vmatprep.subr.mxu0 0.0
      %350 = vmatpush1.msra.mxu0 0.0
      %351 = vmatprep.subr.mxu0 0.0
      %352 = vmatpush1.msra.mxu0 0.0
      %353 = vmatprep.subr.mxu0 0.0
      %354 = vmatpush1.msra.mxu0 0.0
      %355 = vmatprep.subr.mxu0 0.0
      %356 = vmatpush1.msra.mxu0 0.0
      %357 = vmatprep.subr.mxu0 0.0
      %358 = vmatpush1.msra.mxu0 0.0
      %359 = vmatprep.subr.mxu0 0.0
      %360 = vmatpush1.msra.mxu0 0.0
      %361 = vmatprep.subr.mxu0 0.0
      %362 = vmatpush1.msra.mxu0 0.0
      %363 = vmatprep.subr.mxu0 0.0
      %364 = vmatpush1.msra.mxu0 0.0
      %365 = vmatprep.subr.mxu0 0.0
      %366 = vmatpush1.msra.mxu0 0.0
      %367 = vmatprep.subr.mxu0 0.0
      %368 = vmatpush1.msra.mxu0 0.0
      %369 = vmatprep.subr.mxu0 0.0
      %370 = vmatpush1.msra.mxu0 0.0
      %371 = vmatprep.subr.mxu0 0.0
      %372 = vmatpush1.msra.mxu0 0.0
      %373 = vmatprep.subr.mxu0 0.0
      %374 = vmatpush1.msra.mxu0 0.0
      %375 = vmatprep.subr.mxu0 0.0
      %376 = vmatpush1.msra.mxu0 0.0
      %377 = vmatprep.subr.mxu0 0.0
      %378 = vmatpush1.msra.mxu0 0.0
      %379 = vmatprep.subr.mxu0 0.0
      %380 = vmatpush1.msra.mxu0 0.0
      %381 = vmatprep.subr.mxu0 0.0
      %382 = vmatpush1.msra.mxu0 0.0
      %383 = vmatprep.subr.mxu0 0.0
      %384 = vmatpush1.msra.mxu0 0.0
      %385 = vmatprep.subr.mxu0 0.0
      %386 = vmatpush1.msra.mxu0 0.0
      %387 = vmatprep.subr.mxu0 0.0
      %388 = vmatpush1.msra.mxu0 0.0
      %389 = vmatprep.subr.mxu0 0.0
      %390 = vmatpush1.msra.mxu0 0.0
      %391 = vmatprep.subr.mxu0 0.0
      %392 = vmatpush1.msra.mxu0 0.0
      %393 = vmatprep.subr.mxu0 0.0
      %394 = vmatpush1.msra.mxu0 0.0
      %395 = vmatprep.subr.mxu0 0.0
      %396 = vmatpush1.msra.mxu0 0.0
      %397 = vmatprep.subr.mxu0 0.0
      %398 = vmatpush1.msra.mxu0 0.0
      %399 = vmatprep.subr.mxu0 0.0
      %400 = vmatpush1.msra.mxu0 0.0
      %401 = vmatprep.subr.mxu0 0.0
      %402 = vmatpush1.msra.mxu0 0.0
      %403 = vmatprep.subr.mxu0 0.0
      %404 = vmatpush1.msra.mxu0 0.0
      %405 = vmatprep.subr.mxu0 0.0
      %406 = vmatpush1.msra.mxu0 0.0
      %407 = vmatprep.subr.mxu0 0.0
      %408 = vmatpush1.msra.mxu0 0.0
      %409 = vmatprep.mubr.f32.mxu0 0.0
      %410 = vmatmul.mubr.f32.gmra.mrb[0].mxu0 %v340
      %v411 = vpop.f32.mrb[0].mxu0
      %v412 = vadd.f32 %v329, %v411
      %v413 = vpop.f32.mrb[0].mxu0
      %v414 = vadd.f32 %v331, %v413
      %415 = vmatprep.mubr.f32.mxu0 0.0
      %416 = vmatmul.mubr.f32.gmra.mrb[0].mxu0 %v343
      %v417 = vpop.f32.mrb[0].mxu0
      %v418 = vadd.f32 %v335, %v417
      %v419 = vpop.f32.mrb[0].mxu0
      %v420 = vadd.f32 %v337, %v419
      %421 = vdwg.mxu0
      %422 = vrot.lane.b32.xlu0 %v171, 15
      %v423 = vpop.permute.xlu0 %422
      %424 = vrot.lane.b32.xlu0 %v173, 15
      %v425 = vpop.permute.xlu0 %424
      %426 = vrot.lane.b32.xlu0 %v172, 15
      %v427 = vpop.permute.xlu0 %426
      %428 = vrot.lane.b32.xlu0 %v174, 15
      %v429 = vpop.permute.xlu0 %428
      %vm430 = vcmp.lt.s32.totalorder %v176, 15
      %v431 = vsel %vm430, %v423, %v427
      %v432 = vsel %vm430, %v425, %v429
      %v433 = vsel %vm430, %v427, %v423
      %v434 = vsel %vm430, %v429, %v425
      %vm435 = vcmp.lt.s32.totalorder %v200, 15
      %vm436 = vcmp.lt.s32.totalorder %v201, 15
      %vm437 = vmand %vm435, %vm217
      %vm438 = vmand %vm436, %vm218
      %v439 = vsel %vm437, 1, 0
      %v440 = vsel %vm438, 1, 0
      %vm441 = vcmp.eq.s32.totalorder %v439, 1
      %vm442 = vcmp.eq.s32.totalorder %v440, 1
      %v443 = vsel %vm441, %v433, 0.0
      %v444 = vsel %vm442, %v431, 0.0
      %v445 = vsel %vm441, %v434, 0.0
      %v446 = vsel %vm442, %v432, 0.0
      %s447 = scalar_lea.vmem %s1, 32
      %v448 = vld [vmem:[%s447] sm:$0xff]
      %v449 = vld [vmem:[%s447 + $0x8] sm:$0xff]
      %v451 = vsel %vm255, %v448, 0
      %v454 = vsel %vm255, %v449, 0
      %456 = vmatprep.subr.mxu0 %v444
      %457 = vmatpush1.msra.mxu0 %v443
      %458 = vmatprep.subr.mxu0 %v446
      %459 = vmatpush1.msra.mxu0 %v445
      %460 = vmatprep.subr.mxu0 0.0
      %461 = vmatpush1.msra.mxu0 0.0
      %462 = vmatprep.subr.mxu0 0.0
      %463 = vmatpush1.msra.mxu0 0.0
      %464 = vmatprep.subr.mxu0 0.0
      %465 = vmatpush1.msra.mxu0 0.0
      %466 = vmatprep.subr.mxu0 0.0
      %467 = vmatpush1.msra.mxu0 0.0
      %468 = vmatprep.subr.mxu0 0.0
      %469 = vmatpush1.msra.mxu0 0.0
      %470 = vmatprep.subr.mxu0 0.0
      %471 = vmatpush1.msra.mxu0 0.0
      %472 = vmatprep.subr.mxu0 0.0
      %473 = vmatpush1.msra.mxu0 0.0
      %474 = vmatprep.subr.mxu0 0.0
      %475 = vmatpush1.msra.mxu0 0.0
      %476 = vmatprep.subr.mxu0 0.0
      %477 = vmatpush1.msra.mxu0 0.0
      %478 = vmatprep.subr.mxu0 0.0
      %479 = vmatpush1.msra.mxu0 0.0
      %480 = vmatprep.subr.mxu0 0.0
      %481 = vmatpush1.msra.mxu0 0.0
      %482 = vmatprep.subr.mxu0 0.0
      %483 = vmatpush1.msra.mxu0 0.0
      %484 = vmatprep.subr.mxu0 0.0
      %485 = vmatpush1.msra.mxu0 0.0
      %486 = vmatprep.subr.mxu0 0.0
      %487 = vmatpush1.msra.mxu0 0.0
      %488 = vmatprep.subr.mxu0 0.0
      %489 = vmatpush1.msra.mxu0 0.0
      %490 = vmatprep.subr.mxu0 0.0
      %491 = vmatpush1.msra.mxu0 0.0
      %492 = vmatprep.subr.mxu0 0.0
      %493 = vmatpush1.msra.mxu0 0.0
      %494 = vmatprep.subr.mxu0 0.0
      %495 = vmatpush1.msra.mxu0 0.0
      %496 = vmatprep.subr.mxu0 0.0
      %497 = vmatpush1.msra.mxu0 0.0
      %498 = vmatprep.subr.mxu0 0.0
      %499 = vmatpush1.msra.mxu0 0.0
      %500 = vmatprep.subr.mxu0 0.0
      %501 = vmatpush1.msra.mxu0 0.0
      %502 = vmatprep.subr.mxu0 0.0
      %503 = vmatpush1.msra.mxu0 0.0
      %504 = vmatprep.subr.mxu0 0.0
      %505 = vmatpush1.msra.mxu0 0.0
      %506 = vmatprep.subr.mxu0 0.0
      %507 = vmatpush1.msra.mxu0 0.0
      %508 = vmatprep.subr.mxu0 0.0
      %509 = vmatpush1.msra.mxu0 0.0
      %510 = vmatprep.subr.mxu0 0.0
      %511 = vmatpush1.msra.mxu0 0.0
      %512 = vmatprep.subr.mxu0 0.0
      %513 = vmatpush1.msra.mxu0 0.0
      %514 = vmatprep.subr.mxu0 0.0
      %515 = vmatpush1.msra.mxu0 0.0
      %516 = vmatprep.subr.mxu0 0.0
      %517 = vmatpush1.msra.mxu0 0.0
      %518 = vmatprep.subr.mxu0 0.0
      %519 = vmatpush1.msra.mxu0 0.0
      %520 = vmatprep.mubr.f32.mxu0 0.0
      %521 = vmatmul.mubr.f32.gmra.mrb[0].mxu0 %v451
      %v522 = vpop.f32.mrb[0].mxu0
      %v523 = vadd.f32 0.0, %v522
      %v524 = vpop.f32.mrb[0].mxu0
      %v525 = vadd.f32 0.0, %v524
      %526 = vmatprep.mubr.f32.mxu0 0.0
      %527 = vmatmul.mubr.f32.gmra.mrb[0].mxu0 %v454
      %v528 = vpop.f32.mrb[0].mxu0
      %v529 = vadd.f32 0.0, %v528
      %v530 = vpop.f32.mrb[0].mxu0
      %v531 = vadd.f32 0.0, %v530
      %532 = vdwg.mxu0
      %v533 = vadd.f32 %v412, %v523
      %v534 = vadd.f32 %v414, %v525
      %v535 = vadd.f32 %v418, %v529
      %v536 = vadd.f32 %v420, %v531
      %537 = vrot.lane.b32.xlu0 %v171, 1
      %v538 = vpop.permute.xlu0 %537
      %539 = vrot.lane.b32.xlu0 %v173, 1
      %v540 = vpop.permute.xlu0 %539
      %541 = vrot.lane.b32.xlu0 %v172, 1
      %v542 = vpop.permute.xlu0 %541
      %543 = vrot.lane.b32.xlu0 %v174, 1
      %v544 = vpop.permute.xlu0 %543
      %vm545 = vcmp.lt.s32.totalorder %v176, 1
      %v546 = vsel %vm545, %v538, %v542
      %v547 = vsel %vm545, %v540, %v544
      %v548 = vsel %vm545, %v542, %v538
      %v549 = vsel %vm545, %v544, %v540
      %v550 = vsel %vm215, 1, 0
      %v551 = vsel %vm216, 1, 0
      %vm552 = vcmp.eq.s32.totalorder %v550, 1
      %vm553 = vcmp.eq.s32.totalorder %v551, 1
      %v554 = vsel %vm552, %v548, 0.0
      %v555 = vsel %vm553, %v546, 0.0
      %v556 = vsel %vm552, %v549, 0.0
      %v557 = vsel %vm553, %v547, 0.0
      %s558 = scalar_lea.vmem %s1, 48
      %v559 = vld [vmem:[%s558] sm:$0xff]
      %v560 = vld [vmem:[%s558 + $0x8] sm:$0xff]
      %v562 = vsel %vm255, %v559, 0
      %v565 = vsel %vm255, %v560, 0
      %567 = vmatprep.subr.mxu0 %v555
      %568 = vmatpush1.msra.mxu0 %v554
      %569 = vmatprep.subr.mxu0 %v557
      %570 = vmatpush1.msra.mxu0 %v556
      %571 = vmatprep.subr.mxu0 0.0
      %572 = vmatpush1.msra.mxu0 0.0
      %573 = vmatprep.subr.mxu0 0.0
      %574 = vmatpush1.msra.mxu0 0.0
      %575 = vmatprep.subr.mxu0 0.0
      %576 = vmatpush1.msra.mxu0 0.0
      %577 = vmatprep.subr.mxu0 0.0
      %578 = vmatpush1.msra.mxu0 0.0
      %579 = vmatprep.subr.mxu0 0.0
      %580 = vmatpush1.msra.mxu0 0.0
      %581 = vmatprep.subr.mxu0 0.0
      %582 = vmatpush1.msra.mxu0 0.0
      %583 = vmatprep.subr.mxu0 0.0
      %584 = vmatpush1.msra.mxu0 0.0
      %585 = vmatprep.subr.mxu0 0.0
      %586 = vmatpush1.msra.mxu0 0.0
      %587 = vmatprep.subr.mxu0 0.0
      %588 = vmatpush1.msra.mxu0 0.0
      %589 = vmatprep.subr.mxu0 0.0
      %590 = vmatpush1.msra.mxu0 0.0
      %591 = vmatprep.subr.mxu0 0.0
      %592 = vmatpush1.msra.mxu0 0.0
      %593 = vmatprep.subr.mxu0 0.0
      %594 = vmatpush1.msra.mxu0 0.0
      %595 = vmatprep.subr.mxu0 0.0
      %596 = vmatpush1.msra.mxu0 0.0
      %597 = vmatprep.subr.mxu0 0.0
      %598 = vmatpush1.msra.mxu0 0.0
      %599 = vmatprep.subr.mxu0 0.0
      %600 = vmatpush1.msra.mxu0 0.0
      %601 = vmatprep.subr.mxu0 0.0
      %602 = vmatpush1.msra.mxu0 0.0
      %603 = vmatprep.subr.mxu0 0.0
      %604 = vmatpush1.msra.mxu0 0.0
      %605 = vmatprep.subr.mxu0 0.0
      %606 = vmatpush1.msra.mxu0 0.0
      %607 = vmatprep.subr.mxu0 0.0
      %608 = vmatpush1.msra.mxu0 0.0
      %609 = vmatprep.subr.mxu0 0.0
      %610 = vmatpush1.msra.mxu0 0.0
      %611 = vmatprep.subr.mxu0 0.0
      %612 = vmatpush1.msra.mxu0 0.0
      %613 = vmatprep.subr.mxu0 0.0
      %614 = vmatpush1.msra.mxu0 0.0
      %615 = vmatprep.subr.mxu0 0.0
      %616 = vmatpush1.msra.mxu0 0.0
      %617 = vmatprep.subr.mxu0 0.0
      %618 = vmatpush1.msra.mxu0 0.0
      %619 = vmatprep.subr.mxu0 0.0
      %620 = vmatpush1.msra.mxu0 0.0
      %621 = vmatprep.subr.mxu0 0.0
      %622 = vmatpush1.msra.mxu0 0.0
      %623 = vmatprep.subr.mxu0 0.0
      %624 = vmatpush1.msra.mxu0 0.0
      %625 = vmatprep.subr.mxu0 0.0
      %626 = vmatpush1.msra.mxu0 0.0
      %627 = vmatprep.subr.mxu0 0.0
      %628 = vmatpush1.msra.mxu0 0.0
      %629 = vmatprep.subr.mxu0 0.0
      %630 = vmatpush1.msra.mxu0 0.0
      %631 = vmatprep.mubr.f32.mxu0 0.0
      %632 = vmatmul.mubr.f32.gmra.mrb[0].mxu0 %v562
      %v633 = vpop.f32.mrb[0].mxu0
      %v634 = vadd.f32 0.0, %v633
      %v635 = vpop.f32.mrb[0].mxu0
      %v636 = vadd.f32 0.0, %v635
      %637 = vmatprep.mubr.f32.mxu0 0.0
      %638 = vmatmul.mubr.f32.gmra.mrb[0].mxu0 %v565
      %v639 = vpop.f32.mrb[0].mxu0
      %v640 = vadd.f32 0.0, %v639
      %v641 = vpop.f32.mrb[0].mxu0
      %v642 = vadd.f32 0.0, %v641
      %643 = vdwg.mxu0
      %v644 = vadd.f32 %v533, %v634
      %v645 = vadd.f32 %v534, %v636
      %v646 = vadd.f32 %v535, %v640
      %v647 = vadd.f32 %v536, %v642
      %s648 = scalar_lea.vmem %s1, 64
      %v649 = vld [vmem:[%s648] sm:$0xff]
      %v650 = vld [vmem:[%s648 + $0x8] sm:$0xff]
      %v652 = vsel %vm255, %v649, 0
      %v655 = vsel %vm255, %v650, 0
      %657 = vmatprep.subr.mxu0 %v172
      %658 = vmatpush1.msra.mxu0 %v171
      %659 = vmatprep.subr.mxu0 %v174
      %660 = vmatpush1.msra.mxu0 %v173
      %661 = vmatprep.subr.mxu0 0.0
      %662 = vmatpush1.msra.mxu0 0.0
      %663 = vmatprep.subr.mxu0 0.0
      %664 = vmatpush1.msra.mxu0 0.0
      %665 = vmatprep.subr.mxu0 0.0
      %666 = vmatpush1.msra.mxu0 0.0
      %667 = vmatprep.subr.mxu0 0.0
      %668 = vmatpush1.msra.mxu0 0.0
      %669 = vmatprep.subr.mxu0 0.0
      %670 = vmatpush1.msra.mxu0 0.0
      %671 = vmatprep.subr.mxu0 0.0
      %672 = vmatpush1.msra.mxu0 0.0
      %673 = vmatprep.subr.mxu0 0.0
      %674 = vmatpush1.msra.mxu0 0.0
      %675 = vmatprep.subr.mxu0 0.0
      %676 = vmatpush1.msra.mxu0 0.0
      %677 = vmatprep.subr.mxu0 0.0
      %678 = vmatpush1.msra.mxu0 0.0
      %679 = vmatprep.subr.mxu0 0.0
      %680 = vmatpush1.msra.mxu0 0.0
      %681 = vmatprep.subr.mxu0 0.0
      %682 = vmatpush1.msra.mxu0 0.0
      %683 = vmatprep.subr.mxu0 0.0
      %684 = vmatpush1.msra.mxu0 0.0
      %685 = vmatprep.subr.mxu0 0.0
      %686 = vmatpush1.msra.mxu0 0.0
      %687 = vmatprep.subr.mxu0 0.0
      %688 = vmatpush1.msra.mxu0 0.0
      %689 = vmatprep.subr.mxu0 0.0
      %690 = vmatpush1.msra.mxu0 0.0
      %691 = vmatprep.subr.mxu0 0.0
      %692 = vmatpush1.msra.mxu0 0.0
      %693 = vmatprep.subr.mxu0 0.0
      %694 = vmatpush1.msra.mxu0 0.0
      %695 = vmatprep.subr.mxu0 0.0
      %696 = vmatpush1.msra.mxu0 0.0
      %697 = vmatprep.subr.mxu0 0.0
      %698 = vmatpush1.msra.mxu0 0.0
      %699 = vmatprep.subr.mxu0 0.0
      %700 = vmatpush1.msra.mxu0 0.0
      %701 = vmatprep.subr.mxu0 0.0
      %702 = vmatpush1.msra.mxu0 0.0
      %703 = vmatprep.subr.mxu0 0.0
      %704 = vmatpush1.msra.mxu0 0.0
      %705 = vmatprep.subr.mxu0 0.0
      %706 = vmatpush1.msra.mxu0 0.0
      %707 = vmatprep.subr.mxu0 0.0
      %708 = vmatpush1.msra.mxu0 0.0
      %709 = vmatprep.subr.mxu0 0.0
      %710 = vmatpush1.msra.mxu0 0.0
      %711 = vmatprep.subr.mxu0 0.0
      %712 = vmatpush1.msra.mxu0 0.0
      %713 = vmatprep.subr.mxu0 0.0
      %714 = vmatpush1.msra.mxu0 0.0
      %715 = vmatprep.subr.mxu0 0.0
      %716 = vmatpush1.msra.mxu0 0.0
      %717 = vmatprep.subr.mxu0 0.0
      %718 = vmatpush1.msra.mxu0 0.0
      %719 = vmatprep.subr.mxu0 0.0
      %720 = vmatpush1.msra.mxu0 0.0
      %721 = vmatprep.mubr.f32.mxu0 0.0
      %722 = vmatmul.mubr.f32.gmra.mrb[0].mxu0 %v652
      %v723 = vpop.f32.mrb[0].mxu0
      %v724 = vadd.f32 0.0, %v723
      %v725 = vpop.f32.mrb[0].mxu0
      %v726 = vadd.f32 0.0, %v725
      %727 = vmatprep.mubr.f32.mxu0 0.0
      %728 = vmatmul.mubr.f32.gmra.mrb[0].mxu0 %v655
      %v729 = vpop.f32.mrb[0].mxu0
      %v730 = vadd.f32 0.0, %v729
      %v731 = vpop.f32.mrb[0].mxu0
      %v732 = vadd.f32 0.0, %v731
      %733 = vdwg.mxu0
      %v734 = vadd.f32 %v644, %v724
      %v735 = vadd.f32 %v645, %v726
      %v736 = vadd.f32 %v646, %v730
      %v737 = vadd.f32 %v647, %v732
      %738 = vrot.lane.b32.xlu0 %v171, 127
      %v739 = vpop.permute.xlu0 %738
      %740 = vrot.lane.b32.xlu0 %v173, 127
      %v741 = vpop.permute.xlu0 %740
      %742 = vrot.lane.b32.xlu0 %v172, 127
      %v743 = vpop.permute.xlu0 %742
      %744 = vrot.lane.b32.xlu0 %v174, 127
      %v745 = vpop.permute.xlu0 %744
      %vm746 = vcmp.lt.s32.totalorder %v176, 127
      %v747 = vsel %vm746, %v739, %v743
      %v748 = vsel %vm746, %v741, %v745
      %v749 = vsel %vm746, %v743, %v739
      %v750 = vsel %vm746, %v745, %v741
      %v751 = vsel %vm435, 1, 0
      %v752 = vsel %vm436, 1, 0
      %vm753 = vcmp.eq.s32.totalorder %v751, 1
      %vm754 = vcmp.eq.s32.totalorder %v752, 1
      %v755 = vsel %vm753, %v747, 0.0
      %v756 = vsel %vm754, %v749, 0.0
      %v757 = vsel %vm753, %v748, 0.0
      %v758 = vsel %vm754, %v750, 0.0
      %s759 = scalar_lea.vmem %s1, 80
      %v760 = vld [vmem:[%s759] sm:$0xff]
      %v761 = vld [vmem:[%s759 + $0x8] sm:$0xff]
      %v763 = vsel %vm255, %v760, 0
      %v766 = vsel %vm255, %v761, 0
      %768 = vmatprep.subr.mxu0 %v756
      %769 = vmatpush1.msra.mxu0 %v755
      %770 = vmatprep.subr.mxu0 %v758
      %771 = vmatpush1.msra.mxu0 %v757
      %772 = vmatprep.subr.mxu0 0.0
      %773 = vmatpush1.msra.mxu0 0.0
      %774 = vmatprep.subr.mxu0 0.0
      %775 = vmatpush1.msra.mxu0 0.0
      %776 = vmatprep.subr.mxu0 0.0
      %777 = vmatpush1.msra.mxu0 0.0
      %778 = vmatprep.subr.mxu0 0.0
      %779 = vmatpush1.msra.mxu0 0.0
      %780 = vmatprep.subr.mxu0 0.0
      %781 = vmatpush1.msra.mxu0 0.0
      %782 = vmatprep.subr.mxu0 0.0
      %783 = vmatpush1.msra.mxu0 0.0
      %784 = vmatprep.subr.mxu0 0.0
      %785 = vmatpush1.msra.mxu0 0.0
      %786 = vmatprep.subr.mxu0 0.0
      %787 = vmatpush1.msra.mxu0 0.0
      %788 = vmatprep.subr.mxu0 0.0
      %789 = vmatpush1.msra.mxu0 0.0
      %790 = vmatprep.subr.mxu0 0.0
      %791 = vmatpush1.msra.mxu0 0.0
      %792 = vmatprep.subr.mxu0 0.0
      %793 = vmatpush1.msra.mxu0 0.0
      %794 = vmatprep.subr.mxu0 0.0
      %795 = vmatpush1.msra.mxu0 0.0
      %796 = vmatprep.subr.mxu0 0.0
      %797 = vmatpush1.msra.mxu0 0.0
      %798 = vmatprep.subr.mxu0 0.0
      %799 = vmatpush1.msra.mxu0 0.0
      %800 = vmatprep.subr.mxu0 0.0
      %801 = vmatpush1.msra.mxu0 0.0
      %802 = vmatprep.subr.mxu0 0.0
      %803 = vmatpush1.msra.mxu0 0.0
      %804 = vmatprep.subr.mxu0 0.0
      %805 = vmatpush1.msra.mxu0 0.0
      %806 = vmatprep.subr.mxu0 0.0
      %807 = vmatpush1.msra.mxu0 0.0
      %808 = vmatprep.subr.mxu0 0.0
      %809 = vmatpush1.msra.mxu0 0.0
      %810 = vmatprep.subr.mxu0 0.0
      %811 = vmatpush1.msra.mxu0 0.0
      %812 = vmatprep.subr.mxu0 0.0
      %813 = vmatpush1.msra.mxu0 0.0
      %814 = vmatprep.subr.mxu0 0.0
      %815 = vmatpush1.msra.mxu0 0.0
      %816 = vmatprep.subr.mxu0 0.0
      %817 = vmatpush1.msra.mxu0 0.0
      %818 = vmatprep.subr.mxu0 0.0
      %819 = vmatpush1.msra.mxu0 0.0
      %820 = vmatprep.subr.mxu0 0.0
      %821 = vmatpush1.msra.mxu0 0.0
      %822 = vmatprep.subr.mxu0 0.0
      %823 = vmatpush1.msra.mxu0 0.0
      %824 = vmatprep.subr.mxu0 0.0
      %825 = vmatpush1.msra.mxu0 0.0
      %826 = vmatprep.subr.mxu0 0.0
      %827 = vmatpush1.msra.mxu0 0.0
      %828 = vmatprep.subr.mxu0 0.0
      %829 = vmatpush1.msra.mxu0 0.0
      %830 = vmatprep.subr.mxu0 0.0
      %831 = vmatpush1.msra.mxu0 0.0
      %832 = vmatprep.mubr.f32.mxu0 0.0
      %833 = vmatmul.mubr.f32.gmra.mrb[0].mxu0 %v763
      %v834 = vpop.f32.mrb[0].mxu0
      %v835 = vadd.f32 0.0, %v834
      %v836 = vpop.f32.mrb[0].mxu0
      %v837 = vadd.f32 0.0, %v836
      %838 = vmatprep.mubr.f32.mxu0 0.0
      %839 = vmatmul.mubr.f32.gmra.mrb[0].mxu0 %v766
      %v840 = vpop.f32.mrb[0].mxu0
      %v841 = vadd.f32 0.0, %v840
      %v842 = vpop.f32.mrb[0].mxu0
      %v843 = vadd.f32 0.0, %v842
      %844 = vdwg.mxu0
      %v845 = vadd.f32 %v734, %v835
      %v846 = vadd.f32 %v735, %v837
      %v847 = vadd.f32 %v736, %v841
      %v848 = vadd.f32 %v737, %v843
      %849 = vrot.lane.b32.xlu0 %v171, 113
      %v850 = vpop.permute.xlu0 %849
      %851 = vrot.lane.b32.xlu0 %v173, 113
      %v852 = vpop.permute.xlu0 %851
      %853 = vrot.lane.b32.xlu0 %v172, 113
      %v854 = vpop.permute.xlu0 %853
      %855 = vrot.lane.b32.xlu0 %v174, 113
      %v856 = vpop.permute.xlu0 %855
      %vm857 = vcmp.lt.s32.totalorder %v176, 113
      %v858 = vsel %vm857, %v850, %v854
      %v859 = vsel %vm857, %v852, %v856
      %v860 = vsel %vm857, %v854, %v850
      %v861 = vsel %vm857, %v856, %v852
      %vm862 = vcmp.lt.s32.totalorder %v176, 240
      %vm863 = vcmp.lt.s32.totalorder %v177, 240
      %vm864 = vmand %vm215, %vm862
      %vm865 = vmand %vm216, %vm863
      %v866 = vsel %vm864, 1, 0
      %v867 = vsel %vm865, 1, 0
      %vm868 = vcmp.eq.s32.totalorder %v866, 1
      %vm869 = vcmp.eq.s32.totalorder %v867, 1
      %v870 = vsel %vm868, %v858, 0.0
      %v871 = vsel %vm869, %v860, 0.0
      %v872 = vsel %vm868, %v859, 0.0
      %v873 = vsel %vm869, %v861, 0.0
      %s874 = scalar_lea.vmem %s1, 96
      %v875 = vld [vmem:[%s874] sm:$0xff]
      %v876 = vld [vmem:[%s874 + $0x8] sm:$0xff]
      %v878 = vsel %vm255, %v875, 0
      %v881 = vsel %vm255, %v876, 0
      %883 = vmatprep.subr.mxu0 %v871
      %884 = vmatpush1.msra.mxu0 %v870
      %885 = vmatprep.subr.mxu0 %v873
      %886 = vmatpush1.msra.mxu0 %v872
      %887 = vmatprep.subr.mxu0 0.0
      %888 = vmatpush1.msra.mxu0 0.0
      %889 = vmatprep.subr.mxu0 0.0
      %890 = vmatpush1.msra.mxu0 0.0
      %891 = vmatprep.subr.mxu0 0.0
      %892 = vmatpush1.msra.mxu0 0.0
      %893 = vmatprep.subr.mxu0 0.0
      %894 = vmatpush1.msra.mxu0 0.0
      %895 = vmatprep.subr.mxu0 0.0
      %896 = vmatpush1.msra.mxu0 0.0
      %897 = vmatprep.subr.mxu0 0.0
      %898 = vmatpush1.msra.mxu0 0.0
      %899 = vmatprep.subr.mxu0 0.0
      %900 = vmatpush1.msra.mxu0 0.0
      %901 = vmatprep.subr.mxu0 0.0
      %902 = vmatpush1.msra.mxu0 0.0
      %903 = vmatprep.subr.mxu0 0.0
      %904 = vmatpush1.msra.mxu0 0.0
      %905 = vmatprep.subr.mxu0 0.0
      %906 = vmatpush1.msra.mxu0 0.0
      %907 = vmatprep.subr.mxu0 0.0
      %908 = vmatpush1.msra.mxu0 0.0
      %909 = vmatprep.subr.mxu0 0.0
      %910 = vmatpush1.msra.mxu0 0.0
      %911 = vmatprep.subr.mxu0 0.0
      %912 = vmatpush1.msra.mxu0 0.0
      %913 = vmatprep.subr.mxu0 0.0
      %914 = vmatpush1.msra.mxu0 0.0
      %915 = vmatprep.subr.mxu0 0.0
      %916 = vmatpush1.msra.mxu0 0.0
      %917 = vmatprep.subr.mxu0 0.0
      %918 = vmatpush1.msra.mxu0 0.0
      %919 = vmatprep.subr.mxu0 0.0
      %920 = vmatpush1.msra.mxu0 0.0
      %921 = vmatprep.subr.mxu0 0.0
      %922 = vmatpush1.msra.mxu0 0.0
      %923 = vmatprep.subr.mxu0 0.0
      %924 = vmatpush1.msra.mxu0 0.0
      %925 = vmatprep.subr.mxu0 0.0
      %926 = vmatpush1.msra.mxu0 0.0
      %927 = vmatprep.subr.mxu0 0.0
      %928 = vmatpush1.msra.mxu0 0.0
      %929 = vmatprep.subr.mxu0 0.0
      %930 = vmatpush1.msra.mxu0 0.0
      %931 = vmatprep.subr.mxu0 0.0
      %932 = vmatpush1.msra.mxu0 0.0
      %933 = vmatprep.subr.mxu0 0.0
      %934 = vmatpush1.msra.mxu0 0.0
      %935 = vmatprep.subr.mxu0 0.0
      %936 = vmatpush1.msra.mxu0 0.0
      %937 = vmatprep.subr.mxu0 0.0
      %938 = vmatpush1.msra.mxu0 0.0
      %939 = vmatprep.subr.mxu0 0.0
      %940 = vmatpush1.msra.mxu0 0.0
      %941 = vmatprep.subr.mxu0 0.0
      %942 = vmatpush1.msra.mxu0 0.0
      %943 = vmatprep.subr.mxu0 0.0
      %944 = vmatpush1.msra.mxu0 0.0
      %945 = vmatprep.subr.mxu0 0.0
      %946 = vmatpush1.msra.mxu0 0.0
      %947 = vmatprep.mubr.f32.mxu0 0.0
      %948 = vmatmul.mubr.f32.gmra.mrb[0].mxu0 %v878
      %v949 = vpop.f32.mrb[0].mxu0
      %v950 = vadd.f32 0.0, %v949
      %v951 = vpop.f32.mrb[0].mxu0
      %v952 = vadd.f32 0.0, %v951
      %953 = vmatprep.mubr.f32.mxu0 0.0
      %954 = vmatmul.mubr.f32.gmra.mrb[0].mxu0 %v881
      %v955 = vpop.f32.mrb[0].mxu0
      %v956 = vadd.f32 0.0, %v955
      %v957 = vpop.f32.mrb[0].mxu0
      %v958 = vadd.f32 0.0, %v957
      %959 = vdwg.mxu0
      %v960 = vadd.f32 %v845, %v950
      %v961 = vadd.f32 %v846, %v952
      %v962 = vadd.f32 %v847, %v956
      %v963 = vadd.f32 %v848, %v958
      %964 = vrot.lane.b32.xlu0 %v171, 112
      %v965 = vpop.permute.xlu0 %964
      %966 = vrot.lane.b32.xlu0 %v173, 112
      %v967 = vpop.permute.xlu0 %966
      %968 = vrot.lane.b32.xlu0 %v172, 112
      %v969 = vpop.permute.xlu0 %968
      %970 = vrot.lane.b32.xlu0 %v174, 112
      %v971 = vpop.permute.xlu0 %970
      %vm972 = vcmp.lt.s32.totalorder %v176, 112
      %v973 = vsel %vm972, %v965, %v969
      %v974 = vsel %vm972, %v967, %v971
      %v975 = vsel %vm972, %v969, %v965
      %v976 = vsel %vm972, %v971, %v967
      %v977 = vsel %vm862, 1, 0
      %v978 = vsel %vm863, 1, 0
      %vm979 = vcmp.eq.s32.totalorder %v977, 1
      %vm980 = vcmp.eq.s32.totalorder %v978, 1
      %v981 = vsel %vm979, %v973, 0.0
      %v982 = vsel %vm980, %v975, 0.0
      %v983 = vsel %vm979, %v974, 0.0
      %v984 = vsel %vm980, %v976, 0.0
      %s985 = scalar_lea.vmem %s1, 112
      %v986 = vld [vmem:[%s985] sm:$0xff]
      %v987 = vld [vmem:[%s985 + $0x8] sm:$0xff]
      %v989 = vsel %vm255, %v986, 0
      %v992 = vsel %vm255, %v987, 0
      %994 = vmatprep.subr.mxu0 %v982
      %995 = vmatpush1.msra.mxu0 %v981
      %996 = vmatprep.subr.mxu0 %v984
      %997 = vmatpush1.msra.mxu0 %v983
      %998 = vmatprep.subr.mxu0 0.0
      %999 = vmatpush1.msra.mxu0 0.0
      %1000 = vmatprep.subr.mxu0 0.0
      %1001 = vmatpush1.msra.mxu0 0.0
      %1002 = vmatprep.subr.mxu0 0.0
      %1003 = vmatpush1.msra.mxu0 0.0
      %1004 = vmatprep.subr.mxu0 0.0
      %1005 = vmatpush1.msra.mxu0 0.0
      %1006 = vmatprep.subr.mxu0 0.0
      %1007 = vmatpush1.msra.mxu0 0.0
      %1008 = vmatprep.subr.mxu0 0.0
      %1009 = vmatpush1.msra.mxu0 0.0
      %1010 = vmatprep.subr.mxu0 0.0
      %1011 = vmatpush1.msra.mxu0 0.0
      %1012 = vmatprep.subr.mxu0 0.0
      %1013 = vmatpush1.msra.mxu0 0.0
      %1014 = vmatprep.subr.mxu0 0.0
      %1015 = vmatpush1.msra.mxu0 0.0
      %1016 = vmatprep.subr.mxu0 0.0
      %1017 = vmatpush1.msra.mxu0 0.0
      %1018 = vmatprep.subr.mxu0 0.0
      %1019 = vmatpush1.msra.mxu0 0.0
      %1020 = vmatprep.subr.mxu0 0.0
      %1021 = vmatpush1.msra.mxu0 0.0
      %1022 = vmatprep.subr.mxu0 0.0
      %1023 = vmatpush1.msra.mxu0 0.0
      %1024 = vmatprep.subr.mxu0 0.0
      %1025 = vmatpush1.msra.mxu0 0.0
      %1026 = vmatprep.subr.mxu0 0.0
      %1027 = vmatpush1.msra.mxu0 0.0
      %1028 = vmatprep.subr.mxu0 0.0
      %1029 = vmatpush1.msra.mxu0 0.0
      %1030 = vmatprep.subr.mxu0 0.0
      %1031 = vmatpush1.msra.mxu0 0.0
      %1032 = vmatprep.subr.mxu0 0.0
      %1033 = vmatpush1.msra.mxu0 0.0
      %1034 = vmatprep.subr.mxu0 0.0
      %1035 = vmatpush1.msra.mxu0 0.0
      %1036 = vmatprep.subr.mxu0 0.0
      %1037 = vmatpush1.msra.mxu0 0.0
      %1038 = vmatprep.subr.mxu0 0.0
      %1039 = vmatpush1.msra.mxu0 0.0
      %1040 = vmatprep.subr.mxu0 0.0
      %1041 = vmatpush1.msra.mxu0 0.0
      %1042 = vmatprep.subr.mxu0 0.0
      %1043 = vmatpush1.msra.mxu0 0.0
      %1044 = vmatprep.subr.mxu0 0.0
      %1045 = vmatpush1.msra.mxu0 0.0
      %1046 = vmatprep.subr.mxu0 0.0
      %1047 = vmatpush1.msra.mxu0 0.0
      %1048 = vmatprep.subr.mxu0 0.0
      %1049 = vmatpush1.msra.mxu0 0.0
      %1050 = vmatprep.subr.mxu0 0.0
      %1051 = vmatpush1.msra.mxu0 0.0
      %1052 = vmatprep.subr.mxu0 0.0
      %1053 = vmatpush1.msra.mxu0 0.0
      %1054 = vmatprep.subr.mxu0 0.0
      %1055 = vmatpush1.msra.mxu0 0.0
      %1056 = vmatprep.subr.mxu0 0.0
      %1057 = vmatpush1.msra.mxu0 0.0
      %1058 = vmatprep.mubr.f32.mxu0 0.0
      %1059 = vmatmul.mubr.f32.gmra.mrb[0].mxu0 %v989
      %v1060 = vpop.f32.mrb[0].mxu0
      %v1061 = vadd.f32 0.0, %v1060
      %v1062 = vpop.f32.mrb[0].mxu0
      %v1063 = vadd.f32 0.0, %v1062
      %1064 = vmatprep.mubr.f32.mxu0 0.0
      %1065 = vmatmul.mubr.f32.gmra.mrb[0].mxu0 %v992
      %v1066 = vpop.f32.mrb[0].mxu0
      %v1067 = vadd.f32 0.0, %v1066
      %v1068 = vpop.f32.mrb[0].mxu0
      %v1069 = vadd.f32 0.0, %v1068
      %1070 = vdwg.mxu0
      %v1071 = vadd.f32 %v960, %v1061
      %v1072 = vadd.f32 %v961, %v1063
      %v1073 = vadd.f32 %v962, %v1067
      %v1074 = vadd.f32 %v963, %v1069
      %1075 = vrot.lane.b32.xlu0 %v171, 111
      %v1076 = vpop.permute.xlu0 %1075
      %1077 = vrot.lane.b32.xlu0 %v173, 111
      %v1078 = vpop.permute.xlu0 %1077
      %1079 = vrot.lane.b32.xlu0 %v172, 111
      %v1080 = vpop.permute.xlu0 %1079
      %1081 = vrot.lane.b32.xlu0 %v174, 111
      %v1082 = vpop.permute.xlu0 %1081
      %vm1083 = vcmp.lt.s32.totalorder %v176, 111
      %v1084 = vsel %vm1083, %v1076, %v1080
      %v1085 = vsel %vm1083, %v1078, %v1082
      %v1086 = vsel %vm1083, %v1080, %v1076
      %v1087 = vsel %vm1083, %v1082, %v1078
      %vm1088 = vmand %vm435, %vm862
      %vm1089 = vmand %vm436, %vm863
      %v1090 = vsel %vm1088, 1, 0
      %v1091 = vsel %vm1089, 1, 0
      %vm1092 = vcmp.eq.s32.totalorder %v1090, 1
      %vm1093 = vcmp.eq.s32.totalorder %v1091, 1
      %v1094 = vsel %vm1092, %v1084, 0.0
      %v1095 = vsel %vm1093, %v1086, 0.0
      %v1096 = vsel %vm1092, %v1085, 0.0
      %v1097 = vsel %vm1093, %v1087, 0.0
      %s1098 = scalar_lea.vmem %s1, 128
      %v1099 = vld [vmem:[%s1098] sm:$0xff]
      %v1100 = vld [vmem:[%s1098 + $0x8] sm:$0xff]
      %v1102 = vsel %vm255, %v1099, 0
      %v1105 = vsel %vm255, %v1100, 0
      %1107 = vmatprep.subr.mxu0 %v1095
      %1108 = vmatpush1.msra.mxu0 %v1094
      %1109 = vmatprep.subr.mxu0 %v1097
      %1110 = vmatpush1.msra.mxu0 %v1096
      %1111 = vmatprep.subr.mxu0 0.0
      %1112 = vmatpush1.msra.mxu0 0.0
      %1113 = vmatprep.subr.mxu0 0.0
      %1114 = vmatpush1.msra.mxu0 0.0
      %1115 = vmatprep.subr.mxu0 0.0
      %1116 = vmatpush1.msra.mxu0 0.0
      %1117 = vmatprep.subr.mxu0 0.0
      %1118 = vmatpush1.msra.mxu0 0.0
      %1119 = vmatprep.subr.mxu0 0.0
      %1120 = vmatpush1.msra.mxu0 0.0
      %1121 = vmatprep.subr.mxu0 0.0
      %1122 = vmatpush1.msra.mxu0 0.0
      %1123 = vmatprep.subr.mxu0 0.0
      %1124 = vmatpush1.msra.mxu0 0.0
      %1125 = vmatprep.subr.mxu0 0.0
      %1126 = vmatpush1.msra.mxu0 0.0
      %1127 = vmatprep.subr.mxu0 0.0
      %1128 = vmatpush1.msra.mxu0 0.0
      %1129 = vmatprep.subr.mxu0 0.0
      %1130 = vmatpush1.msra.mxu0 0.0
      %1131 = vmatprep.subr.mxu0 0.0
      %1132 = vmatpush1.msra.mxu0 0.0
      %1133 = vmatprep.subr.mxu0 0.0
      %1134 = vmatpush1.msra.mxu0 0.0
      %1135 = vmatprep.subr.mxu0 0.0
      %1136 = vmatpush1.msra.mxu0 0.0
      %1137 = vmatprep.subr.mxu0 0.0
      %1138 = vmatpush1.msra.mxu0 0.0
      %1139 = vmatprep.subr.mxu0 0.0
      %1140 = vmatpush1.msra.mxu0 0.0
      %1141 = vmatprep.subr.mxu0 0.0
      %1142 = vmatpush1.msra.mxu0 0.0
      %1143 = vmatprep.subr.mxu0 0.0
      %1144 = vmatpush1.msra.mxu0 0.0
      %1145 = vmatprep.subr.mxu0 0.0
      %1146 = vmatpush1.msra.mxu0 0.0
      %1147 = vmatprep.subr.mxu0 0.0
      %1148 = vmatpush1.msra.mxu0 0.0
      %1149 = vmatprep.subr.mxu0 0.0
      %1150 = vmatpush1.msra.mxu0 0.0
      %1151 = vmatprep.subr.mxu0 0.0
      %1152 = vmatpush1.msra.mxu0 0.0
      %1153 = vmatprep.subr.mxu0 0.0
      %1154 = vmatpush1.msra.mxu0 0.0
      %1155 = vmatprep.subr.mxu0 0.0
      %1156 = vmatpush1.msra.mxu0 0.0
      %1157 = vmatprep.subr.mxu0 0.0
      %1158 = vmatpush1.msra.mxu0 0.0
      %1159 = vmatprep.subr.mxu0 0.0
      %1160 = vmatpush1.msra.mxu0 0.0
      %1161 = vmatprep.subr.mxu0 0.0
      %1162 = vmatpush1.msra.mxu0 0.0
      %1163 = vmatprep.subr.mxu0 0.0
      %1164 = vmatpush1.msra.mxu0 0.0
      %1165 = vmatprep.subr.mxu0 0.0
      %1166 = vmatpush1.msra.mxu0 0.0
      %1167 = vmatprep.subr.mxu0 0.0
      %1168 = vmatpush1.msra.mxu0 0.0
      %1169 = vmatprep.subr.mxu0 0.0
      %1170 = vmatpush1.msra.mxu0 0.0
      %1171 = vmatprep.mubr.f32.mxu0 0.0
      %1172 = vmatmul.mubr.f32.gmra.mrb[0].mxu0 %v1102
      %v1173 = vpop.f32.mrb[0].mxu0
      %v1174 = vadd.f32 0.0, %v1173
      %v1175 = vpop.f32.mrb[0].mxu0
      %v1176 = vadd.f32 0.0, %v1175
      %1177 = vmatprep.mubr.f32.mxu0 0.0
      %1178 = vmatmul.mubr.f32.gmra.mrb[0].mxu0 %v1105
      %v1179 = vpop.f32.mrb[0].mxu0
      %v1180 = vadd.f32 0.0, %v1179
      %v1181 = vpop.f32.mrb[0].mxu0
      %v1182 = vadd.f32 0.0, %v1181
      %1183 = vdwg.mxu0
      %v1184 = vadd.f32 %v1071, %v1174
      %v1185 = vadd.f32 %v1072, %v1176
      %v1186 = vadd.f32 %v1073, %v1180
      %v1187 = vadd.f32 %v1074, %v1182
      %v1188 = vld [vmem:[%s2] sm:$0xff]
      %v1189 = vld [vmem:[%s2 + $0x8] sm:$0xff]
      %1191 = vset.pattern.permute.xlu0 0
      %1192 = vperm.xlu0 %1191, %v1188
      %v1193 = vpop.permute.xlu0 %1192
      %1196 = vset.pattern.permute.xlu0 0
      %1197 = vperm.xlu0 %1196, %v1189
      %v1198 = vpop.permute.xlu0 %1197
      %v1200 = vadd.f32 %v1184, %v1193
      %v1201 = vadd.f32 %v1185, %v1193
      %v1202 = vadd.f32 %v1186, %v1198
      %v1203 = vadd.f32 %v1187, %v1198
      %1204 = vst [vmem:[%s170] sm:$0xff] %v1200
      %1205 = vst [vmem:[%s170 + $0x8] sm:$0xff] %v1201
      %1206 = vst [vmem:[%s170 + $0x10] sm:$0xff] %v1202
      %1207 = vst [vmem:[%s170 + $0x18] sm:$0xff] %v1203
      %p1208 = scmp.lt.s32.totalorder %s14, 1
      %s1209 = scalar_select %p1208, %s14, 1
      %s1210 = smul.addr %s1209, 4
      %s1211 = smul.addr %s1210, 8
      %s1212 = scalar_lea.vmem %s3, %s1211
      // Predicated region
      $region33: #{fpn_forward.12} parent=31 // pred_check
        %p1213 = pneg %p100
      $region34: #{fpn_forward.12} parent=31 // pred_check_branch
        %1215 = sbr.rel (%p1213) target = $region36
      $region35: #{fpn_forward.12} parent=31 // pred_region
        _
      $region36: #{fpn_forward.12} parent=31 // pred_fallthru
        _
    $region32: #{fpn_forward.12} parent=5 // pred_fallthru
      _
    %p1216 = scmp.le.s32.totalorder 2, %s9
    // Predicated region
    $region37: #{fpn_forward.12} parent=5 // pred_check
      %p1217 = pneg %p1216
    $region38: #{fpn_forward.12} parent=5 // pred_check_branch
      %1219 = sbr.rel (%p1217) target = $region40
    $region39: #{fpn_forward.12} parent=5 // pred_region
      %s1220 = ssub.s32 %s9, 2
      // Predicated region
      $region41: #{fpn_forward.12} parent=39 // pred_check
        %p1221 = pneg %p106
      $region42: #{fpn_forward.12} parent=39 // pred_check_branch
        %1223 = sbr.rel (%p1221) target = $region44
      $region43: #{fpn_forward.12} parent=39 // pred_region
        %p1224 = scmp.lt.s32.totalorder %s15, 1
        %s1225 = scalar_select %p1224, %s15, 1
        %s1226 = smul.addr %s1225, 4
        %s1227 = smul.addr %s1226, 8
        %s1228 = scalar_lea.vmem %s3, %s1227
      $region44: #{fpn_forward.12} parent=39 // pred_fallthru
        _
    $region40: #{fpn_forward.12} parent=5 // pred_fallthru
      _
  $region6: #{fpn_forward.12} parent=0 // loop_footer
    %s13 = sadd.s32 1, %s9
  $region7: #{fpn_forward.12} parent=0 // loop_footer_branch
    %8 = sbr.rel target = $region3
  $region8: #{fpn_forward.12} parent=0 // loop_exit
    _

// kernel: fpn_forward.14
$region0: #{fpn_forward.14}
  #allocation0 [shape = 'u32[]', space=smem, size = 0x4, offset = 0x4, fixed_abs, tag = 'smem constant byte address 0x4 - core index']
  #allocation1 [shape = 'u32[144,128]{1,0:T(1,128)}', space=vmem, size = 0x12000, scoped, tag = 'internal scratch']
  %s0 = inlined_call_operand.vmem [shape: f32[2,16,16], index: 0, kind: input, shape index: {}]
  %s1 = inlined_call_operand.vmem [shape: f32[9,16,16], index: 1, kind: input, shape index: {}]
  %s2 = inlined_call_operand.vmem [shape: f32[16,1], index: 2, kind: input, shape index: {}]
  %s3 = inlined_call_operand.vmem [shape: f32[2,16,16], index: 3, kind: output, shape index: {}]
  %s4 = sld [smem:[#allocation0]]
  $region45: #{fpn_forward.14} parent=0
    _
  %s6 = ssub.s32 1, %s4
  %s7 = scalar_select 0, %s6, %s4
  loop: start=0, step=1, limit=4
  $region2: #{fpn_forward.14} parent=0 // loop_pre_header
    _
  $region3: #{fpn_forward.14} parent=0 // loop_header
    %s9 = sphi 0, %s13
    %p10 = scmp.ge.s32.totalorder %s9, 4
    %s19 = sphi 0, %s21
    %s22 = sphi 0, %s19
    %s23 = sphi 0, %s22
    %s39 = sphi 0, %s23
    %s43 = sphi 0, %s43
    %s45 = sphi 0, %s43
    %s46 = sphi 0, %s45
    %s60 = sphi 0, %s46
    %s64 = sphi 0, %s64
    %s66 = sphi 0, %s64
    %s67 = sphi 0, %s66
    %s81 = sphi 0, %s67
    %s87 = sphi 0, %s89
    %s90 = sphi 0, %s87
    %s91 = sphi 0, %s90
    %s107 = sphi 0, %s91
  $region4: #{fpn_forward.14} parent=0 // loop_header_branch
    %12 = sbr.rel (%p10) target = $region8
  $region5: #{fpn_forward.14} parent=0 // loop_body
    %s14 = ssub.s32 %s9, 1
    %s15 = ssub.s32 %s9, 2
    %s16 = sadd.s32 %s9, 1
    %s17 = ssub.s32 %s9, %s16
    %p18 = scmp.eq.s32.totalorder %s17, 0
    %s20 = sadd.s32 %s19, 1
    %s21 = scalar_select %p18, %s19, %s20
    %p24 = pneg %p18
    %p25 = scmp.eq.s32.totalorder %s9, 1
    %p26 = por %p24, %p25
    %p27 = scmp.ne.s32.totalorder %s19, %s22
    %p28 = scmp.eq.s32.totalorder %s9, 0
    %p29 = por %p27, %p28
    %p30 = scmp.ne.s32.totalorder %s19, %s22
    %p31 = scmp.eq.s32.totalorder %s14, 1
    %p32 = por %p30, %p31
    %p33 = scmp.ne.s32.totalorder %s22, %s23
    %p34 = scmp.eq.s32.totalorder %s14, 0
    %p35 = por %p33, %p34
    %p36 = scmp.ne.s32.totalorder %s22, %s23
    %p37 = scmp.eq.s32.totalorder %s15, 1
    %p38 = por %p36, %p37
    %p40 = scmp.ne.s32.totalorder %s23, %s39
    %p41 = scmp.eq.s32.totalorder %s15, 0
    %p42 = por %p40, %p41
    %s44 = sadd.s32 %s43, 1
    %p47 = scmp.eq.s32.totalorder %s9, 1
    %p48 = scmp.ne.s32.totalorder %s43, %s45
    %p49 = scmp.eq.s32.totalorder %s9, 0
    %p50 = por %p48, %p49
    %p51 = scmp.ne.s32.totalorder %s43, %s45
    %p52 = scmp.eq.s32.totalorder %s14, 1
    %p53 = por %p51, %p52
    %p54 = scmp.ne.s32.totalorder %s45, %s46
    %p55 = scmp.eq.s32.totalorder %s14, 0
    %p56 = por %p54, %p55
    %p57 = scmp.ne.s32.totalorder %s45, %s46
    %p58 = scmp.eq.s32.totalorder %s15, 1
    %p59 = por %p57, %p58
    %p61 = scmp.ne.s32.totalorder %s46, %s60
    %p62 = scmp.eq.s32.totalorder %s15, 0
    %p63 = por %p61, %p62
    %s65 = sadd.s32 %s64, 1
    %p68 = scmp.eq.s32.totalorder %s9, 1
    %p69 = scmp.ne.s32.totalorder %s64, %s66
    %p70 = scmp.eq.s32.totalorder %s9, 0
    %p71 = por %p69, %p70
    %p72 = scmp.ne.s32.totalorder %s64, %s66
    %p73 = scmp.eq.s32.totalorder %s14, 1
    %p74 = por %p72, %p73
    %p75 = scmp.ne.s32.totalorder %s66, %s67
    %p76 = scmp.eq.s32.totalorder %s14, 0
    %p77 = por %p75, %p76
    %p78 = scmp.ne.s32.totalorder %s66, %s67
    %p79 = scmp.eq.s32.totalorder %s15, 1
    %p80 = por %p78, %p79
    %p82 = scmp.ne.s32.totalorder %s67, %s81
    %p83 = scmp.eq.s32.totalorder %s15, 0
    %p84 = por %p82, %p83
    %s85 = ssub.s32 %s9, %s16
    %p86 = scmp.eq.s32.totalorder %s85, 0
    %s88 = sadd.s32 %s87, 1
    %s89 = scalar_select %p86, %s87, %s88
    %p92 = pneg %p86
    %p93 = scmp.eq.s32.totalorder %s9, 1
    %p94 = por %p92, %p93
    %p95 = scmp.ne.s32.totalorder %s87, %s90
    %p96 = scmp.eq.s32.totalorder %s9, 0
    %p97 = por %p95, %p96
    %p98 = scmp.ne.s32.totalorder %s87, %s90
    %p99 = scmp.eq.s32.totalorder %s14, 1
    %p100 = por %p98, %p99
    %p101 = scmp.ne.s32.totalorder %s90, %s91
    %p102 = scmp.eq.s32.totalorder %s14, 0
    %p103 = por %p101, %p102
    %p104 = scmp.ne.s32.totalorder %s90, %s91
    %p105 = scmp.eq.s32.totalorder %s15, 1
    %p106 = por %p104, %p105
    %p108 = scmp.ne.s32.totalorder %s91, %s107
    %p109 = scmp.eq.s32.totalorder %s15, 0
    %p110 = por %p108, %p109
    %p111 = scmp.le.s32.totalorder 1, %s9
    %p112 = scmp.lt.s32.totalorder %s9, 3
    %p113 = pnand %p111, %p112
    %p114 = pneg %p113
    // Predicated region
    $region9: #{fpn_forward.14} parent=5 // pred_check
      _
    $region10: #{fpn_forward.14} parent=5 // pred_check_branch
      %116 = sbr.rel (%p113) target = $region12
    $region11: #{fpn_forward.14} parent=5 // pred_region
      %s117 = ssub.s32 %s9, 1
      // Predicated region
      $region13: #{fpn_forward.14} parent=11 // pred_check
        %p118 = pneg %p56
      $region14: #{fpn_forward.14} parent=11 // pred_check_branch
        %120 = sbr.rel (%p118) target = $region16
      $region15: #{fpn_forward.14} parent=11 // pred_region
        _
      $region16: #{fpn_forward.14} parent=11 // pred_fallthru
        _
      // Predicated region
      $region17: #{fpn_forward.14} parent=11 // pred_check
        %p121 = pneg %p77
      $region18: #{fpn_forward.14} parent=11 // pred_check_branch
        %123 = sbr.rel (%p121) target = $region20
      $region19: #{fpn_forward.14} parent=11 // pred_region
        _
      $region20: #{fpn_forward.14} parent=11 // pred_fallthru
        _
    $region12: #{fpn_forward.14} parent=5 // pred_fallthru
      _
    %p124 = scmp.lt.s32.totalorder %s9, 2
    // Predicated region
    $region21: #{fpn_forward.14} parent=5 // pred_check
      %p125 = pneg %p124
    $region22: #{fpn_forward.14} parent=5 // pred_check_branch
      %127 = sbr.rel (%p125) target = $region24
    $region23: #{fpn_forward.14} parent=5 // pred_region
      // Predicated region
      $region25: #{fpn_forward.14} parent=23 // pred_check
        %p128 = pneg %p29
      $region26: #{fpn_forward.14} parent=23 // pred_check_branch
        %130 = sbr.rel (%p128) target = $region28
      $region27: #{fpn_forward.14} parent=23 // pred_region
        %p131 = scmp.lt.s32.totalorder %s9, 1
        %s132 = scalar_select %p131, %s9, 1
        %s133 = smul.addr %s132, 2
        %s134 = smul.addr %s133, 8
        %s135 = scalar_lea.vmem %s0, %s134
      $region28: #{fpn_forward.14} parent=23 // pred_fallthru
        _
    $region24: #{fpn_forward.14} parent=5 // pred_fallthru
      _
    %p136 = scmp.le.s32.totalorder 1, %s9
    %p137 = scmp.lt.s32.totalorder %s9, 3
    %p138 = pnand %p136, %p137
    %p139 = pneg %p138
    // Predicated region
    $region29: #{fpn_forward.14} parent=5 // pred_check
      _
    $region30: #{fpn_forward.14} parent=5 // pred_check_branch
      %141 = sbr.rel (%p138) target = $region32
    $region31: #{fpn_forward.14} parent=5 // pred_region
      %s142 = ssub.s32 %s9, 1
      %p143 = scmp.lt.s32.totalorder %s14, 1
      %s144 = scalar_select %p143, %s14, 1
      %s145 = smul.addr %s144, 2
      %s146 = smul.addr %s145, 8
      %s147 = scalar_lea.vmem %s0, %s146
      %p148 = pneg %p35
      %p149 = pneg %p32
      %p150 = pneg %p56
      %p151 = pneg %p53
      %p152 = pneg %p77
      %p153 = pneg %p74
      %p154 = pneg %p103
      %p155 = pneg %p100
      %p156 = scmp.lt.s32.totalorder %s14, 1
      %s157 = scalar_select %p156, %s14, 1
      %s158 = smul.addr %s157, 2
      %s159 = smul.addr %s158, 8
      %s160 = scalar_lea.vmem %s3, %s159
      %p161 = scmp.lt.s32.totalorder %s14, 1
      %s162 = scalar_select %p161, %s14, 1
      %s163 = smul.addr %s162, 2
      %s164 = smul.addr %s163, 8
      %s165 = scalar_lea.vmem %s0, %s164
      %p166 = scmp.lt.s32.totalorder %s14, 1
      %s167 = scalar_select %p166, %s14, 1
      %s168 = smul.addr %s167, 2
      %s169 = smul.addr %s168, 8
      %s170 = scalar_lea.vmem %s3, %s169
      %v171 = vld [vmem:[%s165] sm:$0xff]
      %v172 = vld [vmem:[%s165 + $0x8] sm:$0xff]
      %v173 = vlaneseq
      %v174 = vand.u32 %v173, 127
      %vm175 = vcmp.lt.s32.totalorder %v174, 0
      %v176 = vsub.s32 0, %v174
      %v177 = vsel %vm175, %v176, %v174
      %v178 = vshrl.u32 %v177, 2
      %v179 = vand.u32 %v177, 3
      %v180 = vsub.s32 0, %v179
      %v181 = vsel %vm175, %v180, %v179
      %vm182 = vcmp.ne.s32.totalorder %v181, 0
      %vm183 = vcmp.lt.s32.totalorder %v181, 0
      %vm184 = vmand %vm183, %vm182
      %v185 = vadd.s32 %v181, 4
      %v186 = vsel %vm184, %v185, %v181
      %vm187 = vcmask 1047680
      %188 = vrot.lane.b32.xlu0 %v171, 16
      %v189 = vpop.permute.xlu0 %188
      %v190 = vsel %vm187, %v189, %v171
      %191 = vrot.lane.b32.xlu0 %v172, 16
      %v192 = vpop.permute.xlu0 %191
      %v193 = vsel %vm187, %v192, %v172
      %194 = vrot.lane.b32.xlu0 %v190, 16
      %v195 = vpop.permute.xlu0 %194
      %196 = vrot.lane.b32.xlu0 %v193, 16
      %v197 = vpop.permute.xlu0 %196
      %v198 = vsel %vm187, %v195, %v171
      %v199 = vsel %vm187, %v197, %v172
      %vm200 = vcmp.ge.s32.totalorder %v186, 1
      %vm201 = vcmp.ge.s32.totalorder %v174, 4
      %vm202 = vmand %vm200, %vm201
      %v203 = vsel %vm202, 1, 0
      %vm204 = vcmp.eq.s32.totalorder %v203, 1
      %207 = vrot.lane.b32.xlu0 %v198, 117
      %v208 = vpop.permute.xlu0 %207
      %209 = vrot.lane.b32.xlu0 %v199, 117
      %v210 = vpop.permute.xlu0 %209
      %v213 = vsel %vm204, %v208, 0.0
      %v214 = vsel %vm204, %v210, 0.0
      %v215 = vld [vmem:[%s1] sm:$0xff]
      %v216 = vld [vmem:[%s1 + $0x8] sm:$0xff]
      %v217 = vsel %vm201, 1, 0
      %vm218 = vcmp.eq.s32.totalorder %v217, 1
      %219 = vrot.lane.b32.xlu0 %v198, 116
      %v220 = vpop.permute.xlu0 %219
      %221 = vrot.lane.b32.xlu0 %v199, 116
      %v222 = vpop.permute.xlu0 %221
      %v225 = vsel %vm218, %v220, 0.0
      %v226 = vsel %vm218, %v222, 0.0
      %s227 = scalar_lea.vmem %s1, 16
      %v228 = vld [vmem:[%s227] sm:$0xff]
      %v229 = vld [vmem:[%s227 + $0x8] sm:$0xff]
      %vm230 = vcmask 130048
      %v232 = vsel %vm230, %v228, 0
      %v235 = vsel %vm230, %v229, 0
      %237 = vmatprep.subr.mxu0 0.0
      %238 = vmatpush1.msra.mxu0 %v225
      %239 = vmatprep.subr.mxu0 0.0
      %240 = vmatpush1.msra.mxu0 %v226
      %241 = vmatprep.subr.mxu0 0.0
      %242 = vmatpush1.msra.mxu0 0.0
      %243 = vmatprep.subr.mxu0 0.0
      %244 = vmatpush1.msra.mxu0 0.0
      %245 = vmatprep.subr.mxu0 0.0
      %246 = vmatpush1.msra.mxu0 0.0
      %247 = vmatprep.subr.mxu0 0.0
      %248 = vmatpush1.msra.mxu0 0.0
      %249 = vmatprep.subr.mxu0 0.0
      %250 = vmatpush1.msra.mxu0 0.0
      %251 = vmatprep.subr.mxu0 0.0
      %252 = vmatpush1.msra.mxu0 0.0
      %253 = vmatprep.subr.mxu0 0.0
      %254 = vmatpush1.msra.mxu0 0.0
      %255 = vmatprep.subr.mxu0 0.0
      %256 = vmatpush1.msra.mxu0 0.0
      %257 = vmatprep.subr.mxu0 0.0
      %258 = vmatpush1.msra.mxu0 0.0
      %259 = vmatprep.subr.mxu0 0.0
      %260 = vmatpush1.msra.mxu0 0.0
      %261 = vmatprep.subr.mxu0 0.0
      %262 = vmatpush1.msra.mxu0 0.0
      %263 = vmatprep.subr.mxu0 0.0
      %264 = vmatpush1.msra.mxu0 0.0
      %265 = vmatprep.subr.mxu0 0.0
      %266 = vmatpush1.msra.mxu0 0.0
      %267 = vmatprep.subr.mxu0 0.0
      %268 = vmatpush1.msra.mxu0 0.0
      %269 = vmatprep.subr.mxu0 0.0
      %270 = vmatpush1.msra.mxu0 0.0
      %271 = vmatprep.subr.mxu0 0.0
      %272 = vmatpush1.msra.mxu0 0.0
      %273 = vmatprep.subr.mxu0 0.0
      %274 = vmatpush1.msra.mxu0 0.0
      %275 = vmatprep.subr.mxu0 0.0
      %276 = vmatpush1.msra.mxu0 0.0
      %277 = vmatprep.subr.mxu0 0.0
      %278 = vmatpush1.msra.mxu0 0.0
      %279 = vmatprep.subr.mxu0 0.0
      %280 = vmatpush1.msra.mxu0 0.0
      %281 = vmatprep.subr.mxu0 0.0
      %282 = vmatpush1.msra.mxu0 0.0
      %283 = vmatprep.subr.mxu0 0.0
      %284 = vmatpush1.msra.mxu0 0.0
      %285 = vmatprep.subr.mxu0 0.0
      %286 = vmatpush1.msra.mxu0 0.0
      %287 = vmatprep.subr.mxu0 0.0
      %288 = vmatpush1.msra.mxu0 0.0
      %289 = vmatprep.subr.mxu0 0.0
      %290 = vmatpush1.msra.mxu0 0.0
      %291 = vmatprep.subr.mxu0 0.0
      %292 = vmatpush1.msra.mxu0 0.0
      %293 = vmatprep.subr.mxu0 0.0
      %294 = vmatpush1.msra.mxu0 0.0
      %295 = vmatprep.subr.mxu0 0.0
      %296 = vmatpush1.msra.mxu0 0.0
      %297 = vmatprep.subr.mxu0 0.0
      %298 = vmatpush1.msra.mxu0 0.0
      %299 = vmatprep.subr.mxu0 0.0
      %300 = vmatpush1.msra.mxu0 0.0
      %301 = vmatprep.mubr.f32.mxu0 0.0
      %302 = vmatmul.mubr.f32.gmra.mrb[0].mxu0 %v232
      %v303 = vpop.f32.mrb[0].mxu0
      %v304 = vadd.f32 0.0, %v303
      %v305 = vpop.f32.mrb[0].mxu0
      %306 = vmatprep.mubr.f32.mxu0 0.0
      %307 = vmatmul.mubr.f32.gmra.mrb[0].mxu0 %v235
      %v308 = vpop.f32.mrb[0].mxu0
      %v309 = vadd.f32 0.0, %v308
      %v310 = vpop.f32.mrb[0].mxu0
      %311 = vdwg.mxu0
      %v313 = vsel %vm230, %v215, 0
      %v316 = vsel %vm230, %v216, 0
      %318 = vmatprep.subr.mxu0 0.0
      %319 = vmatpush1.msra.mxu0 %v213
      %320 = vmatprep.subr.mxu0 0.0
      %321 = vmatpush1.msra.mxu0 %v214
      %322 = vmatprep.subr.mxu0 0.0
      %323 = vmatpush1.msra.mxu0 0.0
      %324 = vmatprep.subr.mxu0 0.0
      %325 = vmatpush1.msra.mxu0 0.0
      %326 = vmatprep.subr.mxu0 0.0
      %327 = vmatpush1.msra.mxu0 0.0
      %328 = vmatprep.subr.mxu0 0.0
      %329 = vmatpush1.msra.mxu0 0.0
      %330 = vmatprep.subr.mxu0 0.0
      %331 = vmatpush1.msra.mxu0 0.0
      %332 = vmatprep.subr.mxu0 0.0
      %333 = vmatpush1.msra.mxu0 0.0
      %334 = vmatprep.subr.mxu0 0.0
      %335 = vmatpush1.msra.mxu0 0.0
      %336 = vmatprep.subr.mxu0 0.0
      %337 = vmatpush1.msra.mxu0 0.0
      %338 = vmatprep.subr.mxu0 0.0
      %339 = vmatpush1.msra.mxu0 0.0
      %340 = vmatprep.subr.mxu0 0.0
      %341 = vmatpush1.msra.mxu0 0.0
      %342 = vmatprep.subr.mxu0 0.0
      %343 = vmatpush1.msra.mxu0 0.0
      %344 = vmatprep.subr.mxu0 0.0
      %345 = vmatpush1.msra.mxu0 0.0
      %346 = vmatprep.subr.mxu0 0.0
      %347 = vmatpush1.msra.mxu0 0.0
      %348 = vmatprep.subr.mxu0 0.0
      %349 = vmatpush1.msra.mxu0 0.0
      %350 = vmatprep.subr.mxu0 0.0
      %351 = vmatpush1.msra.mxu0 0.0
      %352 = vmatprep.subr.mxu0 0.0
      %353 = vmatpush1.msra.mxu0 0.0
      %354 = vmatprep.subr.mxu0 0.0
      %355 = vmatpush1.msra.mxu0 0.0
      %356 = vmatprep.subr.mxu0 0.0
      %357 = vmatpush1.msra.mxu0 0.0
      %358 = vmatprep.subr.mxu0 0.0
      %359 = vmatpush1.msra.mxu0 0.0
      %360 = vmatprep.subr.mxu0 0.0
      %361 = vmatpush1.msra.mxu0 0.0
      %362 = vmatprep.subr.mxu0 0.0
      %363 = vmatpush1.msra.mxu0 0.0
      %364 = vmatprep.subr.mxu0 0.0
      %365 = vmatpush1.msra.mxu0 0.0
      %366 = vmatprep.subr.mxu0 0.0
      %367 = vmatpush1.msra.mxu0 0.0
      %368 = vmatprep.subr.mxu0 0.0
      %369 = vmatpush1.msra.mxu0 0.0
      %370 = vmatprep.subr.mxu0 0.0
      %371 = vmatpush1.msra.mxu0 0.0
      %372 = vmatprep.subr.mxu0 0.0
      %373 = vmatpush1.msra.mxu0 0.0
      %374 = vmatprep.subr.mxu0 0.0
      %375 = vmatpush1.msra.mxu0 0.0
      %376 = vmatprep.subr.mxu0 0.0
      %377 = vmatpush1.msra.mxu0 0.0
      %378 = vmatprep.subr.mxu0 0.0
      %379 = vmatpush1.msra.mxu0 0.0
      %380 = vmatprep.subr.mxu0 0.0
      %381 = vmatpush1.msra.mxu0 0.0
      %382 = vmatprep.mubr.f32.mxu0 0.0
      %383 = vmatmul.mubr.f32.gmra.mrb[0].mxu0 %v313
      %v384 = vpop.f32.mrb[0].mxu0
      %v385 = vadd.f32 %v304, %v384
      %v386 = vpop.f32.mrb[0].mxu0
      %387 = vmatprep.mubr.f32.mxu0 0.0
      %388 = vmatmul.mubr.f32.gmra.mrb[0].mxu0 %v316
      %v389 = vpop.f32.mrb[0].mxu0
      %v390 = vadd.f32 %v309, %v389
      %v391 = vpop.f32.mrb[0].mxu0
      %392 = vdwg.mxu0
      %vm393 = vcmp.lt.s32.totalorder %v186, 3
      %vm394 = vmand %vm393, %vm201
      %v395 = vsel %vm394, 1, 0
      %vm396 = vcmp.eq.s32.totalorder %v395, 1
      %397 = vrot.lane.b32.xlu0 %v198, 115
      %v398 = vpop.permute.xlu0 %397
      %399 = vrot.lane.b32.xlu0 %v199, 115
      %v400 = vpop.permute.xlu0 %399
      %v403 = vsel %vm396, %v398, 0.0
      %v404 = vsel %vm396, %v400, 0.0
      %s405 = scalar_lea.vmem %s1, 32
      %v406 = vld [vmem:[%s405] sm:$0xff]
      %v407 = vld [vmem:[%s405 + $0x8] sm:$0xff]
      %v409 = vsel %vm230, %v406, 0
      %v412 = vsel %vm230, %v407, 0
      %414 = vmatprep.subr.mxu0 0.0
      %415 = vmatpush1.msra.mxu0 %v403
      %416 = vmatprep.subr.mxu0 0.0
      %417 = vmatpush1.msra.mxu0 %v404
      %418 = vmatprep.subr.mxu0 0.0
      %419 = vmatpush1.msra.mxu0 0.0
      %420 = vmatprep.subr.mxu0 0.0
      %421 = vmatpush1.msra.mxu0 0.0
      %422 = vmatprep.subr.mxu0 0.0
      %423 = vmatpush1.msra.mxu0 0.0
      %424 = vmatprep.subr.mxu0 0.0
      %425 = vmatpush1.msra.mxu0 0.0
      %426 = vmatprep.subr.mxu0 0.0
      %427 = vmatpush1.msra.mxu0 0.0
      %428 = vmatprep.subr.mxu0 0.0
      %429 = vmatpush1.msra.mxu0 0.0
      %430 = vmatprep.subr.mxu0 0.0
      %431 = vmatpush1.msra.mxu0 0.0
      %432 = vmatprep.subr.mxu0 0.0
      %433 = vmatpush1.msra.mxu0 0.0
      %434 = vmatprep.subr.mxu0 0.0
      %435 = vmatpush1.msra.mxu0 0.0
      %436 = vmatprep.subr.mxu0 0.0
      %437 = vmatpush1.msra.mxu0 0.0
      %438 = vmatprep.subr.mxu0 0.0
      %439 = vmatpush1.msra.mxu0 0.0
      %440 = vmatprep.subr.mxu0 0.0
      %441 = vmatpush1.msra.mxu0 0.0
      %442 = vmatprep.subr.mxu0 0.0
      %443 = vmatpush1.msra.mxu0 0.0
      %444 = vmatprep.subr.mxu0 0.0
      %445 = vmatpush1.msra.mxu0 0.0
      %446 = vmatprep.subr.mxu0 0.0
      %447 = vmatpush1.msra.mxu0 0.0
      %448 = vmatprep.subr.mxu0 0.0
      %449 = vmatpush1.msra.mxu0 0.0
      %450 = vmatprep.subr.mxu0 0.0
      %451 = vmatpush1.msra.mxu0 0.0
      %452 = vmatprep.subr.mxu0 0.0
      %453 = vmatpush1.msra.mxu0 0.0
      %454 = vmatprep.subr.mxu0 0.0
      %455 = vmatpush1.msra.mxu0 0.0
      %456 = vmatprep.subr.mxu0 0.0
      %457 = vmatpush1.msra.mxu0 0.0
      %458 = vmatprep.subr.mxu0 0.0
      %459 = vmatpush1.msra.mxu0 0.0
      %460 = vmatprep.subr.mxu0 0.0
      %461 = vmatpush1.msra.mxu0 0.0
      %462 = vmatprep.subr.mxu0 0.0
      %463 = vmatpush1.msra.mxu0 0.0
      %464 = vmatprep.subr.mxu0 0.0
      %465 = vmatpush1.msra.mxu0 0.0
      %466 = vmatprep.subr.mxu0 0.0
      %467 = vmatpush1.msra.mxu0 0.0
      %468 = vmatprep.subr.mxu0 0.0
      %469 = vmatpush1.msra.mxu0 0.0
      %470 = vmatprep.subr.mxu0 0.0
      %471 = vmatpush1.msra.mxu0 0.0
      %472 = vmatprep.subr.mxu0 0.0
      %473 = vmatpush1.msra.mxu0 0.0
      %474 = vmatprep.subr.mxu0 0.0
      %475 = vmatpush1.msra.mxu0 0.0
      %476 = vmatprep.subr.mxu0 0.0
      %477 = vmatpush1.msra.mxu0 0.0
      %478 = vmatprep.mubr.f32.mxu0 0.0
      %479 = vmatmul.mubr.f32.gmra.mrb[0].mxu0 %v409
      %v480 = vpop.f32.mrb[0].mxu0
      %v481 = vadd.f32 0.0, %v480
      %v482 = vpop.f32.mrb[0].mxu0
      %483 = vmatprep.mubr.f32.mxu0 0.0
      %484 = vmatmul.mubr.f32.gmra.mrb[0].mxu0 %v412
      %v485 = vpop.f32.mrb[0].mxu0
      %v486 = vadd.f32 0.0, %v485
      %v487 = vpop.f32.mrb[0].mxu0
      %488 = vdwg.mxu0
      %v489 = vadd.f32 %v385, %v481
      %v490 = vadd.f32 %v390, %v486
      %v491 = vsel %vm200, 1, 0
      %vm492 = vcmp.eq.s32.totalorder %v491, 1
      %493 = vrot.lane.b32.xlu0 %v198, 113
      %v494 = vpop.permute.xlu0 %493
      %495 = vrot.lane.b32.xlu0 %v199, 113
      %v496 = vpop.permute.xlu0 %495
      %v499 = vsel %vm492, %v494, 0.0
      %v500 = vsel %vm492, %v496, 0.0
      %s501 = scalar_lea.vmem %s1, 48
      %v502 = vld [vmem:[%s501] sm:$0xff]
      %v503 = vld [vmem:[%s501 + $0x8] sm:$0xff]
      %v505 = vsel %vm230, %v502, 0
      %v508 = vsel %vm230, %v503, 0
      %510 = vmatprep.subr.mxu0 0.0
      %511 = vmatpush1.msra.mxu0 %v499
      %512 = vmatprep.subr.mxu0 0.0
      %513 = vmatpush1.msra.mxu0 %v500
      %514 = vmatprep.subr.mxu0 0.0
      %515 = vmatpush1.msra.mxu0 0.0
      %516 = vmatprep.subr.mxu0 0.0
      %517 = vmatpush1.msra.mxu0 0.0
      %518 = vmatprep.subr.mxu0 0.0
      %519 = vmatpush1.msra.mxu0 0.0
      %520 = vmatprep.subr.mxu0 0.0
      %521 = vmatpush1.msra.mxu0 0.0
      %522 = vmatprep.subr.mxu0 0.0
      %523 = vmatpush1.msra.mxu0 0.0
      %524 = vmatprep.subr.mxu0 0.0
      %525 = vmatpush1.msra.mxu0 0.0
      %526 = vmatprep.subr.mxu0 0.0
      %527 = vmatpush1.msra.mxu0 0.0
      %528 = vmatprep.subr.mxu0 0.0
      %529 = vmatpush1.msra.mxu0 0.0
      %530 = vmatprep.subr.mxu0 0.0
      %531 = vmatpush1.msra.mxu0 0.0
      %532 = vmatprep.subr.mxu0 0.0
      %533 = vmatpush1.msra.mxu0 0.0
      %534 = vmatprep.subr.mxu0 0.0
      %535 = vmatpush1.msra.mxu0 0.0
      %536 = vmatprep.subr.mxu0 0.0
      %537 = vmatpush1.msra.mxu0 0.0
      %538 = vmatprep.subr.mxu0 0.0
      %539 = vmatpush1.msra.mxu0 0.0
      %540 = vmatprep.subr.mxu0 0.0
      %541 = vmatpush1.msra.mxu0 0.0
      %542 = vmatprep.subr.mxu0 0.0
      %543 = vmatpush1.msra.mxu0 0.0
      %544 = vmatprep.subr.mxu0 0.0
      %545 = vmatpush1.msra.mxu0 0.0
      %546 = vmatprep.subr.mxu0 0.0
      %547 = vmatpush1.msra.mxu0 0.0
      %548 = vmatprep.subr.mxu0 0.0
      %549 = vmatpush1.msra.mxu0 0.0
      %550 = vmatprep.subr.mxu0 0.0
      %551 = vmatpush1.msra.mxu0 0.0
      %552 = vmatprep.subr.mxu0 0.0
      %553 = vmatpush1.msra.mxu0 0.0
      %554 = vmatprep.subr.mxu0 0.0
      %555 = vmatpush1.msra.mxu0 0.0
      %556 = vmatprep.subr.mxu0 0.0
      %557 = vmatpush1.msra.mxu0 0.0
      %558 = vmatprep.subr.mxu0 0.0
      %559 = vmatpush1.msra.mxu0 0.0
      %560 = vmatprep.subr.mxu0 0.0
      %561 = vmatpush1.msra.mxu0 0.0
      %562 = vmatprep.subr.mxu0 0.0
      %563 = vmatpush1.msra.mxu0 0.0
      %564 = vmatprep.subr.mxu0 0.0
      %565 = vmatpush1.msra.mxu0 0.0
      %566 = vmatprep.subr.mxu0 0.0
      %567 = vmatpush1.msra.mxu0 0.0
      %568 = vmatprep.subr.mxu0 0.0
      %569 = vmatpush1.msra.mxu0 0.0
      %570 = vmatprep.subr.mxu0 0.0
      %571 = vmatpush1.msra.mxu0 0.0
      %572 = vmatprep.subr.mxu0 0.0
      %573 = vmatpush1.msra.mxu0 0.0
      %574 = vmatprep.mubr.f32.mxu0 0.0
      %575 = vmatmul.mubr.f32.gmra.mrb[0].mxu0 %v505
      %v576 = vpop.f32.mrb[0].mxu0
      %v577 = vadd.f32 0.0, %v576
      %v578 = vpop.f32.mrb[0].mxu0
      %579 = vmatprep.mubr.f32.mxu0 0.0
      %580 = vmatmul.mubr.f32.gmra.mrb[0].mxu0 %v508
      %v581 = vpop.f32.mrb[0].mxu0
      %v582 = vadd.f32 0.0, %v581
      %v583 = vpop.f32.mrb[0].mxu0
      %584 = vdwg.mxu0
      %v585 = vadd.f32 %v489, %v577
      %v586 = vadd.f32 %v490, %v582
      %s587 = scalar_lea.vmem %s1, 64
      %v588 = vld [vmem:[%s587] sm:$0xff]
      %v589 = vld [vmem:[%s587 + $0x8] sm:$0xff]
      %v591 = vsel %vm230, %v588, 0
      %v594 = vsel %vm230, %v589, 0
      %596 = vmatprep.subr.mxu0 0.0
      %597 = vmatpush1.msra.mxu0 %v171
      %598 = vmatprep.subr.mxu0 0.0
      %599 = vmatpush1.msra.mxu0 %v172
      %600 = vmatprep.subr.mxu0 0.0
      %601 = vmatpush1.msra.mxu0 0.0
      %602 = vmatprep.subr.mxu0 0.0
      %603 = vmatpush1.msra.mxu0 0.0
      %604 = vmatprep.subr.mxu0 0.0
      %605 = vmatpush1.msra.mxu0 0.0
      %606 = vmatprep.subr.mxu0 0.0
      %607 = vmatpush1.msra.mxu0 0.0
      %608 = vmatprep.subr.mxu0 0.0
      %609 = vmatpush1.msra.mxu0 0.0
      %610 = vmatprep.subr.mxu0 0.0
      %611 = vmatpush1.msra.mxu0 0.0
      %612 = vmatprep.subr.mxu0 0.0
      %613 = vmatpush1.msra.mxu0 0.0
      %614 = vmatprep.subr.mxu0 0.0
      %615 = vmatpush1.msra.mxu0 0.0
      %616 = vmatprep.subr.mxu0 0.0
      %617 = vmatpush1.msra.mxu0 0.0
      %618 = vmatprep.subr.mxu0 0.0
      %619 = vmatpush1.msra.mxu0 0.0
      %620 = vmatprep.subr.mxu0 0.0
      %621 = vmatpush1.msra.mxu0 0.0
      %622 = vmatprep.subr.mxu0 0.0
      %623 = vmatpush1.msra.mxu0 0.0
      %624 = vmatprep.subr.mxu0 0.0
      %625 = vmatpush1.msra.mxu0 0.0
      %626 = vmatprep.subr.mxu0 0.0
      %627 = vmatpush1.msra.mxu0 0.0
      %628 = vmatprep.subr.mxu0 0.0
      %629 = vmatpush1.msra.mxu0 0.0
      %630 = vmatprep.subr.mxu0 0.0
      %631 = vmatpush1.msra.mxu0 0.0
      %632 = vmatprep.subr.mxu0 0.0
      %633 = vmatpush1.msra.mxu0 0.0
      %634 = vmatprep.subr.mxu0 0.0
      %635 = vmatpush1.msra.mxu0 0.0
      %636 = vmatprep.subr.mxu0 0.0
      %637 = vmatpush1.msra.mxu0 0.0
      %638 = vmatprep.subr.mxu0 0.0
      %639 = vmatpush1.msra.mxu0 0.0
      %640 = vmatprep.subr.mxu0 0.0
      %641 = vmatpush1.msra.mxu0 0.0
      %642 = vmatprep.subr.mxu0 0.0
      %643 = vmatpush1.msra.mxu0 0.0
      %644 = vmatprep.subr.mxu0 0.0
      %645 = vmatpush1.msra.mxu0 0.0
      %646 = vmatprep.subr.mxu0 0.0
      %647 = vmatpush1.msra.mxu0 0.0
      %648 = vmatprep.subr.mxu0 0.0
      %649 = vmatpush1.msra.mxu0 0.0
      %650 = vmatprep.subr.mxu0 0.0
      %651 = vmatpush1.msra.mxu0 0.0
      %652 = vmatprep.subr.mxu0 0.0
      %653 = vmatpush1.msra.mxu0 0.0
      %654 = vmatprep.subr.mxu0 0.0
      %655 = vmatpush1.msra.mxu0 0.0
      %656 = vmatprep.subr.mxu0 0.0
      %657 = vmatpush1.msra.mxu0 0.0
      %658 = vmatprep.subr.mxu0 0.0
      %659 = vmatpush1.msra.mxu0 0.0
      %660 = vmatprep.mubr.f32.mxu0 0.0
      %661 = vmatmul.mubr.f32.gmra.mrb[0].mxu0 %v591
      %v662 = vpop.f32.mrb[0].mxu0
      %v663 = vadd.f32 0.0, %v662
      %v664 = vpop.f32.mrb[0].mxu0
      %665 = vmatprep.mubr.f32.mxu0 0.0
      %666 = vmatmul.mubr.f32.gmra.mrb[0].mxu0 %v594
      %v667 = vpop.f32.mrb[0].mxu0
      %v668 = vadd.f32 0.0, %v667
      %v669 = vpop.f32.mrb[0].mxu0
      %670 = vdwg.mxu0
      %v671 = vadd.f32 %v585, %v663
      %v672 = vadd.f32 %v586, %v668
      %v673 = vsel %vm393, 1, 0
      %vm674 = vcmp.eq.s32.totalorder %v673, 1
      %675 = vrot.lane.b32.xlu0 %v198, 127
      %v676 = vpop.permute.xlu0 %675
      %677 = vrot.lane.b32.xlu0 %v199, 127
      %v678 = vpop.permute.xlu0 %677
      %v681 = vsel %vm674, %v676, 0.0
      %v682 = vsel %vm674, %v678, 0.0
      %s683 = scalar_lea.vmem %s1, 80
      %v684 = vld [vmem:[%s683] sm:$0xff]
      %v685 = vld [vmem:[%s683 + $0x8] sm:$0xff]
      %v687 = vsel %vm230, %v684, 0
      %v690 = vsel %vm230, %v685, 0
      %692 = vmatprep.subr.mxu0 0.0
      %693 = vmatpush1.msra.mxu0 %v681
      %694 = vmatprep.subr.mxu0 0.0
      %695 = vmatpush1.msra.mxu0 %v682
      %696 = vmatprep.subr.mxu0 0.0
      %697 = vmatpush1.msra.mxu0 0.0
      %698 = vmatprep.subr.mxu0 0.0
      %699 = vmatpush1.msra.mxu0 0.0
      %700 = vmatprep.subr.mxu0 0.0
      %701 = vmatpush1.msra.mxu0 0.0
      %702 = vmatprep.subr.mxu0 0.0
      %703 = vmatpush1.msra.mxu0 0.0
      %704 = vmatprep.subr.mxu0 0.0
      %705 = vmatpush1.msra.mxu0 0.0
      %706 = vmatprep.subr.mxu0 0.0
      %707 = vmatpush1.msra.mxu0 0.0
      %708 = vmatprep.subr.mxu0 0.0
      %709 = vmatpush1.msra.mxu0 0.0
      %710 = vmatprep.subr.mxu0 0.0
      %711 = vmatpush1.msra.mxu0 0.0
      %712 = vmatprep.subr.mxu0 0.0
      %713 = vmatpush1.msra.mxu0 0.0
      %714 = vmatprep.subr.mxu0 0.0
      %715 = vmatpush1.msra.mxu0 0.0
      %716 = vmatprep.subr.mxu0 0.0
      %717 = vmatpush1.msra.mxu0 0.0
      %718 = vmatprep.subr.mxu0 0.0
      %719 = vmatpush1.msra.mxu0 0.0
      %720 = vmatprep.subr.mxu0 0.0
      %721 = vmatpush1.msra.mxu0 0.0
      %722 = vmatprep.subr.mxu0 0.0
      %723 = vmatpush1.msra.mxu0 0.0
      %724 = vmatprep.subr.mxu0 0.0
      %725 = vmatpush1.msra.mxu0 0.0
      %726 = vmatprep.subr.mxu0 0.0
      %727 = vmatpush1.msra.mxu0 0.0
      %728 = vmatprep.subr.mxu0 0.0
      %729 = vmatpush1.msra.mxu0 0.0
      %730 = vmatprep.subr.mxu0 0.0
      %731 = vmatpush1.msra.mxu0 0.0
      %732 = vmatprep.subr.mxu0 0.0
      %733 = vmatpush1.msra.mxu0 0.0
      %734 = vmatprep.subr.mxu0 0.0
      %735 = vmatpush1.msra.mxu0 0.0
      %736 = vmatprep.subr.mxu0 0.0
      %737 = vmatpush1.msra.mxu0 0.0
      %738 = vmatprep.subr.mxu0 0.0
      %739 = vmatpush1.msra.mxu0 0.0
      %740 = vmatprep.subr.mxu0 0.0
      %741 = vmatpush1.msra.mxu0 0.0
      %742 = vmatprep.subr.mxu0 0.0
      %743 = vmatpush1.msra.mxu0 0.0
      %744 = vmatprep.subr.mxu0 0.0
      %745 = vmatpush1.msra.mxu0 0.0
      %746 = vmatprep.subr.mxu0 0.0
      %747 = vmatpush1.msra.mxu0 0.0
      %748 = vmatprep.subr.mxu0 0.0
      %749 = vmatpush1.msra.mxu0 0.0
      %750 = vmatprep.subr.mxu0 0.0
      %751 = vmatpush1.msra.mxu0 0.0
      %752 = vmatprep.subr.mxu0 0.0
      %753 = vmatpush1.msra.mxu0 0.0
      %754 = vmatprep.subr.mxu0 0.0
      %755 = vmatpush1.msra.mxu0 0.0
      %756 = vmatprep.mubr.f32.mxu0 0.0
      %757 = vmatmul.mubr.f32.gmra.mrb[0].mxu0 %v687
      %v758 = vpop.f32.mrb[0].mxu0
      %v759 = vadd.f32 0.0, %v758
      %v760 = vpop.f32.mrb[0].mxu0
      %761 = vmatprep.mubr.f32.mxu0 0.0
      %762 = vmatmul.mubr.f32.gmra.mrb[0].mxu0 %v690
      %v763 = vpop.f32.mrb[0].mxu0
      %v764 = vadd.f32 0.0, %v763
      %v765 = vpop.f32.mrb[0].mxu0
      %766 = vdwg.mxu0
      %v767 = vadd.f32 %v671, %v759
      %v768 = vadd.f32 %v672, %v764
      %vm769 = vcmp.lt.s32.totalorder %v174, 12
      %vm770 = vmand %vm200, %vm769
      %v771 = vsel %vm770, 1, 0
      %vm772 = vcmp.eq.s32.totalorder %v771, 1
      %773 = vrot.lane.b32.xlu0 %v198, 125
      %v774 = vpop.permute.xlu0 %773
      %775 = vrot.lane.b32.xlu0 %v199, 125
      %v776 = vpop.permute.xlu0 %775
      %v779 = vsel %vm772, %v774, 0.0
      %v780 = vsel %vm772, %v776, 0.0
      %s781 = scalar_lea.vmem %s1, 96
      %v782 = vld [vmem:[%s781] sm:$0xff]
      %v783 = vld [vmem:[%s781 + $0x8] sm:$0xff]
      %v785 = vsel %vm230, %v782, 0
      %v788 = vsel %vm230, %v783, 0
      %790 = vmatprep.subr.mxu0 0.0
      %791 = vmatpush1.msra.mxu0 %v779
      %792 = vmatprep.subr.mxu0 0.0
      %793 = vmatpush1.msra.mxu0 %v780
      %794 = vmatprep.subr.mxu0 0.0
      %795 = vmatpush1.msra.mxu0 0.0
      %796 = vmatprep.subr.mxu0 0.0
      %797 = vmatpush1.msra.mxu0 0.0
      %798 = vmatprep.subr.mxu0 0.0
      %799 = vmatpush1.msra.mxu0 0.0
      %800 = vmatprep.subr.mxu0 0.0
      %801 = vmatpush1.msra.mxu0 0.0
      %802 = vmatprep.subr.mxu0 0.0
      %803 = vmatpush1.msra.mxu0 0.0
      %804 = vmatprep.subr.mxu0 0.0
      %805 = vmatpush1.msra.mxu0 0.0
      %806 = vmatprep.subr.mxu0 0.0
      %807 = vmatpush1.msra.mxu0 0.0
      %808 = vmatprep.subr.mxu0 0.0
      %809 = vmatpush1.msra.mxu0 0.0
      %810 = vmatprep.subr.mxu0 0.0
      %811 = vmatpush1.msra.mxu0 0.0
      %812 = vmatprep.subr.mxu0 0.0
      %813 = vmatpush1.msra.mxu0 0.0
      %814 = vmatprep.subr.mxu0 0.0
      %815 = vmatpush1.msra.mxu0 0.0
      %816 = vmatprep.subr.mxu0 0.0
      %817 = vmatpush1.msra.mxu0 0.0
      %818 = vmatprep.subr.mxu0 0.0
      %819 = vmatpush1.msra.mxu0 0.0
      %820 = vmatprep.subr.mxu0 0.0
      %821 = vmatpush1.msra.mxu0 0.0
      %822 = vmatprep.subr.mxu0 0.0
      %823 = vmatpush1.msra.mxu0 0.0
      %824 = vmatprep.subr.mxu0 0.0
      %825 = vmatpush1.msra.mxu0 0.0
      %826 = vmatprep.subr.mxu0 0.0
      %827 = vmatpush1.msra.mxu0 0.0
      %828 = vmatprep.subr.mxu0 0.0
      %829 = vmatpush1.msra.mxu0 0.0
      %830 = vmatprep.subr.mxu0 0.0
      %831 = vmatpush1.msra.mxu0 0.0
      %832 = vmatprep.subr.mxu0 0.0
      %833 = vmatpush1.msra.mxu0 0.0
      %834 = vmatprep.subr.mxu0 0.0
      %835 = vmatpush1.msra.mxu0 0.0
      %836 = vmatprep.subr.mxu0 0.0
      %837 = vmatpush1.msra.mxu0 0.0
      %838 = vmatprep.subr.mxu0 0.0
      %839 = vmatpush1.msra.mxu0 0.0
      %840 = vmatprep.subr.mxu0 0.0
      %841 = vmatpush1.msra.mxu0 0.0
      %842 = vmatprep.subr.mxu0 0.0
      %843 = vmatpush1.msra.mxu0 0.0
      %844 = vmatprep.subr.mxu0 0.0
      %845 = vmatpush1.msra.mxu0 0.0
      %846 = vmatprep.subr.mxu0 0.0
      %847 = vmatpush1.msra.mxu0 0.0
      %848 = vmatprep.subr.mxu0 0.0
      %849 = vmatpush1.msra.mxu0 0.0
      %850 = vmatprep.subr.mxu0 0.0
      %851 = vmatpush1.msra.mxu0 0.0
      %852 = vmatprep.subr.mxu0 0.0
      %853 = vmatpush1.msra.mxu0 0.0
      %854 = vmatprep.mubr.f32.mxu0 0.0
      %855 = vmatmul.mubr.f32.gmra.mrb[0].mxu0 %v785
      %v856 = vpop.f32.mrb[0].mxu0
      %v857 = vadd.f32 0.0, %v856
      %v858 = vpop.f32.mrb[0].mxu0
      %859 = vmatprep.mubr.f32.mxu0 0.0
      %860 = vmatmul.mubr.f32.gmra.mrb[0].mxu0 %v788
      %v861 = vpop.f32.mrb[0].mxu0
      %v862 = vadd.f32 0.0, %v861
      %v863 = vpop.f32.mrb[0].mxu0
      %864 = vdwg.mxu0
      %v865 = vadd.f32 %v767, %v857
      %v866 = vadd.f32 %v768, %v862
      %v867 = vsel %vm769, 1, 0
      %vm868 = vcmp.eq.s32.totalorder %v867, 1
      %869 = vrot.lane.b32.xlu0 %v198, 124
      %v870 = vpop.permute.xlu0 %869
      %871 = vrot.lane.b32.xlu0 %v199, 124
      %v872 = vpop.permute.xlu0 %871
      %v875 = vsel %vm868, %v870, 0.0
      %v876 = vsel %vm868, %v872, 0.0
      %s877 = scalar_lea.vmem %s1, 112
      %v878 = vld [vmem:[%s877] sm:$0xff]
      %v879 = vld [vmem:[%s877 + $0x8] sm:$0xff]
      %v881 = vsel %vm230, %v878, 0
      %v884 = vsel %vm230, %v879, 0
      %886 = vmatprep.subr.mxu0 0.0
      %887 = vmatpush1.msra.mxu0 %v875
      %888 = vmatprep.subr.mxu0 0.0
      %889 = vmatpush1.msra.mxu0 %v876
      %890 = vmatprep.subr.mxu0 0.0
      %891 = vmatpush1.msra.mxu0 0.0
      %892 = vmatprep.subr.mxu0 0.0
      %893 = vmatpush1.msra.mxu0 0.0
      %894 = vmatprep.subr.mxu0 0.0
      %895 = vmatpush1.msra.mxu0 0.0
      %896 = vmatprep.subr.mxu0 0.0
      %897 = vmatpush1.msra.mxu0 0.0
      %898 = vmatprep.subr.mxu0 0.0
      %899 = vmatpush1.msra.mxu0 0.0
      %900 = vmatprep.subr.mxu0 0.0
      %901 = vmatpush1.msra.mxu0 0.0
      %902 = vmatprep.subr.mxu0 0.0
      %903 = vmatpush1.msra.mxu0 0.0
      %904 = vmatprep.subr.mxu0 0.0
      %905 = vmatpush1.msra.mxu0 0.0
      %906 = vmatprep.subr.mxu0 0.0
      %907 = vmatpush1.msra.mxu0 0.0
      %908 = vmatprep.subr.mxu0 0.0
      %909 = vmatpush1.msra.mxu0 0.0
      %910 = vmatprep.subr.mxu0 0.0
      %911 = vmatpush1.msra.mxu0 0.0
      %912 = vmatprep.subr.mxu0 0.0
      %913 = vmatpush1.msra.mxu0 0.0
      %914 = vmatprep.subr.mxu0 0.0
      %915 = vmatpush1.msra.mxu0 0.0
      %916 = vmatprep.subr.mxu0 0.0
      %917 = vmatpush1.msra.mxu0 0.0
      %918 = vmatprep.subr.mxu0 0.0
      %919 = vmatpush1.msra.mxu0 0.0
      %920 = vmatprep.subr.mxu0 0.0
      %921 = vmatpush1.msra.mxu0 0.0
      %922 = vmatprep.subr.mxu0 0.0
      %923 = vmatpush1.msra.mxu0 0.0
      %924 = vmatprep.subr.mxu0 0.0
      %925 = vmatpush1.msra.mxu0 0.0
      %926 = vmatprep.subr.mxu0 0.0
      %927 = vmatpush1.msra.mxu0 0.0
      %928 = vmatprep.subr.mxu0 0.0
      %929 = vmatpush1.msra.mxu0 0.0
      %930 = vmatprep.subr.mxu0 0.0
      %931 = vmatpush1.msra.mxu0 0.0
      %932 = vmatprep.subr.mxu0 0.0
      %933 = vmatpush1.msra.mxu0 0.0
      %934 = vmatprep.subr.mxu0 0.0
      %935 = vmatpush1.msra.mxu0 0.0
      %936 = vmatprep.subr.mxu0 0.0
      %937 = vmatpush1.msra.mxu0 0.0
      %938 = vmatprep.subr.mxu0 0.0
      %939 = vmatpush1.msra.mxu0 0.0
      %940 = vmatprep.subr.mxu0 0.0
      %941 = vmatpush1.msra.mxu0 0.0
      %942 = vmatprep.subr.mxu0 0.0
      %943 = vmatpush1.msra.mxu0 0.0
      %944 = vmatprep.subr.mxu0 0.0
      %945 = vmatpush1.msra.mxu0 0.0
      %946 = vmatprep.subr.mxu0 0.0
      %947 = vmatpush1.msra.mxu0 0.0
      %948 = vmatprep.subr.mxu0 0.0
      %949 = vmatpush1.msra.mxu0 0.0
      %950 = vmatprep.mubr.f32.mxu0 0.0
      %951 = vmatmul.mubr.f32.gmra.mrb[0].mxu0 %v881
      %v952 = vpop.f32.mrb[0].mxu0
      %v953 = vadd.f32 0.0, %v952
      %v954 = vpop.f32.mrb[0].mxu0
      %955 = vmatprep.mubr.f32.mxu0 0.0
      %956 = vmatmul.mubr.f32.gmra.mrb[0].mxu0 %v884
      %v957 = vpop.f32.mrb[0].mxu0
      %v958 = vadd.f32 0.0, %v957
      %v959 = vpop.f32.mrb[0].mxu0
      %960 = vdwg.mxu0
      %v961 = vadd.f32 %v865, %v953
      %v962 = vadd.f32 %v866, %v958
      %vm963 = vmand %vm393, %vm769
      %v964 = vsel %vm963, 1, 0
      %vm965 = vcmp.eq.s32.totalorder %v964, 1
      %966 = vrot.lane.b32.xlu0 %v198, 123
      %v967 = vpop.permute.xlu0 %966
      %968 = vrot.lane.b32.xlu0 %v199, 123
      %v969 = vpop.permute.xlu0 %968
      %v972 = vsel %vm965, %v967, 0.0
      %v973 = vsel %vm965, %v969, 0.0
      %s974 = scalar_lea.vmem %s1, 128
      %v975 = vld [vmem:[%s974] sm:$0xff]
      %v976 = vld [vmem:[%s974 + $0x8] sm:$0xff]
      %v978 = vsel %vm230, %v975, 0
      %v981 = vsel %vm230, %v976, 0
      %983 = vmatprep.subr.mxu0 0.0
      %984 = vmatpush1.msra.mxu0 %v972
      %985 = vmatprep.subr.mxu0 0.0
      %986 = vmatpush1.msra.mxu0 %v973
      %987 = vmatprep.subr.mxu0 0.0
      %988 = vmatpush1.msra.mxu0 0.0
      %989 = vmatprep.subr.mxu0 0.0
      %990 = vmatpush1.msra.mxu0 0.0
      %991 = vmatprep.subr.mxu0 0.0
      %992 = vmatpush1.msra.mxu0 0.0
      %993 = vmatprep.subr.mxu0 0.0
      %994 = vmatpush1.msra.mxu0 0.0
      %995 = vmatprep.subr.mxu0 0.0
      %996 = vmatpush1.msra.mxu0 0.0
      %997 = vmatprep.subr.mxu0 0.0
      %998 = vmatpush1.msra.mxu0 0.0
      %999 = vmatprep.subr.mxu0 0.0
      %1000 = vmatpush1.msra.mxu0 0.0
      %1001 = vmatprep.subr.mxu0 0.0
      %1002 = vmatpush1.msra.mxu0 0.0
      %1003 = vmatprep.subr.mxu0 0.0
      %1004 = vmatpush1.msra.mxu0 0.0
      %1005 = vmatprep.subr.mxu0 0.0
      %1006 = vmatpush1.msra.mxu0 0.0
      %1007 = vmatprep.subr.mxu0 0.0
      %1008 = vmatpush1.msra.mxu0 0.0
      %1009 = vmatprep.subr.mxu0 0.0
      %1010 = vmatpush1.msra.mxu0 0.0
      %1011 = vmatprep.subr.mxu0 0.0
      %1012 = vmatpush1.msra.mxu0 0.0
      %1013 = vmatprep.subr.mxu0 0.0
      %1014 = vmatpush1.msra.mxu0 0.0
      %1015 = vmatprep.subr.mxu0 0.0
      %1016 = vmatpush1.msra.mxu0 0.0
      %1017 = vmatprep.subr.mxu0 0.0
      %1018 = vmatpush1.msra.mxu0 0.0
      %1019 = vmatprep.subr.mxu0 0.0
      %1020 = vmatpush1.msra.mxu0 0.0
      %1021 = vmatprep.subr.mxu0 0.0
      %1022 = vmatpush1.msra.mxu0 0.0
      %1023 = vmatprep.subr.mxu0 0.0
      %1024 = vmatpush1.msra.mxu0 0.0
      %1025 = vmatprep.subr.mxu0 0.0
      %1026 = vmatpush1.msra.mxu0 0.0
      %1027 = vmatprep.subr.mxu0 0.0
      %1028 = vmatpush1.msra.mxu0 0.0
      %1029 = vmatprep.subr.mxu0 0.0
      %1030 = vmatpush1.msra.mxu0 0.0
      %1031 = vmatprep.subr.mxu0 0.0
      %1032 = vmatpush1.msra.mxu0 0.0
      %1033 = vmatprep.subr.mxu0 0.0
      %1034 = vmatpush1.msra.mxu0 0.0
      %1035 = vmatprep.subr.mxu0 0.0
      %1036 = vmatpush1.msra.mxu0 0.0
      %1037 = vmatprep.subr.mxu0 0.0
      %1038 = vmatpush1.msra.mxu0 0.0
      %1039 = vmatprep.subr.mxu0 0.0
      %1040 = vmatpush1.msra.mxu0 0.0
      %1041 = vmatprep.subr.mxu0 0.0
      %1042 = vmatpush1.msra.mxu0 0.0
      %1043 = vmatprep.subr.mxu0 0.0
      %1044 = vmatpush1.msra.mxu0 0.0
      %1045 = vmatprep.subr.mxu0 0.0
      %1046 = vmatpush1.msra.mxu0 0.0
      %1047 = vmatprep.mubr.f32.mxu0 0.0
      %1048 = vmatmul.mubr.f32.gmra.mrb[0].mxu0 %v978
      %v1049 = vpop.f32.mrb[0].mxu0
      %v1050 = vadd.f32 0.0, %v1049
      %v1051 = vpop.f32.mrb[0].mxu0
      %1052 = vmatprep.mubr.f32.mxu0 0.0
      %1053 = vmatmul.mubr.f32.gmra.mrb[0].mxu0 %v981
      %v1054 = vpop.f32.mrb[0].mxu0
      %v1055 = vadd.f32 0.0, %v1054
      %v1056 = vpop.f32.mrb[0].mxu0
      %1057 = vdwg.mxu0
      %v1058 = vadd.f32 %v961, %v1050
      %v1059 = vadd.f32 %v962, %v1055
      %v1060 = vld [vmem:[%s2] sm:$0xff]
      %v1061 = vld [vmem:[%s2 + $0x8] sm:$0xff]
      %1063 = vset.pattern.permute.xlu0 0
      %1064 = vperm.xlu0 %1063, %v1060
      %v1065 = vpop.permute.xlu0 %1064
      %1068 = vset.pattern.permute.xlu0 0
      %1069 = vperm.xlu0 %1068, %v1061
      %v1070 = vpop.permute.xlu0 %1069
      %v1072 = vadd.f32 %v1058, %v1065
      %v1073 = vadd.f32 %v1059, %v1070
      %1074 = vst.msk [vmem:[%s170] sm:$0xff] %vm230, %v1072
      %1075 = vst.msk [vmem:[%s170 + $0x8] sm:$0xff] %vm230, %v1073
      %p1076 = scmp.lt.s32.totalorder %s14, 1
      %s1077 = scalar_select %p1076, %s14, 1
      %s1078 = smul.addr %s1077, 2
      %s1079 = smul.addr %s1078, 8
      %s1080 = scalar_lea.vmem %s3, %s1079
      // Predicated region
      $region33: #{fpn_forward.14} parent=31 // pred_check
        %p1081 = pneg %p100
      $region34: #{fpn_forward.14} parent=31 // pred_check_branch
        %1083 = sbr.rel (%p1081) target = $region36
      $region35: #{fpn_forward.14} parent=31 // pred_region
        _
      $region36: #{fpn_forward.14} parent=31 // pred_fallthru
        _
    $region32: #{fpn_forward.14} parent=5 // pred_fallthru
      _
    %p1084 = scmp.le.s32.totalorder 2, %s9
    // Predicated region
    $region37: #{fpn_forward.14} parent=5 // pred_check
      %p1085 = pneg %p1084
    $region38: #{fpn_forward.14} parent=5 // pred_check_branch
      %1087 = sbr.rel (%p1085) target = $region40
    $region39: #{fpn_forward.14} parent=5 // pred_region
      %s1088 = ssub.s32 %s9, 2
      // Predicated region
      $region41: #{fpn_forward.14} parent=39 // pred_check
        %p1089 = pneg %p106
      $region42: #{fpn_forward.14} parent=39 // pred_check_branch
        %1091 = sbr.rel (%p1089) target = $region44
      $region43: #{fpn_forward.14} parent=39 // pred_region
        %p1092 = scmp.lt.s32.totalorder %s15, 1
        %s1093 = scalar_select %p1092, %s15, 1
        %s1094 = smul.addr %s1093, 2
        %s1095 = smul.addr %s1094, 8
        %s1096 = scalar_lea.vmem %s3, %s1095
      $region44: #{fpn_forward.14} parent=39 // pred_fallthru
        _
    $region40: #{fpn_forward.14} parent=5 // pred_fallthru
      _
  $region6: #{fpn_forward.14} parent=0 // loop_footer
    %s13 = sadd.s32 1, %s9
  $region7: #{fpn_forward.14} parent=0 // loop_footer_branch
    %8 = sbr.rel target = $region3
  $region8: #{fpn_forward.14} parent=0 // loop_exit
    _

// kernel: fpn_forward.15
$region0: #{fpn_forward.15}
  #allocation0 [shape = 'u32[]', space=smem, size = 0x4, offset = 0x4, fixed_abs, tag = 'smem constant byte address 0x4 - core index']
  #allocation1 [shape = 'u32[144,128]{1,0:T(1,128)}', space=vmem, size = 0x12000, scoped, tag = 'internal scratch']
  %s0 = inlined_call_operand.vmem [shape: f32[2,16,4], index: 0, kind: input, shape index: {}]
  %s1 = inlined_call_operand.vmem [shape: f32[9,16,16], index: 1, kind: input, shape index: {}]
  %s2 = inlined_call_operand.vmem [shape: f32[16,1], index: 2, kind: input, shape index: {}]
  %s3 = inlined_call_operand.vmem [shape: f32[2,16,4], index: 3, kind: output, shape index: {}]
  %s4 = sld [smem:[#allocation0]]
  $region45: #{fpn_forward.15} parent=0
    _
  %s6 = ssub.s32 1, %s4
  %s7 = scalar_select 0, %s6, %s4
  loop: start=0, step=1, limit=4
  $region2: #{fpn_forward.15} parent=0 // loop_pre_header
    _
  $region3: #{fpn_forward.15} parent=0 // loop_header
    %s9 = sphi 0, %s13
    %p10 = scmp.ge.s32.totalorder %s9, 4
    %s19 = sphi 0, %s21
    %s22 = sphi 0, %s19
    %s23 = sphi 0, %s22
    %s39 = sphi 0, %s23
    %s43 = sphi 0, %s43
    %s45 = sphi 0, %s43
    %s46 = sphi 0, %s45
    %s60 = sphi 0, %s46
    %s64 = sphi 0, %s64
    %s66 = sphi 0, %s64
    %s67 = sphi 0, %s66
    %s81 = sphi 0, %s67
    %s87 = sphi 0, %s89
    %s90 = sphi 0, %s87
    %s91 = sphi 0, %s90
    %s107 = sphi 0, %s91
  $region4: #{fpn_forward.15} parent=0 // loop_header_branch
    %12 = sbr.rel (%p10) target = $region8
  $region5: #{fpn_forward.15} parent=0 // loop_body
    %s14 = ssub.s32 %s9, 1
    %s15 = ssub.s32 %s9, 2
    %s16 = sadd.s32 %s9, 1
    %s17 = ssub.s32 %s9, %s16
    %p18 = scmp.eq.s32.totalorder %s17, 0
    %s20 = sadd.s32 %s19, 1
    %s21 = scalar_select %p18, %s19, %s20
    %p24 = pneg %p18
    %p25 = scmp.eq.s32.totalorder %s9, 1
    %p26 = por %p24, %p25
    %p27 = scmp.ne.s32.totalorder %s19, %s22
    %p28 = scmp.eq.s32.totalorder %s9, 0
    %p29 = por %p27, %p28
    %p30 = scmp.ne.s32.totalorder %s19, %s22
    %p31 = scmp.eq.s32.totalorder %s14, 1
    %p32 = por %p30, %p31
    %p33 = scmp.ne.s32.totalorder %s22, %s23
    %p34 = scmp.eq.s32.totalorder %s14, 0
    %p35 = por %p33, %p34
    %p36 = scmp.ne.s32.totalorder %s22, %s23
    %p37 = scmp.eq.s32.totalorder %s15, 1
    %p38 = por %p36, %p37
    %p40 = scmp.ne.s32.totalorder %s23, %s39
    %p41 = scmp.eq.s32.totalorder %s15, 0
    %p42 = por %p40, %p41
    %s44 = sadd.s32 %s43, 1
    %p47 = scmp.eq.s32.totalorder %s9, 1
    %p48 = scmp.ne.s32.totalorder %s43, %s45
    %p49 = scmp.eq.s32.totalorder %s9, 0
    %p50 = por %p48, %p49
    %p51 = scmp.ne.s32.totalorder %s43, %s45
    %p52 = scmp.eq.s32.totalorder %s14, 1
    %p53 = por %p51, %p52
    %p54 = scmp.ne.s32.totalorder %s45, %s46
    %p55 = scmp.eq.s32.totalorder %s14, 0
    %p56 = por %p54, %p55
    %p57 = scmp.ne.s32.totalorder %s45, %s46
    %p58 = scmp.eq.s32.totalorder %s15, 1
    %p59 = por %p57, %p58
    %p61 = scmp.ne.s32.totalorder %s46, %s60
    %p62 = scmp.eq.s32.totalorder %s15, 0
    %p63 = por %p61, %p62
    %s65 = sadd.s32 %s64, 1
    %p68 = scmp.eq.s32.totalorder %s9, 1
    %p69 = scmp.ne.s32.totalorder %s64, %s66
    %p70 = scmp.eq.s32.totalorder %s9, 0
    %p71 = por %p69, %p70
    %p72 = scmp.ne.s32.totalorder %s64, %s66
    %p73 = scmp.eq.s32.totalorder %s14, 1
    %p74 = por %p72, %p73
    %p75 = scmp.ne.s32.totalorder %s66, %s67
    %p76 = scmp.eq.s32.totalorder %s14, 0
    %p77 = por %p75, %p76
    %p78 = scmp.ne.s32.totalorder %s66, %s67
    %p79 = scmp.eq.s32.totalorder %s15, 1
    %p80 = por %p78, %p79
    %p82 = scmp.ne.s32.totalorder %s67, %s81
    %p83 = scmp.eq.s32.totalorder %s15, 0
    %p84 = por %p82, %p83
    %s85 = ssub.s32 %s9, %s16
    %p86 = scmp.eq.s32.totalorder %s85, 0
    %s88 = sadd.s32 %s87, 1
    %s89 = scalar_select %p86, %s87, %s88
    %p92 = pneg %p86
    %p93 = scmp.eq.s32.totalorder %s9, 1
    %p94 = por %p92, %p93
    %p95 = scmp.ne.s32.totalorder %s87, %s90
    %p96 = scmp.eq.s32.totalorder %s9, 0
    %p97 = por %p95, %p96
    %p98 = scmp.ne.s32.totalorder %s87, %s90
    %p99 = scmp.eq.s32.totalorder %s14, 1
    %p100 = por %p98, %p99
    %p101 = scmp.ne.s32.totalorder %s90, %s91
    %p102 = scmp.eq.s32.totalorder %s14, 0
    %p103 = por %p101, %p102
    %p104 = scmp.ne.s32.totalorder %s90, %s91
    %p105 = scmp.eq.s32.totalorder %s15, 1
    %p106 = por %p104, %p105
    %p108 = scmp.ne.s32.totalorder %s91, %s107
    %p109 = scmp.eq.s32.totalorder %s15, 0
    %p110 = por %p108, %p109
    %p111 = scmp.le.s32.totalorder 1, %s9
    %p112 = scmp.lt.s32.totalorder %s9, 3
    %p113 = pnand %p111, %p112
    %p114 = pneg %p113
    // Predicated region
    $region9: #{fpn_forward.15} parent=5 // pred_check
      _
    $region10: #{fpn_forward.15} parent=5 // pred_check_branch
      %116 = sbr.rel (%p113) target = $region12
    $region11: #{fpn_forward.15} parent=5 // pred_region
      %s117 = ssub.s32 %s9, 1
      // Predicated region
      $region13: #{fpn_forward.15} parent=11 // pred_check
        %p118 = pneg %p56
      $region14: #{fpn_forward.15} parent=11 // pred_check_branch
        %120 = sbr.rel (%p118) target = $region16
      $region15: #{fpn_forward.15} parent=11 // pred_region
        _
      $region16: #{fpn_forward.15} parent=11 // pred_fallthru
        _
      // Predicated region
      $region17: #{fpn_forward.15} parent=11 // pred_check
        %p121 = pneg %p77
      $region18: #{fpn_forward.15} parent=11 // pred_check_branch
        %123 = sbr.rel (%p121) target = $region20
      $region19: #{fpn_forward.15} parent=11 // pred_region
        _
      $region20: #{fpn_forward.15} parent=11 // pred_fallthru
        _
    $region12: #{fpn_forward.15} parent=5 // pred_fallthru
      _
    %p124 = scmp.lt.s32.totalorder %s9, 2
    // Predicated region
    $region21: #{fpn_forward.15} parent=5 // pred_check
      %p125 = pneg %p124
    $region22: #{fpn_forward.15} parent=5 // pred_check_branch
      %127 = sbr.rel (%p125) target = $region24
    $region23: #{fpn_forward.15} parent=5 // pred_region
      // Predicated region
      $region25: #{fpn_forward.15} parent=23 // pred_check
        %p128 = pneg %p29
      $region26: #{fpn_forward.15} parent=23 // pred_check_branch
        %130 = sbr.rel (%p128) target = $region28
      $region27: #{fpn_forward.15} parent=23 // pred_region
        %p131 = scmp.lt.s32.totalorder %s9, 1
        %s132 = scalar_select %p131, %s9, 1
        %s133 = smul.addr %s132, 2
        %s134 = smul.addr %s133, 8
        %s135 = scalar_lea.vmem %s0, %s134
      $region28: #{fpn_forward.15} parent=23 // pred_fallthru
        _
    $region24: #{fpn_forward.15} parent=5 // pred_fallthru
      _
    %p136 = scmp.le.s32.totalorder 1, %s9
    %p137 = scmp.lt.s32.totalorder %s9, 3
    %p138 = pnand %p136, %p137
    %p139 = pneg %p138
    // Predicated region
    $region29: #{fpn_forward.15} parent=5 // pred_check
      _
    $region30: #{fpn_forward.15} parent=5 // pred_check_branch
      %141 = sbr.rel (%p138) target = $region32
    $region31: #{fpn_forward.15} parent=5 // pred_region
      %s142 = ssub.s32 %s9, 1
      %p143 = scmp.lt.s32.totalorder %s14, 1
      %s144 = scalar_select %p143, %s14, 1
      %s145 = smul.addr %s144, 2
      %s146 = smul.addr %s145, 8
      %s147 = scalar_lea.vmem %s0, %s146
      %p148 = pneg %p35
      %p149 = pneg %p32
      %p150 = pneg %p56
      %p151 = pneg %p53
      %p152 = pneg %p77
      %p153 = pneg %p74
      %p154 = pneg %p103
      %p155 = pneg %p100
      %p156 = scmp.lt.s32.totalorder %s14, 1
      %s157 = scalar_select %p156, %s14, 1
      %s158 = smul.addr %s157, 2
      %s159 = smul.addr %s158, 8
      %s160 = scalar_lea.vmem %s3, %s159
      %p161 = scmp.lt.s32.totalorder %s14, 1
      %s162 = scalar_select %p161, %s14, 1
      %s163 = smul.addr %s162, 2
      %s164 = smul.addr %s163, 8
      %s165 = scalar_lea.vmem %s0, %s164
      %p166 = scmp.lt.s32.totalorder %s14, 1
      %s167 = scalar_select %p166, %s14, 1
      %s168 = smul.addr %s167, 2
      %s169 = smul.addr %s168, 8
      %s170 = scalar_lea.vmem %s3, %s169
      %v171 = vld [vmem:[%s165] sm:$0xff]
      %v172 = vld [vmem:[%s165 + $0x8] sm:$0xff]
      %v173 = vlaneseq
      %v174 = vand.u32 %v173, 127
      %vm175 = vcmp.lt.s32.totalorder %v174, 0
      %v176 = vsub.s32 0, %v174
      %v177 = vsel %vm175, %v176, %v174
      %v178 = vshrl.u32 %v177, 1
      %v179 = vand.u32 %v177, 1
      %v180 = vsub.s32 0, %v179
      %v181 = vsel %vm175, %v180, %v179
      %vm182 = vcmp.ne.s32.totalorder %v181, 0
      %vm183 = vcmp.lt.s32.totalorder %v181, 0
      %vm184 = vmand %vm183, %vm182
      %v185 = vadd.s32 %v181, 2
      %v186 = vsel %vm184, %v185, %v181
      %vm187 = vcmask 1047584
      %188 = vrot.lane.b32.xlu0 %v171, 4
      %v189 = vpop.permute.xlu0 %188
      %v190 = vsel %vm187, %v189, %v171
      %191 = vrot.lane.b32.xlu0 %v172, 4
      %v192 = vpop.permute.xlu0 %191
      %v193 = vsel %vm187, %v192, %v172
      %194 = vrot.lane.b32.xlu0 %v190, 4
      %v195 = vpop.permute.xlu0 %194
      %196 = vrot.lane.b32.xlu0 %v193, 4
      %v197 = vpop.permute.xlu0 %196
      %v198 = vsel %vm187, %v195, %v171
      %v199 = vsel %vm187, %v197, %v172
      %vm200 = vcmp.ge.s32.totalorder %v186, 1
      %vm201 = vcmp.ge.s32.totalorder %v174, 2
      %vm202 = vmand %vm200, %vm201
      %v203 = vsel %vm202, 1, 0
      %vm204 = vcmp.eq.s32.totalorder %v203, 1
      %207 = vrot.lane.b32.xlu0 %v198, 127
      %v208 = vpop.permute.xlu0 %207
      %209 = vrot.lane.b32.xlu0 %v199, 127
      %v210 = vpop.permute.xlu0 %209
      %v213 = vsel %vm204, %v208, 0.0
      %v214 = vsel %vm204, %v210, 0.0
      %v215 = vld [vmem:[%s1] sm:$0xff]
      %v216 = vld [vmem:[%s1 + $0x8] sm:$0xff]
      %v217 = vsel %vm201, 1, 0
      %vm218 = vcmp.eq.s32.totalorder %v217, 1
      %219 = vrot.lane.b32.xlu0 %v198, 126
      %v220 = vpop.permute.xlu0 %219
      %221 = vrot.lane.b32.xlu0 %v199, 126
      %v222 = vpop.permute.xlu0 %221
      %v225 = vsel %vm218, %v220, 0.0
      %v226 = vsel %vm218, %v222, 0.0
      %s227 = scalar_lea.vmem %s1, 16
      %v228 = vld [vmem:[%s227] sm:$0xff]
      %v229 = vld [vmem:[%s227 + $0x8] sm:$0xff]
      %vm230 = vcmask 130048
      %v232 = vsel %vm230, %v228, 0
      %v235 = vsel %vm230, %v229, 0
      %237 = vmatprep.subr.mxu0 0.0
      %238 = vmatpush1.msra.mxu0 %v225
      %239 = vmatprep.subr.mxu0 0.0
      %240 = vmatpush1.msra.mxu0 %v226
      %241 = vmatprep.subr.mxu0 0.0
      %242 = vmatpush1.msra.mxu0 0.0
      %243 = vmatprep.subr.mxu0 0.0
      %244 = vmatpush1.msra.mxu0 0.0
      %245 = vmatprep.subr.mxu0 0.0
      %246 = vmatpush1.msra.mxu0 0.0
      %247 = vmatprep.subr.mxu0 0.0
      %248 = vmatpush1.msra.mxu0 0.0
      %249 = vmatprep.subr.mxu0 0.0
      %250 = vmatpush1.msra.mxu0 0.0
      %251 = vmatprep.subr.mxu0 0.0
      %252 = vmatpush1.msra.mxu0 0.0
      %253 = vmatprep.subr.mxu0 0.0
      %254 = vmatpush1.msra.mxu0 0.0
      %255 = vmatprep.subr.mxu0 0.0
      %256 = vmatpush1.msra.mxu0 0.0
      %257 = vmatprep.subr.mxu0 0.0
      %258 = vmatpush1.msra.mxu0 0.0
      %259 = vmatprep.subr.mxu0 0.0
      %260 = vmatpush1.msra.mxu0 0.0
      %261 = vmatprep.subr.mxu0 0.0
      %262 = vmatpush1.msra.mxu0 0.0
      %263 = vmatprep.subr.mxu0 0.0
      %264 = vmatpush1.msra.mxu0 0.0
      %265 = vmatprep.subr.mxu0 0.0
      %266 = vmatpush1.msra.mxu0 0.0
      %267 = vmatprep.subr.mxu0 0.0
      %268 = vmatpush1.msra.mxu0 0.0
      %269 = vmatprep.subr.mxu0 0.0
      %270 = vmatpush1.msra.mxu0 0.0
      %271 = vmatprep.subr.mxu0 0.0
      %272 = vmatpush1.msra.mxu0 0.0
      %273 = vmatprep.subr.mxu0 0.0
      %274 = vmatpush1.msra.mxu0 0.0
      %275 = vmatprep.subr.mxu0 0.0
      %276 = vmatpush1.msra.mxu0 0.0
      %277 = vmatprep.subr.mxu0 0.0
      %278 = vmatpush1.msra.mxu0 0.0
      %279 = vmatprep.subr.mxu0 0.0
      %280 = vmatpush1.msra.mxu0 0.0
      %281 = vmatprep.subr.mxu0 0.0
      %282 = vmatpush1.msra.mxu0 0.0
      %283 = vmatprep.subr.mxu0 0.0
      %284 = vmatpush1.msra.mxu0 0.0
      %285 = vmatprep.subr.mxu0 0.0
      %286 = vmatpush1.msra.mxu0 0.0
      %287 = vmatprep.subr.mxu0 0.0
      %288 = vmatpush1.msra.mxu0 0.0
      %289 = vmatprep.subr.mxu0 0.0
      %290 = vmatpush1.msra.mxu0 0.0
      %291 = vmatprep.subr.mxu0 0.0
      %292 = vmatpush1.msra.mxu0 0.0
      %293 = vmatprep.subr.mxu0 0.0
      %294 = vmatpush1.msra.mxu0 0.0
      %295 = vmatprep.subr.mxu0 0.0
      %296 = vmatpush1.msra.mxu0 0.0
      %297 = vmatprep.subr.mxu0 0.0
      %298 = vmatpush1.msra.mxu0 0.0
      %299 = vmatprep.subr.mxu0 0.0
      %300 = vmatpush1.msra.mxu0 0.0
      %301 = vmatprep.mubr.f32.mxu0 0.0
      %302 = vmatmul.mubr.f32.gmra.mrb[0].mxu0 %v232
      %v303 = vpop.f32.mrb[0].mxu0
      %v304 = vadd.f32 0.0, %v303
      %v305 = vpop.f32.mrb[0].mxu0
      %306 = vmatprep.mubr.f32.mxu0 0.0
      %307 = vmatmul.mubr.f32.gmra.mrb[0].mxu0 %v235
      %v308 = vpop.f32.mrb[0].mxu0
      %v309 = vadd.f32 0.0, %v308
      %v310 = vpop.f32.mrb[0].mxu0
      %311 = vdwg.mxu0
      %v313 = vsel %vm230, %v215, 0
      %v316 = vsel %vm230, %v216, 0
      %318 = vmatprep.subr.mxu0 0.0
      %319 = vmatpush1.msra.mxu0 %v213
      %320 = vmatprep.subr.mxu0 0.0
      %321 = vmatpush1.msra.mxu0 %v214
      %322 = vmatprep.subr.mxu0 0.0
      %323 = vmatpush1.msra.mxu0 0.0
      %324 = vmatprep.subr.mxu0 0.0
      %325 = vmatpush1.msra.mxu0 0.0
      %326 = vmatprep.subr.mxu0 0.0
      %327 = vmatpush1.msra.mxu0 0.0
      %328 = vmatprep.subr.mxu0 0.0
      %329 = vmatpush1.msra.mxu0 0.0
      %330 = vmatprep.subr.mxu0 0.0
      %331 = vmatpush1.msra.mxu0 0.0
      %332 = vmatprep.subr.mxu0 0.0
      %333 = vmatpush1.msra.mxu0 0.0
      %334 = vmatprep.subr.mxu0 0.0
      %335 = vmatpush1.msra.mxu0 0.0
      %336 = vmatprep.subr.mxu0 0.0
      %337 = vmatpush1.msra.mxu0 0.0
      %338 = vmatprep.subr.mxu0 0.0
      %339 = vmatpush1.msra.mxu0 0.0
      %340 = vmatprep.subr.mxu0 0.0
      %341 = vmatpush1.msra.mxu0 0.0
      %342 = vmatprep.subr.mxu0 0.0
      %343 = vmatpush1.msra.mxu0 0.0
      %344 = vmatprep.subr.mxu0 0.0
      %345 = vmatpush1.msra.mxu0 0.0
      %346 = vmatprep.subr.mxu0 0.0
      %347 = vmatpush1.msra.mxu0 0.0
      %348 = vmatprep.subr.mxu0 0.0
      %349 = vmatpush1.msra.mxu0 0.0
      %350 = vmatprep.subr.mxu0 0.0
      %351 = vmatpush1.msra.mxu0 0.0
      %352 = vmatprep.subr.mxu0 0.0
      %353 = vmatpush1.msra.mxu0 0.0
      %354 = vmatprep.subr.mxu0 0.0
      %355 = vmatpush1.msra.mxu0 0.0
      %356 = vmatprep.subr.mxu0 0.0
      %357 = vmatpush1.msra.mxu0 0.0
      %358 = vmatprep.subr.mxu0 0.0
      %359 = vmatpush1.msra.mxu0 0.0
      %360 = vmatprep.subr.mxu0 0.0
      %361 = vmatpush1.msra.mxu0 0.0
      %362 = vmatprep.subr.mxu0 0.0
      %363 = vmatpush1.msra.mxu0 0.0
      %364 = vmatprep.subr.mxu0 0.0
      %365 = vmatpush1.msra.mxu0 0.0
      %366 = vmatprep.subr.mxu0 0.0
      %367 = vmatpush1.msra.mxu0 0.0
      %368 = vmatprep.subr.mxu0 0.0
      %369 = vmatpush1.msra.mxu0 0.0
      %370 = vmatprep.subr.mxu0 0.0
      %371 = vmatpush1.msra.mxu0 0.0
      %372 = vmatprep.subr.mxu0 0.0
      %373 = vmatpush1.msra.mxu0 0.0
      %374 = vmatprep.subr.mxu0 0.0
      %375 = vmatpush1.msra.mxu0 0.0
      %376 = vmatprep.subr.mxu0 0.0
      %377 = vmatpush1.msra.mxu0 0.0
      %378 = vmatprep.subr.mxu0 0.0
      %379 = vmatpush1.msra.mxu0 0.0
      %380 = vmatprep.subr.mxu0 0.0
      %381 = vmatpush1.msra.mxu0 0.0
      %382 = vmatprep.mubr.f32.mxu0 0.0
      %383 = vmatmul.mubr.f32.gmra.mrb[0].mxu0 %v313
      %v384 = vpop.f32.mrb[0].mxu0
      %v385 = vadd.f32 %v304, %v384
      %v386 = vpop.f32.mrb[0].mxu0
      %387 = vmatprep.mubr.f32.mxu0 0.0
      %388 = vmatmul.mubr.f32.gmra.mrb[0].mxu0 %v316
      %v389 = vpop.f32.mrb[0].mxu0
      %v390 = vadd.f32 %v309, %v389
      %v391 = vpop.f32.mrb[0].mxu0
      %392 = vdwg.mxu0
      %vm393 = vcmp.lt.s32.totalorder %v186, 1
      %vm394 = vmand %vm393, %vm201
      %v395 = vsel %vm394, 1, 0
      %vm396 = vcmp.eq.s32.totalorder %v395, 1
      %397 = vrot.lane.b32.xlu0 %v198, 125
      %v398 = vpop.permute.xlu0 %397
      %399 = vrot.lane.b32.xlu0 %v199, 125
      %v400 = vpop.permute.xlu0 %399
      %v403 = vsel %vm396, %v398, 0.0
      %v404 = vsel %vm396, %v400, 0.0
      %s405 = scalar_lea.vmem %s1, 32
      %v406 = vld [vmem:[%s405] sm:$0xff]
      %v407 = vld [vmem:[%s405 + $0x8] sm:$0xff]
      %v409 = vsel %vm230, %v406, 0
      %v412 = vsel %vm230, %v407, 0
      %414 = vmatprep.subr.mxu0 0.0
      %415 = vmatpush1.msra.mxu0 %v403
      %416 = vmatprep.subr.mxu0 0.0
      %417 = vmatpush1.msra.mxu0 %v404
      %418 = vmatprep.subr.mxu0 0.0
      %419 = vmatpush1.msra.mxu0 0.0
      %420 = vmatprep.subr.mxu0 0.0
      %421 = vmatpush1.msra.mxu0 0.0
      %422 = vmatprep.subr.mxu0 0.0
      %423 = vmatpush1.msra.mxu0 0.0
      %424 = vmatprep.subr.mxu0 0.0
      %425 = vmatpush1.msra.mxu0 0.0
      %426 = vmatprep.subr.mxu0 0.0
      %427 = vmatpush1.msra.mxu0 0.0
      %428 = vmatprep.subr.mxu0 0.0
      %429 = vmatpush1.msra.mxu0 0.0
      %430 = vmatprep.subr.mxu0 0.0
      %431 = vmatpush1.msra.mxu0 0.0
      %432 = vmatprep.subr.mxu0 0.0
      %433 = vmatpush1.msra.mxu0 0.0
      %434 = vmatprep.subr.mxu0 0.0
      %435 = vmatpush1.msra.mxu0 0.0
      %436 = vmatprep.subr.mxu0 0.0
      %437 = vmatpush1.msra.mxu0 0.0
      %438 = vmatprep.subr.mxu0 0.0
      %439 = vmatpush1.msra.mxu0 0.0
      %440 = vmatprep.subr.mxu0 0.0
      %441 = vmatpush1.msra.mxu0 0.0
      %442 = vmatprep.subr.mxu0 0.0
      %443 = vmatpush1.msra.mxu0 0.0
      %444 = vmatprep.subr.mxu0 0.0
      %445 = vmatpush1.msra.mxu0 0.0
      %446 = vmatprep.subr.mxu0 0.0
      %447 = vmatpush1.msra.mxu0 0.0
      %448 = vmatprep.subr.mxu0 0.0
      %449 = vmatpush1.msra.mxu0 0.0
      %450 = vmatprep.subr.mxu0 0.0
      %451 = vmatpush1.msra.mxu0 0.0
      %452 = vmatprep.subr.mxu0 0.0
      %453 = vmatpush1.msra.mxu0 0.0
      %454 = vmatprep.subr.mxu0 0.0
      %455 = vmatpush1.msra.mxu0 0.0
      %456 = vmatprep.subr.mxu0 0.0
      %457 = vmatpush1.msra.mxu0 0.0
      %458 = vmatprep.subr.mxu0 0.0
      %459 = vmatpush1.msra.mxu0 0.0
      %460 = vmatprep.subr.mxu0 0.0
      %461 = vmatpush1.msra.mxu0 0.0
      %462 = vmatprep.subr.mxu0 0.0
      %463 = vmatpush1.msra.mxu0 0.0
      %464 = vmatprep.subr.mxu0 0.0
      %465 = vmatpush1.msra.mxu0 0.0
      %466 = vmatprep.subr.mxu0 0.0
      %467 = vmatpush1.msra.mxu0 0.0
      %468 = vmatprep.subr.mxu0 0.0
      %469 = vmatpush1.msra.mxu0 0.0
      %470 = vmatprep.subr.mxu0 0.0
      %471 = vmatpush1.msra.mxu0 0.0
      %472 = vmatprep.subr.mxu0 0.0
      %473 = vmatpush1.msra.mxu0 0.0
      %474 = vmatprep.subr.mxu0 0.0
      %475 = vmatpush1.msra.mxu0 0.0
      %476 = vmatprep.subr.mxu0 0.0
      %477 = vmatpush1.msra.mxu0 0.0
      %478 = vmatprep.mubr.f32.mxu0 0.0
      %479 = vmatmul.mubr.f32.gmra.mrb[0].mxu0 %v409
      %v480 = vpop.f32.mrb[0].mxu0
      %v481 = vadd.f32 0.0, %v480
      %v482 = vpop.f32.mrb[0].mxu0
      %483 = vmatprep.mubr.f32.mxu0 0.0
      %484 = vmatmul.mubr.f32.gmra.mrb[0].mxu0 %v412
      %v485 = vpop.f32.mrb[0].mxu0
      %v486 = vadd.f32 0.0, %v485
      %v487 = vpop.f32.mrb[0].mxu0
      %488 = vdwg.mxu0
      %v489 = vadd.f32 %v385, %v481
      %v490 = vadd.f32 %v390, %v486
      %v491 = vsel %vm200, 1, 0
      %vm492 = vcmp.eq.s32.totalorder %v491, 1
      %v493 = vsel %vm492, %v398, 0.0
      %v494 = vsel %vm492, %v400, 0.0
      %s495 = scalar_lea.vmem %s1, 48
      %v496 = vld [vmem:[%s495] sm:$0xff]
      %v497 = vld [vmem:[%s495 + $0x8] sm:$0xff]
      %v499 = vsel %vm230, %v496, 0
      %v502 = vsel %vm230, %v497, 0
      %504 = vmatprep.subr.mxu0 0.0
      %505 = vmatpush1.msra.mxu0 %v493
      %506 = vmatprep.subr.mxu0 0.0
      %507 = vmatpush1.msra.mxu0 %v494
      %508 = vmatprep.subr.mxu0 0.0
      %509 = vmatpush1.msra.mxu0 0.0
      %510 = vmatprep.subr.mxu0 0.0
      %511 = vmatpush1.msra.mxu0 0.0
      %512 = vmatprep.subr.mxu0 0.0
      %513 = vmatpush1.msra.mxu0 0.0
      %514 = vmatprep.subr.mxu0 0.0
      %515 = vmatpush1.msra.mxu0 0.0
      %516 = vmatprep.subr.mxu0 0.0
      %517 = vmatpush1.msra.mxu0 0.0
      %518 = vmatprep.subr.mxu0 0.0
      %519 = vmatpush1.msra.mxu0 0.0
      %520 = vmatprep.subr.mxu0 0.0
      %521 = vmatpush1.msra.mxu0 0.0
      %522 = vmatprep.subr.mxu0 0.0
      %523 = vmatpush1.msra.mxu0 0.0
      %524 = vmatprep.subr.mxu0 0.0
      %525 = vmatpush1.msra.mxu0 0.0
      %526 = vmatprep.subr.mxu0 0.0
      %527 = vmatpush1.msra.mxu0 0.0
      %528 = vmatprep.subr.mxu0 0.0
      %529 = vmatpush1.msra.mxu0 0.0
      %530 = vmatprep.subr.mxu0 0.0
      %531 = vmatpush1.msra.mxu0 0.0
      %532 = vmatprep.subr.mxu0 0.0
      %533 = vmatpush1.msra.mxu0 0.0
      %534 = vmatprep.subr.mxu0 0.0
      %535 = vmatpush1.msra.mxu0 0.0
      %536 = vmatprep.subr.mxu0 0.0
      %537 = vmatpush1.msra.mxu0 0.0
      %538 = vmatprep.subr.mxu0 0.0
      %539 = vmatpush1.msra.mxu0 0.0
      %540 = vmatprep.subr.mxu0 0.0
      %541 = vmatpush1.msra.mxu0 0.0
      %542 = vmatprep.subr.mxu0 0.0
      %543 = vmatpush1.msra.mxu0 0.0
      %544 = vmatprep.subr.mxu0 0.0
      %545 = vmatpush1.msra.mxu0 0.0
      %546 = vmatprep.subr.mxu0 0.0
      %547 = vmatpush1.msra.mxu0 0.0
      %548 = vmatprep.subr.mxu0 0.0
      %549 = vmatpush1.msra.mxu0 0.0
      %550 = vmatprep.subr.mxu0 0.0
      %551 = vmatpush1.msra.mxu0 0.0
      %552 = vmatprep.subr.mxu0 0.0
      %553 = vmatpush1.msra.mxu0 0.0
      %554 = vmatprep.subr.mxu0 0.0
      %555 = vmatpush1.msra.mxu0 0.0
      %556 = vmatprep.subr.mxu0 0.0
      %557 = vmatpush1.msra.mxu0 0.0
      %558 = vmatprep.subr.mxu0 0.0
      %559 = vmatpush1.msra.mxu0 0.0
      %560 = vmatprep.subr.mxu0 0.0
      %561 = vmatpush1.msra.mxu0 0.0
      %562 = vmatprep.subr.mxu0 0.0
      %563 = vmatpush1.msra.mxu0 0.0
      %564 = vmatprep.subr.mxu0 0.0
      %565 = vmatpush1.msra.mxu0 0.0
      %566 = vmatprep.subr.mxu0 0.0
      %567 = vmatpush1.msra.mxu0 0.0
      %568 = vmatprep.mubr.f32.mxu0 0.0
      %569 = vmatmul.mubr.f32.gmra.mrb[0].mxu0 %v499
      %v570 = vpop.f32.mrb[0].mxu0
      %v571 = vadd.f32 0.0, %v570
      %v572 = vpop.f32.mrb[0].mxu0
      %573 = vmatprep.mubr.f32.mxu0 0.0
      %574 = vmatmul.mubr.f32.gmra.mrb[0].mxu0 %v502
      %v575 = vpop.f32.mrb[0].mxu0
      %v576 = vadd.f32 0.0, %v575
      %v577 = vpop.f32.mrb[0].mxu0
      %578 = vdwg.mxu0
      %v579 = vadd.f32 %v489, %v571
      %v580 = vadd.f32 %v490, %v576
      %s581 = scalar_lea.vmem %s1, 64
      %v582 = vld [vmem:[%s581] sm:$0xff]
      %v583 = vld [vmem:[%s581 + $0x8] sm:$0xff]
      %v585 = vsel %vm230, %v582, 0
      %v588 = vsel %vm230, %v583, 0
      %590 = vmatprep.subr.mxu0 0.0
      %591 = vmatpush1.msra.mxu0 %v171
      %592 = vmatprep.subr.mxu0 0.0
      %593 = vmatpush1.msra.mxu0 %v172
      %594 = vmatprep.subr.mxu0 0.0
      %595 = vmatpush1.msra.mxu0 0.0
      %596 = vmatprep.subr.mxu0 0.0
      %597 = vmatpush1.msra.mxu0 0.0
      %598 = vmatprep.subr.mxu0 0.0
      %599 = vmatpush1.msra.mxu0 0.0
      %600 = vmatprep.subr.mxu0 0.0
      %601 = vmatpush1.msra.mxu0 0.0
      %602 = vmatprep.subr.mxu0 0.0
      %603 = vmatpush1.msra.mxu0 0.0
      %604 = vmatprep.subr.mxu0 0.0
      %605 = vmatpush1.msra.mxu0 0.0
      %606 = vmatprep.subr.mxu0 0.0
      %607 = vmatpush1.msra.mxu0 0.0
      %608 = vmatprep.subr.mxu0 0.0
      %609 = vmatpush1.msra.mxu0 0.0
      %610 = vmatprep.subr.mxu0 0.0
      %611 = vmatpush1.msra.mxu0 0.0
      %612 = vmatprep.subr.mxu0 0.0
      %613 = vmatpush1.msra.mxu0 0.0
      %614 = vmatprep.subr.mxu0 0.0
      %615 = vmatpush1.msra.mxu0 0.0
      %616 = vmatprep.subr.mxu0 0.0
      %617 = vmatpush1.msra.mxu0 0.0
      %618 = vmatprep.subr.mxu0 0.0
      %619 = vmatpush1.msra.mxu0 0.0
      %620 = vmatprep.subr.mxu0 0.0
      %621 = vmatpush1.msra.mxu0 0.0
      %622 = vmatprep.subr.mxu0 0.0
      %623 = vmatpush1.msra.mxu0 0.0
      %624 = vmatprep.subr.mxu0 0.0
      %625 = vmatpush1.msra.mxu0 0.0
      %626 = vmatprep.subr.mxu0 0.0
      %627 = vmatpush1.msra.mxu0 0.0
      %628 = vmatprep.subr.mxu0 0.0
      %629 = vmatpush1.msra.mxu0 0.0
      %630 = vmatprep.subr.mxu0 0.0
      %631 = vmatpush1.msra.mxu0 0.0
      %632 = vmatprep.subr.mxu0 0.0
      %633 = vmatpush1.msra.mxu0 0.0
      %634 = vmatprep.subr.mxu0 0.0
      %635 = vmatpush1.msra.mxu0 0.0
      %636 = vmatprep.subr.mxu0 0.0
      %637 = vmatpush1.msra.mxu0 0.0
      %638 = vmatprep.subr.mxu0 0.0
      %639 = vmatpush1.msra.mxu0 0.0
      %640 = vmatprep.subr.mxu0 0.0
      %641 = vmatpush1.msra.mxu0 0.0
      %642 = vmatprep.subr.mxu0 0.0
      %643 = vmatpush1.msra.mxu0 0.0
      %644 = vmatprep.subr.mxu0 0.0
      %645 = vmatpush1.msra.mxu0 0.0
      %646 = vmatprep.subr.mxu0 0.0
      %647 = vmatpush1.msra.mxu0 0.0
      %648 = vmatprep.subr.mxu0 0.0
      %649 = vmatpush1.msra.mxu0 0.0
      %650 = vmatprep.subr.mxu0 0.0
      %651 = vmatpush1.msra.mxu0 0.0
      %652 = vmatprep.subr.mxu0 0.0
      %653 = vmatpush1.msra.mxu0 0.0
      %654 = vmatprep.mubr.f32.mxu0 0.0
      %655 = vmatmul.mubr.f32.gmra.mrb[0].mxu0 %v585
      %v656 = vpop.f32.mrb[0].mxu0
      %v657 = vadd.f32 0.0, %v656
      %v658 = vpop.f32.mrb[0].mxu0
      %659 = vmatprep.mubr.f32.mxu0 0.0
      %660 = vmatmul.mubr.f32.gmra.mrb[0].mxu0 %v588
      %v661 = vpop.f32.mrb[0].mxu0
      %v662 = vadd.f32 0.0, %v661
      %v663 = vpop.f32.mrb[0].mxu0
      %664 = vdwg.mxu0
      %v665 = vadd.f32 %v579, %v657
      %v666 = vadd.f32 %v580, %v662
      %v667 = vsel %vm393, 1, 0
      %vm668 = vcmp.eq.s32.totalorder %v667, 1
      %v669 = vsel %vm668, %v208, 0.0
      %v670 = vsel %vm668, %v210, 0.0
      %s671 = scalar_lea.vmem %s1, 80
      %v672 = vld [vmem:[%s671] sm:$0xff]
      %v673 = vld [vmem:[%s671 + $0x8] sm:$0xff]
      %v675 = vsel %vm230, %v672, 0
      %v678 = vsel %vm230, %v673, 0
      %680 = vmatprep.subr.mxu0 0.0
      %681 = vmatpush1.msra.mxu0 %v669
      %682 = vmatprep.subr.mxu0 0.0
      %683 = vmatpush1.msra.mxu0 %v670
      %684 = vmatprep.subr.mxu0 0.0
      %685 = vmatpush1.msra.mxu0 0.0
      %686 = vmatprep.subr.mxu0 0.0
      %687 = vmatpush1.msra.mxu0 0.0
      %688 = vmatprep.subr.mxu0 0.0
      %689 = vmatpush1.msra.mxu0 0.0
      %690 = vmatprep.subr.mxu0 0.0
      %691 = vmatpush1.msra.mxu0 0.0
      %692 = vmatprep.subr.mxu0 0.0
      %693 = vmatpush1.msra.mxu0 0.0
      %694 = vmatprep.subr.mxu0 0.0
      %695 = vmatpush1.msra.mxu0 0.0
      %696 = vmatprep.subr.mxu0 0.0
      %697 = vmatpush1.msra.mxu0 0.0
      %698 = vmatprep.subr.mxu0 0.0
      %699 = vmatpush1.msra.mxu0 0.0
      %700 = vmatprep.subr.mxu0 0.0
      %701 = vmatpush1.msra.mxu0 0.0
      %702 = vmatprep.subr.mxu0 0.0
      %703 = vmatpush1.msra.mxu0 0.0
      %704 = vmatprep.subr.mxu0 0.0
      %705 = vmatpush1.msra.mxu0 0.0
      %706 = vmatprep.subr.mxu0 0.0
      %707 = vmatpush1.msra.mxu0 0.0
      %708 = vmatprep.subr.mxu0 0.0
      %709 = vmatpush1.msra.mxu0 0.0
      %710 = vmatprep.subr.mxu0 0.0
      %711 = vmatpush1.msra.mxu0 0.0
      %712 = vmatprep.subr.mxu0 0.0
      %713 = vmatpush1.msra.mxu0 0.0
      %714 = vmatprep.subr.mxu0 0.0
      %715 = vmatpush1.msra.mxu0 0.0
      %716 = vmatprep.subr.mxu0 0.0
      %717 = vmatpush1.msra.mxu0 0.0
      %718 = vmatprep.subr.mxu0 0.0
      %719 = vmatpush1.msra.mxu0 0.0
      %720 = vmatprep.subr.mxu0 0.0
      %721 = vmatpush1.msra.mxu0 0.0
      %722 = vmatprep.subr.mxu0 0.0
      %723 = vmatpush1.msra.mxu0 0.0
      %724 = vmatprep.subr.mxu0 0.0
      %725 = vmatpush1.msra.mxu0 0.0
      %726 = vmatprep.subr.mxu0 0.0
      %727 = vmatpush1.msra.mxu0 0.0
      %728 = vmatprep.subr.mxu0 0.0
      %729 = vmatpush1.msra.mxu0 0.0
      %730 = vmatprep.subr.mxu0 0.0
      %731 = vmatpush1.msra.mxu0 0.0
      %732 = vmatprep.subr.mxu0 0.0
      %733 = vmatpush1.msra.mxu0 0.0
      %734 = vmatprep.subr.mxu0 0.0
      %735 = vmatpush1.msra.mxu0 0.0
      %736 = vmatprep.subr.mxu0 0.0
      %737 = vmatpush1.msra.mxu0 0.0
      %738 = vmatprep.subr.mxu0 0.0
      %739 = vmatpush1.msra.mxu0 0.0
      %740 = vmatprep.subr.mxu0 0.0
      %741 = vmatpush1.msra.mxu0 0.0
      %742 = vmatprep.subr.mxu0 0.0
      %743 = vmatpush1.msra.mxu0 0.0
      %744 = vmatprep.mubr.f32.mxu0 0.0
      %745 = vmatmul.mubr.f32.gmra.mrb[0].mxu0 %v675
      %v746 = vpop.f32.mrb[0].mxu0
      %v747 = vadd.f32 0.0, %v746
      %v748 = vpop.f32.mrb[0].mxu0
      %749 = vmatprep.mubr.f32.mxu0 0.0
      %750 = vmatmul.mubr.f32.gmra.mrb[0].mxu0 %v678
      %v751 = vpop.f32.mrb[0].mxu0
      %v752 = vadd.f32 0.0, %v751
      %v753 = vpop.f32.mrb[0].mxu0
      %754 = vdwg.mxu0
      %v755 = vadd.f32 %v665, %v747
      %v756 = vadd.f32 %v666, %v752
      %vm757 = vcmp.lt.s32.totalorder %v174, 2
      %vm758 = vmand %vm200, %vm757
      %v759 = vsel %vm758, 1, 0
      %vm760 = vcmp.eq.s32.totalorder %v759, 1
      %v761 = vsel %vm760, %v208, 0.0
      %v762 = vsel %vm760, %v210, 0.0
      %s763 = scalar_lea.vmem %s1, 96
      %v764 = vld [vmem:[%s763] sm:$0xff]
      %v765 = vld [vmem:[%s763 + $0x8] sm:$0xff]
      %v767 = vsel %vm230, %v764, 0
      %v770 = vsel %vm230, %v765, 0
      %772 = vmatprep.subr.mxu0 0.0
      %773 = vmatpush1.msra.mxu0 %v761
      %774 = vmatprep.subr.mxu0 0.0
      %775 = vmatpush1.msra.mxu0 %v762
      %776 = vmatprep.subr.mxu0 0.0
      %777 = vmatpush1.msra.mxu0 0.0
      %778 = vmatprep.subr.mxu0 0.0
      %779 = vmatpush1.msra.mxu0 0.0
      %780 = vmatprep.subr.mxu0 0.0
      %781 = vmatpush1.msra.mxu0 0.0
      %782 = vmatprep.subr.mxu0 0.0
      %783 = vmatpush1.msra.mxu0 0.0
      %784 = vmatprep.subr.mxu0 0.0
      %785 = vmatpush1.msra.mxu0 0.0
      %786 = vmatprep.subr.mxu0 0.0
      %787 = vmatpush1.msra.mxu0 0.0
      %788 = vmatprep.subr.mxu0 0.0
      %789 = vmatpush1.msra.mxu0 0.0
      %790 = vmatprep.subr.mxu0 0.0
      %791 = vmatpush1.msra.mxu0 0.0
      %792 = vmatprep.subr.mxu0 0.0
      %793 = vmatpush1.msra.mxu0 0.0
      %794 = vmatprep.subr.mxu0 0.0
      %795 = vmatpush1.msra.mxu0 0.0
      %796 = vmatprep.subr.mxu0 0.0
      %797 = vmatpush1.msra.mxu0 0.0
      %798 = vmatprep.subr.mxu0 0.0
      %799 = vmatpush1.msra.mxu0 0.0
      %800 = vmatprep.subr.mxu0 0.0
      %801 = vmatpush1.msra.mxu0 0.0
      %802 = vmatprep.subr.mxu0 0.0
      %803 = vmatpush1.msra.mxu0 0.0
      %804 = vmatprep.subr.mxu0 0.0
      %805 = vmatpush1.msra.mxu0 0.0
      %806 = vmatprep.subr.mxu0 0.0
      %807 = vmatpush1.msra.mxu0 0.0
      %808 = vmatprep.subr.mxu0 0.0
      %809 = vmatpush1.msra.mxu0 0.0
      %810 = vmatprep.subr.mxu0 0.0
      %811 = vmatpush1.msra.mxu0 0.0
      %812 = vmatprep.subr.mxu0 0.0
      %813 = vmatpush1.msra.mxu0 0.0
      %814 = vmatprep.subr.mxu0 0.0
      %815 = vmatpush1.msra.mxu0 0.0
      %816 = vmatprep.subr.mxu0 0.0
      %817 = vmatpush1.msra.mxu0 0.0
      %818 = vmatprep.subr.mxu0 0.0
      %819 = vmatpush1.msra.mxu0 0.0
      %820 = vmatprep.subr.mxu0 0.0
      %821 = vmatpush1.msra.mxu0 0.0
      %822 = vmatprep.subr.mxu0 0.0
      %823 = vmatpush1.msra.mxu0 0.0
      %824 = vmatprep.subr.mxu0 0.0
      %825 = vmatpush1.msra.mxu0 0.0
      %826 = vmatprep.subr.mxu0 0.0
      %827 = vmatpush1.msra.mxu0 0.0
      %828 = vmatprep.subr.mxu0 0.0
      %829 = vmatpush1.msra.mxu0 0.0
      %830 = vmatprep.subr.mxu0 0.0
      %831 = vmatpush1.msra.mxu0 0.0
      %832 = vmatprep.subr.mxu0 0.0
      %833 = vmatpush1.msra.mxu0 0.0
      %834 = vmatprep.subr.mxu0 0.0
      %835 = vmatpush1.msra.mxu0 0.0
      %836 = vmatprep.mubr.f32.mxu0 0.0
      %837 = vmatmul.mubr.f32.gmra.mrb[0].mxu0 %v767
      %v838 = vpop.f32.mrb[0].mxu0
      %v839 = vadd.f32 0.0, %v838
      %v840 = vpop.f32.mrb[0].mxu0
      %841 = vmatprep.mubr.f32.mxu0 0.0
      %842 = vmatmul.mubr.f32.gmra.mrb[0].mxu0 %v770
      %v843 = vpop.f32.mrb[0].mxu0
      %v844 = vadd.f32 0.0, %v843
      %v845 = vpop.f32.mrb[0].mxu0
      %846 = vdwg.mxu0
      %v847 = vadd.f32 %v755, %v839
      %v848 = vadd.f32 %v756, %v844
      %v849 = vsel %vm757, 1, 0
      %vm850 = vcmp.eq.s32.totalorder %v849, 1
      %v851 = vsel %vm850, %v220, 0.0
      %v852 = vsel %vm850, %v222, 0.0
      %s853 = scalar_lea.vmem %s1, 112
      %v854 = vld [vmem:[%s853] sm:$0xff]
      %v855 = vld [vmem:[%s853 + $0x8] sm:$0xff]
      %v857 = vsel %vm230, %v854, 0
      %v860 = vsel %vm230, %v855, 0
      %862 = vmatprep.subr.mxu0 0.0
      %863 = vmatpush1.msra.mxu0 %v851
      %864 = vmatprep.subr.mxu0 0.0
      %865 = vmatpush1.msra.mxu0 %v852
      %866 = vmatprep.subr.mxu0 0.0
      %867 = vmatpush1.msra.mxu0 0.0
      %868 = vmatprep.subr.mxu0 0.0
      %869 = vmatpush1.msra.mxu0 0.0
      %870 = vmatprep.subr.mxu0 0.0
      %871 = vmatpush1.msra.mxu0 0.0
      %872 = vmatprep.subr.mxu0 0.0
      %873 = vmatpush1.msra.mxu0 0.0
      %874 = vmatprep.subr.mxu0 0.0
      %875 = vmatpush1.msra.mxu0 0.0
      %876 = vmatprep.subr.mxu0 0.0
      %877 = vmatpush1.msra.mxu0 0.0
      %878 = vmatprep.subr.mxu0 0.0
      %879 = vmatpush1.msra.mxu0 0.0
      %880 = vmatprep.subr.mxu0 0.0
      %881 = vmatpush1.msra.mxu0 0.0
      %882 = vmatprep.subr.mxu0 0.0
      %883 = vmatpush1.msra.mxu0 0.0
      %884 = vmatprep.subr.mxu0 0.0
      %885 = vmatpush1.msra.mxu0 0.0
      %886 = vmatprep.subr.mxu0 0.0
      %887 = vmatpush1.msra.mxu0 0.0
      %888 = vmatprep.subr.mxu0 0.0
      %889 = vmatpush1.msra.mxu0 0.0
      %890 = vmatprep.subr.mxu0 0.0
      %891 = vmatpush1.msra.mxu0 0.0
      %892 = vmatprep.subr.mxu0 0.0
      %893 = vmatpush1.msra.mxu0 0.0
      %894 = vmatprep.subr.mxu0 0.0
      %895 = vmatpush1.msra.mxu0 0.0
      %896 = vmatprep.subr.mxu0 0.0
      %897 = vmatpush1.msra.mxu0 0.0
      %898 = vmatprep.subr.mxu0 0.0
      %899 = vmatpush1.msra.mxu0 0.0
      %900 = vmatprep.subr.mxu0 0.0
      %901 = vmatpush1.msra.mxu0 0.0
      %902 = vmatprep.subr.mxu0 0.0
      %903 = vmatpush1.msra.mxu0 0.0
      %904 = vmatprep.subr.mxu0 0.0
      %905 = vmatpush1.msra.mxu0 0.0
      %906 = vmatprep.subr.mxu0 0.0
      %907 = vmatpush1.msra.mxu0 0.0
      %908 = vmatprep.subr.mxu0 0.0
      %909 = vmatpush1.msra.mxu0 0.0
      %910 = vmatprep.subr.mxu0 0.0
      %911 = vmatpush1.msra.mxu0 0.0
      %912 = vmatprep.subr.mxu0 0.0
      %913 = vmatpush1.msra.mxu0 0.0
      %914 = vmatprep.subr.mxu0 0.0
      %915 = vmatpush1.msra.mxu0 0.0
      %916 = vmatprep.subr.mxu0 0.0
      %917 = vmatpush1.msra.mxu0 0.0
      %918 = vmatprep.subr.mxu0 0.0
      %919 = vmatpush1.msra.mxu0 0.0
      %920 = vmatprep.subr.mxu0 0.0
      %921 = vmatpush1.msra.mxu0 0.0
      %922 = vmatprep.subr.mxu0 0.0
      %923 = vmatpush1.msra.mxu0 0.0
      %924 = vmatprep.subr.mxu0 0.0
      %925 = vmatpush1.msra.mxu0 0.0
      %926 = vmatprep.mubr.f32.mxu0 0.0
      %927 = vmatmul.mubr.f32.gmra.mrb[0].mxu0 %v857
      %v928 = vpop.f32.mrb[0].mxu0
      %v929 = vadd.f32 0.0, %v928
      %v930 = vpop.f32.mrb[0].mxu0
      %931 = vmatprep.mubr.f32.mxu0 0.0
      %932 = vmatmul.mubr.f32.gmra.mrb[0].mxu0 %v860
      %v933 = vpop.f32.mrb[0].mxu0
      %v934 = vadd.f32 0.0, %v933
      %v935 = vpop.f32.mrb[0].mxu0
      %936 = vdwg.mxu0
      %v937 = vadd.f32 %v847, %v929
      %v938 = vadd.f32 %v848, %v934
      %vm939 = vmand %vm393, %vm757
      %v940 = vsel %vm939, 1, 0
      %vm941 = vcmp.eq.s32.totalorder %v940, 1
      %v942 = vsel %vm941, %v398, 0.0
      %v943 = vsel %vm941, %v400, 0.0
      %s944 = scalar_lea.vmem %s1, 128
      %v945 = vld [vmem:[%s944] sm:$0xff]
      %v946 = vld [vmem:[%s944 + $0x8] sm:$0xff]
      %v948 = vsel %vm230, %v945, 0
      %v951 = vsel %vm230, %v946, 0
      %953 = vmatprep.subr.mxu0 0.0
      %954 = vmatpush1.msra.mxu0 %v942
      %955 = vmatprep.subr.mxu0 0.0
      %956 = vmatpush1.msra.mxu0 %v943
      %957 = vmatprep.subr.mxu0 0.0
      %958 = vmatpush1.msra.mxu0 0.0
      %959 = vmatprep.subr.mxu0 0.0
      %960 = vmatpush1.msra.mxu0 0.0
      %961 = vmatprep.subr.mxu0 0.0
      %962 = vmatpush1.msra.mxu0 0.0
      %963 = vmatprep.subr.mxu0 0.0
      %964 = vmatpush1.msra.mxu0 0.0
      %965 = vmatprep.subr.mxu0 0.0
      %966 = vmatpush1.msra.mxu0 0.0
      %967 = vmatprep.subr.mxu0 0.0
      %968 = vmatpush1.msra.mxu0 0.0
      %969 = vmatprep.subr.mxu0 0.0
      %970 = vmatpush1.msra.mxu0 0.0
      %971 = vmatprep.subr.mxu0 0.0
      %972 = vmatpush1.msra.mxu0 0.0
      %973 = vmatprep.subr.mxu0 0.0
      %974 = vmatpush1.msra.mxu0 0.0
      %975 = vmatprep.subr.mxu0 0.0
      %976 = vmatpush1.msra.mxu0 0.0
      %977 = vmatprep.subr.mxu0 0.0
      %978 = vmatpush1.msra.mxu0 0.0
      %979 = vmatprep.subr.mxu0 0.0
      %980 = vmatpush1.msra.mxu0 0.0
      %981 = vmatprep.subr.mxu0 0.0
      %982 = vmatpush1.msra.mxu0 0.0
      %983 = vmatprep.subr.mxu0 0.0
      %984 = vmatpush1.msra.mxu0 0.0
      %985 = vmatprep.subr.mxu0 0.0
      %986 = vmatpush1.msra.mxu0 0.0
      %987 = vmatprep.subr.mxu0 0.0
      %988 = vmatpush1.msra.mxu0 0.0
      %989 = vmatprep.subr.mxu0 0.0
      %990 = vmatpush1.msra.mxu0 0.0
      %991 = vmatprep.subr.mxu0 0.0
      %992 = vmatpush1.msra.mxu0 0.0
      %993 = vmatprep.subr.mxu0 0.0
      %994 = vmatpush1.msra.mxu0 0.0
      %995 = vmatprep.subr.mxu0 0.0
      %996 = vmatpush1.msra.mxu0 0.0
      %997 = vmatprep.subr.mxu0 0.0
      %998 = vmatpush1.msra.mxu0 0.0
      %999 = vmatprep.subr.mxu0 0.0
      %1000 = vmatpush1.msra.mxu0 0.0
      %1001 = vmatprep.subr.mxu0 0.0
      %1002 = vmatpush1.msra.mxu0 0.0
      %1003 = vmatprep.subr.mxu0 0.0
      %1004 = vmatpush1.msra.mxu0 0.0
      %1005 = vmatprep.subr.mxu0 0.0
      %1006 = vmatpush1.msra.mxu0 0.0
      %1007 = vmatprep.subr.mxu0 0.0
      %1008 = vmatpush1.msra.mxu0 0.0
      %1009 = vmatprep.subr.mxu0 0.0
      %1010 = vmatpush1.msra.mxu0 0.0
      %1011 = vmatprep.subr.mxu0 0.0
      %1012 = vmatpush1.msra.mxu0 0.0
      %1013 = vmatprep.subr.mxu0 0.0
      %1014 = vmatpush1.msra.mxu0 0.0
      %1015 = vmatprep.subr.mxu0 0.0
      %1016 = vmatpush1.msra.mxu0 0.0
      %1017 = vmatprep.mubr.f32.mxu0 0.0
      %1018 = vmatmul.mubr.f32.gmra.mrb[0].mxu0 %v948
      %v1019 = vpop.f32.mrb[0].mxu0
      %v1020 = vadd.f32 0.0, %v1019
      %v1021 = vpop.f32.mrb[0].mxu0
      %1022 = vmatprep.mubr.f32.mxu0 0.0
      %1023 = vmatmul.mubr.f32.gmra.mrb[0].mxu0 %v951
      %v1024 = vpop.f32.mrb[0].mxu0
      %v1025 = vadd.f32 0.0, %v1024
      %v1026 = vpop.f32.mrb[0].mxu0
      %1027 = vdwg.mxu0
      %v1028 = vadd.f32 %v937, %v1020
      %v1029 = vadd.f32 %v938, %v1025
      %v1030 = vld [vmem:[%s2] sm:$0xff]
      %v1031 = vld [vmem:[%s2 + $0x8] sm:$0xff]
      %1033 = vset.pattern.permute.xlu0 0
      %1034 = vperm.xlu0 %1033, %v1030
      %v1035 = vpop.permute.xlu0 %1034
      %1038 = vset.pattern.permute.xlu0 0
      %1039 = vperm.xlu0 %1038, %v1031
      %v1040 = vpop.permute.xlu0 %1039
      %v1042 = vadd.f32 %v1028, %v1035
      %v1043 = vadd.f32 %v1029, %v1040
      %vm1044 = vcmask 31744
      %1045 = vst.msk [vmem:[%s170] sm:$0xff] %vm1044, %v1042
      %1046 = vst.msk [vmem:[%s170 + $0x8] sm:$0xff] %vm1044, %v1043
      %p1047 = scmp.lt.s32.totalorder %s14, 1
      %s1048 = scalar_select %p1047, %s14, 1
      %s1049 = smul.addr %s1048, 2
      %s1050 = smul.addr %s1049, 8
      %s1051 = scalar_lea.vmem %s3, %s1050
      // Predicated region
      $region33: #{fpn_forward.15} parent=31 // pred_check
        %p1052 = pneg %p100
      $region34: #{fpn_forward.15} parent=31 // pred_check_branch
        %1054 = sbr.rel (%p1052) target = $region36
      $region35: #{fpn_forward.15} parent=31 // pred_region
        _
      $region36: #{fpn_forward.15} parent=31 // pred_fallthru
        _
    $region32: #{fpn_forward.15} parent=5 // pred_fallthru
      _
    %p1055 = scmp.le.s32.totalorder 2, %s9
    // Predicated region
    $region37: #{fpn_forward.15} parent=5 // pred_check
      %p1056 = pneg %p1055
    $region38: #{fpn_forward.15} parent=5 // pred_check_branch
      %1058 = sbr.rel (%p1056) target = $region40
    $region39: #{fpn_forward.15} parent=5 // pred_region
      %s1059 = ssub.s32 %s9, 2
      // Predicated region
      $region41: #{fpn_forward.15} parent=39 // pred_check
        %p1060 = pneg %p106
      $region42: #{fpn_forward.15} parent=39 // pred_check_branch
        %1062 = sbr.rel (%p1060) target = $region44
      $region43: #{fpn_forward.15} parent=39 // pred_region
        %p1063 = scmp.lt.s32.totalorder %s15, 1
        %s1064 = scalar_select %p1063, %s15, 1
        %s1065 = smul.addr %s1064, 2
        %s1066 = smul.addr %s1065, 8
        %s1067 = scalar_lea.vmem %s3, %s1066
      $region44: #{fpn_forward.15} parent=39 // pred_fallthru
        _
    $region40: #{fpn_forward.15} parent=5 // pred_fallthru
      _
  $region6: #{fpn_forward.15} parent=0 // loop_footer
    %s13 = sadd.s32 1, %s9
  $region7: #{fpn_forward.15} parent=0 // loop_footer_branch
    %8 = sbr.rel target = $region3
  $region8: #{fpn_forward.15} parent=0 // loop_exit
    _

</llo_original>
